<compile_context>
chip_gen: v7x
topology: tpu7x:2x2x1
jax: 0.10.0
libtpu: 0.0.40
codegen_flags: <defaults>
</compile_context>

<pallas_src>
import functools  # noqa: F401
import math

import jax
import jax.numpy as jnp
from jax.experimental import pallas as pl
from jax.experimental.pallas import tpu as pltpu  # noqa: F401  (TPU backend assumed)

# ----------------------------- configuration --------------------------------
N_NODES = 16
HIDDEN = 32           # hidden_dim == out_dim
N_HEADS = 4
HEAD_DIM = HIDDEN // N_HEADS
N_LAYERS = 2
POS_ENC_DIM = 8       # net_params['pos_enc_dim'], lap_pos_enc=True
NUM_ATOM_TYPE = 28
NUM_BOND_TYPE = 4
OUT_COORD = 3         # dynamics head emits per-node 3-D coordinates (cdist(out,out))
# net_params: lap_pos_enc=True, wl_pos_enc=False, full_graph=False, layer_norm=True


# --------------------------- fused Pallas kernel ------------------------------
def _fused_forward_kernel(
    # graph / feature inputs
    h0_ref, lap_ref, e0_ref, mask_ref, sagg_ref, rhead_ref,
    # lap positional-encoding projection
    lapw_ref, lapb_ref,
    # stacked per-layer parameters (leading dim = layer)
    qkvw_ref, qkvb_ref, pew_ref, peb_ref, ohw_ref, ohb_ref, oew_ref, oeb_ref,
    fh1w_ref, fh1b_ref, fh2w_ref, fh2b_ref, fe1w_ref, fe1b_ref, fe2w_ref, fe2b_ref,
    ln1hg_ref, ln1hb_ref, ln1eg_ref, ln1eb_ref,
    ln2hg_ref, ln2hb_ref, ln2eg_ref, ln2eb_ref,
    # readout MLP
    m1w_ref, m1b_ref, m2w_ref, m2b_ref, m3w_ref, m3b_ref,
    # outputs
    out_ref, dist_ref):
    f32 = jnp.float32
    n, d = N_NODES, HIDDEN

    def mm(a, b):
        return jnp.dot(a, b, preferred_element_type=f32)

    def layer_norm(x, g, b):
        mu = jnp.mean(x, axis=-1, keepdims=True)
        var = jnp.mean((x - mu) ** 2, axis=-1, keepdims=True)
        return (x - mu) * jax.lax.rsqrt(var + 1e-5) * g + b

    # node embedding + Laplacian positional-encoding projection
    h = h0_ref[...] + mm(lap_ref[...], lapw_ref[...]) + lapb_ref[...]   # [N, D]
    e = e0_ref[...]                    # [N*N, D]  dense edge features (row = dst*N+src)
    mask = mask_ref[...]               # [N*N, 1]  adjacency mask
    s_agg = sagg_ref[...]              # [N, N*N]  per-destination summation matrix
    r_head = rhead_ref[...]            # [D, D]    per-head sum + broadcast (block-diag ones)

    for l in range(N_LAYERS):          # static unroll (2 layers)
        h_in1, e_in1 = h, e

        # fused Q|K|V projection (one MXU push); K columns carry the 1/sqrt(d_h) scale
        qkv = mm(h, qkvw_ref[l]) + qkvb_ref[l]              # [N, 3D]
        q = qkv[:, 0:d]
        k = qkv[:, d:2 * d]
        v = qkv[:, 2 * d:3 * d]
        ep = mm(e, pew_ref[l]) + peb_ref[l]                 # [N*N, D]

        # lane-dense per-edge tensors: row r = (dst = r // N, src = r % N)
        q_dst = jnp.broadcast_to(q[:, None, :], (n, n, d)).reshape(n * n, d)
        k_src = jnp.broadcast_to(k[None, :, :], (n, n, d)).reshape(n * n, d)
        v_src = jnp.broadcast_to(v[None, :, :], (n, n, d)).reshape(n * n, d)

        # score = (K_src * Q_dst / sqrt(d_h)) * proj_e   (scale folded into K weights)
        score = q_dst * k_src * ep                          # [N*N, D]  == e_out
        # per-head sum over d_h, broadcast back across the head's 8 lanes (one matmul)
        logits = mm(score, r_head)                          # [N*N, D]
        attn = jnp.exp(jnp.clip(logits, -5.0, 5.0)) * mask  # masked softmax numerator

        # aggregate at destination nodes (single MXU matmuls, no per-head loop)
        wv = mm(s_agg, attn * v_src)                        # [N, D]
        z = mm(s_agg, attn)                                 # [N, D] (per-head denominator)
        h_att = wv * pl.reciprocal(z + 1e-6, approx=True)

        h = mm(h_att, ohw_ref[l]) + ohb_ref[l]              # O_h
        e_new = mm(score, oew_ref[l]) + oeb_ref[l]          # O_e

        h = layer_norm(h_in1 + h, ln1hg_ref[l], ln1hb_ref[l])
        e = layer_norm(e_in1 + e_new, ln1eg_ref[l], ln1eb_ref[l])

        h_in2, e_in2 = h, e
        hf = jnp.maximum(mm(h, fh1w_ref[l]) + fh1b_ref[l], 0.0)
        hf = mm(hf, fh2w_ref[l]) + fh2b_ref[l]
        ef = jnp.maximum(mm(e, fe1w_ref[l]) + fe1b_ref[l], 0.0)
        ef = mm(ef, fe2w_ref[l]) + fe2b_ref[l]

        h = layer_norm(h_in2 + hf, ln2hg_ref[l], ln2hb_ref[l])
        e = layer_norm(e_in2 + ef, ln2eg_ref[l], ln2eb_ref[l])

    # per-node readout MLP -> 3-D coordinates
    o = jnp.maximum(mm(h, m1w_ref[...]) + m1b_ref[...], 0.0)
    o = jnp.maximum(mm(o, m2w_ref[...]) + m2b_ref[...], 0.0)
    o = mm(o, m3w_ref[...]) + m3b_ref[...]                  # [N, 3]
    out_ref[...] = o

    # pairwise L2 distances (torch.cdist p=2), transpose-free via dot_general
    osq = o * o
    gram = jax.lax.dot_general(o, o, (((1,), (1,)), ((), ())),
                               preferred_element_type=f32)            # [N, N]
    sq_col = mm(osq, jnp.ones((OUT_COORD, n), f32))                   # [i,j] = |o_i|^2
    sq_row = jax.lax.dot_general(jnp.ones((n, OUT_COORD), f32), osq,
                                 (((1,), (1,)), ((), ())),
                                 preferred_element_type=f32)          # [i,j] = |o_j|^2
    d2 = sq_col + sq_row - 2.0 * gram
    # TODO(synk): forward-only; add an epsilon if gradients through sqrt(0) are needed.
    dist_ref[...] = jnp.sqrt(jnp.maximum(d2, 0.0))


# ------------------------------- parameters ----------------------------------
def _uni(key, shape, fan_in):
    lim = 1.0 / math.sqrt(fan_in)
    return jax.random.uniform(key, shape, jnp.float32, -lim, lim)


def init_params(key):
    ks = iter(jax.random.split(key, 64))
    L, D = N_LAYERS, HIDDEN
    p = {
        "embedding_h": jax.random.normal(next(ks), (NUM_ATOM_TYPE, D), jnp.float32),
        "embedding_e": jax.random.normal(next(ks), (NUM_BOND_TYPE, D), jnp.float32),
        "emb_lap_w": _uni(next(ks), (POS_ENC_DIM, D), POS_ENC_DIM),
        "emb_lap_b": _uni(next(ks), (1, D), POS_ENC_DIM),
        # stacked per-layer parameters; QKV concatenated along the output dim
        "qkv_w": _uni(next(ks), (L, D, 3 * D), D),
        "qkv_b": _uni(next(ks), (L, 1, 3 * D), D),
        "proj_e_w": _uni(next(ks), (L, D, D), D),
        "proj_e_b": _uni(next(ks), (L, 1, D), D),
        "Oh_w": _uni(next(ks), (L, D, D), D), "Oh_b": _uni(next(ks), (L, 1, D), D),
        "Oe_w": _uni(next(ks), (L, D, D), D), "Oe_b": _uni(next(ks), (L, 1, D), D),
        "ffn_h1_w": _uni(next(ks), (L, D, 2 * D), D),
        "ffn_h1_b": _uni(next(ks), (L, 1, 2 * D), D),
        "ffn_h2_w": _uni(next(ks), (L, 2 * D, D), 2 * D),
        "ffn_h2_b": _uni(next(ks), (L, 1, D), 2 * D),
        "ffn_e1_w": _uni(next(ks), (L, D, 2 * D), D),
        "ffn_e1_b": _uni(next(ks), (L, 1, 2 * D), D),
        "ffn_e2_w": _uni(next(ks), (L, 2 * D, D), 2 * D),
        "ffn_e2_b": _uni(next(ks), (L, 1, D), 2 * D),
        "ln1_h_g": jnp.ones((L, 1, D), jnp.float32), "ln1_h_b": jnp.zeros((L, 1, D), jnp.float32),
        "ln1_e_g": jnp.ones((L, 1, D), jnp.float32), "ln1_e_b": jnp.zeros((L, 1, D), jnp.float32),
        "ln2_h_g": jnp.ones((L, 1, D), jnp.float32), "ln2_h_b": jnp.zeros((L, 1, D), jnp.float32),
        "ln2_e_g": jnp.ones((L, 1, D), jnp.float32), "ln2_e_b": jnp.zeros((L, 1, D), jnp.float32),
        "mlp1_w": _uni(next(ks), (D, D // 2), D), "mlp1_b": _uni(next(ks), (1, D // 2), D),
        "mlp2_w": _uni(next(ks), (D // 2, D // 4), D // 2),
        "mlp2_b": _uni(next(ks), (1, D // 4), D // 2),
        "mlp3_w": _uni(next(ks), (D // 4, OUT_COORD), D // 4),
        "mlp3_b": _uni(next(ks), (1, OUT_COORD), D // 4),
    }
    # fold the 1/sqrt(head_dim) attention scale into the K projection (columns D:2D)
    scale = 1.0 / math.sqrt(HEAD_DIM)
    kcol = jnp.concatenate([jnp.ones((D,), jnp.float32),
                            jnp.full((D,), scale, jnp.float32),
                            jnp.ones((D,), jnp.float32)]).reshape(1, 1, 3 * D)
    p["qkv_w"] = p["qkv_w"] * kcol
    p["qkv_b"] = p["qkv_b"] * kcol
    return p


# ------------------------------- model glue -----------------------------------
def lap_positional_encoding(adj_sym, pos_enc_dim):
    # TODO(synk): eigendecomposition has no Pallas equivalent; plain-JAX eigh here.
    n = adj_sym.shape[0]
    deg = jnp.sum(adj_sym, axis=1)
    dinv = jnp.where(deg > 0, deg ** -0.5, 0.0)
    lap = jnp.eye(n, dtype=jnp.float32) - dinv[:, None] * adj_sym * dinv[None, :]
    _, evecs = jnp.linalg.eigh(lap)                       # ascending eigenvalues
    return evecs[:, 1:pos_enc_dim + 1].astype(jnp.float32)


def our_dynamics_forward(params, nodes, src, dst, edge_attr, key):
    """nodes: [N] int atom types; (src, dst): [E] edge index; edge_attr: [E,1] int."""
    n = nodes.shape[0]
    # attention mask: mask[dst, src] = 1 for existing edges (aggregate at destination)
    mask = jnp.zeros((n, n), jnp.float32).at[dst, src].set(1.0)
    # symmetric adjacency for Laplacian positional encoding
    adj = jnp.zeros((n, n), jnp.float32).at[src, dst].set(1.0)
    adj_sym = jnp.maximum(adj, adj.T)

    lap = lap_positional_encoding(adj_sym, POS_ENC_DIM)
    # random sign flip each call (matches the torch training-time augmentation)
    sign_flip = jnp.where(jax.random.uniform(key, (POS_ENC_DIM,)) >= 0.5, 1.0, -1.0)
    lap = lap * sign_flip[None, :]

    # embeddings (glue: table lookups + dense scatter of edge features)
    h0 = params["embedding_h"][nodes]                                    # [N, D]
    e_edge = params["embedding_e"][edge_attr.reshape(-1)]                # [E, D]
    e0 = (jnp.zeros((n, n, HIDDEN), jnp.float32)
          .at[dst, src].set(e_edge)
          .reshape(n * n, HIDDEN))                                       # [N*N, D]
    mask_flat = mask.reshape(n * n, 1)                                   # [N*N, 1]

    # constant helper matrices (let the fused kernel do head-sums / aggregation on MXU)
    s_agg = (jnp.arange(n)[:, None] ==
             (jnp.arange(n * n)[None, :] // n)).astype(jnp.float32)      # [N, N*N]
    r_head = ((jnp.arange(HIDDEN)[:, None] // HEAD_DIM) ==
              (jnp.arange(HIDDEN)[None, :] // HEAD_DIM)).astype(jnp.float32)  # [D, D]

    # TODO(synk): for a batch of graphs add a leading "parallel" grid axis so the
    # two v7x TensorCores each take half the batch; a single 16-node graph stays
    # on one core.
    out, dist = pl.pallas_call(
        _fused_forward_kernel,
        out_shape=(jax.ShapeDtypeStruct((n, OUT_COORD), jnp.float32),
                   jax.ShapeDtypeStruct((n, n), jnp.float32)),
    )(h0, lap, e0, mask_flat, s_agg, r_head,
      params["emb_lap_w"], params["emb_lap_b"],
      params["qkv_w"], params["qkv_b"], params["proj_e_w"], params["proj_e_b"],
      params["Oh_w"], params["Oh_b"], params["Oe_w"], params["Oe_b"],
      params["ffn_h1_w"], params["ffn_h1_b"], params["ffn_h2_w"], params["ffn_h2_b"],
      params["ffn_e1_w"], params["ffn_e1_b"], params["ffn_e2_w"], params["ffn_e2_b"],
      params["ln1_h_g"], params["ln1_h_b"], params["ln1_e_g"], params["ln1_e_b"],
      params["ln2_h_g"], params["ln2_h_b"], params["ln2_e_g"], params["ln2_e_b"],
      params["mlp1_w"], params["mlp1_b"], params["mlp2_w"], params["mlp2_b"],
      params["mlp3_w"], params["mlp3_b"])
    return out, out, dist


# ---------------------------------- main --------------------------------------
if __name__ == "__main__":
    key = jax.random.PRNGKey(0)
    k_nodes, k_edges, k_params, k_flip = jax.random.split(key, 4)

    # small ring molecule: 16 nodes, bidirectional edges (32 directed edges)
    ring_src = jnp.arange(N_NODES, dtype=jnp.int32)
    ring_dst = (ring_src + 1) % N_NODES
    src = jnp.concatenate([ring_src, ring_dst])
    dst = jnp.concatenate([ring_dst, ring_src])

    nodes = jax.random.randint(k_nodes, (N_NODES,), 0, NUM_ATOM_TYPE, dtype=jnp.int32)
    edge_attr = jax.random.randint(k_edges, (src.shape[0], 1), 0, NUM_BOND_TYPE,
                                   dtype=jnp.int32)

    params = init_params(k_params)

    fwd = jax.jit(our_dynamics_forward)
    out, out2, distance = fwd(params, nodes, src, dst, edge_attr, k_flip)
    jax.block_until_ready((out, out2, distance))

    assert out.shape == (N_NODES, OUT_COORD)
    assert distance.shape == (N_NODES, N_NODES)
    assert bool(jnp.all(jnp.isfinite(out))) and bool(jnp.all(jnp.isfinite(distance)))
    print("KERNEL_OK")
</pallas_src>

<mosaic_0001>
module attributes {stable_mosaic.version = 11 : i64} {
  func.func @_fused_forward_kernel(%arg0: memref<16x32xf32, #tpu.memory_space<vmem>>, %arg1: memref<16x8xf32, #tpu.memory_space<vmem>>, %arg2: memref<256x32xf32, #tpu.memory_space<vmem>>, %arg3: memref<256x1xf32, #tpu.memory_space<vmem>>, %arg4: memref<16x256xf32, #tpu.memory_space<vmem>>, %arg5: memref<32x32xf32, #tpu.memory_space<vmem>>, %arg6: memref<8x32xf32, #tpu.memory_space<vmem>>, %arg7: memref<1x32xf32, #tpu.memory_space<vmem>>, %arg8: memref<2x32x96xf32, #tpu.memory_space<vmem>>, %arg9: memref<2x1x96xf32, #tpu.memory_space<vmem>>, %arg10: memref<2x32x32xf32, #tpu.memory_space<vmem>>, %arg11: memref<2x1x32xf32, #tpu.memory_space<vmem>>, %arg12: memref<2x32x32xf32, #tpu.memory_space<vmem>>, %arg13: memref<2x1x32xf32, #tpu.memory_space<vmem>>, %arg14: memref<2x32x32xf32, #tpu.memory_space<vmem>>, %arg15: memref<2x1x32xf32, #tpu.memory_space<vmem>>, %arg16: memref<2x32x64xf32, #tpu.memory_space<vmem>>, %arg17: memref<2x1x64xf32, #tpu.memory_space<vmem>>, %arg18: memref<2x64x32xf32, #tpu.memory_space<vmem>>, %arg19: memref<2x1x32xf32, #tpu.memory_space<vmem>>, %arg20: memref<2x32x64xf32, #tpu.memory_space<vmem>>, %arg21: memref<2x1x64xf32, #tpu.memory_space<vmem>>, %arg22: memref<2x64x32xf32, #tpu.memory_space<vmem>>, %arg23: memref<2x1x32xf32, #tpu.memory_space<vmem>>, %arg24: memref<2x1x32xf32, #tpu.memory_space<vmem>>, %arg25: memref<2x1x32xf32, #tpu.memory_space<vmem>>, %arg26: memref<2x1x32xf32, #tpu.memory_space<vmem>>, %arg27: memref<2x1x32xf32, #tpu.memory_space<vmem>>, %arg28: memref<2x1x32xf32, #tpu.memory_space<vmem>>, %arg29: memref<2x1x32xf32, #tpu.memory_space<vmem>>, %arg30: memref<2x1x32xf32, #tpu.memory_space<vmem>>, %arg31: memref<2x1x32xf32, #tpu.memory_space<vmem>>, %arg32: memref<32x16xf32, #tpu.memory_space<vmem>>, %arg33: memref<1x16xf32, #tpu.memory_space<vmem>>, %arg34: memref<16x8xf32, #tpu.memory_space<vmem>>, %arg35: memref<1x8xf32, #tpu.memory_space<vmem>>, %arg36: memref<8x3xf32, #tpu.memory_space<vmem>>, %arg37: memref<1x3xf32, #tpu.memory_space<vmem>>, %arg38: memref<16x3xf32, #tpu.memory_space<vmem>>, %arg39: memref<16x16xf32, #tpu.memory_space<vmem>>) attributes {dimension_semantics = [], scalar_prefetch = 0 : i64, scratch_operands = 0 : i64, tpu.core_type = #tpu.core_type<tc>} {
    %c0 = arith.constant 0 : index
    %c0_0 = arith.constant 0 : index
    %0 = vector.load %arg0[%c0, %c0_0] : memref<16x32xf32, #tpu.memory_space<vmem>>, vector<16x32xf32>
    %c0_1 = arith.constant 0 : index
    %c0_2 = arith.constant 0 : index
    %1 = vector.load %arg1[%c0_1, %c0_2] : memref<16x8xf32, #tpu.memory_space<vmem>>, vector<16x8xf32>
    %c0_3 = arith.constant 0 : index
    %c0_4 = arith.constant 0 : index
    %2 = vector.load %arg6[%c0_3, %c0_4] : memref<8x32xf32, #tpu.memory_space<vmem>>, vector<8x32xf32>
    %cst = arith.constant dense<0.000000e+00> : vector<16x32xf32>
    %3 = tpu.matmul %1, %2, %cst {dimension_numbers = #tpu.dot_dimension_numbers<[1], [0], [0], [1], [0, 0, 1, 1], [], []>} : vector<16x8xf32>, vector<8x32xf32>, vector<16x32xf32> -> vector<16x32xf32>
    %4 = arith.addf %0, %3 : vector<16x32xf32>
    %c0_5 = arith.constant 0 : index
    %c0_6 = arith.constant 0 : index
    %5 = vector.load %arg7[%c0_5, %c0_6] : memref<1x32xf32, #tpu.memory_space<vmem>>, vector<1x32xf32>
    %6 = vector.broadcast %5 : vector<1x32xf32> to vector<16x32xf32>
    %7 = arith.addf %4, %6 : vector<16x32xf32>
    %c0_7 = arith.constant 0 : index
    %c0_8 = arith.constant 0 : index
    %8 = vector.load %arg2[%c0_7, %c0_8] : memref<256x32xf32, #tpu.memory_space<vmem>>, vector<256x32xf32>
    %c0_9 = arith.constant 0 : index
    %c0_10 = arith.constant 0 : index
    %9 = vector.load %arg3[%c0_9, %c0_10] : memref<256x1xf32, #tpu.memory_space<vmem>>, vector<256x1xf32>
    %c0_11 = arith.constant 0 : index
    %c0_12 = arith.constant 0 : index
    %10 = vector.load %arg4[%c0_11, %c0_12] : memref<16x256xf32, #tpu.memory_space<vmem>>, vector<16x256xf32>
    %c0_13 = arith.constant 0 : index
    %c0_14 = arith.constant 0 : index
    %11 = vector.load %arg5[%c0_13, %c0_14] : memref<32x32xf32, #tpu.memory_space<vmem>>, vector<32x32xf32>
    %c0_15 = arith.constant 0 : index
    %c0_16 = arith.constant 0 : index
    %c0_17 = arith.constant 0 : index
    %12 = vector.load %arg8[%c0_15, %c0_16, %c0_17] : memref<2x32x96xf32, #tpu.memory_space<vmem>>, vector<1x32x96xf32>
    %13 = vector.shape_cast %12 : vector<1x32x96xf32> to vector<32x96xf32>
    %cst_18 = arith.constant dense<0.000000e+00> : vector<16x96xf32>
    %14 = tpu.matmul %7, %13, %cst_18 {dimension_numbers = #tpu.dot_dimension_numbers<[1], [0], [0], [1], [0, 0, 1, 1], [], []>} : vector<16x32xf32>, vector<32x96xf32>, vector<16x96xf32> -> vector<16x96xf32>
    %c0_19 = arith.constant 0 : index
    %c0_20 = arith.constant 0 : index
    %c0_21 = arith.constant 0 : index
    %15 = vector.load %arg9[%c0_19, %c0_20, %c0_21] : memref<2x1x96xf32, #tpu.memory_space<vmem>>, vector<1x1x96xf32>
    %16 = vector.shape_cast %15 : vector<1x1x96xf32> to vector<1x96xf32>
    %17 = vector.broadcast %16 : vector<1x96xf32> to vector<16x96xf32>
    %18 = arith.addf %14, %17 : vector<16x96xf32>
    %19 = vector.extract_strided_slice %18 {offsets = [0, 0], sizes = [16, 32], strides = [1, 1]} : vector<16x96xf32> to vector<16x32xf32>
    %20 = vector.extract_strided_slice %18 {offsets = [0, 32], sizes = [16, 32], strides = [1, 1]} : vector<16x96xf32> to vector<16x32xf32>
    %21 = vector.extract_strided_slice %18 {offsets = [0, 64], sizes = [16, 32], strides = [1, 1]} : vector<16x96xf32> to vector<16x32xf32>
    %c0_22 = arith.constant 0 : index
    %c0_23 = arith.constant 0 : index
    %c0_24 = arith.constant 0 : index
    %22 = vector.load %arg10[%c0_22, %c0_23, %c0_24] : memref<2x32x32xf32, #tpu.memory_space<vmem>>, vector<1x32x32xf32>
    %23 = vector.shape_cast %22 : vector<1x32x32xf32> to vector<32x32xf32>
    %cst_25 = arith.constant dense<0.000000e+00> : vector<256x32xf32>
    %24 = tpu.matmul %8, %23, %cst_25 {dimension_numbers = #tpu.dot_dimension_numbers<[1], [0], [0], [1], [0, 0, 1, 1], [], []>} : vector<256x32xf32>, vector<32x32xf32>, vector<256x32xf32> -> vector<256x32xf32>
    %c0_26 = arith.constant 0 : index
    %c0_27 = arith.constant 0 : index
    %c0_28 = arith.constant 0 : index
    %25 = vector.load %arg11[%c0_26, %c0_27, %c0_28] : memref<2x1x32xf32, #tpu.memory_space<vmem>>, vector<1x1x32xf32>
    %26 = vector.shape_cast %25 : vector<1x1x32xf32> to vector<1x32xf32>
    %27 = vector.broadcast %26 : vector<1x32xf32> to vector<256x32xf32>
    %28 = arith.addf %24, %27 : vector<256x32xf32>
    %29 = vector.shape_cast %19 : vector<16x32xf32> to vector<16x1x32xf32>
    %30 = vector.shape_cast %29 : vector<16x1x32xf32> to vector<16x1x32xf32>
    %31 = vector.broadcast %30 : vector<16x1x32xf32> to vector<16x16x32xf32>
    %32 = vector.shape_cast %31 : vector<16x16x32xf32> to vector<256x32xf32>
    %33 = vector.shape_cast %20 : vector<16x32xf32> to vector<1x16x32xf32>
    %34 = vector.shape_cast %33 : vector<1x16x32xf32> to vector<1x16x32xf32>
    %35 = vector.broadcast %34 : vector<1x16x32xf32> to vector<16x16x32xf32>
    %36 = vector.shape_cast %35 : vector<16x16x32xf32> to vector<256x32xf32>
    %37 = vector.shape_cast %21 : vector<16x32xf32> to vector<1x16x32xf32>
    %38 = vector.shape_cast %37 : vector<1x16x32xf32> to vector<1x16x32xf32>
    %39 = vector.broadcast %38 : vector<1x16x32xf32> to vector<16x16x32xf32>
    %40 = vector.shape_cast %39 : vector<16x16x32xf32> to vector<256x32xf32>
    %41 = arith.mulf %32, %36 : vector<256x32xf32>
    %42 = arith.mulf %41, %28 : vector<256x32xf32>
    %cst_29 = arith.constant dense<0.000000e+00> : vector<256x32xf32>
    %43 = tpu.matmul %42, %11, %cst_29 {dimension_numbers = #tpu.dot_dimension_numbers<[1], [0], [0], [1], [0, 0, 1, 1], [], []>} : vector<256x32xf32>, vector<32x32xf32>, vector<256x32xf32> -> vector<256x32xf32>
    %cst_30 = arith.constant -5.000000e+00 : f32
    %cst_31 = arith.constant 5.000000e+00 : f32
    %44 = vector.broadcast %cst_30 : f32 to vector<256x32xf32>
    %45 = arith.maximumf %44, %43 : vector<256x32xf32>
    %46 = vector.broadcast %cst_31 : f32 to vector<256x32xf32>
    %47 = arith.minimumf %46, %45 : vector<256x32xf32>
    %48 = math.exp %47 : vector<256x32xf32>
    %49 = vector.broadcast %9 : vector<256x1xf32> to vector<256x32xf32>
    %50 = arith.mulf %48, %49 : vector<256x32xf32>
    %51 = arith.mulf %50, %40 : vector<256x32xf32>
    %cst_32 = arith.constant dense<0.000000e+00> : vector<16x32xf32>
    %52 = tpu.matmul %10, %51, %cst_32 {dimension_numbers = #tpu.dot_dimension_numbers<[1], [0], [0], [1], [0, 0, 1, 1], [], []>} : vector<16x256xf32>, vector<256x32xf32>, vector<16x32xf32> -> vector<16x32xf32>
    %cst_33 = arith.constant dense<0.000000e+00> : vector<16x32xf32>
    %53 = tpu.matmul %10, %50, %cst_33 {dimension_numbers = #tpu.dot_dimension_numbers<[1], [0], [0], [1], [0, 0, 1, 1], [], []>} : vector<16x256xf32>, vector<256x32xf32>, vector<16x32xf32> -> vector<16x32xf32>
    %cst_34 = arith.constant 9.99999997E-7 : f32
    %54 = vector.broadcast %cst_34 : f32 to vector<16x32xf32>
    %55 = arith.addf %53, %54 : vector<16x32xf32>
    %56 = tpu.reciprocal %55 {approx = true} : vector<16x32xf32> -> vector<16x32xf32>
    %57 = arith.mulf %52, %56 : vector<16x32xf32>
    %c0_35 = arith.constant 0 : index
    %c0_36 = arith.constant 0 : index
    %c0_37 = arith.constant 0 : index
    %58 = vector.load %arg12[%c0_35, %c0_36, %c0_37] : memref<2x32x32xf32, #tpu.memory_space<vmem>>, vector<1x32x32xf32>
    %59 = vector.shape_cast %58 : vector<1x32x32xf32> to vector<32x32xf32>
    %cst_38 = arith.constant dense<0.000000e+00> : vector<16x32xf32>
    %60 = tpu.matmul %57, %59, %cst_38 {dimension_numbers = #tpu.dot_dimension_numbers<[1], [0], [0], [1], [0, 0, 1, 1], [], []>} : vector<16x32xf32>, vector<32x32xf32>, vector<16x32xf32> -> vector<16x32xf32>
    %c0_39 = arith.constant 0 : index
    %c0_40 = arith.constant 0 : index
    %c0_41 = arith.constant 0 : index
    %61 = vector.load %arg13[%c0_39, %c0_40, %c0_41] : memref<2x1x32xf32, #tpu.memory_space<vmem>>, vector<1x1x32xf32>
    %62 = vector.shape_cast %61 : vector<1x1x32xf32> to vector<1x32xf32>
    %63 = vector.broadcast %62 : vector<1x32xf32> to vector<16x32xf32>
    %64 = arith.addf %60, %63 : vector<16x32xf32>
    %c0_42 = arith.constant 0 : index
    %c0_43 = arith.constant 0 : index
    %c0_44 = arith.constant 0 : index
    %65 = vector.load %arg14[%c0_42, %c0_43, %c0_44] : memref<2x32x32xf32, #tpu.memory_space<vmem>>, vector<1x32x32xf32>
    %66 = vector.shape_cast %65 : vector<1x32x32xf32> to vector<32x32xf32>
    %cst_45 = arith.constant dense<0.000000e+00> : vector<256x32xf32>
    %67 = tpu.matmul %42, %66, %cst_45 {dimension_numbers = #tpu.dot_dimension_numbers<[1], [0], [0], [1], [0, 0, 1, 1], [], []>} : vector<256x32xf32>, vector<32x32xf32>, vector<256x32xf32> -> vector<256x32xf32>
    %c0_46 = arith.constant 0 : index
    %c0_47 = arith.constant 0 : index
    %c0_48 = arith.constant 0 : index
    %68 = vector.load %arg15[%c0_46, %c0_47, %c0_48] : memref<2x1x32xf32, #tpu.memory_space<vmem>>, vector<1x1x32xf32>
    %69 = vector.shape_cast %68 : vector<1x1x32xf32> to vector<1x32xf32>
    %70 = vector.broadcast %69 : vector<1x32xf32> to vector<256x32xf32>
    %71 = arith.addf %67, %70 : vector<256x32xf32>
    %72 = arith.addf %7, %64 : vector<16x32xf32>
    %c0_49 = arith.constant 0 : index
    %c0_50 = arith.constant 0 : index
    %c0_51 = arith.constant 0 : index
    %73 = vector.load %arg24[%c0_49, %c0_50, %c0_51] : memref<2x1x32xf32, #tpu.memory_space<vmem>>, vector<1x1x32xf32>
    %74 = vector.shape_cast %73 : vector<1x1x32xf32> to vector<1x32xf32>
    %c0_52 = arith.constant 0 : index
    %c0_53 = arith.constant 0 : index
    %c0_54 = arith.constant 0 : index
    %75 = vector.load %arg25[%c0_52, %c0_53, %c0_54] : memref<2x1x32xf32, #tpu.memory_space<vmem>>, vector<1x1x32xf32>
    %76 = vector.shape_cast %75 : vector<1x1x32xf32> to vector<1x32xf32>
    %cst_55 = arith.constant dense<0.000000e+00> : vector<16xf32>
    %77 = vector.multi_reduction <add>, %72, %cst_55 [1] : vector<16x32xf32> to vector<16xf32>
    %78 = vector.shape_cast %77 : vector<16xf32> to vector<16x1xf32>
    %cst_56 = arith.constant 3.200000e+01 : f32
    %79 = vector.broadcast %cst_56 : f32 to vector<16x1xf32>
    %80 = arith.divf %78, %79 : vector<16x1xf32>
    %81 = vector.broadcast %80 : vector<16x1xf32> to vector<16x32xf32>
    %82 = arith.subf %72, %81 : vector<16x32xf32>
    %83 = arith.mulf %82, %82 : vector<16x32xf32>
    %cst_57 = arith.constant dense<0.000000e+00> : vector<16xf32>
    %84 = vector.multi_reduction <add>, %83, %cst_57 [1] : vector<16x32xf32> to vector<16xf32>
    %85 = vector.shape_cast %84 : vector<16xf32> to vector<16x1xf32>
    %cst_58 = arith.constant 3.200000e+01 : f32
    %86 = vector.broadcast %cst_58 : f32 to vector<16x1xf32>
    %87 = arith.divf %85, %86 : vector<16x1xf32>
    %88 = vector.broadcast %80 : vector<16x1xf32> to vector<16x32xf32>
    %89 = arith.subf %72, %88 : vector<16x32xf32>
    %cst_59 = arith.constant 9.99999974E-6 : f32
    %90 = vector.broadcast %cst_59 : f32 to vector<16x1xf32>
    %91 = arith.addf %87, %90 : vector<16x1xf32>
    %92 = math.rsqrt %91 : vector<16x1xf32>
    %93 = vector.broadcast %92 : vector<16x1xf32> to vector<16x32xf32>
    %94 = arith.mulf %89, %93 : vector<16x32xf32>
    %95 = vector.broadcast %74 : vector<1x32xf32> to vector<16x32xf32>
    %96 = arith.mulf %94, %95 : vector<16x32xf32>
    %97 = vector.broadcast %76 : vector<1x32xf32> to vector<16x32xf32>
    %98 = arith.addf %96, %97 : vector<16x32xf32>
    %99 = arith.addf %8, %71 : vector<256x32xf32>
    %c0_60 = arith.constant 0 : index
    %c0_61 = arith.constant 0 : index
    %c0_62 = arith.constant 0 : index
    %100 = vector.load %arg26[%c0_60, %c0_61, %c0_62] : memref<2x1x32xf32, #tpu.memory_space<vmem>>, vector<1x1x32xf32>
    %101 = vector.shape_cast %100 : vector<1x1x32xf32> to vector<1x32xf32>
    %c0_63 = arith.constant 0 : index
    %c0_64 = arith.constant 0 : index
    %c0_65 = arith.constant 0 : index
    %102 = vector.load %arg27[%c0_63, %c0_64, %c0_65] : memref<2x1x32xf32, #tpu.memory_space<vmem>>, vector<1x1x32xf32>
    %103 = vector.shape_cast %102 : vector<1x1x32xf32> to vector<1x32xf32>
    %cst_66 = arith.constant dense<0.000000e+00> : vector<256xf32>
    %104 = vector.multi_reduction <add>, %99, %cst_66 [1] : vector<256x32xf32> to vector<256xf32>
    %105 = vector.shape_cast %104 : vector<256xf32> to vector<256x1xf32>
    %cst_67 = arith.constant 3.200000e+01 : f32
    %106 = vector.broadcast %cst_67 : f32 to vector<256x1xf32>
    %107 = arith.divf %105, %106 : vector<256x1xf32>
    %108 = vector.broadcast %107 : vector<256x1xf32> to vector<256x32xf32>
    %109 = arith.subf %99, %108 : vector<256x32xf32>
    %110 = arith.mulf %109, %109 : vector<256x32xf32>
    %cst_68 = arith.constant dense<0.000000e+00> : vector<256xf32>
    %111 = vector.multi_reduction <add>, %110, %cst_68 [1] : vector<256x32xf32> to vector<256xf32>
    %112 = vector.shape_cast %111 : vector<256xf32> to vector<256x1xf32>
    %cst_69 = arith.constant 3.200000e+01 : f32
    %113 = vector.broadcast %cst_69 : f32 to vector<256x1xf32>
    %114 = arith.divf %112, %113 : vector<256x1xf32>
    %115 = vector.broadcast %107 : vector<256x1xf32> to vector<256x32xf32>
    %116 = arith.subf %99, %115 : vector<256x32xf32>
    %cst_70 = arith.constant 9.99999974E-6 : f32
    %117 = vector.broadcast %cst_70 : f32 to vector<256x1xf32>
    %118 = arith.addf %114, %117 : vector<256x1xf32>
    %119 = math.rsqrt %118 : vector<256x1xf32>
    %120 = vector.broadcast %119 : vector<256x1xf32> to vector<256x32xf32>
    %121 = arith.mulf %116, %120 : vector<256x32xf32>
    %122 = vector.broadcast %101 : vector<1x32xf32> to vector<256x32xf32>
    %123 = arith.mulf %121, %122 : vector<256x32xf32>
    %124 = vector.broadcast %103 : vector<1x32xf32> to vector<256x32xf32>
    %125 = arith.addf %123, %124 : vector<256x32xf32>
    %c0_71 = arith.constant 0 : index
    %c0_72 = arith.constant 0 : index
    %c0_73 = arith.constant 0 : index
    %126 = vector.load %arg16[%c0_71, %c0_72, %c0_73] : memref<2x32x64xf32, #tpu.memory_space<vmem>>, vector<1x32x64xf32>
    %127 = vector.shape_cast %126 : vector<1x32x64xf32> to vector<32x64xf32>
    %cst_74 = arith.constant dense<0.000000e+00> : vector<16x64xf32>
    %128 = tpu.matmul %98, %127, %cst_74 {dimension_numbers = #tpu.dot_dimension_numbers<[1], [0], [0], [1], [0, 0, 1, 1], [], []>} : vector<16x32xf32>, vector<32x64xf32>, vector<16x64xf32> -> vector<16x64xf32>
    %c0_75 = arith.constant 0 : index
    %c0_76 = arith.constant 0 : index
    %c0_77 = arith.constant 0 : index
    %129 = vector.load %arg17[%c0_75, %c0_76, %c0_77] : memref<2x1x64xf32, #tpu.memory_space<vmem>>, vector<1x1x64xf32>
    %130 = vector.shape_cast %129 : vector<1x1x64xf32> to vector<1x64xf32>
    %131 = vector.broadcast %130 : vector<1x64xf32> to vector<16x64xf32>
    %132 = arith.addf %128, %131 : vector<16x64xf32>
    %cst_78 = arith.constant 0.000000e+00 : f32
    %133 = vector.broadcast %cst_78 : f32 to vector<16x64xf32>
    %134 = arith.maximumf %132, %133 : vector<16x64xf32>
    %c0_79 = arith.constant 0 : index
    %c0_80 = arith.constant 0 : index
    %c0_81 = arith.constant 0 : index
    %135 = vector.load %arg18[%c0_79, %c0_80, %c0_81] : memref<2x64x32xf32, #tpu.memory_space<vmem>>, vector<1x64x32xf32>
    %136 = vector.shape_cast %135 : vector<1x64x32xf32> to vector<64x32xf32>
    %cst_82 = arith.constant dense<0.000000e+00> : vector<16x32xf32>
    %137 = tpu.matmul %134, %136, %cst_82 {dimension_numbers = #tpu.dot_dimension_numbers<[1], [0], [0], [1], [0, 0, 1, 1], [], []>} : vector<16x64xf32>, vector<64x32xf32>, vector<16x32xf32> -> vector<16x32xf32>
    %c0_83 = arith.constant 0 : index
    %c0_84 = arith.constant 0 : index
    %c0_85 = arith.constant 0 : index
    %138 = vector.load %arg19[%c0_83, %c0_84, %c0_85] : memref<2x1x32xf32, #tpu.memory_space<vmem>>, vector<1x1x32xf32>
    %139 = vector.shape_cast %138 : vector<1x1x32xf32> to vector<1x32xf32>
    %140 = vector.broadcast %139 : vector<1x32xf32> to vector<16x32xf32>
    %141 = arith.addf %137, %140 : vector<16x32xf32>
    %c0_86 = arith.constant 0 : index
    %c0_87 = arith.constant 0 : index
    %c0_88 = arith.constant 0 : index
    %142 = vector.load %arg20[%c0_86, %c0_87, %c0_88] : memref<2x32x64xf32, #tpu.memory_space<vmem>>, vector<1x32x64xf32>
    %143 = vector.shape_cast %142 : vector<1x32x64xf32> to vector<32x64xf32>
    %cst_89 = arith.constant dense<0.000000e+00> : vector<256x64xf32>
    %144 = tpu.matmul %125, %143, %cst_89 {dimension_numbers = #tpu.dot_dimension_numbers<[1], [0], [0], [1], [0, 0, 1, 1], [], []>} : vector<256x32xf32>, vector<32x64xf32>, vector<256x64xf32> -> vector<256x64xf32>
    %c0_90 = arith.constant 0 : index
    %c0_91 = arith.constant 0 : index
    %c0_92 = arith.constant 0 : index
    %145 = vector.load %arg21[%c0_90, %c0_91, %c0_92] : memref<2x1x64xf32, #tpu.memory_space<vmem>>, vector<1x1x64xf32>
    %146 = vector.shape_cast %145 : vector<1x1x64xf32> to vector<1x64xf32>
    %147 = vector.broadcast %146 : vector<1x64xf32> to vector<256x64xf32>
    %148 = arith.addf %144, %147 : vector<256x64xf32>
    %cst_93 = arith.constant 0.000000e+00 : f32
    %149 = vector.broadcast %cst_93 : f32 to vector<256x64xf32>
    %150 = arith.maximumf %148, %149 : vector<256x64xf32>
    %c0_94 = arith.constant 0 : index
    %c0_95 = arith.constant 0 : index
    %c0_96 = arith.constant 0 : index
    %151 = vector.load %arg22[%c0_94, %c0_95, %c0_96] : memref<2x64x32xf32, #tpu.memory_space<vmem>>, vector<1x64x32xf32>
    %152 = vector.shape_cast %151 : vector<1x64x32xf32> to vector<64x32xf32>
    %cst_97 = arith.constant dense<0.000000e+00> : vector<256x32xf32>
    %153 = tpu.matmul %150, %152, %cst_97 {dimension_numbers = #tpu.dot_dimension_numbers<[1], [0], [0], [1], [0, 0, 1, 1], [], []>} : vector<256x64xf32>, vector<64x32xf32>, vector<256x32xf32> -> vector<256x32xf32>
    %c0_98 = arith.constant 0 : index
    %c0_99 = arith.constant 0 : index
    %c0_100 = arith.constant 0 : index
    %154 = vector.load %arg23[%c0_98, %c0_99, %c0_100] : memref<2x1x32xf32, #tpu.memory_space<vmem>>, vector<1x1x32xf32>
    %155 = vector.shape_cast %154 : vector<1x1x32xf32> to vector<1x32xf32>
    %156 = vector.broadcast %155 : vector<1x32xf32> to vector<256x32xf32>
    %157 = arith.addf %153, %156 : vector<256x32xf32>
    %158 = arith.addf %98, %141 : vector<16x32xf32>
    %c0_101 = arith.constant 0 : index
    %c0_102 = arith.constant 0 : index
    %c0_103 = arith.constant 0 : index
    %159 = vector.load %arg28[%c0_101, %c0_102, %c0_103] : memref<2x1x32xf32, #tpu.memory_space<vmem>>, vector<1x1x32xf32>
    %160 = vector.shape_cast %159 : vector<1x1x32xf32> to vector<1x32xf32>
    %c0_104 = arith.constant 0 : index
    %c0_105 = arith.constant 0 : index
    %c0_106 = arith.constant 0 : index
    %161 = vector.load %arg29[%c0_104, %c0_105, %c0_106] : memref<2x1x32xf32, #tpu.memory_space<vmem>>, vector<1x1x32xf32>
    %162 = vector.shape_cast %161 : vector<1x1x32xf32> to vector<1x32xf32>
    %cst_107 = arith.constant dense<0.000000e+00> : vector<16xf32>
    %163 = vector.multi_reduction <add>, %158, %cst_107 [1] : vector<16x32xf32> to vector<16xf32>
    %164 = vector.shape_cast %163 : vector<16xf32> to vector<16x1xf32>
    %cst_108 = arith.constant 3.200000e+01 : f32
    %165 = vector.broadcast %cst_108 : f32 to vector<16x1xf32>
    %166 = arith.divf %164, %165 : vector<16x1xf32>
    %167 = vector.broadcast %166 : vector<16x1xf32> to vector<16x32xf32>
    %168 = arith.subf %158, %167 : vector<16x32xf32>
    %169 = arith.mulf %168, %168 : vector<16x32xf32>
    %cst_109 = arith.constant dense<0.000000e+00> : vector<16xf32>
    %170 = vector.multi_reduction <add>, %169, %cst_109 [1] : vector<16x32xf32> to vector<16xf32>
    %171 = vector.shape_cast %170 : vector<16xf32> to vector<16x1xf32>
    %cst_110 = arith.constant 3.200000e+01 : f32
    %172 = vector.broadcast %cst_110 : f32 to vector<16x1xf32>
    %173 = arith.divf %171, %172 : vector<16x1xf32>
    %174 = vector.broadcast %166 : vector<16x1xf32> to vector<16x32xf32>
    %175 = arith.subf %158, %174 : vector<16x32xf32>
    %cst_111 = arith.constant 9.99999974E-6 : f32
    %176 = vector.broadcast %cst_111 : f32 to vector<16x1xf32>
    %177 = arith.addf %173, %176 : vector<16x1xf32>
    %178 = math.rsqrt %177 : vector<16x1xf32>
    %179 = vector.broadcast %178 : vector<16x1xf32> to vector<16x32xf32>
    %180 = arith.mulf %175, %179 : vector<16x32xf32>
    %181 = vector.broadcast %160 : vector<1x32xf32> to vector<16x32xf32>
    %182 = arith.mulf %180, %181 : vector<16x32xf32>
    %183 = vector.broadcast %162 : vector<1x32xf32> to vector<16x32xf32>
    %184 = arith.addf %182, %183 : vector<16x32xf32>
    %185 = arith.addf %125, %157 : vector<256x32xf32>
    %c0_112 = arith.constant 0 : index
    %c0_113 = arith.constant 0 : index
    %c0_114 = arith.constant 0 : index
    %186 = vector.load %arg30[%c0_112, %c0_113, %c0_114] : memref<2x1x32xf32, #tpu.memory_space<vmem>>, vector<1x1x32xf32>
    %187 = vector.shape_cast %186 : vector<1x1x32xf32> to vector<1x32xf32>
    %c0_115 = arith.constant 0 : index
    %c0_116 = arith.constant 0 : index
    %c0_117 = arith.constant 0 : index
    %188 = vector.load %arg31[%c0_115, %c0_116, %c0_117] : memref<2x1x32xf32, #tpu.memory_space<vmem>>, vector<1x1x32xf32>
    %189 = vector.shape_cast %188 : vector<1x1x32xf32> to vector<1x32xf32>
    %cst_118 = arith.constant dense<0.000000e+00> : vector<256xf32>
    %190 = vector.multi_reduction <add>, %185, %cst_118 [1] : vector<256x32xf32> to vector<256xf32>
    %191 = vector.shape_cast %190 : vector<256xf32> to vector<256x1xf32>
    %cst_119 = arith.constant 3.200000e+01 : f32
    %192 = vector.broadcast %cst_119 : f32 to vector<256x1xf32>
    %193 = arith.divf %191, %192 : vector<256x1xf32>
    %194 = vector.broadcast %193 : vector<256x1xf32> to vector<256x32xf32>
    %195 = arith.subf %185, %194 : vector<256x32xf32>
    %196 = arith.mulf %195, %195 : vector<256x32xf32>
    %cst_120 = arith.constant dense<0.000000e+00> : vector<256xf32>
    %197 = vector.multi_reduction <add>, %196, %cst_120 [1] : vector<256x32xf32> to vector<256xf32>
    %198 = vector.shape_cast %197 : vector<256xf32> to vector<256x1xf32>
    %cst_121 = arith.constant 3.200000e+01 : f32
    %199 = vector.broadcast %cst_121 : f32 to vector<256x1xf32>
    %200 = arith.divf %198, %199 : vector<256x1xf32>
    %201 = vector.broadcast %193 : vector<256x1xf32> to vector<256x32xf32>
    %202 = arith.subf %185, %201 : vector<256x32xf32>
    %cst_122 = arith.constant 9.99999974E-6 : f32
    %203 = vector.broadcast %cst_122 : f32 to vector<256x1xf32>
    %204 = arith.addf %200, %203 : vector<256x1xf32>
    %205 = math.rsqrt %204 : vector<256x1xf32>
    %206 = vector.broadcast %205 : vector<256x1xf32> to vector<256x32xf32>
    %207 = arith.mulf %202, %206 : vector<256x32xf32>
    %208 = vector.broadcast %187 : vector<1x32xf32> to vector<256x32xf32>
    %209 = arith.mulf %207, %208 : vector<256x32xf32>
    %210 = vector.broadcast %189 : vector<1x32xf32> to vector<256x32xf32>
    %211 = arith.addf %209, %210 : vector<256x32xf32>
    %c1 = arith.constant 1 : index
    %c0_123 = arith.constant 0 : index
    %c0_124 = arith.constant 0 : index
    %212 = vector.load %arg8[%c1, %c0_123, %c0_124] : memref<2x32x96xf32, #tpu.memory_space<vmem>>, vector<1x32x96xf32>
    %213 = vector.shape_cast %212 : vector<1x32x96xf32> to vector<32x96xf32>
    %cst_125 = arith.constant dense<0.000000e+00> : vector<16x96xf32>
    %214 = tpu.matmul %184, %213, %cst_125 {dimension_numbers = #tpu.dot_dimension_numbers<[1], [0], [0], [1], [0, 0, 1, 1], [], []>} : vector<16x32xf32>, vector<32x96xf32>, vector<16x96xf32> -> vector<16x96xf32>
    %c1_126 = arith.constant 1 : index
    %c0_127 = arith.constant 0 : index
    %c0_128 = arith.constant 0 : index
    %215 = vector.load %arg9[%c1_126, %c0_127, %c0_128] : memref<2x1x96xf32, #tpu.memory_space<vmem>>, vector<1x1x96xf32>
    %216 = vector.shape_cast %215 : vector<1x1x96xf32> to vector<1x96xf32>
    %217 = vector.broadcast %216 : vector<1x96xf32> to vector<16x96xf32>
    %218 = arith.addf %214, %217 : vector<16x96xf32>
    %219 = vector.extract_strided_slice %218 {offsets = [0, 0], sizes = [16, 32], strides = [1, 1]} : vector<16x96xf32> to vector<16x32xf32>
    %220 = vector.extract_strided_slice %218 {offsets = [0, 32], sizes = [16, 32], strides = [1, 1]} : vector<16x96xf32> to vector<16x32xf32>
    %221 = vector.extract_strided_slice %218 {offsets = [0, 64], sizes = [16, 32], strides = [1, 1]} : vector<16x96xf32> to vector<16x32xf32>
    %c1_129 = arith.constant 1 : index
    %c0_130 = arith.constant 0 : index
    %c0_131 = arith.constant 0 : index
    %222 = vector.load %arg10[%c1_129, %c0_130, %c0_131] : memref<2x32x32xf32, #tpu.memory_space<vmem>>, vector<1x32x32xf32>
    %223 = vector.shape_cast %222 : vector<1x32x32xf32> to vector<32x32xf32>
    %cst_132 = arith.constant dense<0.000000e+00> : vector<256x32xf32>
    %224 = tpu.matmul %211, %223, %cst_132 {dimension_numbers = #tpu.dot_dimension_numbers<[1], [0], [0], [1], [0, 0, 1, 1], [], []>} : vector<256x32xf32>, vector<32x32xf32>, vector<256x32xf32> -> vector<256x32xf32>
    %c1_133 = arith.constant 1 : index
    %c0_134 = arith.constant 0 : index
    %c0_135 = arith.constant 0 : index
    %225 = vector.load %arg11[%c1_133, %c0_134, %c0_135] : memref<2x1x32xf32, #tpu.memory_space<vmem>>, vector<1x1x32xf32>
    %226 = vector.shape_cast %225 : vector<1x1x32xf32> to vector<1x32xf32>
    %227 = vector.broadcast %226 : vector<1x32xf32> to vector<256x32xf32>
    %228 = arith.addf %224, %227 : vector<256x32xf32>
    %229 = vector.shape_cast %219 : vector<16x32xf32> to vector<16x1x32xf32>
    %230 = vector.shape_cast %229 : vector<16x1x32xf32> to vector<16x1x32xf32>
    %231 = vector.broadcast %230 : vector<16x1x32xf32> to vector<16x16x32xf32>
    %232 = vector.shape_cast %231 : vector<16x16x32xf32> to vector<256x32xf32>
    %233 = vector.shape_cast %220 : vector<16x32xf32> to vector<1x16x32xf32>
    %234 = vector.shape_cast %233 : vector<1x16x32xf32> to vector<1x16x32xf32>
    %235 = vector.broadcast %234 : vector<1x16x32xf32> to vector<16x16x32xf32>
    %236 = vector.shape_cast %235 : vector<16x16x32xf32> to vector<256x32xf32>
    %237 = vector.shape_cast %221 : vector<16x32xf32> to vector<1x16x32xf32>
    %238 = vector.shape_cast %237 : vector<1x16x32xf32> to vector<1x16x32xf32>
    %239 = vector.broadcast %238 : vector<1x16x32xf32> to vector<16x16x32xf32>
    %240 = vector.shape_cast %239 : vector<16x16x32xf32> to vector<256x32xf32>
    %241 = arith.mulf %232, %236 : vector<256x32xf32>
    %242 = arith.mulf %241, %228 : vector<256x32xf32>
    %cst_136 = arith.constant dense<0.000000e+00> : vector<256x32xf32>
    %243 = tpu.matmul %242, %11, %cst_136 {dimension_numbers = #tpu.dot_dimension_numbers<[1], [0], [0], [1], [0, 0, 1, 1], [], []>} : vector<256x32xf32>, vector<32x32xf32>, vector<256x32xf32> -> vector<256x32xf32>
    %cst_137 = arith.constant -5.000000e+00 : f32
    %cst_138 = arith.constant 5.000000e+00 : f32
    %244 = vector.broadcast %cst_137 : f32 to vector<256x32xf32>
    %245 = arith.maximumf %244, %243 : vector<256x32xf32>
    %246 = vector.broadcast %cst_138 : f32 to vector<256x32xf32>
    %247 = arith.minimumf %246, %245 : vector<256x32xf32>
    %248 = math.exp %247 : vector<256x32xf32>
    %249 = vector.broadcast %9 : vector<256x1xf32> to vector<256x32xf32>
    %250 = arith.mulf %248, %249 : vector<256x32xf32>
    %251 = arith.mulf %250, %240 : vector<256x32xf32>
    %cst_139 = arith.constant dense<0.000000e+00> : vector<16x32xf32>
    %252 = tpu.matmul %10, %251, %cst_139 {dimension_numbers = #tpu.dot_dimension_numbers<[1], [0], [0], [1], [0, 0, 1, 1], [], []>} : vector<16x256xf32>, vector<256x32xf32>, vector<16x32xf32> -> vector<16x32xf32>
    %cst_140 = arith.constant dense<0.000000e+00> : vector<16x32xf32>
    %253 = tpu.matmul %10, %250, %cst_140 {dimension_numbers = #tpu.dot_dimension_numbers<[1], [0], [0], [1], [0, 0, 1, 1], [], []>} : vector<16x256xf32>, vector<256x32xf32>, vector<16x32xf32> -> vector<16x32xf32>
    %cst_141 = arith.constant 9.99999997E-7 : f32
    %254 = vector.broadcast %cst_141 : f32 to vector<16x32xf32>
    %255 = arith.addf %253, %254 : vector<16x32xf32>
    %256 = tpu.reciprocal %255 {approx = true} : vector<16x32xf32> -> vector<16x32xf32>
    %257 = arith.mulf %252, %256 : vector<16x32xf32>
    %c1_142 = arith.constant 1 : index
    %c0_143 = arith.constant 0 : index
    %c0_144 = arith.constant 0 : index
    %258 = vector.load %arg12[%c1_142, %c0_143, %c0_144] : memref<2x32x32xf32, #tpu.memory_space<vmem>>, vector<1x32x32xf32>
    %259 = vector.shape_cast %258 : vector<1x32x32xf32> to vector<32x32xf32>
    %cst_145 = arith.constant dense<0.000000e+00> : vector<16x32xf32>
    %260 = tpu.matmul %257, %259, %cst_145 {dimension_numbers = #tpu.dot_dimension_numbers<[1], [0], [0], [1], [0, 0, 1, 1], [], []>} : vector<16x32xf32>, vector<32x32xf32>, vector<16x32xf32> -> vector<16x32xf32>
    %c1_146 = arith.constant 1 : index
    %c0_147 = arith.constant 0 : index
    %c0_148 = arith.constant 0 : index
    %261 = vector.load %arg13[%c1_146, %c0_147, %c0_148] : memref<2x1x32xf32, #tpu.memory_space<vmem>>, vector<1x1x32xf32>
    %262 = vector.shape_cast %261 : vector<1x1x32xf32> to vector<1x32xf32>
    %263 = vector.broadcast %262 : vector<1x32xf32> to vector<16x32xf32>
    %264 = arith.addf %260, %263 : vector<16x32xf32>
    %265 = arith.addf %184, %264 : vector<16x32xf32>
    %c1_149 = arith.constant 1 : index
    %c0_150 = arith.constant 0 : index
    %c0_151 = arith.constant 0 : index
    %266 = vector.load %arg24[%c1_149, %c0_150, %c0_151] : memref<2x1x32xf32, #tpu.memory_space<vmem>>, vector<1x1x32xf32>
    %267 = vector.shape_cast %266 : vector<1x1x32xf32> to vector<1x32xf32>
    %c1_152 = arith.constant 1 : index
    %c0_153 = arith.constant 0 : index
    %c0_154 = arith.constant 0 : index
    %268 = vector.load %arg25[%c1_152, %c0_153, %c0_154] : memref<2x1x32xf32, #tpu.memory_space<vmem>>, vector<1x1x32xf32>
    %269 = vector.shape_cast %268 : vector<1x1x32xf32> to vector<1x32xf32>
    %cst_155 = arith.constant dense<0.000000e+00> : vector<16xf32>
    %270 = vector.multi_reduction <add>, %265, %cst_155 [1] : vector<16x32xf32> to vector<16xf32>
    %271 = vector.shape_cast %270 : vector<16xf32> to vector<16x1xf32>
    %cst_156 = arith.constant 3.200000e+01 : f32
    %272 = vector.broadcast %cst_156 : f32 to vector<16x1xf32>
    %273 = arith.divf %271, %272 : vector<16x1xf32>
    %274 = vector.broadcast %273 : vector<16x1xf32> to vector<16x32xf32>
    %275 = arith.subf %265, %274 : vector<16x32xf32>
    %276 = arith.mulf %275, %275 : vector<16x32xf32>
    %cst_157 = arith.constant dense<0.000000e+00> : vector<16xf32>
    %277 = vector.multi_reduction <add>, %276, %cst_157 [1] : vector<16x32xf32> to vector<16xf32>
    %278 = vector.shape_cast %277 : vector<16xf32> to vector<16x1xf32>
    %cst_158 = arith.constant 3.200000e+01 : f32
    %279 = vector.broadcast %cst_158 : f32 to vector<16x1xf32>
    %280 = arith.divf %278, %279 : vector<16x1xf32>
    %281 = vector.broadcast %273 : vector<16x1xf32> to vector<16x32xf32>
    %282 = arith.subf %265, %281 : vector<16x32xf32>
    %cst_159 = arith.constant 9.99999974E-6 : f32
    %283 = vector.broadcast %cst_159 : f32 to vector<16x1xf32>
    %284 = arith.addf %280, %283 : vector<16x1xf32>
    %285 = math.rsqrt %284 : vector<16x1xf32>
    %286 = vector.broadcast %285 : vector<16x1xf32> to vector<16x32xf32>
    %287 = arith.mulf %282, %286 : vector<16x32xf32>
    %288 = vector.broadcast %267 : vector<1x32xf32> to vector<16x32xf32>
    %289 = arith.mulf %287, %288 : vector<16x32xf32>
    %290 = vector.broadcast %269 : vector<1x32xf32> to vector<16x32xf32>
    %291 = arith.addf %289, %290 : vector<16x32xf32>
    %c1_160 = arith.constant 1 : index
    %c0_161 = arith.constant 0 : index
    %c0_162 = arith.constant 0 : index
    %292 = vector.load %arg16[%c1_160, %c0_161, %c0_162] : memref<2x32x64xf32, #tpu.memory_space<vmem>>, vector<1x32x64xf32>
    %293 = vector.shape_cast %292 : vector<1x32x64xf32> to vector<32x64xf32>
    %cst_163 = arith.constant dense<0.000000e+00> : vector<16x64xf32>
    %294 = tpu.matmul %291, %293, %cst_163 {dimension_numbers = #tpu.dot_dimension_numbers<[1], [0], [0], [1], [0, 0, 1, 1], [], []>} : vector<16x32xf32>, vector<32x64xf32>, vector<16x64xf32> -> vector<16x64xf32>
    %c1_164 = arith.constant 1 : index
    %c0_165 = arith.constant 0 : index
    %c0_166 = arith.constant 0 : index
    %295 = vector.load %arg17[%c1_164, %c0_165, %c0_166] : memref<2x1x64xf32, #tpu.memory_space<vmem>>, vector<1x1x64xf32>
    %296 = vector.shape_cast %295 : vector<1x1x64xf32> to vector<1x64xf32>
    %297 = vector.broadcast %296 : vector<1x64xf32> to vector<16x64xf32>
    %298 = arith.addf %294, %297 : vector<16x64xf32>
    %cst_167 = arith.constant 0.000000e+00 : f32
    %299 = vector.broadcast %cst_167 : f32 to vector<16x64xf32>
    %300 = arith.maximumf %298, %299 : vector<16x64xf32>
    %c1_168 = arith.constant 1 : index
    %c0_169 = arith.constant 0 : index
    %c0_170 = arith.constant 0 : index
    %301 = vector.load %arg18[%c1_168, %c0_169, %c0_170] : memref<2x64x32xf32, #tpu.memory_space<vmem>>, vector<1x64x32xf32>
    %302 = vector.shape_cast %301 : vector<1x64x32xf32> to vector<64x32xf32>
    %cst_171 = arith.constant dense<0.000000e+00> : vector<16x32xf32>
    %303 = tpu.matmul %300, %302, %cst_171 {dimension_numbers = #tpu.dot_dimension_numbers<[1], [0], [0], [1], [0, 0, 1, 1], [], []>} : vector<16x64xf32>, vector<64x32xf32>, vector<16x32xf32> -> vector<16x32xf32>
    %c1_172 = arith.constant 1 : index
    %c0_173 = arith.constant 0 : index
    %c0_174 = arith.constant 0 : index
    %304 = vector.load %arg19[%c1_172, %c0_173, %c0_174] : memref<2x1x32xf32, #tpu.memory_space<vmem>>, vector<1x1x32xf32>
    %305 = vector.shape_cast %304 : vector<1x1x32xf32> to vector<1x32xf32>
    %306 = vector.broadcast %305 : vector<1x32xf32> to vector<16x32xf32>
    %307 = arith.addf %303, %306 : vector<16x32xf32>
    %308 = arith.addf %291, %307 : vector<16x32xf32>
    %c1_175 = arith.constant 1 : index
    %c0_176 = arith.constant 0 : index
    %c0_177 = arith.constant 0 : index
    %309 = vector.load %arg28[%c1_175, %c0_176, %c0_177] : memref<2x1x32xf32, #tpu.memory_space<vmem>>, vector<1x1x32xf32>
    %310 = vector.shape_cast %309 : vector<1x1x32xf32> to vector<1x32xf32>
    %c1_178 = arith.constant 1 : index
    %c0_179 = arith.constant 0 : index
    %c0_180 = arith.constant 0 : index
    %311 = vector.load %arg29[%c1_178, %c0_179, %c0_180] : memref<2x1x32xf32, #tpu.memory_space<vmem>>, vector<1x1x32xf32>
    %312 = vector.shape_cast %311 : vector<1x1x32xf32> to vector<1x32xf32>
    %cst_181 = arith.constant dense<0.000000e+00> : vector<16xf32>
    %313 = vector.multi_reduction <add>, %308, %cst_181 [1] : vector<16x32xf32> to vector<16xf32>
    %314 = vector.shape_cast %313 : vector<16xf32> to vector<16x1xf32>
    %cst_182 = arith.constant 3.200000e+01 : f32
    %315 = vector.broadcast %cst_182 : f32 to vector<16x1xf32>
    %316 = arith.divf %314, %315 : vector<16x1xf32>
    %317 = vector.broadcast %316 : vector<16x1xf32> to vector<16x32xf32>
    %318 = arith.subf %308, %317 : vector<16x32xf32>
    %319 = arith.mulf %318, %318 : vector<16x32xf32>
    %cst_183 = arith.constant dense<0.000000e+00> : vector<16xf32>
    %320 = vector.multi_reduction <add>, %319, %cst_183 [1] : vector<16x32xf32> to vector<16xf32>
    %321 = vector.shape_cast %320 : vector<16xf32> to vector<16x1xf32>
    %cst_184 = arith.constant 3.200000e+01 : f32
    %322 = vector.broadcast %cst_184 : f32 to vector<16x1xf32>
    %323 = arith.divf %321, %322 : vector<16x1xf32>
    %324 = vector.broadcast %316 : vector<16x1xf32> to vector<16x32xf32>
    %325 = arith.subf %308, %324 : vector<16x32xf32>
    %cst_185 = arith.constant 9.99999974E-6 : f32
    %326 = vector.broadcast %cst_185 : f32 to vector<16x1xf32>
    %327 = arith.addf %323, %326 : vector<16x1xf32>
    %328 = math.rsqrt %327 : vector<16x1xf32>
    %329 = vector.broadcast %328 : vector<16x1xf32> to vector<16x32xf32>
    %330 = arith.mulf %325, %329 : vector<16x32xf32>
    %331 = vector.broadcast %310 : vector<1x32xf32> to vector<16x32xf32>
    %332 = arith.mulf %330, %331 : vector<16x32xf32>
    %333 = vector.broadcast %312 : vector<1x32xf32> to vector<16x32xf32>
    %334 = arith.addf %332, %333 : vector<16x32xf32>
    %c0_186 = arith.constant 0 : index
    %c0_187 = arith.constant 0 : index
    %335 = vector.load %arg32[%c0_186, %c0_187] : memref<32x16xf32, #tpu.memory_space<vmem>>, vector<32x16xf32>
    %cst_188 = arith.constant dense<0.000000e+00> : vector<16x16xf32>
    %336 = tpu.matmul %334, %335, %cst_188 {dimension_numbers = #tpu.dot_dimension_numbers<[1], [0], [0], [1], [0, 0, 1, 1], [], []>} : vector<16x32xf32>, vector<32x16xf32>, vector<16x16xf32> -> vector<16x16xf32>
    %c0_189 = arith.constant 0 : index
    %c0_190 = arith.constant 0 : index
    %337 = vector.load %arg33[%c0_189, %c0_190] : memref<1x16xf32, #tpu.memory_space<vmem>>, vector<1x16xf32>
    %338 = vector.broadcast %337 : vector<1x16xf32> to vector<16x16xf32>
    %339 = arith.addf %336, %338 : vector<16x16xf32>
    %cst_191 = arith.constant 0.000000e+00 : f32
    %340 = vector.broadcast %cst_191 : f32 to vector<16x16xf32>
    %341 = arith.maximumf %339, %340 : vector<16x16xf32>
    %c0_192 = arith.constant 0 : index
    %c0_193 = arith.constant 0 : index
    %342 = vector.load %arg34[%c0_192, %c0_193] : memref<16x8xf32, #tpu.memory_space<vmem>>, vector<16x8xf32>
    %cst_194 = arith.constant dense<0.000000e+00> : vector<16x8xf32>
    %343 = tpu.matmul %341, %342, %cst_194 {dimension_numbers = #tpu.dot_dimension_numbers<[1], [0], [0], [1], [0, 0, 1, 1], [], []>} : vector<16x16xf32>, vector<16x8xf32>, vector<16x8xf32> -> vector<16x8xf32>
    %c0_195 = arith.constant 0 : index
    %c0_196 = arith.constant 0 : index
    %344 = vector.load %arg35[%c0_195, %c0_196] : memref<1x8xf32, #tpu.memory_space<vmem>>, vector<1x8xf32>
    %345 = vector.broadcast %344 : vector<1x8xf32> to vector<16x8xf32>
    %346 = arith.addf %343, %345 : vector<16x8xf32>
    %cst_197 = arith.constant 0.000000e+00 : f32
    %347 = vector.broadcast %cst_197 : f32 to vector<16x8xf32>
    %348 = arith.maximumf %346, %347 : vector<16x8xf32>
    %c0_198 = arith.constant 0 : index
    %c0_199 = arith.constant 0 : index
    %349 = vector.load %arg36[%c0_198, %c0_199] : memref<8x3xf32, #tpu.memory_space<vmem>>, vector<8x3xf32>
    %cst_200 = arith.constant dense<0.000000e+00> : vector<16x3xf32>
    %350 = tpu.matmul %348, %349, %cst_200 {dimension_numbers = #tpu.dot_dimension_numbers<[1], [0], [0], [1], [0, 0, 1, 1], [], []>} : vector<16x8xf32>, vector<8x3xf32>, vector<16x3xf32> -> vector<16x3xf32>
    %c0_201 = arith.constant 0 : index
    %c0_202 = arith.constant 0 : index
    %351 = vector.load %arg37[%c0_201, %c0_202] : memref<1x3xf32, #tpu.memory_space<vmem>>, vector<1x3xf32>
    %352 = vector.broadcast %351 : vector<1x3xf32> to vector<16x3xf32>
    %353 = arith.addf %350, %352 : vector<16x3xf32>
    %c0_203 = arith.constant 0 : index
    %c0_204 = arith.constant 0 : index
    %354 = vector.load %arg38[%c0_203, %c0_204] : memref<16x3xf32, #tpu.memory_space<vmem>>, vector<16x3xf32>
    tpu.vector_store %arg38[%c0_203, %c0_204], %353 {strides = array<i32>} : memref<16x3xf32, #tpu.memory_space<vmem>>, vector<16x3xf32>,
    %355 = arith.mulf %353, %353 : vector<16x3xf32>
    %cst_205 = arith.constant dense<0.000000e+00> : vector<16x16xf32>
    %356 = tpu.matmul %353, %353, %cst_205 {dimension_numbers = #tpu.dot_dimension_numbers<[1], [1], [0], [0], [0, 0, 1, 0], [], []>} : vector<16x3xf32>, vector<16x3xf32>, vector<16x16xf32> -> vector<16x16xf32>
    %cst_206 = arith.constant 1.000000e+00 : f32
    %357 = vector.broadcast %cst_206 : f32 to vector<3x16xf32>
    %cst_207 = arith.constant dense<0.000000e+00> : vector<16x16xf32>
    %358 = tpu.matmul %355, %357, %cst_207 {dimension_numbers = #tpu.dot_dimension_numbers<[1], [0], [0], [1], [0, 0, 1, 1], [], []>} : vector<16x3xf32>, vector<3x16xf32>, vector<16x16xf32> -> vector<16x16xf32>
    %cst_208 = arith.constant 1.000000e+00 : f32
    %359 = vector.broadcast %cst_208 : f32 to vector<16x3xf32>
    %cst_209 = arith.constant dense<0.000000e+00> : vector<16x16xf32>
    %360 = tpu.matmul %359, %355, %cst_209 {dimension_numbers = #tpu.dot_dimension_numbers<[1], [1], [0], [0], [0, 0, 1, 0], [], []>} : vector<16x3xf32>, vector<16x3xf32>, vector<16x16xf32> -> vector<16x16xf32>
    %361 = arith.addf %358, %360 : vector<16x16xf32>
    %cst_210 = arith.constant 2.000000e+00 : f32
    %362 = vector.broadcast %cst_210 : f32 to vector<16x16xf32>
    %363 = arith.mulf %362, %356 : vector<16x16xf32>
    %364 = arith.subf %361, %363 : vector<16x16xf32>
    %cst_211 = arith.constant 0.000000e+00 : f32
    %365 = vector.broadcast %cst_211 : f32 to vector<16x16xf32>
    %366 = arith.maximumf %364, %365 : vector<16x16xf32>
    %367 = math.sqrt %366 : vector<16x16xf32>
    %c0_212 = arith.constant 0 : index
    %c0_213 = arith.constant 0 : index
    %368 = vector.load %arg39[%c0_212, %c0_213] : memref<16x16xf32, #tpu.memory_space<vmem>>, vector<16x16xf32>
    tpu.vector_store %arg39[%c0_212, %c0_213], %367 {strides = array<i32>} : memref<16x16xf32, #tpu.memory_space<vmem>>, vector<16x16xf32>,
    return
  }
}

</mosaic_0001>

<llo_original>
// kernel: custom-call.2
$region0: #{custom-call.2}
  %s0 = inlined_call_operand.vmem [shape: f32[8,8], index: 0, kind: input, shape index: {}]
  %s1 = inlined_call_operand.vmem [shape: f32[8,8], index: 1, kind: input, shape index: {}]
  %s2 = inlined_call_operand.vmem [shape: f32[8,8], index: 2, kind: input, shape index: {}]
  %s3 = inlined_call_operand.vmem [shape: f32[8,8], index: 3, kind: input, shape index: {}]
  %s4 = inlined_call_operand.vmem [shape: f32[8], index: 4, kind: output, shape index: {0}]
  %s5 = inlined_call_operand.vmem [shape: f32[8], index: 5, kind: output, shape index: {1}]
  %s6 = inlined_call_operand.vmem [shape: f32[8,8], index: 6, kind: output, shape index: {2}]
  %s7 = inlined_call_operand.vmem [shape: f32[8,8], index: 7, kind: output, shape index: {3}]
  %s8 = inlined_call_operand.vmem [shape: f32[8,8], index: 8, kind: output, shape index: {4}]
  %s9 = inlined_call_operand.vmem [shape: f32[8,8], index: 9, kind: output, shape index: {5}]
  %10 = xla_tuple %s4, %s5, %s6, %s7, %s8, %s9
  $region1: #{custom-call.2} parent=0
    #allocation0 [shape = 'u8[4096]{0}', space=vmem, size = 0x1000, scoped, tag = 'operand span for operand 0']
    #allocation1 [shape = 'u8[4096]{0}', space=vmem, size = 0x1000, scoped, tag = 'operand span for operand 1']
    #allocation2 [shape = 'u8[4096]{0}', space=vmem, size = 0x1000, scoped, tag = 'operand span for operand 2']
    #allocation3 [shape = 'u8[4096]{0}', space=vmem, size = 0x1000, scoped, tag = 'operand span for operand 3']
    #allocation4 [shape = 'u8[4096]{0}', space=vmem, size = 0x1000, scoped, tag = 'operand span for operand 4']
    #allocation5 [shape = 'u8[512]{0}', space=vmem, size = 0x400, scoped, tag = 'packed  for operand 4']
    #allocation6 [shape = 'u8[4096]{0}', space=vmem, size = 0x1000, scoped, tag = 'operand span for operand 5']
    #allocation7 [shape = 'u8[512]{0}', space=vmem, size = 0x400, scoped, tag = 'packed  for operand 5']
    #allocation8 [shape = 'u8[4096]{0}', space=vmem, size = 0x1000, scoped, tag = 'operand span for operand 6']
    #allocation9 [shape = 'u8[4096]{0}', space=vmem, size = 0x1000, scoped, tag = 'operand span for operand 7']
    #allocation10 [shape = 'u8[4096]{0}', space=vmem, size = 0x1000, scoped, tag = 'operand span for operand 8']
    #allocation11 [shape = 'u8[4096]{0}', space=vmem, size = 0x1000, scoped, tag = 'operand span for operand 9']
    #allocation12 [shape = 'f32[8,8]{1,0}', space=vmem, size = 0x1000, scoped, tag = 'a top-left matrix']
    #allocation13 [shape = 'f32[8,8]{1,0}', space=vmem, size = 0x1000, scoped, tag = 'a top-right matrix']
    #allocation14 [shape = 'f32[8,8]{1,0}', space=vmem, size = 0x1000, scoped, tag = 'a bottom-left matrix']
    #allocation15 [shape = 'f32[8,8]{1,0}', space=vmem, size = 0x1000, scoped, tag = 'a bottom-right matrix']
    %p12 = scmp.gt.s32.totalorder 8, 0
    // Predicated region
    $region2: #{custom-call.2} parent=1 // pred_check
      %p13 = pneg %p12
    $region3: #{custom-call.2} parent=1 // pred_check_branch
      %15 = sbr.rel (%p13) target = $region5
    $region4: #{custom-call.2} parent=1 // pred_region
      %s16 = sshra.s32 8, 3
      %p17 = scmp.gt.s32.totalorder %s16, 0
      // Predicated region
      $region6: #{custom-call.2} parent=4 // pred_check
        %p18 = pneg %p17
      $region7: #{custom-call.2} parent=4 // pred_check_branch
        %20 = sbr.rel (%p18) target = $region9
      $region8: #{custom-call.2} parent=4 // pred_region
        %s21 = ssub.s32 %s16, 1
        %s22 = smul.u32 %s21, 128
        %s23 = sshra.s32 %s22, 4
        %s24 = scalar_lea.vmem %s0, %s23
        %v25 = vld [vmem:[%s0] sm:$0xff]
        // While loop
        $region10: #{custom-call.2} parent=8 // loop_pre_header
          _
        $region11: #{custom-call.2} parent=8 // loop_header
          %s26 = sphi %s0, %s48
          %s27 = sphi [#allocation0], %s49
          %v28 = vphi %v25, %v50
          %s29 = ssub.s32 %s24, 64
          %p30 = scmp.gt.s32.totalorder %s26, %s29
        $region12: #{custom-call.2} parent=8 // loop_header_branch
          %32 = sbr.rel (%p30) target = $region16
        $region13: #{custom-call.2} parent=8 // loop_body
          %33 = vst [vmem:[%s27] sm:$0xff] %v28
          %v34 = vld [vmem:[%s26 + $0x8] sm:$0xff]
          %35 = vst [vmem:[%s27 + $0x8] sm:$0xff] %v34
          %v36 = vld [vmem:[%s26 + $0x10] sm:$0xff]
          %37 = vst [vmem:[%s27 + $0x10] sm:$0xff] %v36
          %v38 = vld [vmem:[%s26 + $0x18] sm:$0xff]
          %39 = vst [vmem:[%s27 + $0x18] sm:$0xff] %v38
          %v40 = vld [vmem:[%s26 + $0x20] sm:$0xff]
          %41 = vst [vmem:[%s27 + $0x20] sm:$0xff] %v40
          %v42 = vld [vmem:[%s26 + $0x28] sm:$0xff]
          %43 = vst [vmem:[%s27 + $0x28] sm:$0xff] %v42
          %v44 = vld [vmem:[%s26 + $0x30] sm:$0xff]
          %45 = vst [vmem:[%s27 + $0x30] sm:$0xff] %v44
          %v46 = vld [vmem:[%s26 + $0x38] sm:$0xff]
          %47 = vst [vmem:[%s27 + $0x38] sm:$0xff] %v46
        $region14: #{custom-call.2} parent=8 // loop_footer
          %s48 = scalar_lea.vmem %s26, 64
          %s49 = scalar_lea.vmem %s27, 64
          %v50 = vld [vmem:[%s26 + $0x40] sm:$0xff]
        $region15: #{custom-call.2} parent=8 // loop_footer_branch
          %51 = sbr.rel target = $region11
        $region16: #{custom-call.2} parent=8 // loop_exit
          _
        // While loop
        $region17: #{custom-call.2} parent=8 // loop_pre_header
          _
        $region18: #{custom-call.2} parent=8 // loop_header
          %s52 = sphi %s26, %s60
          %s53 = sphi %s27, %s61
          %v54 = vphi %v28, %v54
          %p55 = scmp.gt.s32.totalorder %s52, %s24
        $region19: #{custom-call.2} parent=8 // loop_header_branch
          %57 = sbr.rel (%p55) target = $region23
        $region20: #{custom-call.2} parent=8 // loop_body
          %v58 = vld [vmem:[%s52] sm:$0xff]
          %59 = vst [vmem:[%s53] sm:$0xff] %v58
        $region21: #{custom-call.2} parent=8 // loop_footer
          %s60 = scalar_lea.vmem %s52, 8
          %s61 = scalar_lea.vmem %s53, 8
        $region22: #{custom-call.2} parent=8 // loop_footer_branch
          %62 = sbr.rel target = $region18
        $region23: #{custom-call.2} parent=8 // loop_exit
          _
      $region9: #{custom-call.2} parent=4 // pred_fallthru
        _
      %s63 = sand.u32 8, 7
      %s64 = sshllo.u32 0, %s63
      %s65 = smul.u32 %s16, 128
      %s66 = sshra.s32 %s65, 4
      %s67 = scalar_lea.vmem [#allocation0], %s66
      %s68 = smul.u32 %s16, 128
      %s69 = sshra.s32 %s68, 4
      %s70 = scalar_lea.vmem %s0, %s69
      %v71 = vld [vmem:[%s70] sm:%s64]
      %72 = vst [vmem:[%s67] sm:%s64] %v71
    $region5: #{custom-call.2} parent=1 // pred_fallthru
      _
    %p74 = scmp.gt.s32.totalorder 8, 0
    // Predicated region
    $region24: #{custom-call.2} parent=1 // pred_check
      %p75 = pneg %p74
    $region25: #{custom-call.2} parent=1 // pred_check_branch
      %77 = sbr.rel (%p75) target = $region27
    $region26: #{custom-call.2} parent=1 // pred_region
      %s78 = sshra.s32 8, 3
      %p79 = scmp.gt.s32.totalorder %s78, 0
      // Predicated region
      $region28: #{custom-call.2} parent=26 // pred_check
        %p80 = pneg %p79
      $region29: #{custom-call.2} parent=26 // pred_check_branch
        %82 = sbr.rel (%p80) target = $region31
      $region30: #{custom-call.2} parent=26 // pred_region
        %s83 = ssub.s32 %s78, 1
        %s84 = smul.u32 %s83, 128
        %s85 = sshra.s32 %s84, 4
        %s86 = scalar_lea.vmem %s1, %s85
        %v87 = vld [vmem:[%s1] sm:$0xff]
        // While loop
        $region32: #{custom-call.2} parent=30 // loop_pre_header
          _
        $region33: #{custom-call.2} parent=30 // loop_header
          %s88 = sphi %s1, %s110
          %s89 = sphi [#allocation1], %s111
          %v90 = vphi %v87, %v112
          %s91 = ssub.s32 %s86, 64
          %p92 = scmp.gt.s32.totalorder %s88, %s91
        $region34: #{custom-call.2} parent=30 // loop_header_branch
          %94 = sbr.rel (%p92) target = $region38
        $region35: #{custom-call.2} parent=30 // loop_body
          %95 = vst [vmem:[%s89] sm:$0xff] %v90
          %v96 = vld [vmem:[%s88 + $0x8] sm:$0xff]
          %97 = vst [vmem:[%s89 + $0x8] sm:$0xff] %v96
          %v98 = vld [vmem:[%s88 + $0x10] sm:$0xff]
          %99 = vst [vmem:[%s89 + $0x10] sm:$0xff] %v98
          %v100 = vld [vmem:[%s88 + $0x18] sm:$0xff]
          %101 = vst [vmem:[%s89 + $0x18] sm:$0xff] %v100
          %v102 = vld [vmem:[%s88 + $0x20] sm:$0xff]
          %103 = vst [vmem:[%s89 + $0x20] sm:$0xff] %v102
          %v104 = vld [vmem:[%s88 + $0x28] sm:$0xff]
          %105 = vst [vmem:[%s89 + $0x28] sm:$0xff] %v104
          %v106 = vld [vmem:[%s88 + $0x30] sm:$0xff]
          %107 = vst [vmem:[%s89 + $0x30] sm:$0xff] %v106
          %v108 = vld [vmem:[%s88 + $0x38] sm:$0xff]
          %109 = vst [vmem:[%s89 + $0x38] sm:$0xff] %v108
        $region36: #{custom-call.2} parent=30 // loop_footer
          %s110 = scalar_lea.vmem %s88, 64
          %s111 = scalar_lea.vmem %s89, 64
          %v112 = vld [vmem:[%s88 + $0x40] sm:$0xff]
        $region37: #{custom-call.2} parent=30 // loop_footer_branch
          %113 = sbr.rel target = $region33
        $region38: #{custom-call.2} parent=30 // loop_exit
          _
        // While loop
        $region39: #{custom-call.2} parent=30 // loop_pre_header
          _
        $region40: #{custom-call.2} parent=30 // loop_header
          %s114 = sphi %s88, %s122
          %s115 = sphi %s89, %s123
          %v116 = vphi %v90, %v116
          %p117 = scmp.gt.s32.totalorder %s114, %s86
        $region41: #{custom-call.2} parent=30 // loop_header_branch
          %119 = sbr.rel (%p117) target = $region45
        $region42: #{custom-call.2} parent=30 // loop_body
          %v120 = vld [vmem:[%s114] sm:$0xff]
          %121 = vst [vmem:[%s115] sm:$0xff] %v120
        $region43: #{custom-call.2} parent=30 // loop_footer
          %s122 = scalar_lea.vmem %s114, 8
          %s123 = scalar_lea.vmem %s115, 8
        $region44: #{custom-call.2} parent=30 // loop_footer_branch
          %124 = sbr.rel target = $region40
        $region45: #{custom-call.2} parent=30 // loop_exit
          _
      $region31: #{custom-call.2} parent=26 // pred_fallthru
        _
      %s125 = sand.u32 8, 7
      %s126 = sshllo.u32 0, %s125
      %s127 = smul.u32 %s78, 128
      %s128 = sshra.s32 %s127, 4
      %s129 = scalar_lea.vmem [#allocation1], %s128
      %s130 = smul.u32 %s78, 128
      %s131 = sshra.s32 %s130, 4
      %s132 = scalar_lea.vmem %s1, %s131
      %v133 = vld [vmem:[%s132] sm:%s126]
      %134 = vst [vmem:[%s129] sm:%s126] %v133
    $region27: #{custom-call.2} parent=1 // pred_fallthru
      _
    %p136 = scmp.gt.s32.totalorder 8, 0
    // Predicated region
    $region46: #{custom-call.2} parent=1 // pred_check
      %p137 = pneg %p136
    $region47: #{custom-call.2} parent=1 // pred_check_branch
      %139 = sbr.rel (%p137) target = $region49
    $region48: #{custom-call.2} parent=1 // pred_region
      %s140 = sshra.s32 8, 3
      %p141 = scmp.gt.s32.totalorder %s140, 0
      // Predicated region
      $region50: #{custom-call.2} parent=48 // pred_check
        %p142 = pneg %p141
      $region51: #{custom-call.2} parent=48 // pred_check_branch
        %144 = sbr.rel (%p142) target = $region53
      $region52: #{custom-call.2} parent=48 // pred_region
        %s145 = ssub.s32 %s140, 1
        %s146 = smul.u32 %s145, 128
        %s147 = sshra.s32 %s146, 4
        %s148 = scalar_lea.vmem %s2, %s147
        %v149 = vld [vmem:[%s2] sm:$0xff]
        // While loop
        $region54: #{custom-call.2} parent=52 // loop_pre_header
          _
        $region55: #{custom-call.2} parent=52 // loop_header
          %s150 = sphi %s2, %s172
          %s151 = sphi [#allocation2], %s173
          %v152 = vphi %v149, %v174
          %s153 = ssub.s32 %s148, 64
          %p154 = scmp.gt.s32.totalorder %s150, %s153
        $region56: #{custom-call.2} parent=52 // loop_header_branch
          %156 = sbr.rel (%p154) target = $region60
        $region57: #{custom-call.2} parent=52 // loop_body
          %157 = vst [vmem:[%s151] sm:$0xff] %v152
          %v158 = vld [vmem:[%s150 + $0x8] sm:$0xff]
          %159 = vst [vmem:[%s151 + $0x8] sm:$0xff] %v158
          %v160 = vld [vmem:[%s150 + $0x10] sm:$0xff]
          %161 = vst [vmem:[%s151 + $0x10] sm:$0xff] %v160
          %v162 = vld [vmem:[%s150 + $0x18] sm:$0xff]
          %163 = vst [vmem:[%s151 + $0x18] sm:$0xff] %v162
          %v164 = vld [vmem:[%s150 + $0x20] sm:$0xff]
          %165 = vst [vmem:[%s151 + $0x20] sm:$0xff] %v164
          %v166 = vld [vmem:[%s150 + $0x28] sm:$0xff]
          %167 = vst [vmem:[%s151 + $0x28] sm:$0xff] %v166
          %v168 = vld [vmem:[%s150 + $0x30] sm:$0xff]
          %169 = vst [vmem:[%s151 + $0x30] sm:$0xff] %v168
          %v170 = vld [vmem:[%s150 + $0x38] sm:$0xff]
          %171 = vst [vmem:[%s151 + $0x38] sm:$0xff] %v170
        $region58: #{custom-call.2} parent=52 // loop_footer
          %s172 = scalar_lea.vmem %s150, 64
          %s173 = scalar_lea.vmem %s151, 64
          %v174 = vld [vmem:[%s150 + $0x40] sm:$0xff]
        $region59: #{custom-call.2} parent=52 // loop_footer_branch
          %175 = sbr.rel target = $region55
        $region60: #{custom-call.2} parent=52 // loop_exit
          _
        // While loop
        $region61: #{custom-call.2} parent=52 // loop_pre_header
          _
        $region62: #{custom-call.2} parent=52 // loop_header
          %s176 = sphi %s150, %s184
          %s177 = sphi %s151, %s185
          %v178 = vphi %v152, %v178
          %p179 = scmp.gt.s32.totalorder %s176, %s148
        $region63: #{custom-call.2} parent=52 // loop_header_branch
          %181 = sbr.rel (%p179) target = $region67
        $region64: #{custom-call.2} parent=52 // loop_body
          %v182 = vld [vmem:[%s176] sm:$0xff]
          %183 = vst [vmem:[%s177] sm:$0xff] %v182
        $region65: #{custom-call.2} parent=52 // loop_footer
          %s184 = scalar_lea.vmem %s176, 8
          %s185 = scalar_lea.vmem %s177, 8
        $region66: #{custom-call.2} parent=52 // loop_footer_branch
          %186 = sbr.rel target = $region62
        $region67: #{custom-call.2} parent=52 // loop_exit
          _
      $region53: #{custom-call.2} parent=48 // pred_fallthru
        _
      %s187 = sand.u32 8, 7
      %s188 = sshllo.u32 0, %s187
      %s189 = smul.u32 %s140, 128
      %s190 = sshra.s32 %s189, 4
      %s191 = scalar_lea.vmem [#allocation2], %s190
      %s192 = smul.u32 %s140, 128
      %s193 = sshra.s32 %s192, 4
      %s194 = scalar_lea.vmem %s2, %s193
      %v195 = vld [vmem:[%s194] sm:%s188]
      %196 = vst [vmem:[%s191] sm:%s188] %v195
    $region49: #{custom-call.2} parent=1 // pred_fallthru
      _
    %p198 = scmp.gt.s32.totalorder 8, 0
    // Predicated region
    $region68: #{custom-call.2} parent=1 // pred_check
      %p199 = pneg %p198
    $region69: #{custom-call.2} parent=1 // pred_check_branch
      %201 = sbr.rel (%p199) target = $region71
    $region70: #{custom-call.2} parent=1 // pred_region
      %s202 = sshra.s32 8, 3
      %p203 = scmp.gt.s32.totalorder %s202, 0
      // Predicated region
      $region72: #{custom-call.2} parent=70 // pred_check
        %p204 = pneg %p203
      $region73: #{custom-call.2} parent=70 // pred_check_branch
        %206 = sbr.rel (%p204) target = $region75
      $region74: #{custom-call.2} parent=70 // pred_region
        %s207 = ssub.s32 %s202, 1
        %s208 = smul.u32 %s207, 128
        %s209 = sshra.s32 %s208, 4
        %s210 = scalar_lea.vmem %s3, %s209
        %v211 = vld [vmem:[%s3] sm:$0xff]
        // While loop
        $region76: #{custom-call.2} parent=74 // loop_pre_header
          _
        $region77: #{custom-call.2} parent=74 // loop_header
          %s212 = sphi %s3, %s234
          %s213 = sphi [#allocation3], %s235
          %v214 = vphi %v211, %v236
          %s215 = ssub.s32 %s210, 64
          %p216 = scmp.gt.s32.totalorder %s212, %s215
        $region78: #{custom-call.2} parent=74 // loop_header_branch
          %218 = sbr.rel (%p216) target = $region82
        $region79: #{custom-call.2} parent=74 // loop_body
          %219 = vst [vmem:[%s213] sm:$0xff] %v214
          %v220 = vld [vmem:[%s212 + $0x8] sm:$0xff]
          %221 = vst [vmem:[%s213 + $0x8] sm:$0xff] %v220
          %v222 = vld [vmem:[%s212 + $0x10] sm:$0xff]
          %223 = vst [vmem:[%s213 + $0x10] sm:$0xff] %v222
          %v224 = vld [vmem:[%s212 + $0x18] sm:$0xff]
          %225 = vst [vmem:[%s213 + $0x18] sm:$0xff] %v224
          %v226 = vld [vmem:[%s212 + $0x20] sm:$0xff]
          %227 = vst [vmem:[%s213 + $0x20] sm:$0xff] %v226
          %v228 = vld [vmem:[%s212 + $0x28] sm:$0xff]
          %229 = vst [vmem:[%s213 + $0x28] sm:$0xff] %v228
          %v230 = vld [vmem:[%s212 + $0x30] sm:$0xff]
          %231 = vst [vmem:[%s213 + $0x30] sm:$0xff] %v230
          %v232 = vld [vmem:[%s212 + $0x38] sm:$0xff]
          %233 = vst [vmem:[%s213 + $0x38] sm:$0xff] %v232
        $region80: #{custom-call.2} parent=74 // loop_footer
          %s234 = scalar_lea.vmem %s212, 64
          %s235 = scalar_lea.vmem %s213, 64
          %v236 = vld [vmem:[%s212 + $0x40] sm:$0xff]
        $region81: #{custom-call.2} parent=74 // loop_footer_branch
          %237 = sbr.rel target = $region77
        $region82: #{custom-call.2} parent=74 // loop_exit
          _
        // While loop
        $region83: #{custom-call.2} parent=74 // loop_pre_header
          _
        $region84: #{custom-call.2} parent=74 // loop_header
          %s238 = sphi %s212, %s246
          %s239 = sphi %s213, %s247
          %v240 = vphi %v214, %v240
          %p241 = scmp.gt.s32.totalorder %s238, %s210
        $region85: #{custom-call.2} parent=74 // loop_header_branch
          %243 = sbr.rel (%p241) target = $region89
        $region86: #{custom-call.2} parent=74 // loop_body
          %v244 = vld [vmem:[%s238] sm:$0xff]
          %245 = vst [vmem:[%s239] sm:$0xff] %v244
        $region87: #{custom-call.2} parent=74 // loop_footer
          %s246 = scalar_lea.vmem %s238, 8
          %s247 = scalar_lea.vmem %s239, 8
        $region88: #{custom-call.2} parent=74 // loop_footer_branch
          %248 = sbr.rel target = $region84
        $region89: #{custom-call.2} parent=74 // loop_exit
          _
      $region75: #{custom-call.2} parent=70 // pred_fallthru
        _
      %s249 = sand.u32 8, 7
      %s250 = sshllo.u32 0, %s249
      %s251 = smul.u32 %s202, 128
      %s252 = sshra.s32 %s251, 4
      %s253 = scalar_lea.vmem [#allocation3], %s252
      %s254 = smul.u32 %s202, 128
      %s255 = sshra.s32 %s254, 4
      %s256 = scalar_lea.vmem %s3, %s255
      %v257 = vld [vmem:[%s256] sm:%s250]
      %258 = vst [vmem:[%s253] sm:%s250] %v257
    $region71: #{custom-call.2} parent=1 // pred_fallthru
      _
    %s259 = smov [#allocation12]
    %v260 = vld [vmem:[#allocation0] sm:$0xff]
    %261 = vst [vmem:[%s259] sm:$0xff] %v260
    %s262 = smov [#allocation13]
    %v263 = vld [vmem:[#allocation1] sm:$0xff]
    %264 = vst [vmem:[%s262] sm:$0xff] %v263
    %s265 = smov [#allocation14]
    %v266 = vld [vmem:[#allocation2] sm:$0xff]
    %267 = vst [vmem:[%s265] sm:$0xff] %v266
    %s268 = smov [#allocation15]
    %v269 = vld [vmem:[#allocation3] sm:$0xff]
    %270 = vst [vmem:[%s268] sm:$0xff] %v269
    %271 = vst [vmem:[#allocation8] sm:$0xff] 0.0
    %272 = vst [vmem:[#allocation9] sm:$0xff] 0.0
    %273 = vst [vmem:[#allocation10] sm:$0xff] 0.0
    %274 = vst [vmem:[#allocation11] sm:$0xff] 0.0
    %s275 = smov [#allocation8]
    %v276 = vlaneseq
    %v277 = vand.u32 %v276, 127
    %v278 = vmov %v277
    %v279 = vlaneseq
    %v280 = vshrl.u32 %v279, 7
    %v281 = vmov %v280
    %v282 = vld [vmem:[%s275] sm:$0xff]
    %vm285 = vcmp.eq.s32.totalorder %v281, %v278
    %v286 = vsel %vm285, 1.0, %v282
    %287 = vst [vmem:[%s275] sm:$0xff] %v286
    %s288 = smov [#allocation11]
    %v289 = vlaneseq
    %v290 = vand.u32 %v289, 127
    %v291 = vmov %v290
    %v292 = vlaneseq
    %v293 = vshrl.u32 %v292, 7
    %v294 = vmov %v293
    %v295 = vld [vmem:[%s288] sm:$0xff]
    %vm298 = vcmp.eq.s32.totalorder %v294, %v291
    %v299 = vsel %vm298, 1.0, %v295
    %300 = vst [vmem:[%s288] sm:$0xff] %v299
    // While loop
    $region90: #{custom-call.2} parent=1 // loop_pre_header
      _
    $region91: #{custom-call.2} parent=1 // loop_header
      %s302 = sphi 0, %s844
      %v303 = vlaneseq
      %v304 = vand.u32 %v303, 127
      %v305 = vmov %v304
      %v306 = vlaneseq
      %v307 = vshrl.u32 %v306, 7
      %v308 = vmov %v307
      %s309 = smov [#allocation12]
      %v310 = vlaneseq
      %v311 = vand.u32 %v310, 127
      %vm312 = vcmp.ge.s32.totalorder %v311, 0
      %vm313 = vcmp.lt.s32.totalorder %v311, 8
      %vm314 = vmand %vm312, %vm313
      %v315 = vld [vmem:[%s309] sm:$0xff]
      %v316 = vsel %vm314, %v315, 0.0
      %v317 = vmul.f32 %v316, %v316
      %vm320 = vcmp.eq.s32.totalorder %v308, %v305
      %v321 = vsel %vm320, 0.0, %v317
      %v322 = vlaneseq
      %v323 = vand.u32 %v322, 127
      %v324 = vmov %v323
      %v325 = vlaneseq
      %v326 = vshrl.u32 %v325, 7
      %v327 = vmov %v326
      %s328 = smov [#allocation13]
      %v329 = vlaneseq
      %v330 = vand.u32 %v329, 127
      %vm331 = vcmp.ge.s32.totalorder %v330, 0
      %vm332 = vcmp.lt.s32.totalorder %v330, 8
      %vm333 = vmand %vm331, %vm332
      %v334 = vld [vmem:[%s328] sm:$0xff]
      %v335 = vsel %vm333, %v334, 0.0
      %v336 = vmul.f32 %v335, %v335
      %v337 = vadd.f32 %v321, %v336
      %v338 = vadd.f32 %v317, %v336
      %v339 = vlaneseq
      %v340 = vand.u32 %v339, 127
      %v341 = vmov %v340
      %v342 = vlaneseq
      %v343 = vshrl.u32 %v342, 7
      %v344 = vmov %v343
      %s345 = smov [#allocation14]
      %v346 = vlaneseq
      %v347 = vand.u32 %v346, 127
      %vm348 = vcmp.ge.s32.totalorder %v347, 0
      %vm349 = vcmp.lt.s32.totalorder %v347, 8
      %vm350 = vmand %vm348, %vm349
      %v351 = vld [vmem:[%s345] sm:$0xff]
      %v352 = vsel %vm350, %v351, 0.0
      %v353 = vmul.f32 %v352, %v352
      %v354 = vadd.f32 %v337, %v353
      %v355 = vadd.f32 %v338, %v353
      %v356 = vlaneseq
      %v357 = vand.u32 %v356, 127
      %v358 = vmov %v357
      %v359 = vlaneseq
      %v360 = vshrl.u32 %v359, 7
      %v361 = vmov %v360
      %s362 = smov [#allocation15]
      %v363 = vlaneseq
      %v364 = vand.u32 %v363, 127
      %vm365 = vcmp.ge.s32.totalorder %v364, 0
      %vm366 = vcmp.lt.s32.totalorder %v364, 8
      %vm367 = vmand %vm365, %vm366
      %v368 = vld [vmem:[%s362] sm:$0xff]
      %v369 = vsel %vm367, %v368, 0.0
      %v370 = vmul.f32 %v369, %v369
      %vm373 = vcmp.eq.s32.totalorder %v361, %v358
      %v374 = vsel %vm373, 0.0, %v370
      %v375 = vadd.f32 %v354, %v374
      %v376 = vadd.f32 %v355, %v370
      %377 = vadd.xlane.f32.xlu0 %v376
      %v378 = vpop.xlane.xlu0 %377
      %v379 = vrot.slane %v378, 4
      %v380 = vadd.f32 %v378, %v379
      %v381 = vrot.slane %v380, 2
      %v382 = vadd.f32 %v380, %v381
      %v383 = vrot.slane %v382, 1
      %v384 = vadd.f32 %v382, %v383
      %385 = vadd.xlane.f32.xlu0 %v375
      %v386 = vpop.xlane.xlu0 %385
      %v387 = vrot.slane %v386, 4
      %v388 = vadd.f32 %v386, %v387
      %v389 = vrot.slane %v388, 2
      %v390 = vadd.f32 %v388, %v389
      %v391 = vrot.slane %v390, 1
      %v392 = vadd.f32 %v390, %v391
      %s393 = vtos %v392
      %s394 = vtos %v384
      %s395 = smul.f32 1e-10, %s394
      %p396 = scmp.le.f32.partialorder %s393, %s395
      %p397 = scmp.ge.s32.totalorder %s302, 15
      %p398 = por %p396, %p397
    $region92: #{custom-call.2} parent=1 // loop_header_branch
      %846 = sbr.rel (%p398) target = $region96
    $region93: #{custom-call.2} parent=1 // loop_body
      loop: start=0, step=1, limit=15
      $region97: #{custom-call.2} parent=93 // loop_pre_header
        _
      $region98: #{custom-call.2} parent=93 // loop_header
        %s400 = sphi 0, %s404
        %p401 = scmp.ge.s32.totalorder %s400, 15
      $region99: #{custom-call.2} parent=93 // loop_header_branch
        %403 = sbr.rel (%p401) target = $region103
      $region100: #{custom-call.2} parent=93 // loop_body
        #allocation16 [shape = 'f32[1024]{0}', space=vmem, size = 0x1000, scoped, tag = 'a_tl_diag vmem']
        #allocation17 [shape = 'f32[1024]{0}', space=vmem, size = 0x1000, scoped, tag = 'a_tr_diag vmem']
        #allocation18 [shape = 'f32[1024]{0}', space=vmem, size = 0x1000, scoped, tag = 'a_br_diag vmem']
        #allocation19 [shape = 'f32[1024]{0}', space=vmem, size = 0x1000, scoped, tag = 'rt1 vmem']
        #allocation20 [shape = 'f32[1024]{0}', space=vmem, size = 0x1000, scoped, tag = 'rt2 vmem']
        #allocation21 [shape = 'f32[1024]{0}', space=vmem, size = 0x1000, scoped, tag = 'c vmem']
        #allocation22 [shape = 'f32[1024]{0}', space=vmem, size = 0x1000, scoped, tag = 's vmem']
        #allocation23 [shape = 'f32[4096]{0}', space=vmem, size = 0x4000, scoped, tag = 'c broadcast']
        #allocation24 [shape = 'f32[4096]{0}', space=vmem, size = 0x4000, scoped, tag = 's broadcast']
        %s405 = smov [#allocation12]
        %s406 = smov [#allocation16]
        %v407 = vlaneseq
        %v408 = vand.u32 %v407, 127
        %v409 = vmov %v408
        %v410 = vlaneseq
        %v411 = vshrl.u32 %v410, 7
        %v412 = vmov %v411
        %v413 = vld [vmem:[%s405] sm:$0xff]
        %vm416 = vcmp.eq.s32.totalorder %v412, %v409
        %v417 = vsel %vm416, %v413, 0.0
        %v418 = vrot.slane %v417, 4
        %v419 = vadd.f32 %v417, %v418
        %v420 = vrot.slane %v419, 2
        %v421 = vadd.f32 %v419, %v420
        %v422 = vrot.slane %v421, 1
        %v423 = vadd.f32 %v421, %v422
        %424 = vst [vmem:[%s406] sm:$0x1] %v423
        %s425 = smov [#allocation13]
        %s426 = smov [#allocation17]
        %v427 = vlaneseq
        %v428 = vand.u32 %v427, 127
        %v429 = vmov %v428
        %v430 = vlaneseq
        %v431 = vshrl.u32 %v430, 7
        %v432 = vmov %v431
        %v433 = vld [vmem:[%s425] sm:$0xff]
        %vm436 = vcmp.eq.s32.totalorder %v432, %v429
        %v437 = vsel %vm436, %v433, 0.0
        %v438 = vrot.slane %v437, 4
        %v439 = vadd.f32 %v437, %v438
        %v440 = vrot.slane %v439, 2
        %v441 = vadd.f32 %v439, %v440
        %v442 = vrot.slane %v441, 1
        %v443 = vadd.f32 %v441, %v442
        %444 = vst [vmem:[%s426] sm:$0x1] %v443
        %s445 = smov [#allocation15]
        %s446 = smov [#allocation18]
        %v447 = vlaneseq
        %v448 = vand.u32 %v447, 127
        %v449 = vmov %v448
        %v450 = vlaneseq
        %v451 = vshrl.u32 %v450, 7
        %v452 = vmov %v451
        %v453 = vld [vmem:[%s445] sm:$0xff]
        %vm456 = vcmp.eq.s32.totalorder %v452, %v449
        %v457 = vsel %vm456, %v453, 0.0
        %v458 = vrot.slane %v457, 4
        %v459 = vadd.f32 %v457, %v458
        %v460 = vrot.slane %v459, 2
        %v461 = vadd.f32 %v459, %v460
        %v462 = vrot.slane %v461, 1
        %v463 = vadd.f32 %v461, %v462
        %464 = vst [vmem:[%s446] sm:$0x1] %v463
        %s465 = smov [#allocation21]
        %s466 = smov [#allocation22]
        %s467 = smov [#allocation16]
        %v468 = vld [vmem:[%s467] sm:$0xff]
        %s469 = smov [#allocation17]
        %v470 = vld [vmem:[%s469] sm:$0xff]
        %s471 = smov [#allocation18]
        %v472 = vld [vmem:[%s471] sm:$0xff]
        %v473 = vsub.f32 %v472, %v468
        %v474 = vmul.f32 2.0, %v470
        %v475 = vrcp.pop %v474
        %v476 = vmul.f32 %v473, %v475
        %vm477 = vcmp.ge.f32.partialorder %v476, 0.0
        %v478 = vmul.f32 %v476, %v476
        %v479 = vadd.f32 1.0, %v478
        %v480 = vrsqrt.pop %v479
        %v481 = vmul.f32 %v479, %v480
        %vm482 = vcmp.eq.f32.partialorder %v479, inf
        %v483 = vsel %vm482, %v479, %v481
        %vm484 = vcmp.eq.f32.partialorder %v479, 0.0
        %v485 = vand.u32 %v479, 2147483648
        %v486 = vsel %vm484, %v485, %v483
        %v487 = vxor.u32 %v486, 2147483648
        %v488 = vsel %vm477, %v486, %v487
        %v489 = vadd.f32 %v476, %v488
        %v490 = vrcp.pop %v489
        %v491 = vand.u32 2147483647, %v468
        %v492 = vand.u32 2147483647, %v470
        %v493 = vand.u32 2147483647, %v472
        %v494 = vmin.f32 %v491, %v493
        %v495 = vmul.f32 1.1920929e-08, %v494
        %vm496 = vcmp.le.f32.partialorder %v492, %v495
        %v497 = vsel %vm496, 0.0, %v490
        %v498 = vmul.f32 %v497, %v497
        %v499 = vadd.f32 1.0, %v498
        %v500 = vrsqrt.pop %v499
        %v501 = vmul.f32 %v497, %v500
        %v502 = vmul.f32 %v497, %v470
        %v503 = vsub.f32 %v468, %v502
        %v504 = vmul.f32 %v497, %v470
        %v505 = vadd.f32 %v472, %v504
        %s506 = smov [#allocation19]
        %507 = vst [vmem:[%s506] sm:$0xff] %v503
        %s508 = smov [#allocation20]
        %509 = vst [vmem:[%s508] sm:$0xff] %v505
        %s510 = smov %s465
        %511 = vst [vmem:[%s510] sm:$0xff] %v500
        %s512 = smov %s466
        %513 = vst [vmem:[%s512] sm:$0xff] %v501
        %s514 = smov [#allocation21]
        %v515 = vld [vmem:[%s514] ss:$0 sm:$0xff]
        %v516 = vlaneseq
        %v517 = vand.u32 %v516, 127
        %v518 = vmov %v517
        %v519 = vlaneseq
        %v520 = vshrl.u32 %v519, 7
        %v521 = vmov %v520
        %vm523 = vcmp.eq.s32.totalorder %v521, %v518
        %v524 = vsel %vm523, %v515, 0.0
        %525 = vadd.xlane.f32.xlu0 %v524
        %v526 = vpop.xlane.xlu0 %525
        %s527 = smov [#allocation23]
        %528 = vst [vmem:[%s527] sm:$0xff] %v526
        %s529 = smov [#allocation22]
        %v530 = vld [vmem:[%s529] ss:$0 sm:$0xff]
        %v531 = vlaneseq
        %v532 = vand.u32 %v531, 127
        %v533 = vmov %v532
        %v534 = vlaneseq
        %v535 = vshrl.u32 %v534, 7
        %v536 = vmov %v535
        %vm538 = vcmp.eq.s32.totalorder %v536, %v533
        %v539 = vsel %vm538, %v530, 0.0
        %540 = vadd.xlane.f32.xlu0 %v539
        %v541 = vpop.xlane.xlu0 %540
        %s542 = smov [#allocation24]
        %543 = vst [vmem:[%s542] sm:$0xff] %v541
        %s544 = smov [#allocation23]
        %v545 = vld [vmem:[%s544] sm:$0xff]
        %s546 = smov [#allocation24]
        %v547 = vld [vmem:[%s546] sm:$0xff]
        %s548 = smov [#allocation12]
        %s549 = smov [#allocation13]
        %s550 = smov [#allocation14]
        %s551 = smov [#allocation15]
        %v552 = vld [vmem:[%s548] sm:$0xff]
        %v553 = vld [vmem:[%s549] sm:$0xff]
        %v554 = vld [vmem:[%s550] sm:$0xff]
        %v555 = vld [vmem:[%s551] sm:$0xff]
        %v556 = vmul.f32 %v545, %v552
        %v557 = vmul.f32 %v547, %v554
        %v558 = vsub.f32 %v556, %v557
        %v559 = vmul.f32 %v545, %v553
        %v560 = vmul.f32 %v547, %v555
        %v561 = vsub.f32 %v559, %v560
        %v562 = vmul.f32 %v547, %v552
        %v563 = vmul.f32 %v545, %v554
        %v564 = vadd.f32 %v562, %v563
        %v565 = vmul.f32 %v547, %v553
        %v566 = vmul.f32 %v545, %v555
        %v567 = vadd.f32 %v565, %v566
        %568 = vst [vmem:[%s548] sm:$0xff] %v558
        %569 = vst [vmem:[%s549] sm:$0xff] %v561
        %570 = vst [vmem:[%s550] sm:$0xff] %v564
        %571 = vst [vmem:[%s551] sm:$0xff] %v567
        %s572 = smov [#allocation21]
        %v573 = vld [vmem:[%s572] ss:$0 sm:$0xff]
        %s574 = smov [#allocation22]
        %v575 = vld [vmem:[%s574] ss:$0 sm:$0xff]
        %s576 = smov [#allocation12]
        %s577 = smov [#allocation13]
        %s578 = smov [#allocation14]
        %s579 = smov [#allocation15]
        %v580 = vld [vmem:[%s576] sm:$0xff]
        %v581 = vld [vmem:[%s577] sm:$0xff]
        %v582 = vld [vmem:[%s578] sm:$0xff]
        %v583 = vld [vmem:[%s579] sm:$0xff]
        %v584 = vmul.f32 %v573, %v580
        %v585 = vmul.f32 %v575, %v581
        %v586 = vsub.f32 %v584, %v585
        %v587 = vmul.f32 %v575, %v580
        %v588 = vmul.f32 %v573, %v581
        %v589 = vadd.f32 %v587, %v588
        %v590 = vmul.f32 %v573, %v582
        %v591 = vmul.f32 %v575, %v583
        %v592 = vsub.f32 %v590, %v591
        %v593 = vmul.f32 %v575, %v582
        %v594 = vmul.f32 %v573, %v583
        %v595 = vadd.f32 %v593, %v594
        %596 = vst [vmem:[%s576] sm:$0xff] %v586
        %597 = vst [vmem:[%s577] sm:$0xff] %v589
        %598 = vst [vmem:[%s578] sm:$0xff] %v592
        %599 = vst [vmem:[%s579] sm:$0xff] %v595
        %s600 = smov [#allocation12]
        %s601 = smov [#allocation19]
        %v602 = vlaneseq
        %v603 = vand.u32 %v602, 127
        %v604 = vmov %v603
        %v605 = vlaneseq
        %v606 = vshrl.u32 %v605, 7
        %v607 = vmov %v606
        %v608 = vld [vmem:[%s601] ss:$0 sm:$0xff]
        %v609 = vld [vmem:[%s600] sm:$0xff]
        %vm612 = vcmp.eq.s32.totalorder %v607, %v604
        %v613 = vsel %vm612, %v608, %v609
        %614 = vst [vmem:[%s600] sm:$0xff] %v613
        %s615 = smov [#allocation13]
        %v616 = vlaneseq
        %v617 = vand.u32 %v616, 127
        %v618 = vmov %v617
        %v619 = vlaneseq
        %v620 = vshrl.u32 %v619, 7
        %v621 = vmov %v620
        %v622 = vld [vmem:[%s615] sm:$0xff]
        %vm625 = vcmp.eq.s32.totalorder %v621, %v618
        %v626 = vsel %vm625, 0.0, %v622
        %627 = vst [vmem:[%s615] sm:$0xff] %v626
        %s628 = smov [#allocation14]
        %v629 = vlaneseq
        %v630 = vand.u32 %v629, 127
        %v631 = vmov %v630
        %v632 = vlaneseq
        %v633 = vshrl.u32 %v632, 7
        %v634 = vmov %v633
        %v635 = vld [vmem:[%s628] sm:$0xff]
        %vm638 = vcmp.eq.s32.totalorder %v634, %v631
        %v639 = vsel %vm638, 0.0, %v635
        %640 = vst [vmem:[%s628] sm:$0xff] %v639
        %s641 = smov [#allocation15]
        %s642 = smov [#allocation20]
        %v643 = vlaneseq
        %v644 = vand.u32 %v643, 127
        %v645 = vmov %v644
        %v646 = vlaneseq
        %v647 = vshrl.u32 %v646, 7
        %v648 = vmov %v647
        %v649 = vld [vmem:[%s642] ss:$0 sm:$0xff]
        %v650 = vld [vmem:[%s641] sm:$0xff]
        %vm653 = vcmp.eq.s32.totalorder %v648, %v645
        %v654 = vsel %vm653, %v649, %v650
        %655 = vst [vmem:[%s641] sm:$0xff] %v654
        %s656 = smov [#allocation12]
        %s657 = smov [#allocation13]
        %v658 = vld [vmem:[%s657] sm:$0xff]
        %659 = vrot.lane.b32.xlu0 %v658, 1
        %v660 = vpop.permute.xlu0 %659
        %v661 = vld [vmem:[%s656] sm:$0xff]
        %v662 = vld [vmem:[%s656] sm:$0xff]
        %663 = vrot.lane.b32.xlu0 %v662, 1
        %v664 = vpop.permute.xlu0 %663
        %v665 = vlaneseq
        %v666 = vand.u32 %v665, 127
        %vm667 = vcmp.eq.s32.totalorder %v666, 0
        %v668 = vsel %vm667, %v662, %v664
        %v669 = vlaneseq
        %v670 = vand.u32 %v669, 127
        %vm671 = vcmp.eq.s32.totalorder %v670, 1
        %v672 = vsel %vm671, %v660, %v668
        %v673 = vlaneseq
        %v674 = vand.u32 %v673, 127
        %vm675 = vcmp.ge.s32.totalorder %v674, 0
        %vm676 = vcmp.lt.s32.totalorder %v674, 8
        %vm677 = vmand %vm675, %vm676
        %v678 = vsel %vm677, %v672, 0.0
        %v679 = vld [vmem:[%s657] sm:$0xff]
        %680 = vrot.lane.b32.xlu0 %v679, 127
        %v681 = vpop.permute.xlu0 %680
        %v682 = vlaneseq
        %v683 = vand.u32 %v682, 127
        %vm684 = vcmp.eq.s32.totalorder %v683, 7
        %v685 = vsel %vm684, %v661, %v681
        %686 = vst [vmem:[%s656] sm:$0xff] %v678
        %687 = vst [vmem:[%s657] sm:$0xff] %v685
        %s688 = smov [#allocation14]
        %s689 = smov [#allocation15]
        %v690 = vld [vmem:[%s689] sm:$0xff]
        %691 = vrot.lane.b32.xlu0 %v690, 1
        %v692 = vpop.permute.xlu0 %691
        %v693 = vld [vmem:[%s688] sm:$0xff]
        %v694 = vld [vmem:[%s688] sm:$0xff]
        %695 = vrot.lane.b32.xlu0 %v694, 1
        %v696 = vpop.permute.xlu0 %695
        %v697 = vlaneseq
        %v698 = vand.u32 %v697, 127
        %vm699 = vcmp.eq.s32.totalorder %v698, 0
        %v700 = vsel %vm699, %v694, %v696
        %v701 = vlaneseq
        %v702 = vand.u32 %v701, 127
        %vm703 = vcmp.eq.s32.totalorder %v702, 1
        %v704 = vsel %vm703, %v692, %v700
        %v705 = vlaneseq
        %v706 = vand.u32 %v705, 127
        %vm707 = vcmp.ge.s32.totalorder %v706, 0
        %vm708 = vcmp.lt.s32.totalorder %v706, 8
        %vm709 = vmand %vm707, %vm708
        %v710 = vsel %vm709, %v704, 0.0
        %v711 = vld [vmem:[%s689] sm:$0xff]
        %712 = vrot.lane.b32.xlu0 %v711, 127
        %v713 = vpop.permute.xlu0 %712
        %v714 = vlaneseq
        %v715 = vand.u32 %v714, 127
        %vm716 = vcmp.eq.s32.totalorder %v715, 7
        %v717 = vsel %vm716, %v693, %v713
        %718 = vst [vmem:[%s688] sm:$0xff] %v710
        %719 = vst [vmem:[%s689] sm:$0xff] %v717
        %s720 = smov [#allocation12]
        %s721 = smov [#allocation14]
        %v722 = vld [vmem:[%s720] ss:$0 sm:$0xff]
        %s724 = scalar_lea.vmem %s720, 4294967295
        %v725 = vld [vmem:[%s724] sm:$0xfe]
        %v726 = vlaneseq
        %v727 = vshrl.u32 %v726, 7
        %vm728 = vcmp.eq.s32.totalorder %v727, 0
        %v729 = vsel %vm728, %v722, %v725
        %s730 = scalar_lea.vmem %s720, 7
        %v731 = vld [vmem:[%s730] ss:$0 sm:$0xff]
        %732 = vst [vmem:[%s720] sm:$0xff] %v729
        %v733 = vld [vmem:[%s721] ss:$0 sm:$0xff]
        %s734 = scalar_lea.vmem %s720, 1
        %735 = vst [vmem:[%s734] sm:$0x1] %v733
        %s736 = scalar_lea.vmem %s721, 1
        %v737 = vld [vmem:[%s736] sm:$0x7f]
        %v738 = vlaneseq
        %v739 = vshrl.u32 %v738, 7
        %vm740 = vcmp.eq.s32.totalorder %v739, 7
        %v741 = vsel %vm740, %v731, %v737
        %v742 = vld [vmem:[%s721] ss:$0 sm:$0xff]
        %743 = vst [vmem:[%s721] sm:$0xff] %v741
        %s744 = smov [#allocation13]
        %s745 = smov [#allocation15]
        %v746 = vld [vmem:[%s744] ss:$0 sm:$0xff]
        %s748 = scalar_lea.vmem %s744, 4294967295
        %v749 = vld [vmem:[%s748] sm:$0xfe]
        %v750 = vlaneseq
        %v751 = vshrl.u32 %v750, 7
        %vm752 = vcmp.eq.s32.totalorder %v751, 0
        %v753 = vsel %vm752, %v746, %v749
        %s754 = scalar_lea.vmem %s744, 7
        %v755 = vld [vmem:[%s754] ss:$0 sm:$0xff]
        %756 = vst [vmem:[%s744] sm:$0xff] %v753
        %v757 = vld [vmem:[%s745] ss:$0 sm:$0xff]
        %s758 = scalar_lea.vmem %s744, 1
        %759 = vst [vmem:[%s758] sm:$0x1] %v757
        %s760 = scalar_lea.vmem %s745, 1
        %v761 = vld [vmem:[%s760] sm:$0x7f]
        %v762 = vlaneseq
        %v763 = vshrl.u32 %v762, 7
        %vm764 = vcmp.eq.s32.totalorder %v763, 7
        %v765 = vsel %vm764, %v755, %v761
        %v766 = vld [vmem:[%s745] ss:$0 sm:$0xff]
        %767 = vst [vmem:[%s745] sm:$0xff] %v765
        %s768 = smov [#allocation23]
        %v769 = vld [vmem:[%s768] sm:$0xff]
        %s770 = smov [#allocation24]
        %v771 = vld [vmem:[%s770] sm:$0xff]
        %s772 = smov [#allocation8]
        %s773 = smov [#allocation9]
        %s774 = smov [#allocation10]
        %s775 = smov [#allocation11]
        %v776 = vld [vmem:[%s772] sm:$0xff]
        %v777 = vld [vmem:[%s773] sm:$0xff]
        %v778 = vld [vmem:[%s774] sm:$0xff]
        %v779 = vld [vmem:[%s775] sm:$0xff]
        %v780 = vmul.f32 %v769, %v776
        %v781 = vmul.f32 %v771, %v778
        %v782 = vsub.f32 %v780, %v781
        %v783 = vmul.f32 %v769, %v777
        %v784 = vmul.f32 %v771, %v779
        %v785 = vsub.f32 %v783, %v784
        %v786 = vmul.f32 %v771, %v776
        %v787 = vmul.f32 %v769, %v778
        %v788 = vadd.f32 %v786, %v787
        %v789 = vmul.f32 %v771, %v777
        %v790 = vmul.f32 %v769, %v779
        %v791 = vadd.f32 %v789, %v790
        %792 = vst [vmem:[%s772] sm:$0xff] %v782
        %793 = vst [vmem:[%s773] sm:$0xff] %v785
        %794 = vst [vmem:[%s774] sm:$0xff] %v788
        %795 = vst [vmem:[%s775] sm:$0xff] %v791
        %s796 = smov [#allocation8]
        %s797 = smov [#allocation10]
        %v798 = vld [vmem:[%s796] ss:$0 sm:$0xff]
        %s800 = scalar_lea.vmem %s796, 4294967295
        %v801 = vld [vmem:[%s800] sm:$0xfe]
        %v802 = vlaneseq
        %v803 = vshrl.u32 %v802, 7
        %vm804 = vcmp.eq.s32.totalorder %v803, 0
        %v805 = vsel %vm804, %v798, %v801
        %s806 = scalar_lea.vmem %s796, 7
        %v807 = vld [vmem:[%s806] ss:$0 sm:$0xff]
        %808 = vst [vmem:[%s796] sm:$0xff] %v805
        %v809 = vld [vmem:[%s797] ss:$0 sm:$0xff]
        %s810 = scalar_lea.vmem %s796, 1
        %811 = vst [vmem:[%s810] sm:$0x1] %v809
        %s812 = scalar_lea.vmem %s797, 1
        %v813 = vld [vmem:[%s812] sm:$0x7f]
        %v814 = vlaneseq
        %v815 = vshrl.u32 %v814, 7
        %vm816 = vcmp.eq.s32.totalorder %v815, 7
        %v817 = vsel %vm816, %v807, %v813
        %v818 = vld [vmem:[%s797] ss:$0 sm:$0xff]
        %819 = vst [vmem:[%s797] sm:$0xff] %v817
        %s820 = smov [#allocation9]
        %s821 = smov [#allocation11]
        %v822 = vld [vmem:[%s820] ss:$0 sm:$0xff]
        %s824 = scalar_lea.vmem %s820, 4294967295
        %v825 = vld [vmem:[%s824] sm:$0xfe]
        %v826 = vlaneseq
        %v827 = vshrl.u32 %v826, 7
        %vm828 = vcmp.eq.s32.totalorder %v827, 0
        %v829 = vsel %vm828, %v822, %v825
        %s830 = scalar_lea.vmem %s820, 7
        %v831 = vld [vmem:[%s830] ss:$0 sm:$0xff]
        %832 = vst [vmem:[%s820] sm:$0xff] %v829
        %v833 = vld [vmem:[%s821] ss:$0 sm:$0xff]
        %s834 = scalar_lea.vmem %s820, 1
        %835 = vst [vmem:[%s834] sm:$0x1] %v833
        %s836 = scalar_lea.vmem %s821, 1
        %v837 = vld [vmem:[%s836] sm:$0x7f]
        %v838 = vlaneseq
        %v839 = vshrl.u32 %v838, 7
        %vm840 = vcmp.eq.s32.totalorder %v839, 7
        %v841 = vsel %vm840, %v831, %v837
        %v842 = vld [vmem:[%s821] ss:$0 sm:$0xff]
        %843 = vst [vmem:[%s821] sm:$0xff] %v841
      $region101: #{custom-call.2} parent=93 // loop_footer
        %s404 = sadd.s32 1, %s400
      $region102: #{custom-call.2} parent=93 // loop_footer_branch
        %399 = sbr.rel target = $region98
      $region103: #{custom-call.2} parent=93 // loop_exit
        _
      %s844 = sadd.s32 %s302, 1
    $region94: #{custom-call.2} parent=1 // loop_footer
      _
    $region95: #{custom-call.2} parent=1 // loop_footer_branch
      %301 = sbr.rel target = $region91
    $region96: #{custom-call.2} parent=1 // loop_exit
      _
    %s847 = smov [#allocation12]
    %s848 = smov [#allocation4]
    %v849 = vlaneseq
    %v850 = vand.u32 %v849, 127
    %v851 = vmov %v850
    %v852 = vlaneseq
    %v853 = vshrl.u32 %v852, 7
    %v854 = vmov %v853
    %v855 = vld [vmem:[%s847] sm:$0xff]
    %vm858 = vcmp.eq.s32.totalorder %v854, %v851
    %v859 = vsel %vm858, %v855, 0.0
    %v860 = vrot.slane %v859, 4
    %v861 = vadd.f32 %v859, %v860
    %v862 = vrot.slane %v861, 2
    %v863 = vadd.f32 %v861, %v862
    %v864 = vrot.slane %v863, 1
    %v865 = vadd.f32 %v863, %v864
    %866 = vst [vmem:[%s848] sm:$0x1] %v865
    %s867 = smov [#allocation15]
    %s868 = smov [#allocation6]
    %v869 = vlaneseq
    %v870 = vand.u32 %v869, 127
    %v871 = vmov %v870
    %v872 = vlaneseq
    %v873 = vshrl.u32 %v872, 7
    %v874 = vmov %v873
    %v875 = vld [vmem:[%s867] sm:$0xff]
    %vm878 = vcmp.eq.s32.totalorder %v874, %v871
    %v879 = vsel %vm878, %v875, 0.0
    %v880 = vrot.slane %v879, 4
    %v881 = vadd.f32 %v879, %v880
    %v882 = vrot.slane %v881, 2
    %v883 = vadd.f32 %v881, %v882
    %v884 = vrot.slane %v883, 1
    %v885 = vadd.f32 %v883, %v884
    %886 = vst [vmem:[%s868] sm:$0x1] %v885
    %s888 = sshllo.u32 0, 1
    %v890 = vld [vmem:[#allocation4] sm:%s888]
    %s891 = sshllo.u32 0, 1
    %892 = vst [vmem:[#allocation5] sm:%s891] %v890
    %s894 = sshllo.u32 0, 1
    %v896 = vld [vmem:[#allocation6] sm:%s894]
    %s897 = sshllo.u32 0, 1
    %898 = vst [vmem:[#allocation7] sm:%s897] %v896
    // Predicated region
    $region104: #{custom-call.2} parent=1 // pred_check
      _
    $region105: #{custom-call.2} parent=1 // pred_check_branch
      %900 = sbr.rel (0) target = $region107
    $region106: #{custom-call.2} parent=1 // pred_region
      %p902 = scmp.gt.s32.totalorder 1, 0
      // Predicated region
      $region108: #{custom-call.2} parent=106 // pred_check
        %p903 = pneg %p902
      $region109: #{custom-call.2} parent=106 // pred_check_branch
        %905 = sbr.rel (%p903) target = $region111
      $region110: #{custom-call.2} parent=106 // pred_region
        %s906 = sshra.s32 1, 3
        %p907 = scmp.gt.s32.totalorder %s906, 0
        // Predicated region
        $region112: #{custom-call.2} parent=110 // pred_check
          %p908 = pneg %p907
        $region113: #{custom-call.2} parent=110 // pred_check_branch
          %910 = sbr.rel (%p908) target = $region115
        $region114: #{custom-call.2} parent=110 // pred_region
          %s911 = ssub.s32 %s906, 1
          %s912 = smul.u32 %s911, 128
          %s913 = sshra.s32 %s912, 4
          %s914 = scalar_lea.vmem [#allocation5], %s913
          %v915 = vld [vmem:[#allocation5] sm:$0xff]
          // While loop
          $region116: #{custom-call.2} parent=114 // loop_pre_header
            _
          $region117: #{custom-call.2} parent=114 // loop_header
            %s916 = sphi [#allocation5], %s938
            %s917 = sphi %s4, %s939
            %v918 = vphi %v915, %v940
            %s919 = ssub.s32 %s914, 64
            %p920 = scmp.gt.s32.totalorder %s916, %s919
          $region118: #{custom-call.2} parent=114 // loop_header_branch
            %922 = sbr.rel (%p920) target = $region122
          $region119: #{custom-call.2} parent=114 // loop_body
            %923 = vst [vmem:[%s917] sm:$0xff] %v918
            %v924 = vld [vmem:[%s916 + $0x8] sm:$0xff]
            %925 = vst [vmem:[%s917 + $0x8] sm:$0xff] %v924
            %v926 = vld [vmem:[%s916 + $0x10] sm:$0xff]
            %927 = vst [vmem:[%s917 + $0x10] sm:$0xff] %v926
            %v928 = vld [vmem:[%s916 + $0x18] sm:$0xff]
            %929 = vst [vmem:[%s917 + $0x18] sm:$0xff] %v928
            %v930 = vld [vmem:[%s916 + $0x20] sm:$0xff]
            %931 = vst [vmem:[%s917 + $0x20] sm:$0xff] %v930
            %v932 = vld [vmem:[%s916 + $0x28] sm:$0xff]
            %933 = vst [vmem:[%s917 + $0x28] sm:$0xff] %v932
            %v934 = vld [vmem:[%s916 + $0x30] sm:$0xff]
            %935 = vst [vmem:[%s917 + $0x30] sm:$0xff] %v934
            %v936 = vld [vmem:[%s916 + $0x38] sm:$0xff]
            %937 = vst [vmem:[%s917 + $0x38] sm:$0xff] %v936
          $region120: #{custom-call.2} parent=114 // loop_footer
            %s938 = scalar_lea.vmem %s916, 64
            %s939 = scalar_lea.vmem %s917, 64
            %v940 = vld [vmem:[%s916 + $0x40] sm:$0xff]
          $region121: #{custom-call.2} parent=114 // loop_footer_branch
            %941 = sbr.rel target = $region117
          $region122: #{custom-call.2} parent=114 // loop_exit
            _
          // While loop
          $region123: #{custom-call.2} parent=114 // loop_pre_header
            _
          $region124: #{custom-call.2} parent=114 // loop_header
            %s942 = sphi %s916, %s950
            %s943 = sphi %s917, %s951
            %v944 = vphi %v918, %v944
            %p945 = scmp.gt.s32.totalorder %s942, %s914
          $region125: #{custom-call.2} parent=114 // loop_header_branch
            %947 = sbr.rel (%p945) target = $region129
          $region126: #{custom-call.2} parent=114 // loop_body
            %v948 = vld [vmem:[%s942] sm:$0xff]
            %949 = vst [vmem:[%s943] sm:$0xff] %v948
          $region127: #{custom-call.2} parent=114 // loop_footer
            %s950 = scalar_lea.vmem %s942, 8
            %s951 = scalar_lea.vmem %s943, 8
          $region128: #{custom-call.2} parent=114 // loop_footer_branch
            %952 = sbr.rel target = $region124
          $region129: #{custom-call.2} parent=114 // loop_exit
            _
        $region115: #{custom-call.2} parent=110 // pred_fallthru
          _
        %s953 = sand.u32 1, 7
        %s954 = sshllo.u32 0, %s953
        %s955 = smul.u32 %s906, 128
        %s956 = sshra.s32 %s955, 4
        %s957 = scalar_lea.vmem %s4, %s956
        %s958 = smul.u32 %s906, 128
        %s959 = sshra.s32 %s958, 4
        %s960 = scalar_lea.vmem [#allocation5], %s959
        %v961 = vld [vmem:[%s960] sm:%s954]
        %962 = vst [vmem:[%s957] sm:%s954] %v961
      $region111: #{custom-call.2} parent=106 // pred_fallthru
        _
    $region107: #{custom-call.2} parent=1 // pred_fallthru
      _
    // Predicated region
    $region130: #{custom-call.2} parent=1 // pred_check
      _
    $region131: #{custom-call.2} parent=1 // pred_check_branch
      %964 = sbr.rel (0) target = $region133
    $region132: #{custom-call.2} parent=1 // pred_region
      %p966 = scmp.gt.s32.totalorder 1, 0
      // Predicated region
      $region134: #{custom-call.2} parent=132 // pred_check
        %p967 = pneg %p966
      $region135: #{custom-call.2} parent=132 // pred_check_branch
        %969 = sbr.rel (%p967) target = $region137
      $region136: #{custom-call.2} parent=132 // pred_region
        %s970 = sshra.s32 1, 3
        %p971 = scmp.gt.s32.totalorder %s970, 0
        // Predicated region
        $region138: #{custom-call.2} parent=136 // pred_check
          %p972 = pneg %p971
        $region139: #{custom-call.2} parent=136 // pred_check_branch
          %974 = sbr.rel (%p972) target = $region141
        $region140: #{custom-call.2} parent=136 // pred_region
          %s975 = ssub.s32 %s970, 1
          %s976 = smul.u32 %s975, 128
          %s977 = sshra.s32 %s976, 4
          %s978 = scalar_lea.vmem [#allocation7], %s977
          %v979 = vld [vmem:[#allocation7] sm:$0xff]
          // While loop
          $region142: #{custom-call.2} parent=140 // loop_pre_header
            _
          $region143: #{custom-call.2} parent=140 // loop_header
            %s980 = sphi [#allocation7], %s1002
            %s981 = sphi %s5, %s1003
            %v982 = vphi %v979, %v1004
            %s983 = ssub.s32 %s978, 64
            %p984 = scmp.gt.s32.totalorder %s980, %s983
          $region144: #{custom-call.2} parent=140 // loop_header_branch
            %986 = sbr.rel (%p984) target = $region148
          $region145: #{custom-call.2} parent=140 // loop_body
            %987 = vst [vmem:[%s981] sm:$0xff] %v982
            %v988 = vld [vmem:[%s980 + $0x8] sm:$0xff]
            %989 = vst [vmem:[%s981 + $0x8] sm:$0xff] %v988
            %v990 = vld [vmem:[%s980 + $0x10] sm:$0xff]
            %991 = vst [vmem:[%s981 + $0x10] sm:$0xff] %v990
            %v992 = vld [vmem:[%s980 + $0x18] sm:$0xff]
            %993 = vst [vmem:[%s981 + $0x18] sm:$0xff] %v992
            %v994 = vld [vmem:[%s980 + $0x20] sm:$0xff]
            %995 = vst [vmem:[%s981 + $0x20] sm:$0xff] %v994
            %v996 = vld [vmem:[%s980 + $0x28] sm:$0xff]
            %997 = vst [vmem:[%s981 + $0x28] sm:$0xff] %v996
            %v998 = vld [vmem:[%s980 + $0x30] sm:$0xff]
            %999 = vst [vmem:[%s981 + $0x30] sm:$0xff] %v998
            %v1000 = vld [vmem:[%s980 + $0x38] sm:$0xff]
            %1001 = vst [vmem:[%s981 + $0x38] sm:$0xff] %v1000
          $region146: #{custom-call.2} parent=140 // loop_footer
            %s1002 = scalar_lea.vmem %s980, 64
            %s1003 = scalar_lea.vmem %s981, 64
            %v1004 = vld [vmem:[%s980 + $0x40] sm:$0xff]
          $region147: #{custom-call.2} parent=140 // loop_footer_branch
            %1005 = sbr.rel target = $region143
          $region148: #{custom-call.2} parent=140 // loop_exit
            _
          // While loop
          $region149: #{custom-call.2} parent=140 // loop_pre_header
            _
          $region150: #{custom-call.2} parent=140 // loop_header
            %s1006 = sphi %s980, %s1014
            %s1007 = sphi %s981, %s1015
            %v1008 = vphi %v982, %v1008
            %p1009 = scmp.gt.s32.totalorder %s1006, %s978
          $region151: #{custom-call.2} parent=140 // loop_header_branch
            %1011 = sbr.rel (%p1009) target = $region155
          $region152: #{custom-call.2} parent=140 // loop_body
            %v1012 = vld [vmem:[%s1006] sm:$0xff]
            %1013 = vst [vmem:[%s1007] sm:$0xff] %v1012
          $region153: #{custom-call.2} parent=140 // loop_footer
            %s1014 = scalar_lea.vmem %s1006, 8
            %s1015 = scalar_lea.vmem %s1007, 8
          $region154: #{custom-call.2} parent=140 // loop_footer_branch
            %1016 = sbr.rel target = $region150
          $region155: #{custom-call.2} parent=140 // loop_exit
            _
        $region141: #{custom-call.2} parent=136 // pred_fallthru
          _
        %s1017 = sand.u32 1, 7
        %s1018 = sshllo.u32 0, %s1017
        %s1019 = smul.u32 %s970, 128
        %s1020 = sshra.s32 %s1019, 4
        %s1021 = scalar_lea.vmem %s5, %s1020
        %s1022 = smul.u32 %s970, 128
        %s1023 = sshra.s32 %s1022, 4
        %s1024 = scalar_lea.vmem [#allocation7], %s1023
        %v1025 = vld [vmem:[%s1024] sm:%s1018]
        %1026 = vst [vmem:[%s1021] sm:%s1018] %v1025
      $region137: #{custom-call.2} parent=132 // pred_fallthru
        _
    $region133: #{custom-call.2} parent=1 // pred_fallthru
      _
    %p1028 = scmp.gt.s32.totalorder 8, 0
    // Predicated region
    $region156: #{custom-call.2} parent=1 // pred_check
      %p1029 = pneg %p1028
    $region157: #{custom-call.2} parent=1 // pred_check_branch
      %1031 = sbr.rel (%p1029) target = $region159
    $region158: #{custom-call.2} parent=1 // pred_region
      %s1032 = sshra.s32 8, 3
      %p1033 = scmp.gt.s32.totalorder %s1032, 0
      // Predicated region
      $region160: #{custom-call.2} parent=158 // pred_check
        %p1034 = pneg %p1033
      $region161: #{custom-call.2} parent=158 // pred_check_branch
        %1036 = sbr.rel (%p1034) target = $region163
      $region162: #{custom-call.2} parent=158 // pred_region
        %s1037 = ssub.s32 %s1032, 1
        %s1038 = smul.u32 %s1037, 128
        %s1039 = sshra.s32 %s1038, 4
        %s1040 = scalar_lea.vmem [#allocation8], %s1039
        %v1041 = vld [vmem:[#allocation8] sm:$0xff]
        // While loop
        $region164: #{custom-call.2} parent=162 // loop_pre_header
          _
        $region165: #{custom-call.2} parent=162 // loop_header
          %s1042 = sphi [#allocation8], %s1064
          %s1043 = sphi %s6, %s1065
          %v1044 = vphi %v1041, %v1066
          %s1045 = ssub.s32 %s1040, 64
          %p1046 = scmp.gt.s32.totalorder %s1042, %s1045
        $region166: #{custom-call.2} parent=162 // loop_header_branch
          %1048 = sbr.rel (%p1046) target = $region170
        $region167: #{custom-call.2} parent=162 // loop_body
          %1049 = vst [vmem:[%s1043] sm:$0xff] %v1044
          %v1050 = vld [vmem:[%s1042 + $0x8] sm:$0xff]
          %1051 = vst [vmem:[%s1043 + $0x8] sm:$0xff] %v1050
          %v1052 = vld [vmem:[%s1042 + $0x10] sm:$0xff]
          %1053 = vst [vmem:[%s1043 + $0x10] sm:$0xff] %v1052
          %v1054 = vld [vmem:[%s1042 + $0x18] sm:$0xff]
          %1055 = vst [vmem:[%s1043 + $0x18] sm:$0xff] %v1054
          %v1056 = vld [vmem:[%s1042 + $0x20] sm:$0xff]
          %1057 = vst [vmem:[%s1043 + $0x20] sm:$0xff] %v1056
          %v1058 = vld [vmem:[%s1042 + $0x28] sm:$0xff]
          %1059 = vst [vmem:[%s1043 + $0x28] sm:$0xff] %v1058
          %v1060 = vld [vmem:[%s1042 + $0x30] sm:$0xff]
          %1061 = vst [vmem:[%s1043 + $0x30] sm:$0xff] %v1060
          %v1062 = vld [vmem:[%s1042 + $0x38] sm:$0xff]
          %1063 = vst [vmem:[%s1043 + $0x38] sm:$0xff] %v1062
        $region168: #{custom-call.2} parent=162 // loop_footer
          %s1064 = scalar_lea.vmem %s1042, 64
          %s1065 = scalar_lea.vmem %s1043, 64
          %v1066 = vld [vmem:[%s1042 + $0x40] sm:$0xff]
        $region169: #{custom-call.2} parent=162 // loop_footer_branch
          %1067 = sbr.rel target = $region165
        $region170: #{custom-call.2} parent=162 // loop_exit
          _
        // While loop
        $region171: #{custom-call.2} parent=162 // loop_pre_header
          _
        $region172: #{custom-call.2} parent=162 // loop_header
          %s1068 = sphi %s1042, %s1076
          %s1069 = sphi %s1043, %s1077
          %v1070 = vphi %v1044, %v1070
          %p1071 = scmp.gt.s32.totalorder %s1068, %s1040
        $region173: #{custom-call.2} parent=162 // loop_header_branch
          %1073 = sbr.rel (%p1071) target = $region177
        $region174: #{custom-call.2} parent=162 // loop_body
          %v1074 = vld [vmem:[%s1068] sm:$0xff]
          %1075 = vst [vmem:[%s1069] sm:$0xff] %v1074
        $region175: #{custom-call.2} parent=162 // loop_footer
          %s1076 = scalar_lea.vmem %s1068, 8
          %s1077 = scalar_lea.vmem %s1069, 8
        $region176: #{custom-call.2} parent=162 // loop_footer_branch
          %1078 = sbr.rel target = $region172
        $region177: #{custom-call.2} parent=162 // loop_exit
          _
      $region163: #{custom-call.2} parent=158 // pred_fallthru
        _
      %s1079 = sand.u32 8, 7
      %s1080 = sshllo.u32 0, %s1079
      %s1081 = smul.u32 %s1032, 128
      %s1082 = sshra.s32 %s1081, 4
      %s1083 = scalar_lea.vmem %s6, %s1082
      %s1084 = smul.u32 %s1032, 128
      %s1085 = sshra.s32 %s1084, 4
      %s1086 = scalar_lea.vmem [#allocation8], %s1085
      %v1087 = vld [vmem:[%s1086] sm:%s1080]
      %1088 = vst [vmem:[%s1083] sm:%s1080] %v1087
    $region159: #{custom-call.2} parent=1 // pred_fallthru
      _
    %p1090 = scmp.gt.s32.totalorder 8, 0
    // Predicated region
    $region178: #{custom-call.2} parent=1 // pred_check
      %p1091 = pneg %p1090
    $region179: #{custom-call.2} parent=1 // pred_check_branch
      %1093 = sbr.rel (%p1091) target = $region181
    $region180: #{custom-call.2} parent=1 // pred_region
      %s1094 = sshra.s32 8, 3
      %p1095 = scmp.gt.s32.totalorder %s1094, 0
      // Predicated region
      $region182: #{custom-call.2} parent=180 // pred_check
        %p1096 = pneg %p1095
      $region183: #{custom-call.2} parent=180 // pred_check_branch
        %1098 = sbr.rel (%p1096) target = $region185
      $region184: #{custom-call.2} parent=180 // pred_region
        %s1099 = ssub.s32 %s1094, 1
        %s1100 = smul.u32 %s1099, 128
        %s1101 = sshra.s32 %s1100, 4
        %s1102 = scalar_lea.vmem [#allocation9], %s1101
        %v1103 = vld [vmem:[#allocation9] sm:$0xff]
        // While loop
        $region186: #{custom-call.2} parent=184 // loop_pre_header
          _
        $region187: #{custom-call.2} parent=184 // loop_header
          %s1104 = sphi [#allocation9], %s1126
          %s1105 = sphi %s7, %s1127
          %v1106 = vphi %v1103, %v1128
          %s1107 = ssub.s32 %s1102, 64
          %p1108 = scmp.gt.s32.totalorder %s1104, %s1107
        $region188: #{custom-call.2} parent=184 // loop_header_branch
          %1110 = sbr.rel (%p1108) target = $region192
        $region189: #{custom-call.2} parent=184 // loop_body
          %1111 = vst [vmem:[%s1105] sm:$0xff] %v1106
          %v1112 = vld [vmem:[%s1104 + $0x8] sm:$0xff]
          %1113 = vst [vmem:[%s1105 + $0x8] sm:$0xff] %v1112
          %v1114 = vld [vmem:[%s1104 + $0x10] sm:$0xff]
          %1115 = vst [vmem:[%s1105 + $0x10] sm:$0xff] %v1114
          %v1116 = vld [vmem:[%s1104 + $0x18] sm:$0xff]
          %1117 = vst [vmem:[%s1105 + $0x18] sm:$0xff] %v1116
          %v1118 = vld [vmem:[%s1104 + $0x20] sm:$0xff]
          %1119 = vst [vmem:[%s1105 + $0x20] sm:$0xff] %v1118
          %v1120 = vld [vmem:[%s1104 + $0x28] sm:$0xff]
          %1121 = vst [vmem:[%s1105 + $0x28] sm:$0xff] %v1120
          %v1122 = vld [vmem:[%s1104 + $0x30] sm:$0xff]
          %1123 = vst [vmem:[%s1105 + $0x30] sm:$0xff] %v1122
          %v1124 = vld [vmem:[%s1104 + $0x38] sm:$0xff]
          %1125 = vst [vmem:[%s1105 + $0x38] sm:$0xff] %v1124
        $region190: #{custom-call.2} parent=184 // loop_footer
          %s1126 = scalar_lea.vmem %s1104, 64
          %s1127 = scalar_lea.vmem %s1105, 64
          %v1128 = vld [vmem:[%s1104 + $0x40] sm:$0xff]
        $region191: #{custom-call.2} parent=184 // loop_footer_branch
          %1129 = sbr.rel target = $region187
        $region192: #{custom-call.2} parent=184 // loop_exit
          _
        // While loop
        $region193: #{custom-call.2} parent=184 // loop_pre_header
          _
        $region194: #{custom-call.2} parent=184 // loop_header
          %s1130 = sphi %s1104, %s1138
          %s1131 = sphi %s1105, %s1139
          %v1132 = vphi %v1106, %v1132
          %p1133 = scmp.gt.s32.totalorder %s1130, %s1102
        $region195: #{custom-call.2} parent=184 // loop_header_branch
          %1135 = sbr.rel (%p1133) target = $region199
        $region196: #{custom-call.2} parent=184 // loop_body
          %v1136 = vld [vmem:[%s1130] sm:$0xff]
          %1137 = vst [vmem:[%s1131] sm:$0xff] %v1136
        $region197: #{custom-call.2} parent=184 // loop_footer
          %s1138 = scalar_lea.vmem %s1130, 8
          %s1139 = scalar_lea.vmem %s1131, 8
        $region198: #{custom-call.2} parent=184 // loop_footer_branch
          %1140 = sbr.rel target = $region194
        $region199: #{custom-call.2} parent=184 // loop_exit
          _
      $region185: #{custom-call.2} parent=180 // pred_fallthru
        _
      %s1141 = sand.u32 8, 7
      %s1142 = sshllo.u32 0, %s1141
      %s1143 = smul.u32 %s1094, 128
      %s1144 = sshra.s32 %s1143, 4
      %s1145 = scalar_lea.vmem %s7, %s1144
      %s1146 = smul.u32 %s1094, 128
      %s1147 = sshra.s32 %s1146, 4
      %s1148 = scalar_lea.vmem [#allocation9], %s1147
      %v1149 = vld [vmem:[%s1148] sm:%s1142]
      %1150 = vst [vmem:[%s1145] sm:%s1142] %v1149
    $region181: #{custom-call.2} parent=1 // pred_fallthru
      _
    %p1152 = scmp.gt.s32.totalorder 8, 0
    // Predicated region
    $region200: #{custom-call.2} parent=1 // pred_check
      %p1153 = pneg %p1152
    $region201: #{custom-call.2} parent=1 // pred_check_branch
      %1155 = sbr.rel (%p1153) target = $region203
    $region202: #{custom-call.2} parent=1 // pred_region
      %s1156 = sshra.s32 8, 3
      %p1157 = scmp.gt.s32.totalorder %s1156, 0
      // Predicated region
      $region204: #{custom-call.2} parent=202 // pred_check
        %p1158 = pneg %p1157
      $region205: #{custom-call.2} parent=202 // pred_check_branch
        %1160 = sbr.rel (%p1158) target = $region207
      $region206: #{custom-call.2} parent=202 // pred_region
        %s1161 = ssub.s32 %s1156, 1
        %s1162 = smul.u32 %s1161, 128
        %s1163 = sshra.s32 %s1162, 4
        %s1164 = scalar_lea.vmem [#allocation10], %s1163
        %v1165 = vld [vmem:[#allocation10] sm:$0xff]
        // While loop
        $region208: #{custom-call.2} parent=206 // loop_pre_header
          _
        $region209: #{custom-call.2} parent=206 // loop_header
          %s1166 = sphi [#allocation10], %s1188
          %s1167 = sphi %s8, %s1189
          %v1168 = vphi %v1165, %v1190
          %s1169 = ssub.s32 %s1164, 64
          %p1170 = scmp.gt.s32.totalorder %s1166, %s1169
        $region210: #{custom-call.2} parent=206 // loop_header_branch
          %1172 = sbr.rel (%p1170) target = $region214
        $region211: #{custom-call.2} parent=206 // loop_body
          %1173 = vst [vmem:[%s1167] sm:$0xff] %v1168
          %v1174 = vld [vmem:[%s1166 + $0x8] sm:$0xff]
          %1175 = vst [vmem:[%s1167 + $0x8] sm:$0xff] %v1174
          %v1176 = vld [vmem:[%s1166 + $0x10] sm:$0xff]
          %1177 = vst [vmem:[%s1167 + $0x10] sm:$0xff] %v1176
          %v1178 = vld [vmem:[%s1166 + $0x18] sm:$0xff]
          %1179 = vst [vmem:[%s1167 + $0x18] sm:$0xff] %v1178
          %v1180 = vld [vmem:[%s1166 + $0x20] sm:$0xff]
          %1181 = vst [vmem:[%s1167 + $0x20] sm:$0xff] %v1180
          %v1182 = vld [vmem:[%s1166 + $0x28] sm:$0xff]
          %1183 = vst [vmem:[%s1167 + $0x28] sm:$0xff] %v1182
          %v1184 = vld [vmem:[%s1166 + $0x30] sm:$0xff]
          %1185 = vst [vmem:[%s1167 + $0x30] sm:$0xff] %v1184
          %v1186 = vld [vmem:[%s1166 + $0x38] sm:$0xff]
          %1187 = vst [vmem:[%s1167 + $0x38] sm:$0xff] %v1186
        $region212: #{custom-call.2} parent=206 // loop_footer
          %s1188 = scalar_lea.vmem %s1166, 64
          %s1189 = scalar_lea.vmem %s1167, 64
          %v1190 = vld [vmem:[%s1166 + $0x40] sm:$0xff]
        $region213: #{custom-call.2} parent=206 // loop_footer_branch
          %1191 = sbr.rel target = $region209
        $region214: #{custom-call.2} parent=206 // loop_exit
          _
        // While loop
        $region215: #{custom-call.2} parent=206 // loop_pre_header
          _
        $region216: #{custom-call.2} parent=206 // loop_header
          %s1192 = sphi %s1166, %s1200
          %s1193 = sphi %s1167, %s1201
          %v1194 = vphi %v1168, %v1194
          %p1195 = scmp.gt.s32.totalorder %s1192, %s1164
        $region217: #{custom-call.2} parent=206 // loop_header_branch
          %1197 = sbr.rel (%p1195) target = $region221
        $region218: #{custom-call.2} parent=206 // loop_body
          %v1198 = vld [vmem:[%s1192] sm:$0xff]
          %1199 = vst [vmem:[%s1193] sm:$0xff] %v1198
        $region219: #{custom-call.2} parent=206 // loop_footer
          %s1200 = scalar_lea.vmem %s1192, 8
          %s1201 = scalar_lea.vmem %s1193, 8
        $region220: #{custom-call.2} parent=206 // loop_footer_branch
          %1202 = sbr.rel target = $region216
        $region221: #{custom-call.2} parent=206 // loop_exit
          _
      $region207: #{custom-call.2} parent=202 // pred_fallthru
        _
      %s1203 = sand.u32 8, 7
      %s1204 = sshllo.u32 0, %s1203
      %s1205 = smul.u32 %s1156, 128
      %s1206 = sshra.s32 %s1205, 4
      %s1207 = scalar_lea.vmem %s8, %s1206
      %s1208 = smul.u32 %s1156, 128
      %s1209 = sshra.s32 %s1208, 4
      %s1210 = scalar_lea.vmem [#allocation10], %s1209
      %v1211 = vld [vmem:[%s1210] sm:%s1204]
      %1212 = vst [vmem:[%s1207] sm:%s1204] %v1211
    $region203: #{custom-call.2} parent=1 // pred_fallthru
      _
    %p1214 = scmp.gt.s32.totalorder 8, 0
    // Predicated region
    $region222: #{custom-call.2} parent=1 // pred_check
      %p1215 = pneg %p1214
    $region223: #{custom-call.2} parent=1 // pred_check_branch
      %1217 = sbr.rel (%p1215) target = $region225
    $region224: #{custom-call.2} parent=1 // pred_region
      %s1218 = sshra.s32 8, 3
      %p1219 = scmp.gt.s32.totalorder %s1218, 0
      // Predicated region
      $region226: #{custom-call.2} parent=224 // pred_check
        %p1220 = pneg %p1219
      $region227: #{custom-call.2} parent=224 // pred_check_branch
        %1222 = sbr.rel (%p1220) target = $region229
      $region228: #{custom-call.2} parent=224 // pred_region
        %s1223 = ssub.s32 %s1218, 1
        %s1224 = smul.u32 %s1223, 128
        %s1225 = sshra.s32 %s1224, 4
        %s1226 = scalar_lea.vmem [#allocation11], %s1225
        %v1227 = vld [vmem:[#allocation11] sm:$0xff]
        // While loop
        $region230: #{custom-call.2} parent=228 // loop_pre_header
          _
        $region231: #{custom-call.2} parent=228 // loop_header
          %s1228 = sphi [#allocation11], %s1250
          %s1229 = sphi %s9, %s1251
          %v1230 = vphi %v1227, %v1252
          %s1231 = ssub.s32 %s1226, 64
          %p1232 = scmp.gt.s32.totalorder %s1228, %s1231
        $region232: #{custom-call.2} parent=228 // loop_header_branch
          %1234 = sbr.rel (%p1232) target = $region236
        $region233: #{custom-call.2} parent=228 // loop_body
          %1235 = vst [vmem:[%s1229] sm:$0xff] %v1230
          %v1236 = vld [vmem:[%s1228 + $0x8] sm:$0xff]
          %1237 = vst [vmem:[%s1229 + $0x8] sm:$0xff] %v1236
          %v1238 = vld [vmem:[%s1228 + $0x10] sm:$0xff]
          %1239 = vst [vmem:[%s1229 + $0x10] sm:$0xff] %v1238
          %v1240 = vld [vmem:[%s1228 + $0x18] sm:$0xff]
          %1241 = vst [vmem:[%s1229 + $0x18] sm:$0xff] %v1240
          %v1242 = vld [vmem:[%s1228 + $0x20] sm:$0xff]
          %1243 = vst [vmem:[%s1229 + $0x20] sm:$0xff] %v1242
          %v1244 = vld [vmem:[%s1228 + $0x28] sm:$0xff]
          %1245 = vst [vmem:[%s1229 + $0x28] sm:$0xff] %v1244
          %v1246 = vld [vmem:[%s1228 + $0x30] sm:$0xff]
          %1247 = vst [vmem:[%s1229 + $0x30] sm:$0xff] %v1246
          %v1248 = vld [vmem:[%s1228 + $0x38] sm:$0xff]
          %1249 = vst [vmem:[%s1229 + $0x38] sm:$0xff] %v1248
        $region234: #{custom-call.2} parent=228 // loop_footer
          %s1250 = scalar_lea.vmem %s1228, 64
          %s1251 = scalar_lea.vmem %s1229, 64
          %v1252 = vld [vmem:[%s1228 + $0x40] sm:$0xff]
        $region235: #{custom-call.2} parent=228 // loop_footer_branch
          %1253 = sbr.rel target = $region231
        $region236: #{custom-call.2} parent=228 // loop_exit
          _
        // While loop
        $region237: #{custom-call.2} parent=228 // loop_pre_header
          _
        $region238: #{custom-call.2} parent=228 // loop_header
          %s1254 = sphi %s1228, %s1262
          %s1255 = sphi %s1229, %s1263
          %v1256 = vphi %v1230, %v1256
          %p1257 = scmp.gt.s32.totalorder %s1254, %s1226
        $region239: #{custom-call.2} parent=228 // loop_header_branch
          %1259 = sbr.rel (%p1257) target = $region243
        $region240: #{custom-call.2} parent=228 // loop_body
          %v1260 = vld [vmem:[%s1254] sm:$0xff]
          %1261 = vst [vmem:[%s1255] sm:$0xff] %v1260
        $region241: #{custom-call.2} parent=228 // loop_footer
          %s1262 = scalar_lea.vmem %s1254, 8
          %s1263 = scalar_lea.vmem %s1255, 8
        $region242: #{custom-call.2} parent=228 // loop_footer_branch
          %1264 = sbr.rel target = $region238
        $region243: #{custom-call.2} parent=228 // loop_exit
          _
      $region229: #{custom-call.2} parent=224 // pred_fallthru
        _
      %s1265 = sand.u32 8, 7
      %s1266 = sshllo.u32 0, %s1265
      %s1267 = smul.u32 %s1218, 128
      %s1268 = sshra.s32 %s1267, 4
      %s1269 = scalar_lea.vmem %s9, %s1268
      %s1270 = smul.u32 %s1218, 128
      %s1271 = sshra.s32 %s1270, 4
      %s1272 = scalar_lea.vmem [#allocation11], %s1271
      %v1273 = vld [vmem:[%s1272] sm:%s1266]
      %1274 = vst [vmem:[%s1269] sm:%s1266] %v1273
    $region225: #{custom-call.2} parent=1 // pred_fallthru
      _
    // Predicated region
    $region244: #{custom-call.2} parent=1 // pred_check
      _
    $region245: #{custom-call.2} parent=1 // pred_check_branch
      %1276 = sbr.rel (0) target = $region247
    $region246: #{custom-call.2} parent=1 // pred_region
      _
    $region247: #{custom-call.2} parent=1 // pred_fallthru
      _
    // Predicated region
    $region248: #{custom-call.2} parent=1 // pred_check
      _
    $region249: #{custom-call.2} parent=1 // pred_check_branch
      %1278 = sbr.rel (0) target = $region251
    $region250: #{custom-call.2} parent=1 // pred_region
      _
    $region251: #{custom-call.2} parent=1 // pred_fallthru
      _

// kernel: our_dynamics_forward.1
$region0: #{our_dynamics_forward.1}
  #allocation0 [shape = 'u32[]', space=smem, size = 0x4, offset = 0x4, fixed_abs, tag = 'smem constant byte address 0x4 - core index']
  #allocation1 [shape = 'u32[144,128]{1,0:T(1,128)}', space=vmem, size = 0x12000, scoped, tag = 'internal scratch']
  %s0 = inlined_call_operand.smem [shape: u32[40], index: -1, kind: input, shape index: {}]
  %s1 = sld [smem:[%s0]]
  %s2 = scalar_lea.smem %s0, 1
  %s3 = sld [smem:[%s2]]
  %s4 = scalar_lea.smem %s0, 2
  %s5 = sld [smem:[%s4]]
  %s6 = scalar_lea.smem %s0, 3
  %s7 = sld [smem:[%s6]]
  %s8 = scalar_lea.smem %s0, 4
  %s9 = sld [smem:[%s8]]
  %s10 = scalar_lea.smem %s0, 5
  %s11 = sld [smem:[%s10]]
  %s12 = scalar_lea.smem %s0, 6
  %s13 = sld [smem:[%s12]]
  %s14 = scalar_lea.smem %s0, 7
  %s15 = sld [smem:[%s14]]
  %s16 = scalar_lea.smem %s0, 8
  %s17 = sld [smem:[%s16]]
  %s18 = scalar_lea.smem %s0, 9
  %s19 = sld [smem:[%s18]]
  %s20 = scalar_lea.smem %s0, 10
  %s21 = sld [smem:[%s20]]
  %s22 = scalar_lea.smem %s0, 11
  %s23 = sld [smem:[%s22]]
  %s24 = scalar_lea.smem %s0, 12
  %s25 = sld [smem:[%s24]]
  %s26 = scalar_lea.smem %s0, 13
  %s27 = sld [smem:[%s26]]
  %s28 = scalar_lea.smem %s0, 14
  %s29 = sld [smem:[%s28]]
  %s30 = scalar_lea.smem %s0, 15
  %s31 = sld [smem:[%s30]]
  %s32 = scalar_lea.smem %s0, 16
  %s33 = sld [smem:[%s32]]
  %s34 = scalar_lea.smem %s0, 17
  %s35 = sld [smem:[%s34]]
  %s36 = scalar_lea.smem %s0, 18
  %s37 = sld [smem:[%s36]]
  %s38 = scalar_lea.smem %s0, 19
  %s39 = sld [smem:[%s38]]
  %s40 = scalar_lea.smem %s0, 20
  %s41 = sld [smem:[%s40]]
  %s42 = scalar_lea.smem %s0, 21
  %s43 = sld [smem:[%s42]]
  %s44 = scalar_lea.smem %s0, 22
  %s45 = sld [smem:[%s44]]
  %s46 = scalar_lea.smem %s0, 23
  %s47 = sld [smem:[%s46]]
  %s48 = scalar_lea.smem %s0, 24
  %s49 = sld [smem:[%s48]]
  %s50 = scalar_lea.smem %s0, 25
  %s51 = sld [smem:[%s50]]
  %s52 = scalar_lea.smem %s0, 26
  %s53 = sld [smem:[%s52]]
  %s54 = scalar_lea.smem %s0, 27
  %s55 = sld [smem:[%s54]]
  %s56 = scalar_lea.smem %s0, 28
  %s57 = sld [smem:[%s56]]
  %s58 = scalar_lea.smem %s0, 29
  %s59 = sld [smem:[%s58]]
  %s60 = scalar_lea.smem %s0, 30
  %s61 = sld [smem:[%s60]]
  %s62 = scalar_lea.smem %s0, 31
  %s63 = sld [smem:[%s62]]
  %s64 = scalar_lea.smem %s0, 32
  %s65 = sld [smem:[%s64]]
  %s66 = scalar_lea.smem %s0, 33
  %s67 = sld [smem:[%s66]]
  %s68 = scalar_lea.smem %s0, 34
  %s69 = sld [smem:[%s68]]
  %s70 = scalar_lea.smem %s0, 35
  %s71 = sld [smem:[%s70]]
  %s72 = scalar_lea.smem %s0, 36
  %s73 = sld [smem:[%s72]]
  %s74 = scalar_lea.smem %s0, 37
  %s75 = sld [smem:[%s74]]
  %s76 = scalar_lea.smem %s0, 38
  %s77 = sld [smem:[%s76]]
  %s78 = scalar_lea.smem %s0, 39
  %s79 = sld [smem:[%s78]]
  %80 = xla_tuple %s77, %s79
  %s81 = sld [smem:[#allocation0]]
  $region170: #{our_dynamics_forward.1} parent=0
    _
  %s83 = ssub.s32 1, %s81
  %s84 = scalar_select 0, %s83, %s81
  $region1: #{our_dynamics_forward.1} parent=0
    #allocation2 [shape = 'u8[8192]{0}', space=vmem, size = 0x2000, scoped, tag = 'output window, operand 1, single buffered']
    #allocation3 [shape = 's32[1]{0}', space=sflag, size = 0x4, scoped, tag = 'scoped memory for our_dynamics_forward.1']
    %85 = vsyncpa [#allocation3], 0
    // Predicated region
    $region2: #{our_dynamics_forward.1} parent=1 // pred_check
      _
    $region3: #{our_dynamics_forward.1} parent=1 // pred_check_branch
      %87 = sbr.rel (0) target = $region5
    $region4: #{our_dynamics_forward.1} parent=1 // pred_region
      _
    $region5: #{our_dynamics_forward.1} parent=1 // pred_fallthru
      _
    // Predicated region
    $region6: #{our_dynamics_forward.1} parent=1 // pred_check
      _
    $region7: #{our_dynamics_forward.1} parent=1 // pred_check_branch
      %89 = sbr.rel (0) target = $region9
    $region8: #{our_dynamics_forward.1} parent=1 // pred_region
      _
    $region9: #{our_dynamics_forward.1} parent=1 // pred_fallthru
      _
    // Predicated region
    $region10: #{our_dynamics_forward.1} parent=1 // pred_check
      _
    $region11: #{our_dynamics_forward.1} parent=1 // pred_check_branch
      %91 = sbr.rel (0) target = $region13
    $region12: #{our_dynamics_forward.1} parent=1 // pred_region
      _
    $region13: #{our_dynamics_forward.1} parent=1 // pred_fallthru
      _
    // Predicated region
    $region14: #{our_dynamics_forward.1} parent=1 // pred_check
      _
    $region15: #{our_dynamics_forward.1} parent=1 // pred_check_branch
      %93 = sbr.rel (0) target = $region17
    $region16: #{our_dynamics_forward.1} parent=1 // pred_region
      _
    $region17: #{our_dynamics_forward.1} parent=1 // pred_fallthru
      _
    // Predicated region
    $region18: #{our_dynamics_forward.1} parent=1 // pred_check
      _
    $region19: #{our_dynamics_forward.1} parent=1 // pred_check_branch
      %95 = sbr.rel (0) target = $region21
    $region20: #{our_dynamics_forward.1} parent=1 // pred_region
      _
    $region21: #{our_dynamics_forward.1} parent=1 // pred_fallthru
      _
    // Predicated region
    $region22: #{our_dynamics_forward.1} parent=1 // pred_check
      _
    $region23: #{our_dynamics_forward.1} parent=1 // pred_check_branch
      %97 = sbr.rel (0) target = $region25
    $region24: #{our_dynamics_forward.1} parent=1 // pred_region
      _
    $region25: #{our_dynamics_forward.1} parent=1 // pred_fallthru
      _
    // Predicated region
    $region26: #{our_dynamics_forward.1} parent=1 // pred_check
      _
    $region27: #{our_dynamics_forward.1} parent=1 // pred_check_branch
      %99 = sbr.rel (0) target = $region29
    $region28: #{our_dynamics_forward.1} parent=1 // pred_region
      _
    $region29: #{our_dynamics_forward.1} parent=1 // pred_fallthru
      _
    // Predicated region
    $region30: #{our_dynamics_forward.1} parent=1 // pred_check
      _
    $region31: #{our_dynamics_forward.1} parent=1 // pred_check_branch
      %101 = sbr.rel (0) target = $region33
    $region32: #{our_dynamics_forward.1} parent=1 // pred_region
      _
    $region33: #{our_dynamics_forward.1} parent=1 // pred_fallthru
      _
    // Predicated region
    $region34: #{our_dynamics_forward.1} parent=1 // pred_check
      _
    $region35: #{our_dynamics_forward.1} parent=1 // pred_check_branch
      %103 = sbr.rel (0) target = $region37
    $region36: #{our_dynamics_forward.1} parent=1 // pred_region
      _
    $region37: #{our_dynamics_forward.1} parent=1 // pred_fallthru
      _
    // Predicated region
    $region38: #{our_dynamics_forward.1} parent=1 // pred_check
      _
    $region39: #{our_dynamics_forward.1} parent=1 // pred_check_branch
      %105 = sbr.rel (0) target = $region41
    $region40: #{our_dynamics_forward.1} parent=1 // pred_region
      _
    $region41: #{our_dynamics_forward.1} parent=1 // pred_fallthru
      _
    // Predicated region
    $region42: #{our_dynamics_forward.1} parent=1 // pred_check
      _
    $region43: #{our_dynamics_forward.1} parent=1 // pred_check_branch
      %107 = sbr.rel (0) target = $region45
    $region44: #{our_dynamics_forward.1} parent=1 // pred_region
      _
    $region45: #{our_dynamics_forward.1} parent=1 // pred_fallthru
      _
    // Predicated region
    $region46: #{our_dynamics_forward.1} parent=1 // pred_check
      _
    $region47: #{our_dynamics_forward.1} parent=1 // pred_check_branch
      %109 = sbr.rel (0) target = $region49
    $region48: #{our_dynamics_forward.1} parent=1 // pred_region
      _
    $region49: #{our_dynamics_forward.1} parent=1 // pred_fallthru
      _
    // Predicated region
    $region50: #{our_dynamics_forward.1} parent=1 // pred_check
      _
    $region51: #{our_dynamics_forward.1} parent=1 // pred_check_branch
      %111 = sbr.rel (0) target = $region53
    $region52: #{our_dynamics_forward.1} parent=1 // pred_region
      _
    $region53: #{our_dynamics_forward.1} parent=1 // pred_fallthru
      _
    // Predicated region
    $region54: #{our_dynamics_forward.1} parent=1 // pred_check
      _
    $region55: #{our_dynamics_forward.1} parent=1 // pred_check_branch
      %113 = sbr.rel (0) target = $region57
    $region56: #{our_dynamics_forward.1} parent=1 // pred_region
      _
    $region57: #{our_dynamics_forward.1} parent=1 // pred_fallthru
      _
    // Predicated region
    $region58: #{our_dynamics_forward.1} parent=1 // pred_check
      _
    $region59: #{our_dynamics_forward.1} parent=1 // pred_check_branch
      %115 = sbr.rel (0) target = $region61
    $region60: #{our_dynamics_forward.1} parent=1 // pred_region
      _
    $region61: #{our_dynamics_forward.1} parent=1 // pred_fallthru
      _
    // Predicated region
    $region62: #{our_dynamics_forward.1} parent=1 // pred_check
      _
    $region63: #{our_dynamics_forward.1} parent=1 // pred_check_branch
      %117 = sbr.rel (0) target = $region65
    $region64: #{our_dynamics_forward.1} parent=1 // pred_region
      _
    $region65: #{our_dynamics_forward.1} parent=1 // pred_fallthru
      _
    // Predicated region
    $region66: #{our_dynamics_forward.1} parent=1 // pred_check
      _
    $region67: #{our_dynamics_forward.1} parent=1 // pred_check_branch
      %119 = sbr.rel (0) target = $region69
    $region68: #{our_dynamics_forward.1} parent=1 // pred_region
      _
    $region69: #{our_dynamics_forward.1} parent=1 // pred_fallthru
      _
    // Predicated region
    $region70: #{our_dynamics_forward.1} parent=1 // pred_check
      _
    $region71: #{our_dynamics_forward.1} parent=1 // pred_check_branch
      %121 = sbr.rel (0) target = $region73
    $region72: #{our_dynamics_forward.1} parent=1 // pred_region
      _
    $region73: #{our_dynamics_forward.1} parent=1 // pred_fallthru
      _
    // Predicated region
    $region74: #{our_dynamics_forward.1} parent=1 // pred_check
      _
    $region75: #{our_dynamics_forward.1} parent=1 // pred_check_branch
      %123 = sbr.rel (0) target = $region77
    $region76: #{our_dynamics_forward.1} parent=1 // pred_region
      _
    $region77: #{our_dynamics_forward.1} parent=1 // pred_fallthru
      _
    // Predicated region
    $region78: #{our_dynamics_forward.1} parent=1 // pred_check
      _
    $region79: #{our_dynamics_forward.1} parent=1 // pred_check_branch
      %125 = sbr.rel (0) target = $region81
    $region80: #{our_dynamics_forward.1} parent=1 // pred_region
      _
    $region81: #{our_dynamics_forward.1} parent=1 // pred_fallthru
      _
    // Predicated region
    $region82: #{our_dynamics_forward.1} parent=1 // pred_check
      _
    $region83: #{our_dynamics_forward.1} parent=1 // pred_check_branch
      %127 = sbr.rel (0) target = $region85
    $region84: #{our_dynamics_forward.1} parent=1 // pred_region
      _
    $region85: #{our_dynamics_forward.1} parent=1 // pred_fallthru
      _
    // Predicated region
    $region86: #{our_dynamics_forward.1} parent=1 // pred_check
      _
    $region87: #{our_dynamics_forward.1} parent=1 // pred_check_branch
      %129 = sbr.rel (0) target = $region89
    $region88: #{our_dynamics_forward.1} parent=1 // pred_region
      _
    $region89: #{our_dynamics_forward.1} parent=1 // pred_fallthru
      _
    // Predicated region
    $region90: #{our_dynamics_forward.1} parent=1 // pred_check
      _
    $region91: #{our_dynamics_forward.1} parent=1 // pred_check_branch
      %131 = sbr.rel (0) target = $region93
    $region92: #{our_dynamics_forward.1} parent=1 // pred_region
      _
    $region93: #{our_dynamics_forward.1} parent=1 // pred_fallthru
      _
    // Predicated region
    $region94: #{our_dynamics_forward.1} parent=1 // pred_check
      _
    $region95: #{our_dynamics_forward.1} parent=1 // pred_check_branch
      %133 = sbr.rel (0) target = $region97
    $region96: #{our_dynamics_forward.1} parent=1 // pred_region
      _
    $region97: #{our_dynamics_forward.1} parent=1 // pred_fallthru
      _
    // Predicated region
    $region98: #{our_dynamics_forward.1} parent=1 // pred_check
      _
    $region99: #{our_dynamics_forward.1} parent=1 // pred_check_branch
      %135 = sbr.rel (0) target = $region101
    $region100: #{our_dynamics_forward.1} parent=1 // pred_region
      _
    $region101: #{our_dynamics_forward.1} parent=1 // pred_fallthru
      _
    // Predicated region
    $region102: #{our_dynamics_forward.1} parent=1 // pred_check
      _
    $region103: #{our_dynamics_forward.1} parent=1 // pred_check_branch
      %137 = sbr.rel (0) target = $region105
    $region104: #{our_dynamics_forward.1} parent=1 // pred_region
      _
    $region105: #{our_dynamics_forward.1} parent=1 // pred_fallthru
      _
    // Predicated region
    $region106: #{our_dynamics_forward.1} parent=1 // pred_check
      _
    $region107: #{our_dynamics_forward.1} parent=1 // pred_check_branch
      %139 = sbr.rel (0) target = $region109
    $region108: #{our_dynamics_forward.1} parent=1 // pred_region
      _
    $region109: #{our_dynamics_forward.1} parent=1 // pred_fallthru
      _
    // Predicated region
    $region110: #{our_dynamics_forward.1} parent=1 // pred_check
      _
    $region111: #{our_dynamics_forward.1} parent=1 // pred_check_branch
      %141 = sbr.rel (0) target = $region113
    $region112: #{our_dynamics_forward.1} parent=1 // pred_region
      _
    $region113: #{our_dynamics_forward.1} parent=1 // pred_fallthru
      _
    // Predicated region
    $region114: #{our_dynamics_forward.1} parent=1 // pred_check
      _
    $region115: #{our_dynamics_forward.1} parent=1 // pred_check_branch
      %143 = sbr.rel (0) target = $region117
    $region116: #{our_dynamics_forward.1} parent=1 // pred_region
      _
    $region117: #{our_dynamics_forward.1} parent=1 // pred_fallthru
      _
    // Predicated region
    $region118: #{our_dynamics_forward.1} parent=1 // pred_check
      _
    $region119: #{our_dynamics_forward.1} parent=1 // pred_check_branch
      %145 = sbr.rel (0) target = $region121
    $region120: #{our_dynamics_forward.1} parent=1 // pred_region
      _
    $region121: #{our_dynamics_forward.1} parent=1 // pred_fallthru
      _
    // Predicated region
    $region122: #{our_dynamics_forward.1} parent=1 // pred_check
      _
    $region123: #{our_dynamics_forward.1} parent=1 // pred_check_branch
      %147 = sbr.rel (0) target = $region125
    $region124: #{our_dynamics_forward.1} parent=1 // pred_region
      _
    $region125: #{our_dynamics_forward.1} parent=1 // pred_fallthru
      _
    // Predicated region
    $region126: #{our_dynamics_forward.1} parent=1 // pred_check
      _
    $region127: #{our_dynamics_forward.1} parent=1 // pred_check_branch
      %149 = sbr.rel (0) target = $region129
    $region128: #{our_dynamics_forward.1} parent=1 // pred_region
      _
    $region129: #{our_dynamics_forward.1} parent=1 // pred_fallthru
      _
    // Predicated region
    $region130: #{our_dynamics_forward.1} parent=1 // pred_check
      _
    $region131: #{our_dynamics_forward.1} parent=1 // pred_check_branch
      %151 = sbr.rel (0) target = $region133
    $region132: #{our_dynamics_forward.1} parent=1 // pred_region
      _
    $region133: #{our_dynamics_forward.1} parent=1 // pred_fallthru
      _
    // Predicated region
    $region134: #{our_dynamics_forward.1} parent=1 // pred_check
      _
    $region135: #{our_dynamics_forward.1} parent=1 // pred_check_branch
      %153 = sbr.rel (0) target = $region137
    $region136: #{our_dynamics_forward.1} parent=1 // pred_region
      _
    $region137: #{our_dynamics_forward.1} parent=1 // pred_fallthru
      _
    // Predicated region
    $region138: #{our_dynamics_forward.1} parent=1 // pred_check
      _
    $region139: #{our_dynamics_forward.1} parent=1 // pred_check_branch
      %155 = sbr.rel (0) target = $region141
    $region140: #{our_dynamics_forward.1} parent=1 // pred_region
      _
    $region141: #{our_dynamics_forward.1} parent=1 // pred_fallthru
      _
    // Predicated region
    $region142: #{our_dynamics_forward.1} parent=1 // pred_check
      _
    $region143: #{our_dynamics_forward.1} parent=1 // pred_check_branch
      %157 = sbr.rel (0) target = $region145
    $region144: #{our_dynamics_forward.1} parent=1 // pred_region
      _
    $region145: #{our_dynamics_forward.1} parent=1 // pred_fallthru
      _
    // Predicated region
    $region146: #{our_dynamics_forward.1} parent=1 // pred_check
      _
    $region147: #{our_dynamics_forward.1} parent=1 // pred_check_branch
      %159 = sbr.rel (0) target = $region149
    $region148: #{our_dynamics_forward.1} parent=1 // pred_region
      _
    $region149: #{our_dynamics_forward.1} parent=1 // pred_fallthru
      _
    // Predicated region
    $region150: #{our_dynamics_forward.1} parent=1 // pred_check
      _
    $region151: #{our_dynamics_forward.1} parent=1 // pred_check_branch
      %161 = sbr.rel (0) target = $region153
    $region152: #{our_dynamics_forward.1} parent=1 // pred_region
      _
    $region153: #{our_dynamics_forward.1} parent=1 // pred_fallthru
      _
    %v162 = vld [vmem:[%s1] sm:$0xff]
    %v163 = vld [vmem:[%s1 + $0x8] sm:$0xff]
    %v164 = vld [vmem:[%s3] sm:$0xff]
    %v165 = vld [vmem:[%s3 + $0x8] sm:$0xff]
    %v166 = vld [vmem:[%s13] sm:$0xff]
    %vm167 = vcmask 64512
    %v169 = vsel %vm167, %v164, 0
    %v172 = vsel %vm167, %v165, 0
    %174 = vmatprep.subr.mxu0 0.0
    %175 = vmatpush1.msra.mxu0 %v166
    %176 = vmatprep.subr.mxu0 0.0
    %177 = vmatpush1.msra.mxu0 0.0
    %178 = vmatprep.subr.mxu0 0.0
    %179 = vmatpush1.msra.mxu0 0.0
    %180 = vmatprep.subr.mxu0 0.0
    %181 = vmatpush1.msra.mxu0 0.0
    %182 = vmatprep.subr.mxu0 0.0
    %183 = vmatpush1.msra.mxu0 0.0
    %184 = vmatprep.subr.mxu0 0.0
    %185 = vmatpush1.msra.mxu0 0.0
    %186 = vmatprep.subr.mxu0 0.0
    %187 = vmatpush1.msra.mxu0 0.0
    %188 = vmatprep.subr.mxu0 0.0
    %189 = vmatpush1.msra.mxu0 0.0
    %190 = vmatprep.subr.mxu0 0.0
    %191 = vmatpush1.msra.mxu0 0.0
    %192 = vmatprep.subr.mxu0 0.0
    %193 = vmatpush1.msra.mxu0 0.0
    %194 = vmatprep.subr.mxu0 0.0
    %195 = vmatpush1.msra.mxu0 0.0
    %196 = vmatprep.subr.mxu0 0.0
    %197 = vmatpush1.msra.mxu0 0.0
    %198 = vmatprep.subr.mxu0 0.0
    %199 = vmatpush1.msra.mxu0 0.0
    %200 = vmatprep.subr.mxu0 0.0
    %201 = vmatpush1.msra.mxu0 0.0
    %202 = vmatprep.subr.mxu0 0.0
    %203 = vmatpush1.msra.mxu0 0.0
    %204 = vmatprep.subr.mxu0 0.0
    %205 = vmatpush1.msra.mxu0 0.0
    %206 = vmatprep.subr.mxu0 0.0
    %207 = vmatpush1.msra.mxu0 0.0
    %208 = vmatprep.subr.mxu0 0.0
    %209 = vmatpush1.msra.mxu0 0.0
    %210 = vmatprep.subr.mxu0 0.0
    %211 = vmatpush1.msra.mxu0 0.0
    %212 = vmatprep.subr.mxu0 0.0
    %213 = vmatpush1.msra.mxu0 0.0
    %214 = vmatprep.subr.mxu0 0.0
    %215 = vmatpush1.msra.mxu0 0.0
    %216 = vmatprep.subr.mxu0 0.0
    %217 = vmatpush1.msra.mxu0 0.0
    %218 = vmatprep.subr.mxu0 0.0
    %219 = vmatpush1.msra.mxu0 0.0
    %220 = vmatprep.subr.mxu0 0.0
    %221 = vmatpush1.msra.mxu0 0.0
    %222 = vmatprep.subr.mxu0 0.0
    %223 = vmatpush1.msra.mxu0 0.0
    %224 = vmatprep.subr.mxu0 0.0
    %225 = vmatpush1.msra.mxu0 0.0
    %226 = vmatprep.subr.mxu0 0.0
    %227 = vmatpush1.msra.mxu0 0.0
    %228 = vmatprep.subr.mxu0 0.0
    %229 = vmatpush1.msra.mxu0 0.0
    %230 = vmatprep.subr.mxu0 0.0
    %231 = vmatpush1.msra.mxu0 0.0
    %232 = vmatprep.subr.mxu0 0.0
    %233 = vmatpush1.msra.mxu0 0.0
    %234 = vmatprep.subr.mxu0 0.0
    %235 = vmatpush1.msra.mxu0 0.0
    %236 = vmatprep.subr.mxu0 0.0
    %237 = vmatpush1.msra.mxu0 0.0
    %238 = vmatprep.mubr.f32.mxu0 0.0
    %239 = vmatmul.mubr.f32.gmra.mrb[0].mxu0 %v169
    %v240 = vpop.f32.mrb[0].mxu0
    %v241 = vadd.f32 0.0, %v240
    %v242 = vpop.f32.mrb[0].mxu0
    %243 = vmatprep.mubr.f32.mxu0 0.0
    %244 = vmatmul.mubr.f32.gmra.mrb[0].mxu0 %v172
    %v245 = vpop.f32.mrb[0].mxu0
    %v246 = vadd.f32 0.0, %v245
    %v247 = vpop.f32.mrb[0].mxu0
    %248 = vdwg.mxu0
    %v249 = vadd.f32 %v162, %v241
    %v250 = vadd.f32 %v163, %v246
    %v251 = vld [vmem:[%s15] sm:$0x1]
    %v253 = vlaneseq
    %v254 = vshrl.u32 %v253, 7
    %v255 = vsub.s32 0, %v254
    %v256 = vrot.slane %v251, %v255
    %v258 = vadd.f32 %v249, %v256
    %v259 = vadd.f32 %v250, %v256
    %v260 = vld [vmem:[%s5] sm:$0xff]
    %v261 = vld [vmem:[%s5 + $0x8] sm:$0xff]
    %v262 = vld [vmem:[%s5 + $0x10] sm:$0xff]
    %v263 = vld [vmem:[%s5 + $0x18] sm:$0xff]
    %v264 = vld [vmem:[%s5 + $0x20] sm:$0xff]
    %v265 = vld [vmem:[%s5 + $0x28] sm:$0xff]
    %v266 = vld [vmem:[%s5 + $0x30] sm:$0xff]
    %v267 = vld [vmem:[%s5 + $0x38] sm:$0xff]
    %v268 = vld [vmem:[%s5 + $0x40] sm:$0xff]
    %v269 = vld [vmem:[%s5 + $0x48] sm:$0xff]
    %v270 = vld [vmem:[%s5 + $0x50] sm:$0xff]
    %v271 = vld [vmem:[%s5 + $0x58] sm:$0xff]
    %v272 = vld [vmem:[%s5 + $0x60] sm:$0xff]
    %v273 = vld [vmem:[%s5 + $0x68] sm:$0xff]
    %v274 = vld [vmem:[%s5 + $0x70] sm:$0xff]
    %v275 = vld [vmem:[%s5 + $0x78] sm:$0xff]
    %v276 = vld [vmem:[%s5 + $0x80] sm:$0xff]
    %v277 = vld [vmem:[%s5 + $0x88] sm:$0xff]
    %v278 = vld [vmem:[%s5 + $0x90] sm:$0xff]
    %v279 = vld [vmem:[%s5 + $0x98] sm:$0xff]
    %v280 = vld [vmem:[%s5 + $0xa0] sm:$0xff]
    %v281 = vld [vmem:[%s5 + $0xa8] sm:$0xff]
    %v282 = vld [vmem:[%s5 + $0xb0] sm:$0xff]
    %v283 = vld [vmem:[%s5 + $0xb8] sm:$0xff]
    %v284 = vld [vmem:[%s5 + $0xc0] sm:$0xff]
    %v285 = vld [vmem:[%s5 + $0xc8] sm:$0xff]
    %v286 = vld [vmem:[%s5 + $0xd0] sm:$0xff]
    %v287 = vld [vmem:[%s5 + $0xd8] sm:$0xff]
    %v288 = vld [vmem:[%s5 + $0xe0] sm:$0xff]
    %v289 = vld [vmem:[%s5 + $0xe8] sm:$0xff]
    %v290 = vld [vmem:[%s5 + $0xf0] sm:$0xff]
    %v291 = vld [vmem:[%s5 + $0xf8] sm:$0xff]
    %v292 = vld [vmem:[%s7] sm:$0xff]
    %v293 = vld [vmem:[%s7 + $0x8] sm:$0xff]
    %v294 = vld [vmem:[%s7 + $0x10] sm:$0xff]
    %v295 = vld [vmem:[%s7 + $0x18] sm:$0xff]
    %v296 = vld [vmem:[%s7 + $0x20] sm:$0xff]
    %v297 = vld [vmem:[%s7 + $0x28] sm:$0xff]
    %v298 = vld [vmem:[%s7 + $0x30] sm:$0xff]
    %v299 = vld [vmem:[%s7 + $0x38] sm:$0xff]
    %v300 = vld [vmem:[%s7 + $0x40] sm:$0xff]
    %v301 = vld [vmem:[%s7 + $0x48] sm:$0xff]
    %v302 = vld [vmem:[%s7 + $0x50] sm:$0xff]
    %v303 = vld [vmem:[%s7 + $0x58] sm:$0xff]
    %v304 = vld [vmem:[%s7 + $0x60] sm:$0xff]
    %v305 = vld [vmem:[%s7 + $0x68] sm:$0xff]
    %v306 = vld [vmem:[%s7 + $0x70] sm:$0xff]
    %v307 = vld [vmem:[%s7 + $0x78] sm:$0xff]
    %v308 = vld [vmem:[%s7 + $0x80] sm:$0xff]
    %v309 = vld [vmem:[%s7 + $0x88] sm:$0xff]
    %v310 = vld [vmem:[%s7 + $0x90] sm:$0xff]
    %v311 = vld [vmem:[%s7 + $0x98] sm:$0xff]
    %v312 = vld [vmem:[%s7 + $0xa0] sm:$0xff]
    %v313 = vld [vmem:[%s7 + $0xa8] sm:$0xff]
    %v314 = vld [vmem:[%s7 + $0xb0] sm:$0xff]
    %v315 = vld [vmem:[%s7 + $0xb8] sm:$0xff]
    %v316 = vld [vmem:[%s7 + $0xc0] sm:$0xff]
    %v317 = vld [vmem:[%s7 + $0xc8] sm:$0xff]
    %v318 = vld [vmem:[%s7 + $0xd0] sm:$0xff]
    %v319 = vld [vmem:[%s7 + $0xd8] sm:$0xff]
    %v320 = vld [vmem:[%s7 + $0xe0] sm:$0xff]
    %v321 = vld [vmem:[%s7 + $0xe8] sm:$0xff]
    %v322 = vld [vmem:[%s7 + $0xf0] sm:$0xff]
    %v323 = vld [vmem:[%s7 + $0xf8] sm:$0xff]
    %v324 = vld [vmem:[%s9] sm:$0xff]
    %v325 = vld [vmem:[%s9 + $0x8] sm:$0xff]
    %v326 = vld [vmem:[%s9 + $0x10] sm:$0xff]
    %v327 = vld [vmem:[%s9 + $0x18] sm:$0xff]
    %v328 = vld [vmem:[%s11] sm:$0xff]
    %v329 = vld [vmem:[%s11 + $0x8] sm:$0xff]
    %v330 = vld [vmem:[%s11 + $0x10] sm:$0xff]
    %v331 = vld [vmem:[%s11 + $0x18] sm:$0xff]
    %v332 = vld [vmem:[%s17] sm:$0xff]
    %v333 = vld [vmem:[%s17 + $0x8] sm:$0xff]
    %v334 = vld [vmem:[%s17 + $0x10] sm:$0xff]
    %v335 = vld [vmem:[%s17 + $0x18] sm:$0xff]
    %v336 = vld [vmem:[%s19] sm:$0x1]
    %v338 = vlaneseq
    %v339 = vshrl.u32 %v338, 7
    %v340 = vsub.s32 0, %v339
    %v341 = vrot.slane %v336, %v340
    %vm343 = vcmask 261120
    %v345 = vsel %vm343, %v258, 0
    %v348 = vsel %vm343, %v259, 0
    %350 = vmatprep.subr.mxu0 0.0
    %351 = vmatpush1.msra.mxu0 %v332
    %352 = vmatprep.subr.mxu0 0.0
    %353 = vmatpush1.msra.mxu0 %v333
    %354 = vmatprep.subr.mxu0 0.0
    %355 = vmatpush1.msra.mxu0 %v334
    %356 = vmatprep.subr.mxu0 0.0
    %357 = vmatpush1.msra.mxu0 %v335
    %358 = vmatprep.subr.mxu0 0.0
    %359 = vmatpush1.msra.mxu0 0.0
    %360 = vmatprep.subr.mxu0 0.0
    %361 = vmatpush1.msra.mxu0 0.0
    %362 = vmatprep.subr.mxu0 0.0
    %363 = vmatpush1.msra.mxu0 0.0
    %364 = vmatprep.subr.mxu0 0.0
    %365 = vmatpush1.msra.mxu0 0.0
    %366 = vmatprep.subr.mxu0 0.0
    %367 = vmatpush1.msra.mxu0 0.0
    %368 = vmatprep.subr.mxu0 0.0
    %369 = vmatpush1.msra.mxu0 0.0
    %370 = vmatprep.subr.mxu0 0.0
    %371 = vmatpush1.msra.mxu0 0.0
    %372 = vmatprep.subr.mxu0 0.0
    %373 = vmatpush1.msra.mxu0 0.0
    %374 = vmatprep.subr.mxu0 0.0
    %375 = vmatpush1.msra.mxu0 0.0
    %376 = vmatprep.subr.mxu0 0.0
    %377 = vmatpush1.msra.mxu0 0.0
    %378 = vmatprep.subr.mxu0 0.0
    %379 = vmatpush1.msra.mxu0 0.0
    %380 = vmatprep.subr.mxu0 0.0
    %381 = vmatpush1.msra.mxu0 0.0
    %382 = vmatprep.subr.mxu0 0.0
    %383 = vmatpush1.msra.mxu0 0.0
    %384 = vmatprep.subr.mxu0 0.0
    %385 = vmatpush1.msra.mxu0 0.0
    %386 = vmatprep.subr.mxu0 0.0
    %387 = vmatpush1.msra.mxu0 0.0
    %388 = vmatprep.subr.mxu0 0.0
    %389 = vmatpush1.msra.mxu0 0.0
    %390 = vmatprep.subr.mxu0 0.0
    %391 = vmatpush1.msra.mxu0 0.0
    %392 = vmatprep.subr.mxu0 0.0
    %393 = vmatpush1.msra.mxu0 0.0
    %394 = vmatprep.subr.mxu0 0.0
    %395 = vmatpush1.msra.mxu0 0.0
    %396 = vmatprep.subr.mxu0 0.0
    %397 = vmatpush1.msra.mxu0 0.0
    %398 = vmatprep.subr.mxu0 0.0
    %399 = vmatpush1.msra.mxu0 0.0
    %400 = vmatprep.subr.mxu0 0.0
    %401 = vmatpush1.msra.mxu0 0.0
    %402 = vmatprep.subr.mxu0 0.0
    %403 = vmatpush1.msra.mxu0 0.0
    %404 = vmatprep.subr.mxu0 0.0
    %405 = vmatpush1.msra.mxu0 0.0
    %406 = vmatprep.subr.mxu0 0.0
    %407 = vmatpush1.msra.mxu0 0.0
    %408 = vmatprep.subr.mxu0 0.0
    %409 = vmatpush1.msra.mxu0 0.0
    %410 = vmatprep.subr.mxu0 0.0
    %411 = vmatpush1.msra.mxu0 0.0
    %412 = vmatprep.subr.mxu0 0.0
    %413 = vmatpush1.msra.mxu0 0.0
    %414 = vmatprep.mubr.f32.mxu0 0.0
    %415 = vmatmul.mubr.f32.gmra.mrb[0].mxu0 %v345
    %v416 = vpop.f32.mrb[0].mxu0
    %v417 = vadd.f32 %v341, %v416
    %v418 = vpop.f32.mrb[0].mxu0
    %419 = vmatprep.mubr.f32.mxu0 0.0
    %420 = vmatmul.mubr.f32.gmra.mrb[0].mxu0 %v348
    %v421 = vpop.f32.mrb[0].mxu0
    %v422 = vadd.f32 %v341, %v421
    %v423 = vpop.f32.mrb[0].mxu0
    %424 = vdwg.mxu0
    %v425 = vld [vmem:[%s21] sm:$0xff]
    %v426 = vld [vmem:[%s21 + $0x8] sm:$0xff]
    %v427 = vld [vmem:[%s21 + $0x10] sm:$0xff]
    %v428 = vld [vmem:[%s21 + $0x18] sm:$0xff]
    %v429 = vld [vmem:[%s23] sm:$0x1]
    %v431 = vlaneseq
    %v432 = vshrl.u32 %v431, 7
    %v433 = vsub.s32 0, %v432
    %v434 = vrot.slane %v429, %v433
    %v437 = vsel %vm343, %v260, 0
    %v440 = vsel %vm343, %v261, 0
    %v443 = vsel %vm343, %v262, 0
    %v446 = vsel %vm343, %v263, 0
    %v449 = vsel %vm343, %v264, 0
    %v452 = vsel %vm343, %v265, 0
    %v455 = vsel %vm343, %v266, 0
    %v458 = vsel %vm343, %v267, 0
    %v461 = vsel %vm343, %v268, 0
    %v464 = vsel %vm343, %v269, 0
    %v467 = vsel %vm343, %v270, 0
    %v470 = vsel %vm343, %v271, 0
    %v473 = vsel %vm343, %v272, 0
    %v476 = vsel %vm343, %v273, 0
    %v479 = vsel %vm343, %v274, 0
    %v482 = vsel %vm343, %v275, 0
    %v485 = vsel %vm343, %v276, 0
    %v488 = vsel %vm343, %v277, 0
    %v491 = vsel %vm343, %v278, 0
    %v494 = vsel %vm343, %v279, 0
    %v497 = vsel %vm343, %v280, 0
    %v500 = vsel %vm343, %v281, 0
    %v503 = vsel %vm343, %v282, 0
    %v506 = vsel %vm343, %v283, 0
    %v509 = vsel %vm343, %v284, 0
    %v512 = vsel %vm343, %v285, 0
    %v515 = vsel %vm343, %v286, 0
    %v518 = vsel %vm343, %v287, 0
    %v521 = vsel %vm343, %v288, 0
    %v524 = vsel %vm343, %v289, 0
    %v527 = vsel %vm343, %v290, 0
    %v530 = vsel %vm343, %v291, 0
    %532 = vmatprep.subr.mxu0 0.0
    %533 = vmatpush1.msra.mxu0 %v425
    %534 = vmatprep.subr.mxu0 0.0
    %535 = vmatpush1.msra.mxu0 %v426
    %536 = vmatprep.subr.mxu0 0.0
    %537 = vmatpush1.msra.mxu0 %v427
    %538 = vmatprep.subr.mxu0 0.0
    %539 = vmatpush1.msra.mxu0 %v428
    %540 = vmatprep.subr.mxu0 0.0
    %541 = vmatpush1.msra.mxu0 0.0
    %542 = vmatprep.subr.mxu0 0.0
    %543 = vmatpush1.msra.mxu0 0.0
    %544 = vmatprep.subr.mxu0 0.0
    %545 = vmatpush1.msra.mxu0 0.0
    %546 = vmatprep.subr.mxu0 0.0
    %547 = vmatpush1.msra.mxu0 0.0
    %548 = vmatprep.subr.mxu0 0.0
    %549 = vmatpush1.msra.mxu0 0.0
    %550 = vmatprep.subr.mxu0 0.0
    %551 = vmatpush1.msra.mxu0 0.0
    %552 = vmatprep.subr.mxu0 0.0
    %553 = vmatpush1.msra.mxu0 0.0
    %554 = vmatprep.subr.mxu0 0.0
    %555 = vmatpush1.msra.mxu0 0.0
    %556 = vmatprep.subr.mxu0 0.0
    %557 = vmatpush1.msra.mxu0 0.0
    %558 = vmatprep.subr.mxu0 0.0
    %559 = vmatpush1.msra.mxu0 0.0
    %560 = vmatprep.subr.mxu0 0.0
    %561 = vmatpush1.msra.mxu0 0.0
    %562 = vmatprep.subr.mxu0 0.0
    %563 = vmatpush1.msra.mxu0 0.0
    %564 = vmatprep.subr.mxu0 0.0
    %565 = vmatpush1.msra.mxu0 0.0
    %566 = vmatprep.subr.mxu0 0.0
    %567 = vmatpush1.msra.mxu0 0.0
    %568 = vmatprep.subr.mxu0 0.0
    %569 = vmatpush1.msra.mxu0 0.0
    %570 = vmatprep.subr.mxu0 0.0
    %571 = vmatpush1.msra.mxu0 0.0
    %572 = vmatprep.subr.mxu0 0.0
    %573 = vmatpush1.msra.mxu0 0.0
    %574 = vmatprep.subr.mxu0 0.0
    %575 = vmatpush1.msra.mxu0 0.0
    %576 = vmatprep.subr.mxu0 0.0
    %577 = vmatpush1.msra.mxu0 0.0
    %578 = vmatprep.subr.mxu0 0.0
    %579 = vmatpush1.msra.mxu0 0.0
    %580 = vmatprep.subr.mxu0 0.0
    %581 = vmatpush1.msra.mxu0 0.0
    %582 = vmatprep.subr.mxu0 0.0
    %583 = vmatpush1.msra.mxu0 0.0
    %584 = vmatprep.subr.mxu0 0.0
    %585 = vmatpush1.msra.mxu0 0.0
    %586 = vmatprep.subr.mxu0 0.0
    %587 = vmatpush1.msra.mxu0 0.0
    %588 = vmatprep.subr.mxu0 0.0
    %589 = vmatpush1.msra.mxu0 0.0
    %590 = vmatprep.subr.mxu0 0.0
    %591 = vmatpush1.msra.mxu0 0.0
    %592 = vmatprep.subr.mxu0 0.0
    %593 = vmatpush1.msra.mxu0 0.0
    %594 = vmatprep.subr.mxu0 0.0
    %595 = vmatpush1.msra.mxu0 0.0
    %596 = vmatprep.mubr.f32.mxu0 0.0
    %597 = vmatmul.mubr.f32.gmra.mrb[0].mxu0 %v437
    %v598 = vpop.f32.mrb[0].mxu0
    %v599 = vadd.f32 %v434, %v598
    %v600 = vpop.f32.mrb[0].mxu0
    %601 = vmatprep.mubr.f32.mxu0 0.0
    %602 = vmatmul.mubr.f32.gmra.mrb[0].mxu0 %v440
    %v603 = vpop.f32.mrb[0].mxu0
    %v604 = vadd.f32 %v434, %v603
    %v605 = vpop.f32.mrb[0].mxu0
    %606 = vmatprep.mubr.f32.mxu0 0.0
    %607 = vmatmul.mubr.f32.gmra.mrb[0].mxu0 %v443
    %v608 = vpop.f32.mrb[0].mxu0
    %v609 = vadd.f32 %v434, %v608
    %v610 = vpop.f32.mrb[0].mxu0
    %611 = vmatprep.mubr.f32.mxu0 0.0
    %612 = vmatmul.mubr.f32.gmra.mrb[0].mxu0 %v446
    %v613 = vpop.f32.mrb[0].mxu0
    %v614 = vadd.f32 %v434, %v613
    %v615 = vpop.f32.mrb[0].mxu0
    %616 = vmatprep.mubr.f32.mxu0 0.0
    %617 = vmatmul.mubr.f32.gmra.mrb[0].mxu0 %v449
    %v618 = vpop.f32.mrb[0].mxu0
    %v619 = vadd.f32 %v434, %v618
    %v620 = vpop.f32.mrb[0].mxu0
    %621 = vmatprep.mubr.f32.mxu0 0.0
    %622 = vmatmul.mubr.f32.gmra.mrb[0].mxu0 %v452
    %v623 = vpop.f32.mrb[0].mxu0
    %v624 = vadd.f32 %v434, %v623
    %v625 = vpop.f32.mrb[0].mxu0
    %626 = vmatprep.mubr.f32.mxu0 0.0
    %627 = vmatmul.mubr.f32.gmra.mrb[0].mxu0 %v455
    %v628 = vpop.f32.mrb[0].mxu0
    %v629 = vadd.f32 %v434, %v628
    %v630 = vpop.f32.mrb[0].mxu0
    %631 = vmatprep.mubr.f32.mxu0 0.0
    %632 = vmatmul.mubr.f32.gmra.mrb[0].mxu0 %v458
    %v633 = vpop.f32.mrb[0].mxu0
    %v634 = vadd.f32 %v434, %v633
    %v635 = vpop.f32.mrb[0].mxu0
    %636 = vmatprep.mubr.f32.mxu0 0.0
    %637 = vmatmul.mubr.f32.gmra.mrb[0].mxu0 %v461
    %v638 = vpop.f32.mrb[0].mxu0
    %v639 = vadd.f32 %v434, %v638
    %v640 = vpop.f32.mrb[0].mxu0
    %641 = vmatprep.mubr.f32.mxu0 0.0
    %642 = vmatmul.mubr.f32.gmra.mrb[0].mxu0 %v464
    %v643 = vpop.f32.mrb[0].mxu0
    %v644 = vadd.f32 %v434, %v643
    %v645 = vpop.f32.mrb[0].mxu0
    %646 = vmatprep.mubr.f32.mxu0 0.0
    %647 = vmatmul.mubr.f32.gmra.mrb[0].mxu0 %v467
    %v648 = vpop.f32.mrb[0].mxu0
    %v649 = vadd.f32 %v434, %v648
    %v650 = vpop.f32.mrb[0].mxu0
    %651 = vmatprep.mubr.f32.mxu0 0.0
    %652 = vmatmul.mubr.f32.gmra.mrb[0].mxu0 %v470
    %v653 = vpop.f32.mrb[0].mxu0
    %v654 = vadd.f32 %v434, %v653
    %v655 = vpop.f32.mrb[0].mxu0
    %656 = vmatprep.mubr.f32.mxu0 0.0
    %657 = vmatmul.mubr.f32.gmra.mrb[0].mxu0 %v473
    %v658 = vpop.f32.mrb[0].mxu0
    %v659 = vadd.f32 %v434, %v658
    %v660 = vpop.f32.mrb[0].mxu0
    %661 = vmatprep.mubr.f32.mxu0 0.0
    %662 = vmatmul.mubr.f32.gmra.mrb[0].mxu0 %v476
    %v663 = vpop.f32.mrb[0].mxu0
    %v664 = vadd.f32 %v434, %v663
    %v665 = vpop.f32.mrb[0].mxu0
    %666 = vmatprep.mubr.f32.mxu0 0.0
    %667 = vmatmul.mubr.f32.gmra.mrb[0].mxu0 %v479
    %v668 = vpop.f32.mrb[0].mxu0
    %v669 = vadd.f32 %v434, %v668
    %v670 = vpop.f32.mrb[0].mxu0
    %671 = vmatprep.mubr.f32.mxu0 0.0
    %672 = vmatmul.mubr.f32.gmra.mrb[0].mxu0 %v482
    %v673 = vpop.f32.mrb[0].mxu0
    %v674 = vadd.f32 %v434, %v673
    %v675 = vpop.f32.mrb[0].mxu0
    %676 = vmatprep.mubr.f32.mxu0 0.0
    %677 = vmatmul.mubr.f32.gmra.mrb[0].mxu0 %v485
    %v678 = vpop.f32.mrb[0].mxu0
    %v679 = vadd.f32 %v434, %v678
    %v680 = vpop.f32.mrb[0].mxu0
    %681 = vmatprep.mubr.f32.mxu0 0.0
    %682 = vmatmul.mubr.f32.gmra.mrb[0].mxu0 %v488
    %v683 = vpop.f32.mrb[0].mxu0
    %v684 = vadd.f32 %v434, %v683
    %v685 = vpop.f32.mrb[0].mxu0
    %686 = vmatprep.mubr.f32.mxu0 0.0
    %687 = vmatmul.mubr.f32.gmra.mrb[0].mxu0 %v491
    %v688 = vpop.f32.mrb[0].mxu0
    %v689 = vadd.f32 %v434, %v688
    %v690 = vpop.f32.mrb[0].mxu0
    %691 = vmatprep.mubr.f32.mxu0 0.0
    %692 = vmatmul.mubr.f32.gmra.mrb[0].mxu0 %v494
    %v693 = vpop.f32.mrb[0].mxu0
    %v694 = vadd.f32 %v434, %v693
    %v695 = vpop.f32.mrb[0].mxu0
    %696 = vmatprep.mubr.f32.mxu0 0.0
    %697 = vmatmul.mubr.f32.gmra.mrb[0].mxu0 %v497
    %v698 = vpop.f32.mrb[0].mxu0
    %v699 = vadd.f32 %v434, %v698
    %v700 = vpop.f32.mrb[0].mxu0
    %701 = vmatprep.mubr.f32.mxu0 0.0
    %702 = vmatmul.mubr.f32.gmra.mrb[0].mxu0 %v500
    %v703 = vpop.f32.mrb[0].mxu0
    %v704 = vadd.f32 %v434, %v703
    %v705 = vpop.f32.mrb[0].mxu0
    %706 = vmatprep.mubr.f32.mxu0 0.0
    %707 = vmatmul.mubr.f32.gmra.mrb[0].mxu0 %v503
    %v708 = vpop.f32.mrb[0].mxu0
    %v709 = vadd.f32 %v434, %v708
    %v710 = vpop.f32.mrb[0].mxu0
    %711 = vmatprep.mubr.f32.mxu0 0.0
    %712 = vmatmul.mubr.f32.gmra.mrb[0].mxu0 %v506
    %v713 = vpop.f32.mrb[0].mxu0
    %v714 = vadd.f32 %v434, %v713
    %v715 = vpop.f32.mrb[0].mxu0
    %716 = vmatprep.mubr.f32.mxu0 0.0
    %717 = vmatmul.mubr.f32.gmra.mrb[0].mxu0 %v509
    %v718 = vpop.f32.mrb[0].mxu0
    %v719 = vadd.f32 %v434, %v718
    %v720 = vpop.f32.mrb[0].mxu0
    %721 = vmatprep.mubr.f32.mxu0 0.0
    %722 = vmatmul.mubr.f32.gmra.mrb[0].mxu0 %v512
    %v723 = vpop.f32.mrb[0].mxu0
    %v724 = vadd.f32 %v434, %v723
    %v725 = vpop.f32.mrb[0].mxu0
    %726 = vmatprep.mubr.f32.mxu0 0.0
    %727 = vmatmul.mubr.f32.gmra.mrb[0].mxu0 %v515
    %v728 = vpop.f32.mrb[0].mxu0
    %v729 = vadd.f32 %v434, %v728
    %v730 = vpop.f32.mrb[0].mxu0
    %731 = vmatprep.mubr.f32.mxu0 0.0
    %732 = vmatmul.mubr.f32.gmra.mrb[0].mxu0 %v518
    %v733 = vpop.f32.mrb[0].mxu0
    %v734 = vadd.f32 %v434, %v733
    %v735 = vpop.f32.mrb[0].mxu0
    %736 = vmatprep.mubr.f32.mxu0 0.0
    %737 = vmatmul.mubr.f32.gmra.mrb[0].mxu0 %v521
    %v738 = vpop.f32.mrb[0].mxu0
    %v739 = vadd.f32 %v434, %v738
    %v740 = vpop.f32.mrb[0].mxu0
    %741 = vmatprep.mubr.f32.mxu0 0.0
    %742 = vmatmul.mubr.f32.gmra.mrb[0].mxu0 %v524
    %v743 = vpop.f32.mrb[0].mxu0
    %v744 = vadd.f32 %v434, %v743
    %v745 = vpop.f32.mrb[0].mxu0
    %746 = vmatprep.mubr.f32.mxu0 0.0
    %747 = vmatmul.mubr.f32.gmra.mrb[0].mxu0 %v527
    %v748 = vpop.f32.mrb[0].mxu0
    %v749 = vadd.f32 %v434, %v748
    %v750 = vpop.f32.mrb[0].mxu0
    %751 = vmatprep.mubr.f32.mxu0 0.0
    %752 = vmatmul.mubr.f32.gmra.mrb[0].mxu0 %v530
    %v753 = vpop.f32.mrb[0].mxu0
    %v754 = vadd.f32 %v434, %v753
    %v755 = vpop.f32.mrb[0].mxu0
    %756 = vdwg.mxu0
    %v759 = vcombine.high %v417, %v417
    %v761 = vunpack.c.l.s4 1966171168
    %v762 = vunpack.c.0.s8 %v761
    %v763 = vlaneseq
    %v764 = vshrl.u32 %v763, 7
    %v765 = vsub.s32 %v762, %v764
    %v766 = vrot.slane %v417, %v765
    %v768 = vunpack.c.l.s4 1966171168
    %v769 = vunpack.c.0.s8 %v768
    %v770 = vlaneseq
    %v771 = vshrl.u32 %v770, 7
    %v772 = vsub.s32 %v769, %v771
    %v773 = vrot.slane %v759, %v772
    %v774 = vcombine.high %v766, %v766
    %v775 = vcombine.high %v773, %v773
    %v777 = vunpack.c.l.s4 1966171168
    %v778 = vunpack.c.0.s8 %v777
    %v779 = vlaneseq
    %v780 = vshrl.u32 %v779, 7
    %v781 = vsub.s32 %v778, %v780
    %v782 = vrot.slane %v766, %v781
    %v784 = vunpack.c.l.s4 1966171168
    %v785 = vunpack.c.0.s8 %v784
    %v786 = vlaneseq
    %v787 = vshrl.u32 %v786, 7
    %v788 = vsub.s32 %v785, %v787
    %v789 = vrot.slane %v773, %v788
    %v791 = vunpack.c.l.s4 1966171168
    %v792 = vunpack.c.0.s8 %v791
    %v793 = vlaneseq
    %v794 = vshrl.u32 %v793, 7
    %v795 = vsub.s32 %v792, %v794
    %v796 = vrot.slane %v774, %v795
    %v798 = vunpack.c.l.s4 1966171168
    %v799 = vunpack.c.0.s8 %v798
    %v800 = vlaneseq
    %v801 = vshrl.u32 %v800, 7
    %v802 = vsub.s32 %v799, %v801
    %v803 = vrot.slane %v775, %v802
    %v804 = vcombine.high %v782, %v782
    %v805 = vcombine.high %v789, %v789
    %v806 = vcombine.high %v796, %v796
    %v807 = vcombine.high %v803, %v803
    %v808 = vcombine.high %v422, %v422
    %v810 = vunpack.c.l.s4 1966171168
    %v811 = vunpack.c.0.s8 %v810
    %v812 = vlaneseq
    %v813 = vshrl.u32 %v812, 7
    %v814 = vsub.s32 %v811, %v813
    %v815 = vrot.slane %v422, %v814
    %v817 = vunpack.c.l.s4 1966171168
    %v818 = vunpack.c.0.s8 %v817
    %v819 = vlaneseq
    %v820 = vshrl.u32 %v819, 7
    %v821 = vsub.s32 %v818, %v820
    %v822 = vrot.slane %v808, %v821
    %v823 = vcombine.high %v815, %v815
    %v824 = vcombine.high %v822, %v822
    %v826 = vunpack.c.l.s4 1966171168
    %v827 = vunpack.c.0.s8 %v826
    %v828 = vlaneseq
    %v829 = vshrl.u32 %v828, 7
    %v830 = vsub.s32 %v827, %v829
    %v831 = vrot.slane %v815, %v830
    %v833 = vunpack.c.l.s4 1966171168
    %v834 = vunpack.c.0.s8 %v833
    %v835 = vlaneseq
    %v836 = vshrl.u32 %v835, 7
    %v837 = vsub.s32 %v834, %v836
    %v838 = vrot.slane %v822, %v837
    %v840 = vunpack.c.l.s4 1966171168
    %v841 = vunpack.c.0.s8 %v840
    %v842 = vlaneseq
    %v843 = vshrl.u32 %v842, 7
    %v844 = vsub.s32 %v841, %v843
    %v845 = vrot.slane %v823, %v844
    %v847 = vunpack.c.l.s4 1966171168
    %v848 = vunpack.c.0.s8 %v847
    %v849 = vlaneseq
    %v850 = vshrl.u32 %v849, 7
    %v851 = vsub.s32 %v848, %v850
    %v852 = vrot.slane %v824, %v851
    %v853 = vcombine.high %v831, %v831
    %v854 = vcombine.high %v838, %v838
    %v855 = vcombine.high %v845, %v845
    %v856 = vcombine.high %v852, %v852
    %v857 = vlaneseq
    %v858 = vshrl.u32 %v857, 7
    %v859 = vsub.s32 0, %v858
    %v860 = vrot.slane %v782, %v859
    %v861 = vlaneseq
    %v862 = vshrl.u32 %v861, 7
    %v863 = vsub.s32 0, %v862
    %v864 = vrot.slane %v796, %v863
    %v865 = vlaneseq
    %v866 = vshrl.u32 %v865, 7
    %v867 = vsub.s32 0, %v866
    %v868 = vrot.slane %v804, %v867
    %v869 = vlaneseq
    %v870 = vshrl.u32 %v869, 7
    %v871 = vsub.s32 0, %v870
    %v872 = vrot.slane %v806, %v871
    %v873 = vlaneseq
    %v874 = vshrl.u32 %v873, 7
    %v875 = vsub.s32 0, %v874
    %v876 = vrot.slane %v789, %v875
    %v877 = vlaneseq
    %v878 = vshrl.u32 %v877, 7
    %v879 = vsub.s32 0, %v878
    %v880 = vrot.slane %v803, %v879
    %v881 = vlaneseq
    %v882 = vshrl.u32 %v881, 7
    %v883 = vsub.s32 0, %v882
    %v884 = vrot.slane %v805, %v883
    %v885 = vlaneseq
    %v886 = vshrl.u32 %v885, 7
    %v887 = vsub.s32 0, %v886
    %v888 = vrot.slane %v807, %v887
    %v889 = vlaneseq
    %v890 = vshrl.u32 %v889, 7
    %v891 = vsub.s32 0, %v890
    %v892 = vrot.slane %v831, %v891
    %v893 = vlaneseq
    %v894 = vshrl.u32 %v893, 7
    %v895 = vsub.s32 0, %v894
    %v896 = vrot.slane %v845, %v895
    %v897 = vlaneseq
    %v898 = vshrl.u32 %v897, 7
    %v899 = vsub.s32 0, %v898
    %v900 = vrot.slane %v853, %v899
    %v901 = vlaneseq
    %v902 = vshrl.u32 %v901, 7
    %v903 = vsub.s32 0, %v902
    %v904 = vrot.slane %v855, %v903
    %v905 = vlaneseq
    %v906 = vshrl.u32 %v905, 7
    %v907 = vsub.s32 0, %v906
    %v908 = vrot.slane %v838, %v907
    %v909 = vlaneseq
    %v910 = vshrl.u32 %v909, 7
    %v911 = vsub.s32 0, %v910
    %v912 = vrot.slane %v852, %v911
    %v913 = vlaneseq
    %v914 = vshrl.u32 %v913, 7
    %v915 = vsub.s32 0, %v914
    %v916 = vrot.slane %v854, %v915
    %v917 = vlaneseq
    %v918 = vshrl.u32 %v917, 7
    %v919 = vsub.s32 0, %v918
    %v920 = vrot.slane %v856, %v919
    %937 = vrot.lane.b32.xlu0 %v417, 96
    %v938 = vpop.permute.xlu0 %937
    %939 = vrot.lane.b32.xlu0 %v422, 96
    %v940 = vpop.permute.xlu0 %939
    %v943 = vmul.f32 %v860, %v938
    %v944 = vmul.f32 %v860, %v940
    %v945 = vmul.f32 %v864, %v938
    %v946 = vmul.f32 %v864, %v940
    %v947 = vmul.f32 %v868, %v938
    %v948 = vmul.f32 %v868, %v940
    %v949 = vmul.f32 %v872, %v938
    %v950 = vmul.f32 %v872, %v940
    %v951 = vmul.f32 %v876, %v938
    %v952 = vmul.f32 %v876, %v940
    %v953 = vmul.f32 %v880, %v938
    %v954 = vmul.f32 %v880, %v940
    %v955 = vmul.f32 %v884, %v938
    %v956 = vmul.f32 %v884, %v940
    %v957 = vmul.f32 %v888, %v938
    %v958 = vmul.f32 %v888, %v940
    %v959 = vmul.f32 %v892, %v938
    %v960 = vmul.f32 %v892, %v940
    %v961 = vmul.f32 %v896, %v938
    %v962 = vmul.f32 %v896, %v940
    %v963 = vmul.f32 %v900, %v938
    %v964 = vmul.f32 %v900, %v940
    %v965 = vmul.f32 %v904, %v938
    %v966 = vmul.f32 %v904, %v940
    %v967 = vmul.f32 %v908, %v938
    %v968 = vmul.f32 %v908, %v940
    %v969 = vmul.f32 %v912, %v938
    %v970 = vmul.f32 %v912, %v940
    %v971 = vmul.f32 %v916, %v938
    %v972 = vmul.f32 %v916, %v940
    %v973 = vmul.f32 %v920, %v938
    %v974 = vmul.f32 %v920, %v940
    %v975 = vmul.f32 %v943, %v599
    %v976 = vmul.f32 %v944, %v604
    %v977 = vmul.f32 %v945, %v609
    %v978 = vmul.f32 %v946, %v614
    %v979 = vmul.f32 %v947, %v619
    %v980 = vmul.f32 %v948, %v624
    %v981 = vmul.f32 %v949, %v629
    %v982 = vmul.f32 %v950, %v634
    %v983 = vmul.f32 %v951, %v639
    %v984 = vmul.f32 %v952, %v644
    %v985 = vmul.f32 %v953, %v649
    %v986 = vmul.f32 %v954, %v654
    %v987 = vmul.f32 %v955, %v659
    %v988 = vmul.f32 %v956, %v664
    %v989 = vmul.f32 %v957, %v669
    %v990 = vmul.f32 %v958, %v674
    %v991 = vmul.f32 %v959, %v679
    %v992 = vmul.f32 %v960, %v684
    %v993 = vmul.f32 %v961, %v689
    %v994 = vmul.f32 %v962, %v694
    %v995 = vmul.f32 %v963, %v699
    %v996 = vmul.f32 %v964, %v704
    %v997 = vmul.f32 %v965, %v709
    %v998 = vmul.f32 %v966, %v714
    %v999 = vmul.f32 %v967, %v719
    %v1000 = vmul.f32 %v968, %v724
    %v1001 = vmul.f32 %v969, %v729
    %v1002 = vmul.f32 %v970, %v734
    %v1003 = vmul.f32 %v971, %v739
    %v1004 = vmul.f32 %v972, %v744
    %v1005 = vmul.f32 %v973, %v749
    %v1006 = vmul.f32 %v974, %v754
    %v1008 = vsel %vm343, %v975, 0
    %v1011 = vsel %vm343, %v976, 0
    %v1014 = vsel %vm343, %v977, 0
    %v1017 = vsel %vm343, %v978, 0
    %v1020 = vsel %vm343, %v979, 0
    %v1023 = vsel %vm343, %v980, 0
    %v1026 = vsel %vm343, %v981, 0
    %v1029 = vsel %vm343, %v982, 0
    %v1032 = vsel %vm343, %v983, 0
    %v1035 = vsel %vm343, %v984, 0
    %v1038 = vsel %vm343, %v985, 0
    %v1041 = vsel %vm343, %v986, 0
    %v1044 = vsel %vm343, %v987, 0
    %v1047 = vsel %vm343, %v988, 0
    %v1050 = vsel %vm343, %v989, 0
    %v1053 = vsel %vm343, %v990, 0
    %v1056 = vsel %vm343, %v991, 0
    %v1059 = vsel %vm343, %v992, 0
    %v1062 = vsel %vm343, %v993, 0
    %v1065 = vsel %vm343, %v994, 0
    %v1068 = vsel %vm343, %v995, 0
    %v1071 = vsel %vm343, %v996, 0
    %v1074 = vsel %vm343, %v997, 0
    %v1077 = vsel %vm343, %v998, 0
    %v1080 = vsel %vm343, %v999, 0
    %v1083 = vsel %vm343, %v1000, 0
    %v1086 = vsel %vm343, %v1001, 0
    %v1089 = vsel %vm343, %v1002, 0
    %v1092 = vsel %vm343, %v1003, 0
    %v1095 = vsel %vm343, %v1004, 0
    %v1098 = vsel %vm343, %v1005, 0
    %v1101 = vsel %vm343, %v1006, 0
    %1103 = vmatprep.subr.mxu0 0.0
    %1104 = vmatpush1.msra.mxu0 %v328
    %1105 = vmatprep.subr.mxu0 0.0
    %1106 = vmatpush1.msra.mxu0 %v329
    %1107 = vmatprep.subr.mxu0 0.0
    %1108 = vmatpush1.msra.mxu0 %v330
    %1109 = vmatprep.subr.mxu0 0.0
    %1110 = vmatpush1.msra.mxu0 %v331
    %1111 = vmatprep.subr.mxu0 0.0
    %1112 = vmatpush1.msra.mxu0 0.0
    %1113 = vmatprep.subr.mxu0 0.0
    %1114 = vmatpush1.msra.mxu0 0.0
    %1115 = vmatprep.subr.mxu0 0.0
    %1116 = vmatpush1.msra.mxu0 0.0
    %1117 = vmatprep.subr.mxu0 0.0
    %1118 = vmatpush1.msra.mxu0 0.0
    %1119 = vmatprep.subr.mxu0 0.0
    %1120 = vmatpush1.msra.mxu0 0.0
    %1121 = vmatprep.subr.mxu0 0.0
    %1122 = vmatpush1.msra.mxu0 0.0
    %1123 = vmatprep.subr.mxu0 0.0
    %1124 = vmatpush1.msra.mxu0 0.0
    %1125 = vmatprep.subr.mxu0 0.0
    %1126 = vmatpush1.msra.mxu0 0.0
    %1127 = vmatprep.subr.mxu0 0.0
    %1128 = vmatpush1.msra.mxu0 0.0
    %1129 = vmatprep.subr.mxu0 0.0
    %1130 = vmatpush1.msra.mxu0 0.0
    %1131 = vmatprep.subr.mxu0 0.0
    %1132 = vmatpush1.msra.mxu0 0.0
    %1133 = vmatprep.subr.mxu0 0.0
    %1134 = vmatpush1.msra.mxu0 0.0
    %1135 = vmatprep.subr.mxu0 0.0
    %1136 = vmatpush1.msra.mxu0 0.0
    %1137 = vmatprep.subr.mxu0 0.0
    %1138 = vmatpush1.msra.mxu0 0.0
    %1139 = vmatprep.subr.mxu0 0.0
    %1140 = vmatpush1.msra.mxu0 0.0
    %1141 = vmatprep.subr.mxu0 0.0
    %1142 = vmatpush1.msra.mxu0 0.0
    %1143 = vmatprep.subr.mxu0 0.0
    %1144 = vmatpush1.msra.mxu0 0.0
    %1145 = vmatprep.subr.mxu0 0.0
    %1146 = vmatpush1.msra.mxu0 0.0
    %1147 = vmatprep.subr.mxu0 0.0
    %1148 = vmatpush1.msra.mxu0 0.0
    %1149 = vmatprep.subr.mxu0 0.0
    %1150 = vmatpush1.msra.mxu0 0.0
    %1151 = vmatprep.subr.mxu0 0.0
    %1152 = vmatpush1.msra.mxu0 0.0
    %1153 = vmatprep.subr.mxu0 0.0
    %1154 = vmatpush1.msra.mxu0 0.0
    %1155 = vmatprep.subr.mxu0 0.0
    %1156 = vmatpush1.msra.mxu0 0.0
    %1157 = vmatprep.subr.mxu0 0.0
    %1158 = vmatpush1.msra.mxu0 0.0
    %1159 = vmatprep.subr.mxu0 0.0
    %1160 = vmatpush1.msra.mxu0 0.0
    %1161 = vmatprep.subr.mxu0 0.0
    %1162 = vmatpush1.msra.mxu0 0.0
    %1163 = vmatprep.subr.mxu0 0.0
    %1164 = vmatpush1.msra.mxu0 0.0
    %1165 = vmatprep.subr.mxu0 0.0
    %1166 = vmatpush1.msra.mxu0 0.0
    %1167 = vmatprep.mubr.f32.mxu0 0.0
    %1168 = vmatmul.mubr.f32.gmra.mrb[0].mxu0 %v1008
    %v1169 = vpop.f32.mrb[0].mxu0
    %v1170 = vadd.f32 0.0, %v1169
    %v1171 = vpop.f32.mrb[0].mxu0
    %1172 = vmatprep.mubr.f32.mxu0 0.0
    %1173 = vmatmul.mubr.f32.gmra.mrb[0].mxu0 %v1011
    %v1174 = vpop.f32.mrb[0].mxu0
    %v1175 = vadd.f32 0.0, %v1174
    %v1176 = vpop.f32.mrb[0].mxu0
    %1177 = vmatprep.mubr.f32.mxu0 0.0
    %1178 = vmatmul.mubr.f32.gmra.mrb[0].mxu0 %v1014
    %v1179 = vpop.f32.mrb[0].mxu0
    %v1180 = vadd.f32 0.0, %v1179
    %v1181 = vpop.f32.mrb[0].mxu0
    %1182 = vmatprep.mubr.f32.mxu0 0.0
    %1183 = vmatmul.mubr.f32.gmra.mrb[0].mxu0 %v1017
    %v1184 = vpop.f32.mrb[0].mxu0
    %v1185 = vadd.f32 0.0, %v1184
    %v1186 = vpop.f32.mrb[0].mxu0
    %1187 = vmatprep.mubr.f32.mxu0 0.0
    %1188 = vmatmul.mubr.f32.gmra.mrb[0].mxu0 %v1020
    %v1189 = vpop.f32.mrb[0].mxu0
    %v1190 = vadd.f32 0.0, %v1189
    %v1191 = vpop.f32.mrb[0].mxu0
    %1192 = vmatprep.mubr.f32.mxu0 0.0
    %1193 = vmatmul.mubr.f32.gmra.mrb[0].mxu0 %v1023
    %v1194 = vpop.f32.mrb[0].mxu0
    %v1195 = vadd.f32 0.0, %v1194
    %v1196 = vpop.f32.mrb[0].mxu0
    %1197 = vmatprep.mubr.f32.mxu0 0.0
    %1198 = vmatmul.mubr.f32.gmra.mrb[0].mxu0 %v1026
    %v1199 = vpop.f32.mrb[0].mxu0
    %v1200 = vadd.f32 0.0, %v1199
    %v1201 = vpop.f32.mrb[0].mxu0
    %1202 = vmatprep.mubr.f32.mxu0 0.0
    %1203 = vmatmul.mubr.f32.gmra.mrb[0].mxu0 %v1029
    %v1204 = vpop.f32.mrb[0].mxu0
    %v1205 = vadd.f32 0.0, %v1204
    %v1206 = vpop.f32.mrb[0].mxu0
    %1207 = vmatprep.mubr.f32.mxu0 0.0
    %1208 = vmatmul.mubr.f32.gmra.mrb[0].mxu0 %v1032
    %v1209 = vpop.f32.mrb[0].mxu0
    %v1210 = vadd.f32 0.0, %v1209
    %v1211 = vpop.f32.mrb[0].mxu0
    %1212 = vmatprep.mubr.f32.mxu0 0.0
    %1213 = vmatmul.mubr.f32.gmra.mrb[0].mxu0 %v1035
    %v1214 = vpop.f32.mrb[0].mxu0
    %v1215 = vadd.f32 0.0, %v1214
    %v1216 = vpop.f32.mrb[0].mxu0
    %1217 = vmatprep.mubr.f32.mxu0 0.0
    %1218 = vmatmul.mubr.f32.gmra.mrb[0].mxu0 %v1038
    %v1219 = vpop.f32.mrb[0].mxu0
    %v1220 = vadd.f32 0.0, %v1219
    %v1221 = vpop.f32.mrb[0].mxu0
    %1222 = vmatprep.mubr.f32.mxu0 0.0
    %1223 = vmatmul.mubr.f32.gmra.mrb[0].mxu0 %v1041
    %v1224 = vpop.f32.mrb[0].mxu0
    %v1225 = vadd.f32 0.0, %v1224
    %v1226 = vpop.f32.mrb[0].mxu0
    %1227 = vmatprep.mubr.f32.mxu0 0.0
    %1228 = vmatmul.mubr.f32.gmra.mrb[0].mxu0 %v1044
    %v1229 = vpop.f32.mrb[0].mxu0
    %v1230 = vadd.f32 0.0, %v1229
    %v1231 = vpop.f32.mrb[0].mxu0
    %1232 = vmatprep.mubr.f32.mxu0 0.0
    %1233 = vmatmul.mubr.f32.gmra.mrb[0].mxu0 %v1047
    %v1234 = vpop.f32.mrb[0].mxu0
    %v1235 = vadd.f32 0.0, %v1234
    %v1236 = vpop.f32.mrb[0].mxu0
    %1237 = vmatprep.mubr.f32.mxu0 0.0
    %1238 = vmatmul.mubr.f32.gmra.mrb[0].mxu0 %v1050
    %v1239 = vpop.f32.mrb[0].mxu0
    %v1240 = vadd.f32 0.0, %v1239
    %v1241 = vpop.f32.mrb[0].mxu0
    %1242 = vmatprep.mubr.f32.mxu0 0.0
    %1243 = vmatmul.mubr.f32.gmra.mrb[0].mxu0 %v1053
    %v1244 = vpop.f32.mrb[0].mxu0
    %v1245 = vadd.f32 0.0, %v1244
    %v1246 = vpop.f32.mrb[0].mxu0
    %1247 = vmatprep.mubr.f32.mxu0 0.0
    %1248 = vmatmul.mubr.f32.gmra.mrb[0].mxu0 %v1056
    %v1249 = vpop.f32.mrb[0].mxu0
    %v1250 = vadd.f32 0.0, %v1249
    %v1251 = vpop.f32.mrb[0].mxu0
    %1252 = vmatprep.mubr.f32.mxu0 0.0
    %1253 = vmatmul.mubr.f32.gmra.mrb[0].mxu0 %v1059
    %v1254 = vpop.f32.mrb[0].mxu0
    %v1255 = vadd.f32 0.0, %v1254
    %v1256 = vpop.f32.mrb[0].mxu0
    %1257 = vmatprep.mubr.f32.mxu0 0.0
    %1258 = vmatmul.mubr.f32.gmra.mrb[0].mxu0 %v1062
    %v1259 = vpop.f32.mrb[0].mxu0
    %v1260 = vadd.f32 0.0, %v1259
    %v1261 = vpop.f32.mrb[0].mxu0
    %1262 = vmatprep.mubr.f32.mxu0 0.0
    %1263 = vmatmul.mubr.f32.gmra.mrb[0].mxu0 %v1065
    %v1264 = vpop.f32.mrb[0].mxu0
    %v1265 = vadd.f32 0.0, %v1264
    %v1266 = vpop.f32.mrb[0].mxu0
    %1267 = vmatprep.mubr.f32.mxu0 0.0
    %1268 = vmatmul.mubr.f32.gmra.mrb[0].mxu0 %v1068
    %v1269 = vpop.f32.mrb[0].mxu0
    %v1270 = vadd.f32 0.0, %v1269
    %v1271 = vpop.f32.mrb[0].mxu0
    %1272 = vmatprep.mubr.f32.mxu0 0.0
    %1273 = vmatmul.mubr.f32.gmra.mrb[0].mxu0 %v1071
    %v1274 = vpop.f32.mrb[0].mxu0
    %v1275 = vadd.f32 0.0, %v1274
    %v1276 = vpop.f32.mrb[0].mxu0
    %1277 = vmatprep.mubr.f32.mxu0 0.0
    %1278 = vmatmul.mubr.f32.gmra.mrb[0].mxu0 %v1074
    %v1279 = vpop.f32.mrb[0].mxu0
    %v1280 = vadd.f32 0.0, %v1279
    %v1281 = vpop.f32.mrb[0].mxu0
    %1282 = vmatprep.mubr.f32.mxu0 0.0
    %1283 = vmatmul.mubr.f32.gmra.mrb[0].mxu0 %v1077
    %v1284 = vpop.f32.mrb[0].mxu0
    %v1285 = vadd.f32 0.0, %v1284
    %v1286 = vpop.f32.mrb[0].mxu0
    %1287 = vmatprep.mubr.f32.mxu0 0.0
    %1288 = vmatmul.mubr.f32.gmra.mrb[0].mxu0 %v1080
    %v1289 = vpop.f32.mrb[0].mxu0
    %v1290 = vadd.f32 0.0, %v1289
    %v1291 = vpop.f32.mrb[0].mxu0
    %1292 = vmatprep.mubr.f32.mxu0 0.0
    %1293 = vmatmul.mubr.f32.gmra.mrb[0].mxu0 %v1083
    %v1294 = vpop.f32.mrb[0].mxu0
    %v1295 = vadd.f32 0.0, %v1294
    %v1296 = vpop.f32.mrb[0].mxu0
    %1297 = vmatprep.mubr.f32.mxu0 0.0
    %1298 = vmatmul.mubr.f32.gmra.mrb[0].mxu0 %v1086
    %v1299 = vpop.f32.mrb[0].mxu0
    %v1300 = vadd.f32 0.0, %v1299
    %v1301 = vpop.f32.mrb[0].mxu0
    %1302 = vmatprep.mubr.f32.mxu0 0.0
    %1303 = vmatmul.mubr.f32.gmra.mrb[0].mxu0 %v1089
    %v1304 = vpop.f32.mrb[0].mxu0
    %v1305 = vadd.f32 0.0, %v1304
    %v1306 = vpop.f32.mrb[0].mxu0
    %1307 = vmatprep.mubr.f32.mxu0 0.0
    %1308 = vmatmul.mubr.f32.gmra.mrb[0].mxu0 %v1092
    %v1309 = vpop.f32.mrb[0].mxu0
    %v1310 = vadd.f32 0.0, %v1309
    %v1311 = vpop.f32.mrb[0].mxu0
    %1312 = vmatprep.mubr.f32.mxu0 0.0
    %1313 = vmatmul.mubr.f32.gmra.mrb[0].mxu0 %v1095
    %v1314 = vpop.f32.mrb[0].mxu0
    %v1315 = vadd.f32 0.0, %v1314
    %v1316 = vpop.f32.mrb[0].mxu0
    %1317 = vmatprep.mubr.f32.mxu0 0.0
    %1318 = vmatmul.mubr.f32.gmra.mrb[0].mxu0 %v1098
    %v1319 = vpop.f32.mrb[0].mxu0
    %v1320 = vadd.f32 0.0, %v1319
    %v1321 = vpop.f32.mrb[0].mxu0
    %1322 = vmatprep.mubr.f32.mxu0 0.0
    %1323 = vmatmul.mubr.f32.gmra.mrb[0].mxu0 %v1101
    %v1324 = vpop.f32.mrb[0].mxu0
    %v1325 = vadd.f32 0.0, %v1324
    %v1326 = vpop.f32.mrb[0].mxu0
    %1327 = vdwg.mxu0
    %v1328 = vmax.f32 %v1170, -5.0
    %v1329 = vmax.f32 %v1175, -5.0
    %v1330 = vmax.f32 %v1180, -5.0
    %v1331 = vmax.f32 %v1185, -5.0
    %v1332 = vmax.f32 %v1190, -5.0
    %v1333 = vmax.f32 %v1195, -5.0
    %v1334 = vmax.f32 %v1200, -5.0
    %v1335 = vmax.f32 %v1205, -5.0
    %v1336 = vmax.f32 %v1210, -5.0
    %v1337 = vmax.f32 %v1215, -5.0
    %v1338 = vmax.f32 %v1220, -5.0
    %v1339 = vmax.f32 %v1225, -5.0
    %v1340 = vmax.f32 %v1230, -5.0
    %v1341 = vmax.f32 %v1235, -5.0
    %v1342 = vmax.f32 %v1240, -5.0
    %v1343 = vmax.f32 %v1245, -5.0
    %v1344 = vmax.f32 %v1250, -5.0
    %v1345 = vmax.f32 %v1255, -5.0
    %v1346 = vmax.f32 %v1260, -5.0
    %v1347 = vmax.f32 %v1265, -5.0
    %v1348 = vmax.f32 %v1270, -5.0
    %v1349 = vmax.f32 %v1275, -5.0
    %v1350 = vmax.f32 %v1280, -5.0
    %v1351 = vmax.f32 %v1285, -5.0
    %v1352 = vmax.f32 %v1290, -5.0
    %v1353 = vmax.f32 %v1295, -5.0
    %v1354 = vmax.f32 %v1300, -5.0
    %v1355 = vmax.f32 %v1305, -5.0
    %v1356 = vmax.f32 %v1310, -5.0
    %v1357 = vmax.f32 %v1315, -5.0
    %v1358 = vmax.f32 %v1320, -5.0
    %v1359 = vmax.f32 %v1325, -5.0
    %v1360 = vmin.f32 %v1328, 5.0
    %v1361 = vmin.f32 %v1329, 5.0
    %v1362 = vmin.f32 %v1330, 5.0
    %v1363 = vmin.f32 %v1331, 5.0
    %v1364 = vmin.f32 %v1332, 5.0
    %v1365 = vmin.f32 %v1333, 5.0
    %v1366 = vmin.f32 %v1334, 5.0
    %v1367 = vmin.f32 %v1335, 5.0
    %v1368 = vmin.f32 %v1336, 5.0
    %v1369 = vmin.f32 %v1337, 5.0
    %v1370 = vmin.f32 %v1338, 5.0
    %v1371 = vmin.f32 %v1339, 5.0
    %v1372 = vmin.f32 %v1340, 5.0
    %v1373 = vmin.f32 %v1341, 5.0
    %v1374 = vmin.f32 %v1342, 5.0
    %v1375 = vmin.f32 %v1343, 5.0
    %v1376 = vmin.f32 %v1344, 5.0
    %v1377 = vmin.f32 %v1345, 5.0
    %v1378 = vmin.f32 %v1346, 5.0
    %v1379 = vmin.f32 %v1347, 5.0
    %v1380 = vmin.f32 %v1348, 5.0
    %v1381 = vmin.f32 %v1349, 5.0
    %v1382 = vmin.f32 %v1350, 5.0
    %v1383 = vmin.f32 %v1351, 5.0
    %v1384 = vmin.f32 %v1352, 5.0
    %v1385 = vmin.f32 %v1353, 5.0
    %v1386 = vmin.f32 %v1354, 5.0
    %v1387 = vmin.f32 %v1355, 5.0
    %v1388 = vmin.f32 %v1356, 5.0
    %v1389 = vmin.f32 %v1357, 5.0
    %v1390 = vmin.f32 %v1358, 5.0
    %v1391 = vmin.f32 %v1359, 5.0
    %v1392 = vmul.f32 %v1360, 1.442695
    %v1393 = vpow.pop %v1392
    %v1394 = vmul.f32 %v1361, 1.442695
    %v1395 = vpow.pop %v1394
    %v1396 = vmul.f32 %v1362, 1.442695
    %v1397 = vpow.pop %v1396
    %v1398 = vmul.f32 %v1363, 1.442695
    %v1399 = vpow.pop %v1398
    %v1400 = vmul.f32 %v1364, 1.442695
    %v1401 = vpow.pop %v1400
    %v1402 = vmul.f32 %v1365, 1.442695
    %v1403 = vpow.pop %v1402
    %v1404 = vmul.f32 %v1366, 1.442695
    %v1405 = vpow.pop %v1404
    %v1406 = vmul.f32 %v1367, 1.442695
    %v1407 = vpow.pop %v1406
    %v1408 = vmul.f32 %v1368, 1.442695
    %v1409 = vpow.pop %v1408
    %v1410 = vmul.f32 %v1369, 1.442695
    %v1411 = vpow.pop %v1410
    %v1412 = vmul.f32 %v1370, 1.442695
    %v1413 = vpow.pop %v1412
    %v1414 = vmul.f32 %v1371, 1.442695
    %v1415 = vpow.pop %v1414
    %v1416 = vmul.f32 %v1372, 1.442695
    %v1417 = vpow.pop %v1416
    %v1418 = vmul.f32 %v1373, 1.442695
    %v1419 = vpow.pop %v1418
    %v1420 = vmul.f32 %v1374, 1.442695
    %v1421 = vpow.pop %v1420
    %v1422 = vmul.f32 %v1375, 1.442695
    %v1423 = vpow.pop %v1422
    %v1424 = vmul.f32 %v1376, 1.442695
    %v1425 = vpow.pop %v1424
    %v1426 = vmul.f32 %v1377, 1.442695
    %v1427 = vpow.pop %v1426
    %v1428 = vmul.f32 %v1378, 1.442695
    %v1429 = vpow.pop %v1428
    %v1430 = vmul.f32 %v1379, 1.442695
    %v1431 = vpow.pop %v1430
    %v1432 = vmul.f32 %v1380, 1.442695
    %v1433 = vpow.pop %v1432
    %v1434 = vmul.f32 %v1381, 1.442695
    %v1435 = vpow.pop %v1434
    %v1436 = vmul.f32 %v1382, 1.442695
    %v1437 = vpow.pop %v1436
    %v1438 = vmul.f32 %v1383, 1.442695
    %v1439 = vpow.pop %v1438
    %v1440 = vmul.f32 %v1384, 1.442695
    %v1441 = vpow.pop %v1440
    %v1442 = vmul.f32 %v1385, 1.442695
    %v1443 = vpow.pop %v1442
    %v1444 = vmul.f32 %v1386, 1.442695
    %v1445 = vpow.pop %v1444
    %v1446 = vmul.f32 %v1387, 1.442695
    %v1447 = vpow.pop %v1446
    %v1448 = vmul.f32 %v1388, 1.442695
    %v1449 = vpow.pop %v1448
    %v1450 = vmul.f32 %v1389, 1.442695
    %v1451 = vpow.pop %v1450
    %v1452 = vmul.f32 %v1390, 1.442695
    %v1453 = vpow.pop %v1452
    %v1454 = vmul.f32 %v1391, 1.442695
    %v1455 = vpow.pop %v1454
    %1457 = vset.pattern.permute.xlu0 0
    %1458 = vperm.xlu0 %1457, %v292
    %v1459 = vpop.permute.xlu0 %1458
    %1462 = vset.pattern.permute.xlu0 0
    %1463 = vperm.xlu0 %1462, %v293
    %v1464 = vpop.permute.xlu0 %1463
    %1467 = vset.pattern.permute.xlu0 0
    %1468 = vperm.xlu0 %1467, %v294
    %v1469 = vpop.permute.xlu0 %1468
    %1472 = vset.pattern.permute.xlu0 0
    %1473 = vperm.xlu0 %1472, %v295
    %v1474 = vpop.permute.xlu0 %1473
    %1477 = vset.pattern.permute.xlu0 0
    %1478 = vperm.xlu0 %1477, %v296
    %v1479 = vpop.permute.xlu0 %1478
    %1482 = vset.pattern.permute.xlu0 0
    %1483 = vperm.xlu0 %1482, %v297
    %v1484 = vpop.permute.xlu0 %1483
    %1487 = vset.pattern.permute.xlu0 0
    %1488 = vperm.xlu0 %1487, %v298
    %v1489 = vpop.permute.xlu0 %1488
    %1492 = vset.pattern.permute.xlu0 0
    %1493 = vperm.xlu0 %1492, %v299
    %v1494 = vpop.permute.xlu0 %1493
    %1497 = vset.pattern.permute.xlu0 0
    %1498 = vperm.xlu0 %1497, %v300
    %v1499 = vpop.permute.xlu0 %1498
    %1502 = vset.pattern.permute.xlu0 0
    %1503 = vperm.xlu0 %1502, %v301
    %v1504 = vpop.permute.xlu0 %1503
    %1507 = vset.pattern.permute.xlu0 0
    %1508 = vperm.xlu0 %1507, %v302
    %v1509 = vpop.permute.xlu0 %1508
    %1512 = vset.pattern.permute.xlu0 0
    %1513 = vperm.xlu0 %1512, %v303
    %v1514 = vpop.permute.xlu0 %1513
    %1517 = vset.pattern.permute.xlu0 0
    %1518 = vperm.xlu0 %1517, %v304
    %v1519 = vpop.permute.xlu0 %1518
    %1522 = vset.pattern.permute.xlu0 0
    %1523 = vperm.xlu0 %1522, %v305
    %v1524 = vpop.permute.xlu0 %1523
    %1527 = vset.pattern.permute.xlu0 0
    %1528 = vperm.xlu0 %1527, %v306
    %v1529 = vpop.permute.xlu0 %1528
    %1532 = vset.pattern.permute.xlu0 0
    %1533 = vperm.xlu0 %1532, %v307
    %v1534 = vpop.permute.xlu0 %1533
    %1537 = vset.pattern.permute.xlu0 0
    %1538 = vperm.xlu0 %1537, %v308
    %v1539 = vpop.permute.xlu0 %1538
    %1542 = vset.pattern.permute.xlu0 0
    %1543 = vperm.xlu0 %1542, %v309
    %v1544 = vpop.permute.xlu0 %1543
    %1547 = vset.pattern.permute.xlu0 0
    %1548 = vperm.xlu0 %1547, %v310
    %v1549 = vpop.permute.xlu0 %1548
    %1552 = vset.pattern.permute.xlu0 0
    %1553 = vperm.xlu0 %1552, %v311
    %v1554 = vpop.permute.xlu0 %1553
    %1557 = vset.pattern.permute.xlu0 0
    %1558 = vperm.xlu0 %1557, %v312
    %v1559 = vpop.permute.xlu0 %1558
    %1562 = vset.pattern.permute.xlu0 0
    %1563 = vperm.xlu0 %1562, %v313
    %v1564 = vpop.permute.xlu0 %1563
    %1567 = vset.pattern.permute.xlu0 0
    %1568 = vperm.xlu0 %1567, %v314
    %v1569 = vpop.permute.xlu0 %1568
    %1572 = vset.pattern.permute.xlu0 0
    %1573 = vperm.xlu0 %1572, %v315
    %v1574 = vpop.permute.xlu0 %1573
    %1577 = vset.pattern.permute.xlu0 0
    %1578 = vperm.xlu0 %1577, %v316
    %v1579 = vpop.permute.xlu0 %1578
    %1582 = vset.pattern.permute.xlu0 0
    %1583 = vperm.xlu0 %1582, %v317
    %v1584 = vpop.permute.xlu0 %1583
    %1587 = vset.pattern.permute.xlu0 0
    %1588 = vperm.xlu0 %1587, %v318
    %v1589 = vpop.permute.xlu0 %1588
    %1592 = vset.pattern.permute.xlu0 0
    %1593 = vperm.xlu0 %1592, %v319
    %v1594 = vpop.permute.xlu0 %1593
    %1597 = vset.pattern.permute.xlu0 0
    %1598 = vperm.xlu0 %1597, %v320
    %v1599 = vpop.permute.xlu0 %1598
    %1602 = vset.pattern.permute.xlu0 0
    %1603 = vperm.xlu0 %1602, %v321
    %v1604 = vpop.permute.xlu0 %1603
    %1607 = vset.pattern.permute.xlu0 0
    %1608 = vperm.xlu0 %1607, %v322
    %v1609 = vpop.permute.xlu0 %1608
    %1612 = vset.pattern.permute.xlu0 0
    %1613 = vperm.xlu0 %1612, %v323
    %v1614 = vpop.permute.xlu0 %1613
    %v1616 = vmul.f32 %v1393, %v1459
    %v1617 = vmul.f32 %v1395, %v1464
    %v1618 = vmul.f32 %v1397, %v1469
    %v1619 = vmul.f32 %v1399, %v1474
    %v1620 = vmul.f32 %v1401, %v1479
    %v1621 = vmul.f32 %v1403, %v1484
    %v1622 = vmul.f32 %v1405, %v1489
    %v1623 = vmul.f32 %v1407, %v1494
    %v1624 = vmul.f32 %v1409, %v1499
    %v1625 = vmul.f32 %v1411, %v1504
    %v1626 = vmul.f32 %v1413, %v1509
    %v1627 = vmul.f32 %v1415, %v1514
    %v1628 = vmul.f32 %v1417, %v1519
    %v1629 = vmul.f32 %v1419, %v1524
    %v1630 = vmul.f32 %v1421, %v1529
    %v1631 = vmul.f32 %v1423, %v1534
    %v1632 = vmul.f32 %v1425, %v1539
    %v1633 = vmul.f32 %v1427, %v1544
    %v1634 = vmul.f32 %v1429, %v1549
    %v1635 = vmul.f32 %v1431, %v1554
    %v1636 = vmul.f32 %v1433, %v1559
    %v1637 = vmul.f32 %v1435, %v1564
    %v1638 = vmul.f32 %v1437, %v1569
    %v1639 = vmul.f32 %v1439, %v1574
    %v1640 = vmul.f32 %v1441, %v1579
    %v1641 = vmul.f32 %v1443, %v1584
    %v1642 = vmul.f32 %v1445, %v1589
    %v1643 = vmul.f32 %v1447, %v1594
    %v1644 = vmul.f32 %v1449, %v1599
    %v1645 = vmul.f32 %v1451, %v1604
    %v1646 = vmul.f32 %v1453, %v1609
    %v1647 = vmul.f32 %v1455, %v1614
    %1648 = vrot.lane.b32.xlu0 %v417, 64
    %v1649 = vpop.permute.xlu0 %1648
    %1650 = vrot.lane.b32.xlu0 %v422, 64
    %v1651 = vpop.permute.xlu0 %1650
    %v1654 = vmul.f32 %v1616, %v1649
    %v1655 = vmul.f32 %v1617, %v1651
    %v1656 = vmul.f32 %v1618, %v1649
    %v1657 = vmul.f32 %v1619, %v1651
    %v1658 = vmul.f32 %v1620, %v1649
    %v1659 = vmul.f32 %v1621, %v1651
    %v1660 = vmul.f32 %v1622, %v1649
    %v1661 = vmul.f32 %v1623, %v1651
    %v1662 = vmul.f32 %v1624, %v1649
    %v1663 = vmul.f32 %v1625, %v1651
    %v1664 = vmul.f32 %v1626, %v1649
    %v1665 = vmul.f32 %v1627, %v1651
    %v1666 = vmul.f32 %v1628, %v1649
    %v1667 = vmul.f32 %v1629, %v1651
    %v1668 = vmul.f32 %v1630, %v1649
    %v1669 = vmul.f32 %v1631, %v1651
    %v1670 = vmul.f32 %v1632, %v1649
    %v1671 = vmul.f32 %v1633, %v1651
    %v1672 = vmul.f32 %v1634, %v1649
    %v1673 = vmul.f32 %v1635, %v1651
    %v1674 = vmul.f32 %v1636, %v1649
    %v1675 = vmul.f32 %v1637, %v1651
    %v1676 = vmul.f32 %v1638, %v1649
    %v1677 = vmul.f32 %v1639, %v1651
    %v1678 = vmul.f32 %v1640, %v1649
    %v1679 = vmul.f32 %v1641, %v1651
    %v1680 = vmul.f32 %v1642, %v1649
    %v1681 = vmul.f32 %v1643, %v1651
    %v1682 = vmul.f32 %v1644, %v1649
    %v1683 = vmul.f32 %v1645, %v1651
    %v1684 = vmul.f32 %v1646, %v1649
    %v1685 = vmul.f32 %v1647, %v1651
    %1686 = vmatprep.subr.mxu0 0.0
    %1687 = vmatpush1.msra.mxu0 %v1654
    %1688 = vmatprep.subr.mxu0 0.0
    %1689 = vmatpush1.msra.mxu0 %v1655
    %1690 = vmatprep.subr.mxu0 0.0
    %1691 = vmatpush1.msra.mxu0 %v1656
    %1692 = vmatprep.subr.mxu0 0.0
    %1693 = vmatpush1.msra.mxu0 %v1657
    %1694 = vmatprep.subr.mxu0 0.0
    %1695 = vmatpush1.msra.mxu0 %v1658
    %1696 = vmatprep.subr.mxu0 0.0
    %1697 = vmatpush1.msra.mxu0 %v1659
    %1698 = vmatprep.subr.mxu0 0.0
    %1699 = vmatpush1.msra.mxu0 %v1660
    %1700 = vmatprep.subr.mxu0 0.0
    %1701 = vmatpush1.msra.mxu0 %v1661
    %1702 = vmatprep.subr.mxu0 0.0
    %1703 = vmatpush1.msra.mxu0 %v1662
    %1704 = vmatprep.subr.mxu0 0.0
    %1705 = vmatpush1.msra.mxu0 %v1663
    %1706 = vmatprep.subr.mxu0 0.0
    %1707 = vmatpush1.msra.mxu0 %v1664
    %1708 = vmatprep.subr.mxu0 0.0
    %1709 = vmatpush1.msra.mxu0 %v1665
    %1710 = vmatprep.subr.mxu0 0.0
    %1711 = vmatpush1.msra.mxu0 %v1666
    %1712 = vmatprep.subr.mxu0 0.0
    %1713 = vmatpush1.msra.mxu0 %v1667
    %1714 = vmatprep.subr.mxu0 0.0
    %1715 = vmatpush1.msra.mxu0 %v1668
    %1716 = vmatprep.subr.mxu0 0.0
    %1717 = vmatpush1.msra.mxu0 %v1669
    %1718 = vmatprep.subr.mxu0 0.0
    %1719 = vmatpush1.msra.mxu0 %v1670
    %1720 = vmatprep.subr.mxu0 0.0
    %1721 = vmatpush1.msra.mxu0 %v1671
    %1722 = vmatprep.subr.mxu0 0.0
    %1723 = vmatpush1.msra.mxu0 %v1672
    %1724 = vmatprep.subr.mxu0 0.0
    %1725 = vmatpush1.msra.mxu0 %v1673
    %1726 = vmatprep.subr.mxu0 0.0
    %1727 = vmatpush1.msra.mxu0 %v1674
    %1728 = vmatprep.subr.mxu0 0.0
    %1729 = vmatpush1.msra.mxu0 %v1675
    %1730 = vmatprep.subr.mxu0 0.0
    %1731 = vmatpush1.msra.mxu0 %v1676
    %1732 = vmatprep.subr.mxu0 0.0
    %1733 = vmatpush1.msra.mxu0 %v1677
    %1734 = vmatprep.subr.mxu0 0.0
    %1735 = vmatpush1.msra.mxu0 %v1678
    %1736 = vmatprep.subr.mxu0 0.0
    %1737 = vmatpush1.msra.mxu0 %v1679
    %1738 = vmatprep.subr.mxu0 0.0
    %1739 = vmatpush1.msra.mxu0 %v1680
    %1740 = vmatprep.subr.mxu0 0.0
    %1741 = vmatpush1.msra.mxu0 %v1681
    %1742 = vmatprep.subr.mxu0 0.0
    %1743 = vmatpush1.msra.mxu0 %v1682
    %1744 = vmatprep.subr.mxu0 0.0
    %1745 = vmatpush1.msra.mxu0 %v1683
    %1746 = vmatprep.subr.mxu0 0.0
    %1747 = vmatpush1.msra.mxu0 %v1684
    %1748 = vmatprep.subr.mxu0 0.0
    %1749 = vmatpush1.msra.mxu0 %v1685
    %1750 = vmatprep.mubr.f32.mxu0 %v325
    %1751 = vmatmul.mubr.f32.gmra.mrb[0].mxu0 %v324
    %v1752 = vpop.f32.mrb[0].mxu0
    %v1753 = vadd.f32 0.0, %v1752
    %v1754 = vpop.f32.mrb[0].mxu0
    %1755 = vmatprep.mubr.f32.mxu0 %v327
    %1756 = vmatmul.mubr.f32.gmra.mrb[0].mxu0 %v326
    %v1757 = vpop.f32.mrb[0].mxu0
    %v1758 = vadd.f32 0.0, %v1757
    %v1759 = vpop.f32.mrb[0].mxu0
    %1760 = vdwg.mxu0
    %1761 = vmatprep.subr.mxu0 0.0
    %1762 = vmatpush1.msra.mxu0 %v1616
    %1763 = vmatprep.subr.mxu0 0.0
    %1764 = vmatpush1.msra.mxu0 %v1617
    %1765 = vmatprep.subr.mxu0 0.0
    %1766 = vmatpush1.msra.mxu0 %v1618
    %1767 = vmatprep.subr.mxu0 0.0
    %1768 = vmatpush1.msra.mxu0 %v1619
    %1769 = vmatprep.subr.mxu0 0.0
    %1770 = vmatpush1.msra.mxu0 %v1620
    %1771 = vmatprep.subr.mxu0 0.0
    %1772 = vmatpush1.msra.mxu0 %v1621
    %1773 = vmatprep.subr.mxu0 0.0
    %1774 = vmatpush1.msra.mxu0 %v1622
    %1775 = vmatprep.subr.mxu0 0.0
    %1776 = vmatpush1.msra.mxu0 %v1623
    %1777 = vmatprep.subr.mxu0 0.0
    %1778 = vmatpush1.msra.mxu0 %v1624
    %1779 = vmatprep.subr.mxu0 0.0
    %1780 = vmatpush1.msra.mxu0 %v1625
    %1781 = vmatprep.subr.mxu0 0.0
    %1782 = vmatpush1.msra.mxu0 %v1626
    %1783 = vmatprep.subr.mxu0 0.0
    %1784 = vmatpush1.msra.mxu0 %v1627
    %1785 = vmatprep.subr.mxu0 0.0
    %1786 = vmatpush1.msra.mxu0 %v1628
    %1787 = vmatprep.subr.mxu0 0.0
    %1788 = vmatpush1.msra.mxu0 %v1629
    %1789 = vmatprep.subr.mxu0 0.0
    %1790 = vmatpush1.msra.mxu0 %v1630
    %1791 = vmatprep.subr.mxu0 0.0
    %1792 = vmatpush1.msra.mxu0 %v1631
    %1793 = vmatprep.subr.mxu0 0.0
    %1794 = vmatpush1.msra.mxu0 %v1632
    %1795 = vmatprep.subr.mxu0 0.0
    %1796 = vmatpush1.msra.mxu0 %v1633
    %1797 = vmatprep.subr.mxu0 0.0
    %1798 = vmatpush1.msra.mxu0 %v1634
    %1799 = vmatprep.subr.mxu0 0.0
    %1800 = vmatpush1.msra.mxu0 %v1635
    %1801 = vmatprep.subr.mxu0 0.0
    %1802 = vmatpush1.msra.mxu0 %v1636
    %1803 = vmatprep.subr.mxu0 0.0
    %1804 = vmatpush1.msra.mxu0 %v1637
    %1805 = vmatprep.subr.mxu0 0.0
    %1806 = vmatpush1.msra.mxu0 %v1638
    %1807 = vmatprep.subr.mxu0 0.0
    %1808 = vmatpush1.msra.mxu0 %v1639
    %1809 = vmatprep.subr.mxu0 0.0
    %1810 = vmatpush1.msra.mxu0 %v1640
    %1811 = vmatprep.subr.mxu0 0.0
    %1812 = vmatpush1.msra.mxu0 %v1641
    %1813 = vmatprep.subr.mxu0 0.0
    %1814 = vmatpush1.msra.mxu0 %v1642
    %1815 = vmatprep.subr.mxu0 0.0
    %1816 = vmatpush1.msra.mxu0 %v1643
    %1817 = vmatprep.subr.mxu0 0.0
    %1818 = vmatpush1.msra.mxu0 %v1644
    %1819 = vmatprep.subr.mxu0 0.0
    %1820 = vmatpush1.msra.mxu0 %v1645
    %1821 = vmatprep.subr.mxu0 0.0
    %1822 = vmatpush1.msra.mxu0 %v1646
    %1823 = vmatprep.subr.mxu0 0.0
    %1824 = vmatpush1.msra.mxu0 %v1647
    %1825 = vmatprep.mubr.f32.mxu0 %v325
    %1826 = vmatmul.mubr.f32.gmra.mrb[0].mxu0 %v324
    %v1827 = vpop.f32.mrb[0].mxu0
    %v1828 = vadd.f32 1e-06, %v1827
    %v1829 = vpop.f32.mrb[0].mxu0
    %1830 = vmatprep.mubr.f32.mxu0 %v327
    %1831 = vmatmul.mubr.f32.gmra.mrb[0].mxu0 %v326
    %v1832 = vpop.f32.mrb[0].mxu0
    %v1833 = vadd.f32 1e-06, %v1832
    %v1834 = vpop.f32.mrb[0].mxu0
    %1835 = vdwg.mxu0
    %v1836 = vrcp.pop %v1828
    %v1837 = vrcp.pop %v1833
    %v1838 = vmul.f32 %v1753, %v1836
    %v1839 = vmul.f32 %v1758, %v1837
    %v1840 = vld [vmem:[%s25] sm:$0xff]
    %v1841 = vld [vmem:[%s25 + $0x8] sm:$0xff]
    %v1842 = vld [vmem:[%s25 + $0x10] sm:$0xff]
    %v1843 = vld [vmem:[%s25 + $0x18] sm:$0xff]
    %v1844 = vld [vmem:[%s27] sm:$0x1]
    %v1846 = vlaneseq
    %v1847 = vshrl.u32 %v1846, 7
    %v1848 = vsub.s32 0, %v1847
    %v1849 = vrot.slane %v1844, %v1848
    %v1852 = vsel %vm343, %v1838, 0
    %v1855 = vsel %vm343, %v1839, 0
    %1857 = vmatprep.subr.mxu0 0.0
    %1858 = vmatpush1.msra.mxu0 %v1840
    %1859 = vmatprep.subr.mxu0 0.0
    %1860 = vmatpush1.msra.mxu0 %v1841
    %1861 = vmatprep.subr.mxu0 0.0
    %1862 = vmatpush1.msra.mxu0 %v1842
    %1863 = vmatprep.subr.mxu0 0.0
    %1864 = vmatpush1.msra.mxu0 %v1843
    %1865 = vmatprep.subr.mxu0 0.0
    %1866 = vmatpush1.msra.mxu0 0.0
    %1867 = vmatprep.subr.mxu0 0.0
    %1868 = vmatpush1.msra.mxu0 0.0
    %1869 = vmatprep.subr.mxu0 0.0
    %1870 = vmatpush1.msra.mxu0 0.0
    %1871 = vmatprep.subr.mxu0 0.0
    %1872 = vmatpush1.msra.mxu0 0.0
    %1873 = vmatprep.subr.mxu0 0.0
    %1874 = vmatpush1.msra.mxu0 0.0
    %1875 = vmatprep.subr.mxu0 0.0
    %1876 = vmatpush1.msra.mxu0 0.0
    %1877 = vmatprep.subr.mxu0 0.0
    %1878 = vmatpush1.msra.mxu0 0.0
    %1879 = vmatprep.subr.mxu0 0.0
    %1880 = vmatpush1.msra.mxu0 0.0
    %1881 = vmatprep.subr.mxu0 0.0
    %1882 = vmatpush1.msra.mxu0 0.0
    %1883 = vmatprep.subr.mxu0 0.0
    %1884 = vmatpush1.msra.mxu0 0.0
    %1885 = vmatprep.subr.mxu0 0.0
    %1886 = vmatpush1.msra.mxu0 0.0
    %1887 = vmatprep.subr.mxu0 0.0
    %1888 = vmatpush1.msra.mxu0 0.0
    %1889 = vmatprep.subr.mxu0 0.0
    %1890 = vmatpush1.msra.mxu0 0.0
    %1891 = vmatprep.subr.mxu0 0.0
    %1892 = vmatpush1.msra.mxu0 0.0
    %1893 = vmatprep.subr.mxu0 0.0
    %1894 = vmatpush1.msra.mxu0 0.0
    %1895 = vmatprep.subr.mxu0 0.0
    %1896 = vmatpush1.msra.mxu0 0.0
    %1897 = vmatprep.subr.mxu0 0.0
    %1898 = vmatpush1.msra.mxu0 0.0
    %1899 = vmatprep.subr.mxu0 0.0
    %1900 = vmatpush1.msra.mxu0 0.0
    %1901 = vmatprep.subr.mxu0 0.0
    %1902 = vmatpush1.msra.mxu0 0.0
    %1903 = vmatprep.subr.mxu0 0.0
    %1904 = vmatpush1.msra.mxu0 0.0
    %1905 = vmatprep.subr.mxu0 0.0
    %1906 = vmatpush1.msra.mxu0 0.0
    %1907 = vmatprep.subr.mxu0 0.0
    %1908 = vmatpush1.msra.mxu0 0.0
    %1909 = vmatprep.subr.mxu0 0.0
    %1910 = vmatpush1.msra.mxu0 0.0
    %1911 = vmatprep.subr.mxu0 0.0
    %1912 = vmatpush1.msra.mxu0 0.0
    %1913 = vmatprep.subr.mxu0 0.0
    %1914 = vmatpush1.msra.mxu0 0.0
    %1915 = vmatprep.subr.mxu0 0.0
    %1916 = vmatpush1.msra.mxu0 0.0
    %1917 = vmatprep.subr.mxu0 0.0
    %1918 = vmatpush1.msra.mxu0 0.0
    %1919 = vmatprep.subr.mxu0 0.0
    %1920 = vmatpush1.msra.mxu0 0.0
    %1921 = vmatprep.mubr.f32.mxu0 0.0
    %1922 = vmatmul.mubr.f32.gmra.mrb[0].mxu0 %v1852
    %v1923 = vpop.f32.mrb[0].mxu0
    %v1924 = vadd.f32 %v1849, %v1923
    %v1925 = vpop.f32.mrb[0].mxu0
    %1926 = vmatprep.mubr.f32.mxu0 0.0
    %1927 = vmatmul.mubr.f32.gmra.mrb[0].mxu0 %v1855
    %v1928 = vpop.f32.mrb[0].mxu0
    %v1929 = vadd.f32 %v1849, %v1928
    %v1930 = vpop.f32.mrb[0].mxu0
    %1931 = vdwg.mxu0
    %v1932 = vld [vmem:[%s29] sm:$0xff]
    %v1933 = vld [vmem:[%s29 + $0x8] sm:$0xff]
    %v1934 = vld [vmem:[%s29 + $0x10] sm:$0xff]
    %v1935 = vld [vmem:[%s29 + $0x18] sm:$0xff]
    %v1936 = vld [vmem:[%s31] sm:$0x1]
    %v1938 = vlaneseq
    %v1939 = vshrl.u32 %v1938, 7
    %v1940 = vsub.s32 0, %v1939
    %v1941 = vrot.slane %v1936, %v1940
    %1943 = vmatprep.subr.mxu0 0.0
    %1944 = vmatpush1.msra.mxu0 %v1932
    %1945 = vmatprep.subr.mxu0 0.0
    %1946 = vmatpush1.msra.mxu0 %v1933
    %1947 = vmatprep.subr.mxu0 0.0
    %1948 = vmatpush1.msra.mxu0 %v1934
    %1949 = vmatprep.subr.mxu0 0.0
    %1950 = vmatpush1.msra.mxu0 %v1935
    %1951 = vmatprep.subr.mxu0 0.0
    %1952 = vmatpush1.msra.mxu0 0.0
    %1953 = vmatprep.subr.mxu0 0.0
    %1954 = vmatpush1.msra.mxu0 0.0
    %1955 = vmatprep.subr.mxu0 0.0
    %1956 = vmatpush1.msra.mxu0 0.0
    %1957 = vmatprep.subr.mxu0 0.0
    %1958 = vmatpush1.msra.mxu0 0.0
    %1959 = vmatprep.subr.mxu0 0.0
    %1960 = vmatpush1.msra.mxu0 0.0
    %1961 = vmatprep.subr.mxu0 0.0
    %1962 = vmatpush1.msra.mxu0 0.0
    %1963 = vmatprep.subr.mxu0 0.0
    %1964 = vmatpush1.msra.mxu0 0.0
    %1965 = vmatprep.subr.mxu0 0.0
    %1966 = vmatpush1.msra.mxu0 0.0
    %1967 = vmatprep.subr.mxu0 0.0
    %1968 = vmatpush1.msra.mxu0 0.0
    %1969 = vmatprep.subr.mxu0 0.0
    %1970 = vmatpush1.msra.mxu0 0.0
    %1971 = vmatprep.subr.mxu0 0.0
    %1972 = vmatpush1.msra.mxu0 0.0
    %1973 = vmatprep.subr.mxu0 0.0
    %1974 = vmatpush1.msra.mxu0 0.0
    %1975 = vmatprep.subr.mxu0 0.0
    %1976 = vmatpush1.msra.mxu0 0.0
    %1977 = vmatprep.subr.mxu0 0.0
    %1978 = vmatpush1.msra.mxu0 0.0
    %1979 = vmatprep.subr.mxu0 0.0
    %1980 = vmatpush1.msra.mxu0 0.0
    %1981 = vmatprep.subr.mxu0 0.0
    %1982 = vmatpush1.msra.mxu0 0.0
    %1983 = vmatprep.subr.mxu0 0.0
    %1984 = vmatpush1.msra.mxu0 0.0
    %1985 = vmatprep.subr.mxu0 0.0
    %1986 = vmatpush1.msra.mxu0 0.0
    %1987 = vmatprep.subr.mxu0 0.0
    %1988 = vmatpush1.msra.mxu0 0.0
    %1989 = vmatprep.subr.mxu0 0.0
    %1990 = vmatpush1.msra.mxu0 0.0
    %1991 = vmatprep.subr.mxu0 0.0
    %1992 = vmatpush1.msra.mxu0 0.0
    %1993 = vmatprep.subr.mxu0 0.0
    %1994 = vmatpush1.msra.mxu0 0.0
    %1995 = vmatprep.subr.mxu0 0.0
    %1996 = vmatpush1.msra.mxu0 0.0
    %1997 = vmatprep.subr.mxu0 0.0
    %1998 = vmatpush1.msra.mxu0 0.0
    %1999 = vmatprep.subr.mxu0 0.0
    %2000 = vmatpush1.msra.mxu0 0.0
    %2001 = vmatprep.subr.mxu0 0.0
    %2002 = vmatpush1.msra.mxu0 0.0
    %2003 = vmatprep.subr.mxu0 0.0
    %2004 = vmatpush1.msra.mxu0 0.0
    %2005 = vmatprep.subr.mxu0 0.0
    %2006 = vmatpush1.msra.mxu0 0.0
    %2007 = vmatprep.mubr.f32.mxu0 0.0
    %2008 = vmatmul.mubr.f32.gmra.mrb[0].mxu0 %v1008
    %v2009 = vpop.f32.mrb[0].mxu0
    %v2010 = vadd.f32 %v1941, %v2009
    %v2011 = vpop.f32.mrb[0].mxu0
    %2012 = vmatprep.mubr.f32.mxu0 0.0
    %2013 = vmatmul.mubr.f32.gmra.mrb[0].mxu0 %v1011
    %v2014 = vpop.f32.mrb[0].mxu0
    %v2015 = vadd.f32 %v1941, %v2014
    %v2016 = vpop.f32.mrb[0].mxu0
    %2017 = vmatprep.mubr.f32.mxu0 0.0
    %2018 = vmatmul.mubr.f32.gmra.mrb[0].mxu0 %v1014
    %v2019 = vpop.f32.mrb[0].mxu0
    %v2020 = vadd.f32 %v1941, %v2019
    %v2021 = vpop.f32.mrb[0].mxu0
    %2022 = vmatprep.mubr.f32.mxu0 0.0
    %2023 = vmatmul.mubr.f32.gmra.mrb[0].mxu0 %v1017
    %v2024 = vpop.f32.mrb[0].mxu0
    %v2025 = vadd.f32 %v1941, %v2024
    %v2026 = vpop.f32.mrb[0].mxu0
    %2027 = vmatprep.mubr.f32.mxu0 0.0
    %2028 = vmatmul.mubr.f32.gmra.mrb[0].mxu0 %v1020
    %v2029 = vpop.f32.mrb[0].mxu0
    %v2030 = vadd.f32 %v1941, %v2029
    %v2031 = vpop.f32.mrb[0].mxu0
    %2032 = vmatprep.mubr.f32.mxu0 0.0
    %2033 = vmatmul.mubr.f32.gmra.mrb[0].mxu0 %v1023
    %v2034 = vpop.f32.mrb[0].mxu0
    %v2035 = vadd.f32 %v1941, %v2034
    %v2036 = vpop.f32.mrb[0].mxu0
    %2037 = vmatprep.mubr.f32.mxu0 0.0
    %2038 = vmatmul.mubr.f32.gmra.mrb[0].mxu0 %v1026
    %v2039 = vpop.f32.mrb[0].mxu0
    %v2040 = vadd.f32 %v1941, %v2039
    %v2041 = vpop.f32.mrb[0].mxu0
    %2042 = vmatprep.mubr.f32.mxu0 0.0
    %2043 = vmatmul.mubr.f32.gmra.mrb[0].mxu0 %v1029
    %v2044 = vpop.f32.mrb[0].mxu0
    %v2045 = vadd.f32 %v1941, %v2044
    %v2046 = vpop.f32.mrb[0].mxu0
    %2047 = vmatprep.mubr.f32.mxu0 0.0
    %2048 = vmatmul.mubr.f32.gmra.mrb[0].mxu0 %v1032
    %v2049 = vpop.f32.mrb[0].mxu0
    %v2050 = vadd.f32 %v1941, %v2049
    %v2051 = vpop.f32.mrb[0].mxu0
    %2052 = vmatprep.mubr.f32.mxu0 0.0
    %2053 = vmatmul.mubr.f32.gmra.mrb[0].mxu0 %v1035
    %v2054 = vpop.f32.mrb[0].mxu0
    %v2055 = vadd.f32 %v1941, %v2054
    %v2056 = vpop.f32.mrb[0].mxu0
    %2057 = vmatprep.mubr.f32.mxu0 0.0
    %2058 = vmatmul.mubr.f32.gmra.mrb[0].mxu0 %v1038
    %v2059 = vpop.f32.mrb[0].mxu0
    %v2060 = vadd.f32 %v1941, %v2059
    %v2061 = vpop.f32.mrb[0].mxu0
    %2062 = vmatprep.mubr.f32.mxu0 0.0
    %2063 = vmatmul.mubr.f32.gmra.mrb[0].mxu0 %v1041
    %v2064 = vpop.f32.mrb[0].mxu0
    %v2065 = vadd.f32 %v1941, %v2064
    %v2066 = vpop.f32.mrb[0].mxu0
    %2067 = vmatprep.mubr.f32.mxu0 0.0
    %2068 = vmatmul.mubr.f32.gmra.mrb[0].mxu0 %v1044
    %v2069 = vpop.f32.mrb[0].mxu0
    %v2070 = vadd.f32 %v1941, %v2069
    %v2071 = vpop.f32.mrb[0].mxu0
    %2072 = vmatprep.mubr.f32.mxu0 0.0
    %2073 = vmatmul.mubr.f32.gmra.mrb[0].mxu0 %v1047
    %v2074 = vpop.f32.mrb[0].mxu0
    %v2075 = vadd.f32 %v1941, %v2074
    %v2076 = vpop.f32.mrb[0].mxu0
    %2077 = vmatprep.mubr.f32.mxu0 0.0
    %2078 = vmatmul.mubr.f32.gmra.mrb[0].mxu0 %v1050
    %v2079 = vpop.f32.mrb[0].mxu0
    %v2080 = vadd.f32 %v1941, %v2079
    %v2081 = vpop.f32.mrb[0].mxu0
    %2082 = vmatprep.mubr.f32.mxu0 0.0
    %2083 = vmatmul.mubr.f32.gmra.mrb[0].mxu0 %v1053
    %v2084 = vpop.f32.mrb[0].mxu0
    %v2085 = vadd.f32 %v1941, %v2084
    %v2086 = vpop.f32.mrb[0].mxu0
    %2087 = vmatprep.mubr.f32.mxu0 0.0
    %2088 = vmatmul.mubr.f32.gmra.mrb[0].mxu0 %v1056
    %v2089 = vpop.f32.mrb[0].mxu0
    %v2090 = vadd.f32 %v1941, %v2089
    %v2091 = vpop.f32.mrb[0].mxu0
    %2092 = vmatprep.mubr.f32.mxu0 0.0
    %2093 = vmatmul.mubr.f32.gmra.mrb[0].mxu0 %v1059
    %v2094 = vpop.f32.mrb[0].mxu0
    %v2095 = vadd.f32 %v1941, %v2094
    %v2096 = vpop.f32.mrb[0].mxu0
    %2097 = vmatprep.mubr.f32.mxu0 0.0
    %2098 = vmatmul.mubr.f32.gmra.mrb[0].mxu0 %v1062
    %v2099 = vpop.f32.mrb[0].mxu0
    %v2100 = vadd.f32 %v1941, %v2099
    %v2101 = vpop.f32.mrb[0].mxu0
    %2102 = vmatprep.mubr.f32.mxu0 0.0
    %2103 = vmatmul.mubr.f32.gmra.mrb[0].mxu0 %v1065
    %v2104 = vpop.f32.mrb[0].mxu0
    %v2105 = vadd.f32 %v1941, %v2104
    %v2106 = vpop.f32.mrb[0].mxu0
    %2107 = vmatprep.mubr.f32.mxu0 0.0
    %2108 = vmatmul.mubr.f32.gmra.mrb[0].mxu0 %v1068
    %v2109 = vpop.f32.mrb[0].mxu0
    %v2110 = vadd.f32 %v1941, %v2109
    %v2111 = vpop.f32.mrb[0].mxu0
    %2112 = vmatprep.mubr.f32.mxu0 0.0
    %2113 = vmatmul.mubr.f32.gmra.mrb[0].mxu0 %v1071
    %v2114 = vpop.f32.mrb[0].mxu0
    %v2115 = vadd.f32 %v1941, %v2114
    %v2116 = vpop.f32.mrb[0].mxu0
    %2117 = vmatprep.mubr.f32.mxu0 0.0
    %2118 = vmatmul.mubr.f32.gmra.mrb[0].mxu0 %v1074
    %v2119 = vpop.f32.mrb[0].mxu0
    %v2120 = vadd.f32 %v1941, %v2119
    %v2121 = vpop.f32.mrb[0].mxu0
    %2122 = vmatprep.mubr.f32.mxu0 0.0
    %2123 = vmatmul.mubr.f32.gmra.mrb[0].mxu0 %v1077
    %v2124 = vpop.f32.mrb[0].mxu0
    %v2125 = vadd.f32 %v1941, %v2124
    %v2126 = vpop.f32.mrb[0].mxu0
    %2127 = vmatprep.mubr.f32.mxu0 0.0
    %2128 = vmatmul.mubr.f32.gmra.mrb[0].mxu0 %v1080
    %v2129 = vpop.f32.mrb[0].mxu0
    %v2130 = vadd.f32 %v1941, %v2129
    %v2131 = vpop.f32.mrb[0].mxu0
    %2132 = vmatprep.mubr.f32.mxu0 0.0
    %2133 = vmatmul.mubr.f32.gmra.mrb[0].mxu0 %v1083
    %v2134 = vpop.f32.mrb[0].mxu0
    %v2135 = vadd.f32 %v1941, %v2134
    %v2136 = vpop.f32.mrb[0].mxu0
    %2137 = vmatprep.mubr.f32.mxu0 0.0
    %2138 = vmatmul.mubr.f32.gmra.mrb[0].mxu0 %v1086
    %v2139 = vpop.f32.mrb[0].mxu0
    %v2140 = vadd.f32 %v1941, %v2139
    %v2141 = vpop.f32.mrb[0].mxu0
    %2142 = vmatprep.mubr.f32.mxu0 0.0
    %2143 = vmatmul.mubr.f32.gmra.mrb[0].mxu0 %v1089
    %v2144 = vpop.f32.mrb[0].mxu0
    %v2145 = vadd.f32 %v1941, %v2144
    %v2146 = vpop.f32.mrb[0].mxu0
    %2147 = vmatprep.mubr.f32.mxu0 0.0
    %2148 = vmatmul.mubr.f32.gmra.mrb[0].mxu0 %v1092
    %v2149 = vpop.f32.mrb[0].mxu0
    %v2150 = vadd.f32 %v1941, %v2149
    %v2151 = vpop.f32.mrb[0].mxu0
    %2152 = vmatprep.mubr.f32.mxu0 0.0
    %2153 = vmatmul.mubr.f32.gmra.mrb[0].mxu0 %v1095
    %v2154 = vpop.f32.mrb[0].mxu0
    %v2155 = vadd.f32 %v1941, %v2154
    %v2156 = vpop.f32.mrb[0].mxu0
    %2157 = vmatprep.mubr.f32.mxu0 0.0
    %2158 = vmatmul.mubr.f32.gmra.mrb[0].mxu0 %v1098
    %v2159 = vpop.f32.mrb[0].mxu0
    %v2160 = vadd.f32 %v1941, %v2159
    %v2161 = vpop.f32.mrb[0].mxu0
    %2162 = vmatprep.mubr.f32.mxu0 0.0
    %2163 = vmatmul.mubr.f32.gmra.mrb[0].mxu0 %v1101
    %v2164 = vpop.f32.mrb[0].mxu0
    %v2165 = vadd.f32 %v1941, %v2164
    %v2166 = vpop.f32.mrb[0].mxu0
    %2167 = vdwg.mxu0
    %v2168 = vadd.f32 %v258, %v1924
    %v2169 = vadd.f32 %v259, %v1929
    %v2170 = vld [vmem:[%s49] sm:$0x1]
    %v2171 = vld [vmem:[%s51] sm:$0x1]
    %v2172 = vsel %vm343, %v2168, 0.0
    %2173 = vadd.xlane.f32.xlu0 %v2172
    %v2174 = vpop.xlane.xlu0 %2173
    %v2175 = vsel %vm343, %v2169, 0.0
    %2176 = vadd.xlane.f32.xlu0 %v2175
    %v2177 = vpop.xlane.xlu0 %2176
    %v2178 = vrcp.pop 32.0
    %v2179 = vmul.f32 %v2174, %v2178
    %v2180 = vmul.f32 %v2177, %v2178
    %v2181 = vsub.f32 %v2168, %v2179
    %v2182 = vsub.f32 %v2169, %v2180
    %v2183 = vmul.f32 %v2181, %v2181
    %v2184 = vmul.f32 %v2182, %v2182
    %v2185 = vsel %vm343, %v2183, 0.0
    %2186 = vadd.xlane.f32.xlu0 %v2185
    %v2187 = vpop.xlane.xlu0 %2186
    %v2188 = vsel %vm343, %v2184, 0.0
    %2189 = vadd.xlane.f32.xlu0 %v2188
    %v2190 = vpop.xlane.xlu0 %2189
    %v2191 = vmul.f32 %v2187, %v2178
    %v2192 = vmul.f32 %v2190, %v2178
    %v2193 = vadd.f32 %v2191, 1e-05
    %v2194 = vadd.f32 %v2192, 1e-05
    %v2195 = vrsqrt.pop %v2193
    %v2196 = vrsqrt.pop %v2194
    %v2197 = vmul.f32 %v2181, %v2195
    %v2198 = vmul.f32 %v2182, %v2196
    %v2200 = vlaneseq
    %v2201 = vshrl.u32 %v2200, 7
    %v2202 = vsub.s32 0, %v2201
    %v2203 = vrot.slane %v2170, %v2202
    %v2205 = vmul.f32 %v2197, %v2203
    %v2206 = vmul.f32 %v2198, %v2203
    %v2208 = vlaneseq
    %v2209 = vshrl.u32 %v2208, 7
    %v2210 = vsub.s32 0, %v2209
    %v2211 = vrot.slane %v2171, %v2210
    %v2213 = vadd.f32 %v2205, %v2211
    %v2214 = vadd.f32 %v2206, %v2211
    %v2215 = vadd.f32 %v260, %v2010
    %v2216 = vadd.f32 %v261, %v2015
    %v2217 = vadd.f32 %v262, %v2020
    %v2218 = vadd.f32 %v263, %v2025
    %v2219 = vadd.f32 %v264, %v2030
    %v2220 = vadd.f32 %v265, %v2035
    %v2221 = vadd.f32 %v266, %v2040
    %v2222 = vadd.f32 %v267, %v2045
    %v2223 = vadd.f32 %v268, %v2050
    %v2224 = vadd.f32 %v269, %v2055
    %v2225 = vadd.f32 %v270, %v2060
    %v2226 = vadd.f32 %v271, %v2065
    %v2227 = vadd.f32 %v272, %v2070
    %v2228 = vadd.f32 %v273, %v2075
    %v2229 = vadd.f32 %v274, %v2080
    %v2230 = vadd.f32 %v275, %v2085
    %v2231 = vadd.f32 %v276, %v2090
    %v2232 = vadd.f32 %v277, %v2095
    %v2233 = vadd.f32 %v278, %v2100
    %v2234 = vadd.f32 %v279, %v2105
    %v2235 = vadd.f32 %v280, %v2110
    %v2236 = vadd.f32 %v281, %v2115
    %v2237 = vadd.f32 %v282, %v2120
    %v2238 = vadd.f32 %v283, %v2125
    %v2239 = vadd.f32 %v284, %v2130
    %v2240 = vadd.f32 %v285, %v2135
    %v2241 = vadd.f32 %v286, %v2140
    %v2242 = vadd.f32 %v287, %v2145
    %v2243 = vadd.f32 %v288, %v2150
    %v2244 = vadd.f32 %v289, %v2155
    %v2245 = vadd.f32 %v290, %v2160
    %v2246 = vadd.f32 %v291, %v2165
    %v2247 = vld [vmem:[%s53] sm:$0x1]
    %v2248 = vld [vmem:[%s55] sm:$0x1]
    %v2249 = vsel %vm343, %v2215, 0.0
    %2250 = vadd.xlane.f32.xlu0 %v2249
    %v2251 = vpop.xlane.xlu0 %2250
    %v2252 = vsel %vm343, %v2216, 0.0
    %2253 = vadd.xlane.f32.xlu0 %v2252
    %v2254 = vpop.xlane.xlu0 %2253
    %v2255 = vsel %vm343, %v2217, 0.0
    %2256 = vadd.xlane.f32.xlu0 %v2255
    %v2257 = vpop.xlane.xlu0 %2256
    %v2258 = vsel %vm343, %v2218, 0.0
    %2259 = vadd.xlane.f32.xlu0 %v2258
    %v2260 = vpop.xlane.xlu0 %2259
    %v2261 = vsel %vm343, %v2219, 0.0
    %2262 = vadd.xlane.f32.xlu0 %v2261
    %v2263 = vpop.xlane.xlu0 %2262
    %v2264 = vsel %vm343, %v2220, 0.0
    %2265 = vadd.xlane.f32.xlu0 %v2264
    %v2266 = vpop.xlane.xlu0 %2265
    %v2267 = vsel %vm343, %v2221, 0.0
    %2268 = vadd.xlane.f32.xlu0 %v2267
    %v2269 = vpop.xlane.xlu0 %2268
    %v2270 = vsel %vm343, %v2222, 0.0
    %2271 = vadd.xlane.f32.xlu0 %v2270
    %v2272 = vpop.xlane.xlu0 %2271
    %v2273 = vsel %vm343, %v2223, 0.0
    %2274 = vadd.xlane.f32.xlu0 %v2273
    %v2275 = vpop.xlane.xlu0 %2274
    %v2276 = vsel %vm343, %v2224, 0.0
    %2277 = vadd.xlane.f32.xlu0 %v2276
    %v2278 = vpop.xlane.xlu0 %2277
    %v2279 = vsel %vm343, %v2225, 0.0
    %2280 = vadd.xlane.f32.xlu0 %v2279
    %v2281 = vpop.xlane.xlu0 %2280
    %v2282 = vsel %vm343, %v2226, 0.0
    %2283 = vadd.xlane.f32.xlu0 %v2282
    %v2284 = vpop.xlane.xlu0 %2283
    %v2285 = vsel %vm343, %v2227, 0.0
    %2286 = vadd.xlane.f32.xlu0 %v2285
    %v2287 = vpop.xlane.xlu0 %2286
    %v2288 = vsel %vm343, %v2228, 0.0
    %2289 = vadd.xlane.f32.xlu0 %v2288
    %v2290 = vpop.xlane.xlu0 %2289
    %v2291 = vsel %vm343, %v2229, 0.0
    %2292 = vadd.xlane.f32.xlu0 %v2291
    %v2293 = vpop.xlane.xlu0 %2292
    %v2294 = vsel %vm343, %v2230, 0.0
    %2295 = vadd.xlane.f32.xlu0 %v2294
    %v2296 = vpop.xlane.xlu0 %2295
    %v2297 = vsel %vm343, %v2231, 0.0
    %2298 = vadd.xlane.f32.xlu0 %v2297
    %v2299 = vpop.xlane.xlu0 %2298
    %v2300 = vsel %vm343, %v2232, 0.0
    %2301 = vadd.xlane.f32.xlu0 %v2300
    %v2302 = vpop.xlane.xlu0 %2301
    %v2303 = vsel %vm343, %v2233, 0.0
    %2304 = vadd.xlane.f32.xlu0 %v2303
    %v2305 = vpop.xlane.xlu0 %2304
    %v2306 = vsel %vm343, %v2234, 0.0
    %2307 = vadd.xlane.f32.xlu0 %v2306
    %v2308 = vpop.xlane.xlu0 %2307
    %v2309 = vsel %vm343, %v2235, 0.0
    %2310 = vadd.xlane.f32.xlu0 %v2309
    %v2311 = vpop.xlane.xlu0 %2310
    %v2312 = vsel %vm343, %v2236, 0.0
    %2313 = vadd.xlane.f32.xlu0 %v2312
    %v2314 = vpop.xlane.xlu0 %2313
    %v2315 = vsel %vm343, %v2237, 0.0
    %2316 = vadd.xlane.f32.xlu0 %v2315
    %v2317 = vpop.xlane.xlu0 %2316
    %v2318 = vsel %vm343, %v2238, 0.0
    %2319 = vadd.xlane.f32.xlu0 %v2318
    %v2320 = vpop.xlane.xlu0 %2319
    %v2321 = vsel %vm343, %v2239, 0.0
    %2322 = vadd.xlane.f32.xlu0 %v2321
    %v2323 = vpop.xlane.xlu0 %2322
    %v2324 = vsel %vm343, %v2240, 0.0
    %2325 = vadd.xlane.f32.xlu0 %v2324
    %v2326 = vpop.xlane.xlu0 %2325
    %v2327 = vsel %vm343, %v2241, 0.0
    %2328 = vadd.xlane.f32.xlu0 %v2327
    %v2329 = vpop.xlane.xlu0 %2328
    %v2330 = vsel %vm343, %v2242, 0.0
    %2331 = vadd.xlane.f32.xlu0 %v2330
    %v2332 = vpop.xlane.xlu0 %2331
    %v2333 = vsel %vm343, %v2243, 0.0
    %2334 = vadd.xlane.f32.xlu0 %v2333
    %v2335 = vpop.xlane.xlu0 %2334
    %v2336 = vsel %vm343, %v2244, 0.0
    %2337 = vadd.xlane.f32.xlu0 %v2336
    %v2338 = vpop.xlane.xlu0 %2337
    %v2339 = vsel %vm343, %v2245, 0.0
    %2340 = vadd.xlane.f32.xlu0 %v2339
    %v2341 = vpop.xlane.xlu0 %2340
    %v2342 = vsel %vm343, %v2246, 0.0
    %2343 = vadd.xlane.f32.xlu0 %v2342
    %v2344 = vpop.xlane.xlu0 %2343
    %v2345 = vmul.f32 %v2251, %v2178
    %v2346 = vmul.f32 %v2254, %v2178
    %v2347 = vmul.f32 %v2257, %v2178
    %v2348 = vmul.f32 %v2260, %v2178
    %v2349 = vmul.f32 %v2263, %v2178
    %v2350 = vmul.f32 %v2266, %v2178
    %v2351 = vmul.f32 %v2269, %v2178
    %v2352 = vmul.f32 %v2272, %v2178
    %v2353 = vmul.f32 %v2275, %v2178
    %v2354 = vmul.f32 %v2278, %v2178
    %v2355 = vmul.f32 %v2281, %v2178
    %v2356 = vmul.f32 %v2284, %v2178
    %v2357 = vmul.f32 %v2287, %v2178
    %v2358 = vmul.f32 %v2290, %v2178
    %v2359 = vmul.f32 %v2293, %v2178
    %v2360 = vmul.f32 %v2296, %v2178
    %v2361 = vmul.f32 %v2299, %v2178
    %v2362 = vmul.f32 %v2302, %v2178
    %v2363 = vmul.f32 %v2305, %v2178
    %v2364 = vmul.f32 %v2308, %v2178
    %v2365 = vmul.f32 %v2311, %v2178
    %v2366 = vmul.f32 %v2314, %v2178
    %v2367 = vmul.f32 %v2317, %v2178
    %v2368 = vmul.f32 %v2320, %v2178
    %v2369 = vmul.f32 %v2323, %v2178
    %v2370 = vmul.f32 %v2326, %v2178
    %v2371 = vmul.f32 %v2329, %v2178
    %v2372 = vmul.f32 %v2332, %v2178
    %v2373 = vmul.f32 %v2335, %v2178
    %v2374 = vmul.f32 %v2338, %v2178
    %v2375 = vmul.f32 %v2341, %v2178
    %v2376 = vmul.f32 %v2344, %v2178
    %v2377 = vsub.f32 %v2215, %v2345
    %v2378 = vsub.f32 %v2216, %v2346
    %v2379 = vsub.f32 %v2217, %v2347
    %v2380 = vsub.f32 %v2218, %v2348
    %v2381 = vsub.f32 %v2219, %v2349
    %v2382 = vsub.f32 %v2220, %v2350
    %v2383 = vsub.f32 %v2221, %v2351
    %v2384 = vsub.f32 %v2222, %v2352
    %v2385 = vsub.f32 %v2223, %v2353
    %v2386 = vsub.f32 %v2224, %v2354
    %v2387 = vsub.f32 %v2225, %v2355
    %v2388 = vsub.f32 %v2226, %v2356
    %v2389 = vsub.f32 %v2227, %v2357
    %v2390 = vsub.f32 %v2228, %v2358
    %v2391 = vsub.f32 %v2229, %v2359
    %v2392 = vsub.f32 %v2230, %v2360
    %v2393 = vsub.f32 %v2231, %v2361
    %v2394 = vsub.f32 %v2232, %v2362
    %v2395 = vsub.f32 %v2233, %v2363
    %v2396 = vsub.f32 %v2234, %v2364
    %v2397 = vsub.f32 %v2235, %v2365
    %v2398 = vsub.f32 %v2236, %v2366
    %v2399 = vsub.f32 %v2237, %v2367
    %v2400 = vsub.f32 %v2238, %v2368
    %v2401 = vsub.f32 %v2239, %v2369
    %v2402 = vsub.f32 %v2240, %v2370
    %v2403 = vsub.f32 %v2241, %v2371
    %v2404 = vsub.f32 %v2242, %v2372
    %v2405 = vsub.f32 %v2243, %v2373
    %v2406 = vsub.f32 %v2244, %v2374
    %v2407 = vsub.f32 %v2245, %v2375
    %v2408 = vsub.f32 %v2246, %v2376
    %v2409 = vmul.f32 %v2377, %v2377
    %v2410 = vmul.f32 %v2378, %v2378
    %v2411 = vmul.f32 %v2379, %v2379
    %v2412 = vmul.f32 %v2380, %v2380
    %v2413 = vmul.f32 %v2381, %v2381
    %v2414 = vmul.f32 %v2382, %v2382
    %v2415 = vmul.f32 %v2383, %v2383
    %v2416 = vmul.f32 %v2384, %v2384
    %v2417 = vmul.f32 %v2385, %v2385
    %v2418 = vmul.f32 %v2386, %v2386
    %v2419 = vmul.f32 %v2387, %v2387
    %v2420 = vmul.f32 %v2388, %v2388
    %v2421 = vmul.f32 %v2389, %v2389
    %v2422 = vmul.f32 %v2390, %v2390
    %v2423 = vmul.f32 %v2391, %v2391
    %v2424 = vmul.f32 %v2392, %v2392
    %v2425 = vmul.f32 %v2393, %v2393
    %v2426 = vmul.f32 %v2394, %v2394
    %v2427 = vmul.f32 %v2395, %v2395
    %v2428 = vmul.f32 %v2396, %v2396
    %v2429 = vmul.f32 %v2397, %v2397
    %v2430 = vmul.f32 %v2398, %v2398
    %v2431 = vmul.f32 %v2399, %v2399
    %v2432 = vmul.f32 %v2400, %v2400
    %v2433 = vmul.f32 %v2401, %v2401
    %v2434 = vmul.f32 %v2402, %v2402
    %v2435 = vmul.f32 %v2403, %v2403
    %v2436 = vmul.f32 %v2404, %v2404
    %v2437 = vmul.f32 %v2405, %v2405
    %v2438 = vmul.f32 %v2406, %v2406
    %v2439 = vmul.f32 %v2407, %v2407
    %v2440 = vmul.f32 %v2408, %v2408
    %v2441 = vsel %vm343, %v2409, 0.0
    %2442 = vadd.xlane.f32.xlu0 %v2441
    %v2443 = vpop.xlane.xlu0 %2442
    %v2444 = vsel %vm343, %v2410, 0.0
    %2445 = vadd.xlane.f32.xlu0 %v2444
    %v2446 = vpop.xlane.xlu0 %2445
    %v2447 = vsel %vm343, %v2411, 0.0
    %2448 = vadd.xlane.f32.xlu0 %v2447
    %v2449 = vpop.xlane.xlu0 %2448
    %v2450 = vsel %vm343, %v2412, 0.0
    %2451 = vadd.xlane.f32.xlu0 %v2450
    %v2452 = vpop.xlane.xlu0 %2451
    %v2453 = vsel %vm343, %v2413, 0.0
    %2454 = vadd.xlane.f32.xlu0 %v2453
    %v2455 = vpop.xlane.xlu0 %2454
    %v2456 = vsel %vm343, %v2414, 0.0
    %2457 = vadd.xlane.f32.xlu0 %v2456
    %v2458 = vpop.xlane.xlu0 %2457
    %v2459 = vsel %vm343, %v2415, 0.0
    %2460 = vadd.xlane.f32.xlu0 %v2459
    %v2461 = vpop.xlane.xlu0 %2460
    %v2462 = vsel %vm343, %v2416, 0.0
    %2463 = vadd.xlane.f32.xlu0 %v2462
    %v2464 = vpop.xlane.xlu0 %2463
    %v2465 = vsel %vm343, %v2417, 0.0
    %2466 = vadd.xlane.f32.xlu0 %v2465
    %v2467 = vpop.xlane.xlu0 %2466
    %v2468 = vsel %vm343, %v2418, 0.0
    %2469 = vadd.xlane.f32.xlu0 %v2468
    %v2470 = vpop.xlane.xlu0 %2469
    %v2471 = vsel %vm343, %v2419, 0.0
    %2472 = vadd.xlane.f32.xlu0 %v2471
    %v2473 = vpop.xlane.xlu0 %2472
    %v2474 = vsel %vm343, %v2420, 0.0
    %2475 = vadd.xlane.f32.xlu0 %v2474
    %v2476 = vpop.xlane.xlu0 %2475
    %v2477 = vsel %vm343, %v2421, 0.0
    %2478 = vadd.xlane.f32.xlu0 %v2477
    %v2479 = vpop.xlane.xlu0 %2478
    %v2480 = vsel %vm343, %v2422, 0.0
    %2481 = vadd.xlane.f32.xlu0 %v2480
    %v2482 = vpop.xlane.xlu0 %2481
    %v2483 = vsel %vm343, %v2423, 0.0
    %2484 = vadd.xlane.f32.xlu0 %v2483
    %v2485 = vpop.xlane.xlu0 %2484
    %v2486 = vsel %vm343, %v2424, 0.0
    %2487 = vadd.xlane.f32.xlu0 %v2486
    %v2488 = vpop.xlane.xlu0 %2487
    %v2489 = vsel %vm343, %v2425, 0.0
    %2490 = vadd.xlane.f32.xlu0 %v2489
    %v2491 = vpop.xlane.xlu0 %2490
    %v2492 = vsel %vm343, %v2426, 0.0
    %2493 = vadd.xlane.f32.xlu0 %v2492
    %v2494 = vpop.xlane.xlu0 %2493
    %v2495 = vsel %vm343, %v2427, 0.0
    %2496 = vadd.xlane.f32.xlu0 %v2495
    %v2497 = vpop.xlane.xlu0 %2496
    %v2498 = vsel %vm343, %v2428, 0.0
    %2499 = vadd.xlane.f32.xlu0 %v2498
    %v2500 = vpop.xlane.xlu0 %2499
    %v2501 = vsel %vm343, %v2429, 0.0
    %2502 = vadd.xlane.f32.xlu0 %v2501
    %v2503 = vpop.xlane.xlu0 %2502
    %v2504 = vsel %vm343, %v2430, 0.0
    %2505 = vadd.xlane.f32.xlu0 %v2504
    %v2506 = vpop.xlane.xlu0 %2505
    %v2507 = vsel %vm343, %v2431, 0.0
    %2508 = vadd.xlane.f32.xlu0 %v2507
    %v2509 = vpop.xlane.xlu0 %2508
    %v2510 = vsel %vm343, %v2432, 0.0
    %2511 = vadd.xlane.f32.xlu0 %v2510
    %v2512 = vpop.xlane.xlu0 %2511
    %v2513 = vsel %vm343, %v2433, 0.0
    %2514 = vadd.xlane.f32.xlu0 %v2513
    %v2515 = vpop.xlane.xlu0 %2514
    %v2516 = vsel %vm343, %v2434, 0.0
    %2517 = vadd.xlane.f32.xlu0 %v2516
    %v2518 = vpop.xlane.xlu0 %2517
    %v2519 = vsel %vm343, %v2435, 0.0
    %2520 = vadd.xlane.f32.xlu0 %v2519
    %v2521 = vpop.xlane.xlu0 %2520
    %v2522 = vsel %vm343, %v2436, 0.0
    %2523 = vadd.xlane.f32.xlu0 %v2522
    %v2524 = vpop.xlane.xlu0 %2523
    %v2525 = vsel %vm343, %v2437, 0.0
    %2526 = vadd.xlane.f32.xlu0 %v2525
    %v2527 = vpop.xlane.xlu0 %2526
    %v2528 = vsel %vm343, %v2438, 0.0
    %2529 = vadd.xlane.f32.xlu0 %v2528
    %v2530 = vpop.xlane.xlu0 %2529
    %v2531 = vsel %vm343, %v2439, 0.0
    %2532 = vadd.xlane.f32.xlu0 %v2531
    %v2533 = vpop.xlane.xlu0 %2532
    %v2534 = vsel %vm343, %v2440, 0.0
    %2535 = vadd.xlane.f32.xlu0 %v2534
    %v2536 = vpop.xlane.xlu0 %2535
    %v2537 = vmul.f32 %v2443, %v2178
    %v2538 = vmul.f32 %v2446, %v2178
    %v2539 = vmul.f32 %v2449, %v2178
    %v2540 = vmul.f32 %v2452, %v2178
    %v2541 = vmul.f32 %v2455, %v2178
    %v2542 = vmul.f32 %v2458, %v2178
    %v2543 = vmul.f32 %v2461, %v2178
    %v2544 = vmul.f32 %v2464, %v2178
    %v2545 = vmul.f32 %v2467, %v2178
    %v2546 = vmul.f32 %v2470, %v2178
    %v2547 = vmul.f32 %v2473, %v2178
    %v2548 = vmul.f32 %v2476, %v2178
    %v2549 = vmul.f32 %v2479, %v2178
    %v2550 = vmul.f32 %v2482, %v2178
    %v2551 = vmul.f32 %v2485, %v2178
    %v2552 = vmul.f32 %v2488, %v2178
    %v2553 = vmul.f32 %v2491, %v2178
    %v2554 = vmul.f32 %v2494, %v2178
    %v2555 = vmul.f32 %v2497, %v2178
    %v2556 = vmul.f32 %v2500, %v2178
    %v2557 = vmul.f32 %v2503, %v2178
    %v2558 = vmul.f32 %v2506, %v2178
    %v2559 = vmul.f32 %v2509, %v2178
    %v2560 = vmul.f32 %v2512, %v2178
    %v2561 = vmul.f32 %v2515, %v2178
    %v2562 = vmul.f32 %v2518, %v2178
    %v2563 = vmul.f32 %v2521, %v2178
    %v2564 = vmul.f32 %v2524, %v2178
    %v2565 = vmul.f32 %v2527, %v2178
    %v2566 = vmul.f32 %v2530, %v2178
    %v2567 = vmul.f32 %v2533, %v2178
    %v2568 = vmul.f32 %v2536, %v2178
    %v2569 = vadd.f32 %v2537, 1e-05
    %v2570 = vadd.f32 %v2538, 1e-05
    %v2571 = vadd.f32 %v2539, 1e-05
    %v2572 = vadd.f32 %v2540, 1e-05
    %v2573 = vadd.f32 %v2541, 1e-05
    %v2574 = vadd.f32 %v2542, 1e-05
    %v2575 = vadd.f32 %v2543, 1e-05
    %v2576 = vadd.f32 %v2544, 1e-05
    %v2577 = vadd.f32 %v2545, 1e-05
    %v2578 = vadd.f32 %v2546, 1e-05
    %v2579 = vadd.f32 %v2547, 1e-05
    %v2580 = vadd.f32 %v2548, 1e-05
    %v2581 = vadd.f32 %v2549, 1e-05
    %v2582 = vadd.f32 %v2550, 1e-05
    %v2583 = vadd.f32 %v2551, 1e-05
    %v2584 = vadd.f32 %v2552, 1e-05
    %v2585 = vadd.f32 %v2553, 1e-05
    %v2586 = vadd.f32 %v2554, 1e-05
    %v2587 = vadd.f32 %v2555, 1e-05
    %v2588 = vadd.f32 %v2556, 1e-05
    %v2589 = vadd.f32 %v2557, 1e-05
    %v2590 = vadd.f32 %v2558, 1e-05
    %v2591 = vadd.f32 %v2559, 1e-05
    %v2592 = vadd.f32 %v2560, 1e-05
    %v2593 = vadd.f32 %v2561, 1e-05
    %v2594 = vadd.f32 %v2562, 1e-05
    %v2595 = vadd.f32 %v2563, 1e-05
    %v2596 = vadd.f32 %v2564, 1e-05
    %v2597 = vadd.f32 %v2565, 1e-05
    %v2598 = vadd.f32 %v2566, 1e-05
    %v2599 = vadd.f32 %v2567, 1e-05
    %v2600 = vadd.f32 %v2568, 1e-05
    %v2601 = vrsqrt.pop %v2569
    %v2602 = vrsqrt.pop %v2570
    %v2603 = vrsqrt.pop %v2571
    %v2604 = vrsqrt.pop %v2572
    %v2605 = vrsqrt.pop %v2573
    %v2606 = vrsqrt.pop %v2574
    %v2607 = vrsqrt.pop %v2575
    %v2608 = vrsqrt.pop %v2576
    %v2609 = vrsqrt.pop %v2577
    %v2610 = vrsqrt.pop %v2578
    %v2611 = vrsqrt.pop %v2579
    %v2612 = vrsqrt.pop %v2580
    %v2613 = vrsqrt.pop %v2581
    %v2614 = vrsqrt.pop %v2582
    %v2615 = vrsqrt.pop %v2583
    %v2616 = vrsqrt.pop %v2584
    %v2617 = vrsqrt.pop %v2585
    %v2618 = vrsqrt.pop %v2586
    %v2619 = vrsqrt.pop %v2587
    %v2620 = vrsqrt.pop %v2588
    %v2621 = vrsqrt.pop %v2589
    %v2622 = vrsqrt.pop %v2590
    %v2623 = vrsqrt.pop %v2591
    %v2624 = vrsqrt.pop %v2592
    %v2625 = vrsqrt.pop %v2593
    %v2626 = vrsqrt.pop %v2594
    %v2627 = vrsqrt.pop %v2595
    %v2628 = vrsqrt.pop %v2596
    %v2629 = vrsqrt.pop %v2597
    %v2630 = vrsqrt.pop %v2598
    %v2631 = vrsqrt.pop %v2599
    %v2632 = vrsqrt.pop %v2600
    %v2633 = vmul.f32 %v2377, %v2601
    %v2634 = vmul.f32 %v2378, %v2602
    %v2635 = vmul.f32 %v2379, %v2603
    %v2636 = vmul.f32 %v2380, %v2604
    %v2637 = vmul.f32 %v2381, %v2605
    %v2638 = vmul.f32 %v2382, %v2606
    %v2639 = vmul.f32 %v2383, %v2607
    %v2640 = vmul.f32 %v2384, %v2608
    %v2641 = vmul.f32 %v2385, %v2609
    %v2642 = vmul.f32 %v2386, %v2610
    %v2643 = vmul.f32 %v2387, %v2611
    %v2644 = vmul.f32 %v2388, %v2612
    %v2645 = vmul.f32 %v2389, %v2613
    %v2646 = vmul.f32 %v2390, %v2614
    %v2647 = vmul.f32 %v2391, %v2615
    %v2648 = vmul.f32 %v2392, %v2616
    %v2649 = vmul.f32 %v2393, %v2617
    %v2650 = vmul.f32 %v2394, %v2618
    %v2651 = vmul.f32 %v2395, %v2619
    %v2652 = vmul.f32 %v2396, %v2620
    %v2653 = vmul.f32 %v2397, %v2621
    %v2654 = vmul.f32 %v2398, %v2622
    %v2655 = vmul.f32 %v2399, %v2623
    %v2656 = vmul.f32 %v2400, %v2624
    %v2657 = vmul.f32 %v2401, %v2625
    %v2658 = vmul.f32 %v2402, %v2626
    %v2659 = vmul.f32 %v2403, %v2627
    %v2660 = vmul.f32 %v2404, %v2628
    %v2661 = vmul.f32 %v2405, %v2629
    %v2662 = vmul.f32 %v2406, %v2630
    %v2663 = vmul.f32 %v2407, %v2631
    %v2664 = vmul.f32 %v2408, %v2632
    %v2666 = vlaneseq
    %v2667 = vshrl.u32 %v2666, 7
    %v2668 = vsub.s32 0, %v2667
    %v2669 = vrot.slane %v2247, %v2668
    %v2671 = vmul.f32 %v2633, %v2669
    %v2672 = vmul.f32 %v2634, %v2669
    %v2673 = vmul.f32 %v2635, %v2669
    %v2674 = vmul.f32 %v2636, %v2669
    %v2675 = vmul.f32 %v2637, %v2669
    %v2676 = vmul.f32 %v2638, %v2669
    %v2677 = vmul.f32 %v2639, %v2669
    %v2678 = vmul.f32 %v2640, %v2669
    %v2679 = vmul.f32 %v2641, %v2669
    %v2680 = vmul.f32 %v2642, %v2669
    %v2681 = vmul.f32 %v2643, %v2669
    %v2682 = vmul.f32 %v2644, %v2669
    %v2683 = vmul.f32 %v2645, %v2669
    %v2684 = vmul.f32 %v2646, %v2669
    %v2685 = vmul.f32 %v2647, %v2669
    %v2686 = vmul.f32 %v2648, %v2669
    %v2687 = vmul.f32 %v2649, %v2669
    %v2688 = vmul.f32 %v2650, %v2669
    %v2689 = vmul.f32 %v2651, %v2669
    %v2690 = vmul.f32 %v2652, %v2669
    %v2691 = vmul.f32 %v2653, %v2669
    %v2692 = vmul.f32 %v2654, %v2669
    %v2693 = vmul.f32 %v2655, %v2669
    %v2694 = vmul.f32 %v2656, %v2669
    %v2695 = vmul.f32 %v2657, %v2669
    %v2696 = vmul.f32 %v2658, %v2669
    %v2697 = vmul.f32 %v2659, %v2669
    %v2698 = vmul.f32 %v2660, %v2669
    %v2699 = vmul.f32 %v2661, %v2669
    %v2700 = vmul.f32 %v2662, %v2669
    %v2701 = vmul.f32 %v2663, %v2669
    %v2702 = vmul.f32 %v2664, %v2669
    %v2704 = vlaneseq
    %v2705 = vshrl.u32 %v2704, 7
    %v2706 = vsub.s32 0, %v2705
    %v2707 = vrot.slane %v2248, %v2706
    %v2709 = vadd.f32 %v2671, %v2707
    %v2710 = vadd.f32 %v2672, %v2707
    %v2711 = vadd.f32 %v2673, %v2707
    %v2712 = vadd.f32 %v2674, %v2707
    %v2713 = vadd.f32 %v2675, %v2707
    %v2714 = vadd.f32 %v2676, %v2707
    %v2715 = vadd.f32 %v2677, %v2707
    %v2716 = vadd.f32 %v2678, %v2707
    %v2717 = vadd.f32 %v2679, %v2707
    %v2718 = vadd.f32 %v2680, %v2707
    %v2719 = vadd.f32 %v2681, %v2707
    %v2720 = vadd.f32 %v2682, %v2707
    %v2721 = vadd.f32 %v2683, %v2707
    %v2722 = vadd.f32 %v2684, %v2707
    %v2723 = vadd.f32 %v2685, %v2707
    %v2724 = vadd.f32 %v2686, %v2707
    %v2725 = vadd.f32 %v2687, %v2707
    %v2726 = vadd.f32 %v2688, %v2707
    %v2727 = vadd.f32 %v2689, %v2707
    %v2728 = vadd.f32 %v2690, %v2707
    %v2729 = vadd.f32 %v2691, %v2707
    %v2730 = vadd.f32 %v2692, %v2707
    %v2731 = vadd.f32 %v2693, %v2707
    %v2732 = vadd.f32 %v2694, %v2707
    %v2733 = vadd.f32 %v2695, %v2707
    %v2734 = vadd.f32 %v2696, %v2707
    %v2735 = vadd.f32 %v2697, %v2707
    %v2736 = vadd.f32 %v2698, %v2707
    %v2737 = vadd.f32 %v2699, %v2707
    %v2738 = vadd.f32 %v2700, %v2707
    %v2739 = vadd.f32 %v2701, %v2707
    %v2740 = vadd.f32 %v2702, %v2707
    %v2741 = vld [vmem:[%s33] sm:$0xff]
    %v2742 = vld [vmem:[%s33 + $0x8] sm:$0xff]
    %v2743 = vld [vmem:[%s33 + $0x10] sm:$0xff]
    %v2744 = vld [vmem:[%s33 + $0x18] sm:$0xff]
    %v2745 = vld [vmem:[%s35] sm:$0x1]
    %v2747 = vlaneseq
    %v2748 = vshrl.u32 %v2747, 7
    %v2749 = vsub.s32 0, %v2748
    %v2750 = vrot.slane %v2745, %v2749
    %v2753 = vsel %vm343, %v2213, 0
    %v2756 = vsel %vm343, %v2214, 0
    %2758 = vmatprep.subr.mxu0 0.0
    %2759 = vmatpush1.msra.mxu0 %v2741
    %2760 = vmatprep.subr.mxu0 0.0
    %2761 = vmatpush1.msra.mxu0 %v2742
    %2762 = vmatprep.subr.mxu0 0.0
    %2763 = vmatpush1.msra.mxu0 %v2743
    %2764 = vmatprep.subr.mxu0 0.0
    %2765 = vmatpush1.msra.mxu0 %v2744
    %2766 = vmatprep.subr.mxu0 0.0
    %2767 = vmatpush1.msra.mxu0 0.0
    %2768 = vmatprep.subr.mxu0 0.0
    %2769 = vmatpush1.msra.mxu0 0.0
    %2770 = vmatprep.subr.mxu0 0.0
    %2771 = vmatpush1.msra.mxu0 0.0
    %2772 = vmatprep.subr.mxu0 0.0
    %2773 = vmatpush1.msra.mxu0 0.0
    %2774 = vmatprep.subr.mxu0 0.0
    %2775 = vmatpush1.msra.mxu0 0.0
    %2776 = vmatprep.subr.mxu0 0.0
    %2777 = vmatpush1.msra.mxu0 0.0
    %2778 = vmatprep.subr.mxu0 0.0
    %2779 = vmatpush1.msra.mxu0 0.0
    %2780 = vmatprep.subr.mxu0 0.0
    %2781 = vmatpush1.msra.mxu0 0.0
    %2782 = vmatprep.subr.mxu0 0.0
    %2783 = vmatpush1.msra.mxu0 0.0
    %2784 = vmatprep.subr.mxu0 0.0
    %2785 = vmatpush1.msra.mxu0 0.0
    %2786 = vmatprep.subr.mxu0 0.0
    %2787 = vmatpush1.msra.mxu0 0.0
    %2788 = vmatprep.subr.mxu0 0.0
    %2789 = vmatpush1.msra.mxu0 0.0
    %2790 = vmatprep.subr.mxu0 0.0
    %2791 = vmatpush1.msra.mxu0 0.0
    %2792 = vmatprep.subr.mxu0 0.0
    %2793 = vmatpush1.msra.mxu0 0.0
    %2794 = vmatprep.subr.mxu0 0.0
    %2795 = vmatpush1.msra.mxu0 0.0
    %2796 = vmatprep.subr.mxu0 0.0
    %2797 = vmatpush1.msra.mxu0 0.0
    %2798 = vmatprep.subr.mxu0 0.0
    %2799 = vmatpush1.msra.mxu0 0.0
    %2800 = vmatprep.subr.mxu0 0.0
    %2801 = vmatpush1.msra.mxu0 0.0
    %2802 = vmatprep.subr.mxu0 0.0
    %2803 = vmatpush1.msra.mxu0 0.0
    %2804 = vmatprep.subr.mxu0 0.0
    %2805 = vmatpush1.msra.mxu0 0.0
    %2806 = vmatprep.subr.mxu0 0.0
    %2807 = vmatpush1.msra.mxu0 0.0
    %2808 = vmatprep.subr.mxu0 0.0
    %2809 = vmatpush1.msra.mxu0 0.0
    %2810 = vmatprep.subr.mxu0 0.0
    %2811 = vmatpush1.msra.mxu0 0.0
    %2812 = vmatprep.subr.mxu0 0.0
    %2813 = vmatpush1.msra.mxu0 0.0
    %2814 = vmatprep.subr.mxu0 0.0
    %2815 = vmatpush1.msra.mxu0 0.0
    %2816 = vmatprep.subr.mxu0 0.0
    %2817 = vmatpush1.msra.mxu0 0.0
    %2818 = vmatprep.subr.mxu0 0.0
    %2819 = vmatpush1.msra.mxu0 0.0
    %2820 = vmatprep.subr.mxu0 0.0
    %2821 = vmatpush1.msra.mxu0 0.0
    %2822 = vmatprep.mubr.f32.mxu0 0.0
    %2823 = vmatmul.mubr.f32.gmra.mrb[0].mxu0 %v2753
    %v2824 = vpop.f32.mrb[0].mxu0
    %v2825 = vadd.f32 %v2750, %v2824
    %v2826 = vpop.f32.mrb[0].mxu0
    %2827 = vmatprep.mubr.f32.mxu0 0.0
    %2828 = vmatmul.mubr.f32.gmra.mrb[0].mxu0 %v2756
    %v2829 = vpop.f32.mrb[0].mxu0
    %v2830 = vadd.f32 %v2750, %v2829
    %v2831 = vpop.f32.mrb[0].mxu0
    %2832 = vdwg.mxu0
    %v2833 = vmax.f32 %v2825, 0.0
    %v2834 = vmax.f32 %v2830, 0.0
    %v2835 = vld [vmem:[%s37] sm:$0xff]
    %v2836 = vld [vmem:[%s37 + $0x8] sm:$0xff]
    %v2837 = vld [vmem:[%s37 + $0x10] sm:$0xff]
    %v2838 = vld [vmem:[%s37 + $0x18] sm:$0xff]
    %v2839 = vld [vmem:[%s37 + $0x20] sm:$0xff]
    %v2840 = vld [vmem:[%s37 + $0x28] sm:$0xff]
    %v2841 = vld [vmem:[%s37 + $0x30] sm:$0xff]
    %v2842 = vld [vmem:[%s37 + $0x38] sm:$0xff]
    %v2843 = vld [vmem:[%s39] sm:$0x1]
    %v2845 = vlaneseq
    %v2846 = vshrl.u32 %v2845, 7
    %v2847 = vsub.s32 0, %v2846
    %v2848 = vrot.slane %v2843, %v2847
    %vm2850 = vcmask 523264
    %v2852 = vsel %vm2850, %v2833, 0
    %v2855 = vsel %vm2850, %v2834, 0
    %2857 = vmatprep.subr.mxu0 0.0
    %2858 = vmatpush1.msra.mxu0 %v2835
    %2859 = vmatprep.subr.mxu0 0.0
    %2860 = vmatpush1.msra.mxu0 %v2836
    %2861 = vmatprep.subr.mxu0 0.0
    %2862 = vmatpush1.msra.mxu0 %v2837
    %2863 = vmatprep.subr.mxu0 0.0
    %2864 = vmatpush1.msra.mxu0 %v2838
    %2865 = vmatprep.subr.mxu0 0.0
    %2866 = vmatpush1.msra.mxu0 %v2839
    %2867 = vmatprep.subr.mxu0 0.0
    %2868 = vmatpush1.msra.mxu0 %v2840
    %2869 = vmatprep.subr.mxu0 0.0
    %2870 = vmatpush1.msra.mxu0 %v2841
    %2871 = vmatprep.subr.mxu0 0.0
    %2872 = vmatpush1.msra.mxu0 %v2842
    %2873 = vmatprep.subr.mxu0 0.0
    %2874 = vmatpush1.msra.mxu0 0.0
    %2875 = vmatprep.subr.mxu0 0.0
    %2876 = vmatpush1.msra.mxu0 0.0
    %2877 = vmatprep.subr.mxu0 0.0
    %2878 = vmatpush1.msra.mxu0 0.0
    %2879 = vmatprep.subr.mxu0 0.0
    %2880 = vmatpush1.msra.mxu0 0.0
    %2881 = vmatprep.subr.mxu0 0.0
    %2882 = vmatpush1.msra.mxu0 0.0
    %2883 = vmatprep.subr.mxu0 0.0
    %2884 = vmatpush1.msra.mxu0 0.0
    %2885 = vmatprep.subr.mxu0 0.0
    %2886 = vmatpush1.msra.mxu0 0.0
    %2887 = vmatprep.subr.mxu0 0.0
    %2888 = vmatpush1.msra.mxu0 0.0
    %2889 = vmatprep.subr.mxu0 0.0
    %2890 = vmatpush1.msra.mxu0 0.0
    %2891 = vmatprep.subr.mxu0 0.0
    %2892 = vmatpush1.msra.mxu0 0.0
    %2893 = vmatprep.subr.mxu0 0.0
    %2894 = vmatpush1.msra.mxu0 0.0
    %2895 = vmatprep.subr.mxu0 0.0
    %2896 = vmatpush1.msra.mxu0 0.0
    %2897 = vmatprep.subr.mxu0 0.0
    %2898 = vmatpush1.msra.mxu0 0.0
    %2899 = vmatprep.subr.mxu0 0.0
    %2900 = vmatpush1.msra.mxu0 0.0
    %2901 = vmatprep.subr.mxu0 0.0
    %2902 = vmatpush1.msra.mxu0 0.0
    %2903 = vmatprep.subr.mxu0 0.0
    %2904 = vmatpush1.msra.mxu0 0.0
    %2905 = vmatprep.subr.mxu0 0.0
    %2906 = vmatpush1.msra.mxu0 0.0
    %2907 = vmatprep.subr.mxu0 0.0
    %2908 = vmatpush1.msra.mxu0 0.0
    %2909 = vmatprep.subr.mxu0 0.0
    %2910 = vmatpush1.msra.mxu0 0.0
    %2911 = vmatprep.subr.mxu0 0.0
    %2912 = vmatpush1.msra.mxu0 0.0
    %2913 = vmatprep.subr.mxu0 0.0
    %2914 = vmatpush1.msra.mxu0 0.0
    %2915 = vmatprep.subr.mxu0 0.0
    %2916 = vmatpush1.msra.mxu0 0.0
    %2917 = vmatprep.subr.mxu0 0.0
    %2918 = vmatpush1.msra.mxu0 0.0
    %2919 = vmatprep.subr.mxu0 0.0
    %2920 = vmatpush1.msra.mxu0 0.0
    %2921 = vmatprep.mubr.f32.mxu0 0.0
    %2922 = vmatmul.mubr.f32.gmra.mrb[0].mxu0 %v2852
    %v2923 = vpop.f32.mrb[0].mxu0
    %v2924 = vadd.f32 %v2848, %v2923
    %v2925 = vpop.f32.mrb[0].mxu0
    %2926 = vmatprep.mubr.f32.mxu0 0.0
    %2927 = vmatmul.mubr.f32.gmra.mrb[0].mxu0 %v2855
    %v2928 = vpop.f32.mrb[0].mxu0
    %v2929 = vadd.f32 %v2848, %v2928
    %v2930 = vpop.f32.mrb[0].mxu0
    %2931 = vdwg.mxu0
    %v2932 = vld [vmem:[%s41] sm:$0xff]
    %v2933 = vld [vmem:[%s41 + $0x8] sm:$0xff]
    %v2934 = vld [vmem:[%s41 + $0x10] sm:$0xff]
    %v2935 = vld [vmem:[%s41 + $0x18] sm:$0xff]
    %v2936 = vld [vmem:[%s43] sm:$0x1]
    %v2938 = vlaneseq
    %v2939 = vshrl.u32 %v2938, 7
    %v2940 = vsub.s32 0, %v2939
    %v2941 = vrot.slane %v2936, %v2940
    %v2944 = vsel %vm343, %v2709, 0
    %v2947 = vsel %vm343, %v2710, 0
    %v2950 = vsel %vm343, %v2711, 0
    %v2953 = vsel %vm343, %v2712, 0
    %v2956 = vsel %vm343, %v2713, 0
    %v2959 = vsel %vm343, %v2714, 0
    %v2962 = vsel %vm343, %v2715, 0
    %v2965 = vsel %vm343, %v2716, 0
    %v2968 = vsel %vm343, %v2717, 0
    %v2971 = vsel %vm343, %v2718, 0
    %v2974 = vsel %vm343, %v2719, 0
    %v2977 = vsel %vm343, %v2720, 0
    %v2980 = vsel %vm343, %v2721, 0
    %v2983 = vsel %vm343, %v2722, 0
    %v2986 = vsel %vm343, %v2723, 0
    %v2989 = vsel %vm343, %v2724, 0
    %v2992 = vsel %vm343, %v2725, 0
    %v2995 = vsel %vm343, %v2726, 0
    %v2998 = vsel %vm343, %v2727, 0
    %v3001 = vsel %vm343, %v2728, 0
    %v3004 = vsel %vm343, %v2729, 0
    %v3007 = vsel %vm343, %v2730, 0
    %v3010 = vsel %vm343, %v2731, 0
    %v3013 = vsel %vm343, %v2732, 0
    %v3016 = vsel %vm343, %v2733, 0
    %v3019 = vsel %vm343, %v2734, 0
    %v3022 = vsel %vm343, %v2735, 0
    %v3025 = vsel %vm343, %v2736, 0
    %v3028 = vsel %vm343, %v2737, 0
    %v3031 = vsel %vm343, %v2738, 0
    %v3034 = vsel %vm343, %v2739, 0
    %v3037 = vsel %vm343, %v2740, 0
    %3039 = vmatprep.subr.mxu0 0.0
    %3040 = vmatpush1.msra.mxu0 %v2932
    %3041 = vmatprep.subr.mxu0 0.0
    %3042 = vmatpush1.msra.mxu0 %v2933
    %3043 = vmatprep.subr.mxu0 0.0
    %3044 = vmatpush1.msra.mxu0 %v2934
    %3045 = vmatprep.subr.mxu0 0.0
    %3046 = vmatpush1.msra.mxu0 %v2935
    %3047 = vmatprep.subr.mxu0 0.0
    %3048 = vmatpush1.msra.mxu0 0.0
    %3049 = vmatprep.subr.mxu0 0.0
    %3050 = vmatpush1.msra.mxu0 0.0
    %3051 = vmatprep.subr.mxu0 0.0
    %3052 = vmatpush1.msra.mxu0 0.0
    %3053 = vmatprep.subr.mxu0 0.0
    %3054 = vmatpush1.msra.mxu0 0.0
    %3055 = vmatprep.subr.mxu0 0.0
    %3056 = vmatpush1.msra.mxu0 0.0
    %3057 = vmatprep.subr.mxu0 0.0
    %3058 = vmatpush1.msra.mxu0 0.0
    %3059 = vmatprep.subr.mxu0 0.0
    %3060 = vmatpush1.msra.mxu0 0.0
    %3061 = vmatprep.subr.mxu0 0.0
    %3062 = vmatpush1.msra.mxu0 0.0
    %3063 = vmatprep.subr.mxu0 0.0
    %3064 = vmatpush1.msra.mxu0 0.0
    %3065 = vmatprep.subr.mxu0 0.0
    %3066 = vmatpush1.msra.mxu0 0.0
    %3067 = vmatprep.subr.mxu0 0.0
    %3068 = vmatpush1.msra.mxu0 0.0
    %3069 = vmatprep.subr.mxu0 0.0
    %3070 = vmatpush1.msra.mxu0 0.0
    %3071 = vmatprep.subr.mxu0 0.0
    %3072 = vmatpush1.msra.mxu0 0.0
    %3073 = vmatprep.subr.mxu0 0.0
    %3074 = vmatpush1.msra.mxu0 0.0
    %3075 = vmatprep.subr.mxu0 0.0
    %3076 = vmatpush1.msra.mxu0 0.0
    %3077 = vmatprep.subr.mxu0 0.0
    %3078 = vmatpush1.msra.mxu0 0.0
    %3079 = vmatprep.subr.mxu0 0.0
    %3080 = vmatpush1.msra.mxu0 0.0
    %3081 = vmatprep.subr.mxu0 0.0
    %3082 = vmatpush1.msra.mxu0 0.0
    %3083 = vmatprep.subr.mxu0 0.0
    %3084 = vmatpush1.msra.mxu0 0.0
    %3085 = vmatprep.subr.mxu0 0.0
    %3086 = vmatpush1.msra.mxu0 0.0
    %3087 = vmatprep.subr.mxu0 0.0
    %3088 = vmatpush1.msra.mxu0 0.0
    %3089 = vmatprep.subr.mxu0 0.0
    %3090 = vmatpush1.msra.mxu0 0.0
    %3091 = vmatprep.subr.mxu0 0.0
    %3092 = vmatpush1.msra.mxu0 0.0
    %3093 = vmatprep.subr.mxu0 0.0
    %3094 = vmatpush1.msra.mxu0 0.0
    %3095 = vmatprep.subr.mxu0 0.0
    %3096 = vmatpush1.msra.mxu0 0.0
    %3097 = vmatprep.subr.mxu0 0.0
    %3098 = vmatpush1.msra.mxu0 0.0
    %3099 = vmatprep.subr.mxu0 0.0
    %3100 = vmatpush1.msra.mxu0 0.0
    %3101 = vmatprep.subr.mxu0 0.0
    %3102 = vmatpush1.msra.mxu0 0.0
    %3103 = vmatprep.mubr.f32.mxu0 0.0
    %3104 = vmatmul.mubr.f32.gmra.mrb[0].mxu0 %v2944
    %v3105 = vpop.f32.mrb[0].mxu0
    %v3106 = vadd.f32 %v2941, %v3105
    %v3107 = vpop.f32.mrb[0].mxu0
    %3108 = vmatprep.mubr.f32.mxu0 0.0
    %3109 = vmatmul.mubr.f32.gmra.mrb[0].mxu0 %v2947
    %v3110 = vpop.f32.mrb[0].mxu0
    %v3111 = vadd.f32 %v2941, %v3110
    %v3112 = vpop.f32.mrb[0].mxu0
    %3113 = vmatprep.mubr.f32.mxu0 0.0
    %3114 = vmatmul.mubr.f32.gmra.mrb[0].mxu0 %v2950
    %v3115 = vpop.f32.mrb[0].mxu0
    %v3116 = vadd.f32 %v2941, %v3115
    %v3117 = vpop.f32.mrb[0].mxu0
    %3118 = vmatprep.mubr.f32.mxu0 0.0
    %3119 = vmatmul.mubr.f32.gmra.mrb[0].mxu0 %v2953
    %v3120 = vpop.f32.mrb[0].mxu0
    %v3121 = vadd.f32 %v2941, %v3120
    %v3122 = vpop.f32.mrb[0].mxu0
    %3123 = vmatprep.mubr.f32.mxu0 0.0
    %3124 = vmatmul.mubr.f32.gmra.mrb[0].mxu0 %v2956
    %v3125 = vpop.f32.mrb[0].mxu0
    %v3126 = vadd.f32 %v2941, %v3125
    %v3127 = vpop.f32.mrb[0].mxu0
    %3128 = vmatprep.mubr.f32.mxu0 0.0
    %3129 = vmatmul.mubr.f32.gmra.mrb[0].mxu0 %v2959
    %v3130 = vpop.f32.mrb[0].mxu0
    %v3131 = vadd.f32 %v2941, %v3130
    %v3132 = vpop.f32.mrb[0].mxu0
    %3133 = vmatprep.mubr.f32.mxu0 0.0
    %3134 = vmatmul.mubr.f32.gmra.mrb[0].mxu0 %v2962
    %v3135 = vpop.f32.mrb[0].mxu0
    %v3136 = vadd.f32 %v2941, %v3135
    %v3137 = vpop.f32.mrb[0].mxu0
    %3138 = vmatprep.mubr.f32.mxu0 0.0
    %3139 = vmatmul.mubr.f32.gmra.mrb[0].mxu0 %v2965
    %v3140 = vpop.f32.mrb[0].mxu0
    %v3141 = vadd.f32 %v2941, %v3140
    %v3142 = vpop.f32.mrb[0].mxu0
    %3143 = vmatprep.mubr.f32.mxu0 0.0
    %3144 = vmatmul.mubr.f32.gmra.mrb[0].mxu0 %v2968
    %v3145 = vpop.f32.mrb[0].mxu0
    %v3146 = vadd.f32 %v2941, %v3145
    %v3147 = vpop.f32.mrb[0].mxu0
    %3148 = vmatprep.mubr.f32.mxu0 0.0
    %3149 = vmatmul.mubr.f32.gmra.mrb[0].mxu0 %v2971
    %v3150 = vpop.f32.mrb[0].mxu0
    %v3151 = vadd.f32 %v2941, %v3150
    %v3152 = vpop.f32.mrb[0].mxu0
    %3153 = vmatprep.mubr.f32.mxu0 0.0
    %3154 = vmatmul.mubr.f32.gmra.mrb[0].mxu0 %v2974
    %v3155 = vpop.f32.mrb[0].mxu0
    %v3156 = vadd.f32 %v2941, %v3155
    %v3157 = vpop.f32.mrb[0].mxu0
    %3158 = vmatprep.mubr.f32.mxu0 0.0
    %3159 = vmatmul.mubr.f32.gmra.mrb[0].mxu0 %v2977
    %v3160 = vpop.f32.mrb[0].mxu0
    %v3161 = vadd.f32 %v2941, %v3160
    %v3162 = vpop.f32.mrb[0].mxu0
    %3163 = vmatprep.mubr.f32.mxu0 0.0
    %3164 = vmatmul.mubr.f32.gmra.mrb[0].mxu0 %v2980
    %v3165 = vpop.f32.mrb[0].mxu0
    %v3166 = vadd.f32 %v2941, %v3165
    %v3167 = vpop.f32.mrb[0].mxu0
    %3168 = vmatprep.mubr.f32.mxu0 0.0
    %3169 = vmatmul.mubr.f32.gmra.mrb[0].mxu0 %v2983
    %v3170 = vpop.f32.mrb[0].mxu0
    %v3171 = vadd.f32 %v2941, %v3170
    %v3172 = vpop.f32.mrb[0].mxu0
    %3173 = vmatprep.mubr.f32.mxu0 0.0
    %3174 = vmatmul.mubr.f32.gmra.mrb[0].mxu0 %v2986
    %v3175 = vpop.f32.mrb[0].mxu0
    %v3176 = vadd.f32 %v2941, %v3175
    %v3177 = vpop.f32.mrb[0].mxu0
    %3178 = vmatprep.mubr.f32.mxu0 0.0
    %3179 = vmatmul.mubr.f32.gmra.mrb[0].mxu0 %v2989
    %v3180 = vpop.f32.mrb[0].mxu0
    %v3181 = vadd.f32 %v2941, %v3180
    %v3182 = vpop.f32.mrb[0].mxu0
    %3183 = vmatprep.mubr.f32.mxu0 0.0
    %3184 = vmatmul.mubr.f32.gmra.mrb[0].mxu0 %v2992
    %v3185 = vpop.f32.mrb[0].mxu0
    %v3186 = vadd.f32 %v2941, %v3185
    %v3187 = vpop.f32.mrb[0].mxu0
    %3188 = vmatprep.mubr.f32.mxu0 0.0
    %3189 = vmatmul.mubr.f32.gmra.mrb[0].mxu0 %v2995
    %v3190 = vpop.f32.mrb[0].mxu0
    %v3191 = vadd.f32 %v2941, %v3190
    %v3192 = vpop.f32.mrb[0].mxu0
    %3193 = vmatprep.mubr.f32.mxu0 0.0
    %3194 = vmatmul.mubr.f32.gmra.mrb[0].mxu0 %v2998
    %v3195 = vpop.f32.mrb[0].mxu0
    %v3196 = vadd.f32 %v2941, %v3195
    %v3197 = vpop.f32.mrb[0].mxu0
    %3198 = vmatprep.mubr.f32.mxu0 0.0
    %3199 = vmatmul.mubr.f32.gmra.mrb[0].mxu0 %v3001
    %v3200 = vpop.f32.mrb[0].mxu0
    %v3201 = vadd.f32 %v2941, %v3200
    %v3202 = vpop.f32.mrb[0].mxu0
    %3203 = vmatprep.mubr.f32.mxu0 0.0
    %3204 = vmatmul.mubr.f32.gmra.mrb[0].mxu0 %v3004
    %v3205 = vpop.f32.mrb[0].mxu0
    %v3206 = vadd.f32 %v2941, %v3205
    %v3207 = vpop.f32.mrb[0].mxu0
    %3208 = vmatprep.mubr.f32.mxu0 0.0
    %3209 = vmatmul.mubr.f32.gmra.mrb[0].mxu0 %v3007
    %v3210 = vpop.f32.mrb[0].mxu0
    %v3211 = vadd.f32 %v2941, %v3210
    %v3212 = vpop.f32.mrb[0].mxu0
    %3213 = vmatprep.mubr.f32.mxu0 0.0
    %3214 = vmatmul.mubr.f32.gmra.mrb[0].mxu0 %v3010
    %v3215 = vpop.f32.mrb[0].mxu0
    %v3216 = vadd.f32 %v2941, %v3215
    %v3217 = vpop.f32.mrb[0].mxu0
    %3218 = vmatprep.mubr.f32.mxu0 0.0
    %3219 = vmatmul.mubr.f32.gmra.mrb[0].mxu0 %v3013
    %v3220 = vpop.f32.mrb[0].mxu0
    %v3221 = vadd.f32 %v2941, %v3220
    %v3222 = vpop.f32.mrb[0].mxu0
    %3223 = vmatprep.mubr.f32.mxu0 0.0
    %3224 = vmatmul.mubr.f32.gmra.mrb[0].mxu0 %v3016
    %v3225 = vpop.f32.mrb[0].mxu0
    %v3226 = vadd.f32 %v2941, %v3225
    %v3227 = vpop.f32.mrb[0].mxu0
    %3228 = vmatprep.mubr.f32.mxu0 0.0
    %3229 = vmatmul.mubr.f32.gmra.mrb[0].mxu0 %v3019
    %v3230 = vpop.f32.mrb[0].mxu0
    %v3231 = vadd.f32 %v2941, %v3230
    %v3232 = vpop.f32.mrb[0].mxu0
    %3233 = vmatprep.mubr.f32.mxu0 0.0
    %3234 = vmatmul.mubr.f32.gmra.mrb[0].mxu0 %v3022
    %v3235 = vpop.f32.mrb[0].mxu0
    %v3236 = vadd.f32 %v2941, %v3235
    %v3237 = vpop.f32.mrb[0].mxu0
    %3238 = vmatprep.mubr.f32.mxu0 0.0
    %3239 = vmatmul.mubr.f32.gmra.mrb[0].mxu0 %v3025
    %v3240 = vpop.f32.mrb[0].mxu0
    %v3241 = vadd.f32 %v2941, %v3240
    %v3242 = vpop.f32.mrb[0].mxu0
    %3243 = vmatprep.mubr.f32.mxu0 0.0
    %3244 = vmatmul.mubr.f32.gmra.mrb[0].mxu0 %v3028
    %v3245 = vpop.f32.mrb[0].mxu0
    %v3246 = vadd.f32 %v2941, %v3245
    %v3247 = vpop.f32.mrb[0].mxu0
    %3248 = vmatprep.mubr.f32.mxu0 0.0
    %3249 = vmatmul.mubr.f32.gmra.mrb[0].mxu0 %v3031
    %v3250 = vpop.f32.mrb[0].mxu0
    %v3251 = vadd.f32 %v2941, %v3250
    %v3252 = vpop.f32.mrb[0].mxu0
    %3253 = vmatprep.mubr.f32.mxu0 0.0
    %3254 = vmatmul.mubr.f32.gmra.mrb[0].mxu0 %v3034
    %v3255 = vpop.f32.mrb[0].mxu0
    %v3256 = vadd.f32 %v2941, %v3255
    %v3257 = vpop.f32.mrb[0].mxu0
    %3258 = vmatprep.mubr.f32.mxu0 0.0
    %3259 = vmatmul.mubr.f32.gmra.mrb[0].mxu0 %v3037
    %v3260 = vpop.f32.mrb[0].mxu0
    %v3261 = vadd.f32 %v2941, %v3260
    %v3262 = vpop.f32.mrb[0].mxu0
    %3263 = vdwg.mxu0
    %v3264 = vmax.f32 %v3106, 0.0
    %v3265 = vmax.f32 %v3111, 0.0
    %v3266 = vmax.f32 %v3116, 0.0
    %v3267 = vmax.f32 %v3121, 0.0
    %v3268 = vmax.f32 %v3126, 0.0
    %v3269 = vmax.f32 %v3131, 0.0
    %v3270 = vmax.f32 %v3136, 0.0
    %v3271 = vmax.f32 %v3141, 0.0
    %v3272 = vmax.f32 %v3146, 0.0
    %v3273 = vmax.f32 %v3151, 0.0
    %v3274 = vmax.f32 %v3156, 0.0
    %v3275 = vmax.f32 %v3161, 0.0
    %v3276 = vmax.f32 %v3166, 0.0
    %v3277 = vmax.f32 %v3171, 0.0
    %v3278 = vmax.f32 %v3176, 0.0
    %v3279 = vmax.f32 %v3181, 0.0
    %v3280 = vmax.f32 %v3186, 0.0
    %v3281 = vmax.f32 %v3191, 0.0
    %v3282 = vmax.f32 %v3196, 0.0
    %v3283 = vmax.f32 %v3201, 0.0
    %v3284 = vmax.f32 %v3206, 0.0
    %v3285 = vmax.f32 %v3211, 0.0
    %v3286 = vmax.f32 %v3216, 0.0
    %v3287 = vmax.f32 %v3221, 0.0
    %v3288 = vmax.f32 %v3226, 0.0
    %v3289 = vmax.f32 %v3231, 0.0
    %v3290 = vmax.f32 %v3236, 0.0
    %v3291 = vmax.f32 %v3241, 0.0
    %v3292 = vmax.f32 %v3246, 0.0
    %v3293 = vmax.f32 %v3251, 0.0
    %v3294 = vmax.f32 %v3256, 0.0
    %v3295 = vmax.f32 %v3261, 0.0
    %v3296 = vld [vmem:[%s45] sm:$0xff]
    %v3297 = vld [vmem:[%s45 + $0x8] sm:$0xff]
    %v3298 = vld [vmem:[%s45 + $0x10] sm:$0xff]
    %v3299 = vld [vmem:[%s45 + $0x18] sm:$0xff]
    %v3300 = vld [vmem:[%s45 + $0x20] sm:$0xff]
    %v3301 = vld [vmem:[%s45 + $0x28] sm:$0xff]
    %v3302 = vld [vmem:[%s45 + $0x30] sm:$0xff]
    %v3303 = vld [vmem:[%s45 + $0x38] sm:$0xff]
    %v3304 = vld [vmem:[%s47] sm:$0x1]
    %v3306 = vlaneseq
    %v3307 = vshrl.u32 %v3306, 7
    %v3308 = vsub.s32 0, %v3307
    %v3309 = vrot.slane %v3304, %v3308
    %v3312 = vsel %vm2850, %v3264, 0
    %v3315 = vsel %vm2850, %v3265, 0
    %v3318 = vsel %vm2850, %v3266, 0
    %v3321 = vsel %vm2850, %v3267, 0
    %v3324 = vsel %vm2850, %v3268, 0
    %v3327 = vsel %vm2850, %v3269, 0
    %v3330 = vsel %vm2850, %v3270, 0
    %v3333 = vsel %vm2850, %v3271, 0
    %v3336 = vsel %vm2850, %v3272, 0
    %v3339 = vsel %vm2850, %v3273, 0
    %v3342 = vsel %vm2850, %v3274, 0
    %v3345 = vsel %vm2850, %v3275, 0
    %v3348 = vsel %vm2850, %v3276, 0
    %v3351 = vsel %vm2850, %v3277, 0
    %v3354 = vsel %vm2850, %v3278, 0
    %v3357 = vsel %vm2850, %v3279, 0
    %v3360 = vsel %vm2850, %v3280, 0
    %v3363 = vsel %vm2850, %v3281, 0
    %v3366 = vsel %vm2850, %v3282, 0
    %v3369 = vsel %vm2850, %v3283, 0
    %v3372 = vsel %vm2850, %v3284, 0
    %v3375 = vsel %vm2850, %v3285, 0
    %v3378 = vsel %vm2850, %v3286, 0
    %v3381 = vsel %vm2850, %v3287, 0
    %v3384 = vsel %vm2850, %v3288, 0
    %v3387 = vsel %vm2850, %v3289, 0
    %v3390 = vsel %vm2850, %v3290, 0
    %v3393 = vsel %vm2850, %v3291, 0
    %v3396 = vsel %vm2850, %v3292, 0
    %v3399 = vsel %vm2850, %v3293, 0
    %v3402 = vsel %vm2850, %v3294, 0
    %v3405 = vsel %vm2850, %v3295, 0
    %3407 = vmatprep.subr.mxu0 0.0
    %3408 = vmatpush1.msra.mxu0 %v3296
    %3409 = vmatprep.subr.mxu0 0.0
    %3410 = vmatpush1.msra.mxu0 %v3297
    %3411 = vmatprep.subr.mxu0 0.0
    %3412 = vmatpush1.msra.mxu0 %v3298
    %3413 = vmatprep.subr.mxu0 0.0
    %3414 = vmatpush1.msra.mxu0 %v3299
    %3415 = vmatprep.subr.mxu0 0.0
    %3416 = vmatpush1.msra.mxu0 %v3300
    %3417 = vmatprep.subr.mxu0 0.0
    %3418 = vmatpush1.msra.mxu0 %v3301
    %3419 = vmatprep.subr.mxu0 0.0
    %3420 = vmatpush1.msra.mxu0 %v3302
    %3421 = vmatprep.subr.mxu0 0.0
    %3422 = vmatpush1.msra.mxu0 %v3303
    %3423 = vmatprep.subr.mxu0 0.0
    %3424 = vmatpush1.msra.mxu0 0.0
    %3425 = vmatprep.subr.mxu0 0.0
    %3426 = vmatpush1.msra.mxu0 0.0
    %3427 = vmatprep.subr.mxu0 0.0
    %3428 = vmatpush1.msra.mxu0 0.0
    %3429 = vmatprep.subr.mxu0 0.0
    %3430 = vmatpush1.msra.mxu0 0.0
    %3431 = vmatprep.subr.mxu0 0.0
    %3432 = vmatpush1.msra.mxu0 0.0
    %3433 = vmatprep.subr.mxu0 0.0
    %3434 = vmatpush1.msra.mxu0 0.0
    %3435 = vmatprep.subr.mxu0 0.0
    %3436 = vmatpush1.msra.mxu0 0.0
    %3437 = vmatprep.subr.mxu0 0.0
    %3438 = vmatpush1.msra.mxu0 0.0
    %3439 = vmatprep.subr.mxu0 0.0
    %3440 = vmatpush1.msra.mxu0 0.0
    %3441 = vmatprep.subr.mxu0 0.0
    %3442 = vmatpush1.msra.mxu0 0.0
    %3443 = vmatprep.subr.mxu0 0.0
    %3444 = vmatpush1.msra.mxu0 0.0
    %3445 = vmatprep.subr.mxu0 0.0
    %3446 = vmatpush1.msra.mxu0 0.0
    %3447 = vmatprep.subr.mxu0 0.0
    %3448 = vmatpush1.msra.mxu0 0.0
    %3449 = vmatprep.subr.mxu0 0.0
    %3450 = vmatpush1.msra.mxu0 0.0
    %3451 = vmatprep.subr.mxu0 0.0
    %3452 = vmatpush1.msra.mxu0 0.0
    %3453 = vmatprep.subr.mxu0 0.0
    %3454 = vmatpush1.msra.mxu0 0.0
    %3455 = vmatprep.subr.mxu0 0.0
    %3456 = vmatpush1.msra.mxu0 0.0
    %3457 = vmatprep.subr.mxu0 0.0
    %3458 = vmatpush1.msra.mxu0 0.0
    %3459 = vmatprep.subr.mxu0 0.0
    %3460 = vmatpush1.msra.mxu0 0.0
    %3461 = vmatprep.subr.mxu0 0.0
    %3462 = vmatpush1.msra.mxu0 0.0
    %3463 = vmatprep.subr.mxu0 0.0
    %3464 = vmatpush1.msra.mxu0 0.0
    %3465 = vmatprep.subr.mxu0 0.0
    %3466 = vmatpush1.msra.mxu0 0.0
    %3467 = vmatprep.subr.mxu0 0.0
    %3468 = vmatpush1.msra.mxu0 0.0
    %3469 = vmatprep.subr.mxu0 0.0
    %3470 = vmatpush1.msra.mxu0 0.0
    %3471 = vmatprep.mubr.f32.mxu0 0.0
    %3472 = vmatmul.mubr.f32.gmra.mrb[0].mxu0 %v3312
    %v3473 = vpop.f32.mrb[0].mxu0
    %v3474 = vadd.f32 %v3309, %v3473
    %v3475 = vpop.f32.mrb[0].mxu0
    %3476 = vmatprep.mubr.f32.mxu0 0.0
    %3477 = vmatmul.mubr.f32.gmra.mrb[0].mxu0 %v3315
    %v3478 = vpop.f32.mrb[0].mxu0
    %v3479 = vadd.f32 %v3309, %v3478
    %v3480 = vpop.f32.mrb[0].mxu0
    %3481 = vmatprep.mubr.f32.mxu0 0.0
    %3482 = vmatmul.mubr.f32.gmra.mrb[0].mxu0 %v3318
    %v3483 = vpop.f32.mrb[0].mxu0
    %v3484 = vadd.f32 %v3309, %v3483
    %v3485 = vpop.f32.mrb[0].mxu0
    %3486 = vmatprep.mubr.f32.mxu0 0.0
    %3487 = vmatmul.mubr.f32.gmra.mrb[0].mxu0 %v3321
    %v3488 = vpop.f32.mrb[0].mxu0
    %v3489 = vadd.f32 %v3309, %v3488
    %v3490 = vpop.f32.mrb[0].mxu0
    %3491 = vmatprep.mubr.f32.mxu0 0.0
    %3492 = vmatmul.mubr.f32.gmra.mrb[0].mxu0 %v3324
    %v3493 = vpop.f32.mrb[0].mxu0
    %v3494 = vadd.f32 %v3309, %v3493
    %v3495 = vpop.f32.mrb[0].mxu0
    %3496 = vmatprep.mubr.f32.mxu0 0.0
    %3497 = vmatmul.mubr.f32.gmra.mrb[0].mxu0 %v3327
    %v3498 = vpop.f32.mrb[0].mxu0
    %v3499 = vadd.f32 %v3309, %v3498
    %v3500 = vpop.f32.mrb[0].mxu0
    %3501 = vmatprep.mubr.f32.mxu0 0.0
    %3502 = vmatmul.mubr.f32.gmra.mrb[0].mxu0 %v3330
    %v3503 = vpop.f32.mrb[0].mxu0
    %v3504 = vadd.f32 %v3309, %v3503
    %v3505 = vpop.f32.mrb[0].mxu0
    %3506 = vmatprep.mubr.f32.mxu0 0.0
    %3507 = vmatmul.mubr.f32.gmra.mrb[0].mxu0 %v3333
    %v3508 = vpop.f32.mrb[0].mxu0
    %v3509 = vadd.f32 %v3309, %v3508
    %v3510 = vpop.f32.mrb[0].mxu0
    %3511 = vmatprep.mubr.f32.mxu0 0.0
    %3512 = vmatmul.mubr.f32.gmra.mrb[0].mxu0 %v3336
    %v3513 = vpop.f32.mrb[0].mxu0
    %v3514 = vadd.f32 %v3309, %v3513
    %v3515 = vpop.f32.mrb[0].mxu0
    %3516 = vmatprep.mubr.f32.mxu0 0.0
    %3517 = vmatmul.mubr.f32.gmra.mrb[0].mxu0 %v3339
    %v3518 = vpop.f32.mrb[0].mxu0
    %v3519 = vadd.f32 %v3309, %v3518
    %v3520 = vpop.f32.mrb[0].mxu0
    %3521 = vmatprep.mubr.f32.mxu0 0.0
    %3522 = vmatmul.mubr.f32.gmra.mrb[0].mxu0 %v3342
    %v3523 = vpop.f32.mrb[0].mxu0
    %v3524 = vadd.f32 %v3309, %v3523
    %v3525 = vpop.f32.mrb[0].mxu0
    %3526 = vmatprep.mubr.f32.mxu0 0.0
    %3527 = vmatmul.mubr.f32.gmra.mrb[0].mxu0 %v3345
    %v3528 = vpop.f32.mrb[0].mxu0
    %v3529 = vadd.f32 %v3309, %v3528
    %v3530 = vpop.f32.mrb[0].mxu0
    %3531 = vmatprep.mubr.f32.mxu0 0.0
    %3532 = vmatmul.mubr.f32.gmra.mrb[0].mxu0 %v3348
    %v3533 = vpop.f32.mrb[0].mxu0
    %v3534 = vadd.f32 %v3309, %v3533
    %v3535 = vpop.f32.mrb[0].mxu0
    %3536 = vmatprep.mubr.f32.mxu0 0.0
    %3537 = vmatmul.mubr.f32.gmra.mrb[0].mxu0 %v3351
    %v3538 = vpop.f32.mrb[0].mxu0
    %v3539 = vadd.f32 %v3309, %v3538
    %v3540 = vpop.f32.mrb[0].mxu0
    %3541 = vmatprep.mubr.f32.mxu0 0.0
    %3542 = vmatmul.mubr.f32.gmra.mrb[0].mxu0 %v3354
    %v3543 = vpop.f32.mrb[0].mxu0
    %v3544 = vadd.f32 %v3309, %v3543
    %v3545 = vpop.f32.mrb[0].mxu0
    %3546 = vmatprep.mubr.f32.mxu0 0.0
    %3547 = vmatmul.mubr.f32.gmra.mrb[0].mxu0 %v3357
    %v3548 = vpop.f32.mrb[0].mxu0
    %v3549 = vadd.f32 %v3309, %v3548
    %v3550 = vpop.f32.mrb[0].mxu0
    %3551 = vmatprep.mubr.f32.mxu0 0.0
    %3552 = vmatmul.mubr.f32.gmra.mrb[0].mxu0 %v3360
    %v3553 = vpop.f32.mrb[0].mxu0
    %v3554 = vadd.f32 %v3309, %v3553
    %v3555 = vpop.f32.mrb[0].mxu0
    %3556 = vmatprep.mubr.f32.mxu0 0.0
    %3557 = vmatmul.mubr.f32.gmra.mrb[0].mxu0 %v3363
    %v3558 = vpop.f32.mrb[0].mxu0
    %v3559 = vadd.f32 %v3309, %v3558
    %v3560 = vpop.f32.mrb[0].mxu0
    %3561 = vmatprep.mubr.f32.mxu0 0.0
    %3562 = vmatmul.mubr.f32.gmra.mrb[0].mxu0 %v3366
    %v3563 = vpop.f32.mrb[0].mxu0
    %v3564 = vadd.f32 %v3309, %v3563
    %v3565 = vpop.f32.mrb[0].mxu0
    %3566 = vmatprep.mubr.f32.mxu0 0.0
    %3567 = vmatmul.mubr.f32.gmra.mrb[0].mxu0 %v3369
    %v3568 = vpop.f32.mrb[0].mxu0
    %v3569 = vadd.f32 %v3309, %v3568
    %v3570 = vpop.f32.mrb[0].mxu0
    %3571 = vmatprep.mubr.f32.mxu0 0.0
    %3572 = vmatmul.mubr.f32.gmra.mrb[0].mxu0 %v3372
    %v3573 = vpop.f32.mrb[0].mxu0
    %v3574 = vadd.f32 %v3309, %v3573
    %v3575 = vpop.f32.mrb[0].mxu0
    %3576 = vmatprep.mubr.f32.mxu0 0.0
    %3577 = vmatmul.mubr.f32.gmra.mrb[0].mxu0 %v3375
    %v3578 = vpop.f32.mrb[0].mxu0
    %v3579 = vadd.f32 %v3309, %v3578
    %v3580 = vpop.f32.mrb[0].mxu0
    %3581 = vmatprep.mubr.f32.mxu0 0.0
    %3582 = vmatmul.mubr.f32.gmra.mrb[0].mxu0 %v3378
    %v3583 = vpop.f32.mrb[0].mxu0
    %v3584 = vadd.f32 %v3309, %v3583
    %v3585 = vpop.f32.mrb[0].mxu0
    %3586 = vmatprep.mubr.f32.mxu0 0.0
    %3587 = vmatmul.mubr.f32.gmra.mrb[0].mxu0 %v3381
    %v3588 = vpop.f32.mrb[0].mxu0
    %v3589 = vadd.f32 %v3309, %v3588
    %v3590 = vpop.f32.mrb[0].mxu0
    %3591 = vmatprep.mubr.f32.mxu0 0.0
    %3592 = vmatmul.mubr.f32.gmra.mrb[0].mxu0 %v3384
    %v3593 = vpop.f32.mrb[0].mxu0
    %v3594 = vadd.f32 %v3309, %v3593
    %v3595 = vpop.f32.mrb[0].mxu0
    %3596 = vmatprep.mubr.f32.mxu0 0.0
    %3597 = vmatmul.mubr.f32.gmra.mrb[0].mxu0 %v3387
    %v3598 = vpop.f32.mrb[0].mxu0
    %v3599 = vadd.f32 %v3309, %v3598
    %v3600 = vpop.f32.mrb[0].mxu0
    %3601 = vmatprep.mubr.f32.mxu0 0.0
    %3602 = vmatmul.mubr.f32.gmra.mrb[0].mxu0 %v3390
    %v3603 = vpop.f32.mrb[0].mxu0
    %v3604 = vadd.f32 %v3309, %v3603
    %v3605 = vpop.f32.mrb[0].mxu0
    %3606 = vmatprep.mubr.f32.mxu0 0.0
    %3607 = vmatmul.mubr.f32.gmra.mrb[0].mxu0 %v3393
    %v3608 = vpop.f32.mrb[0].mxu0
    %v3609 = vadd.f32 %v3309, %v3608
    %v3610 = vpop.f32.mrb[0].mxu0
    %3611 = vmatprep.mubr.f32.mxu0 0.0
    %3612 = vmatmul.mubr.f32.gmra.mrb[0].mxu0 %v3396
    %v3613 = vpop.f32.mrb[0].mxu0
    %v3614 = vadd.f32 %v3309, %v3613
    %v3615 = vpop.f32.mrb[0].mxu0
    %3616 = vmatprep.mubr.f32.mxu0 0.0
    %3617 = vmatmul.mubr.f32.gmra.mrb[0].mxu0 %v3399
    %v3618 = vpop.f32.mrb[0].mxu0
    %v3619 = vadd.f32 %v3309, %v3618
    %v3620 = vpop.f32.mrb[0].mxu0
    %3621 = vmatprep.mubr.f32.mxu0 0.0
    %3622 = vmatmul.mubr.f32.gmra.mrb[0].mxu0 %v3402
    %v3623 = vpop.f32.mrb[0].mxu0
    %v3624 = vadd.f32 %v3309, %v3623
    %v3625 = vpop.f32.mrb[0].mxu0
    %3626 = vmatprep.mubr.f32.mxu0 0.0
    %3627 = vmatmul.mubr.f32.gmra.mrb[0].mxu0 %v3405
    %v3628 = vpop.f32.mrb[0].mxu0
    %v3629 = vadd.f32 %v3309, %v3628
    %v3630 = vpop.f32.mrb[0].mxu0
    %3631 = vdwg.mxu0
    %v3632 = vadd.f32 %v2213, %v2924
    %v3633 = vadd.f32 %v2214, %v2929
    %v3634 = vld [vmem:[%s57] sm:$0x1]
    %v3635 = vld [vmem:[%s59] sm:$0x1]
    %v3636 = vsel %vm343, %v3632, 0.0
    %3637 = vadd.xlane.f32.xlu0 %v3636
    %v3638 = vpop.xlane.xlu0 %3637
    %v3639 = vsel %vm343, %v3633, 0.0
    %3640 = vadd.xlane.f32.xlu0 %v3639
    %v3641 = vpop.xlane.xlu0 %3640
    %v3642 = vmul.f32 %v3638, %v2178
    %v3643 = vmul.f32 %v3641, %v2178
    %v3644 = vsub.f32 %v3632, %v3642
    %v3645 = vsub.f32 %v3633, %v3643
    %v3646 = vmul.f32 %v3644, %v3644
    %v3647 = vmul.f32 %v3645, %v3645
    %v3648 = vsel %vm343, %v3646, 0.0
    %3649 = vadd.xlane.f32.xlu0 %v3648
    %v3650 = vpop.xlane.xlu0 %3649
    %v3651 = vsel %vm343, %v3647, 0.0
    %3652 = vadd.xlane.f32.xlu0 %v3651
    %v3653 = vpop.xlane.xlu0 %3652
    %v3654 = vmul.f32 %v3650, %v2178
    %v3655 = vmul.f32 %v3653, %v2178
    %v3656 = vadd.f32 %v3654, 1e-05
    %v3657 = vadd.f32 %v3655, 1e-05
    %v3658 = vrsqrt.pop %v3656
    %v3659 = vrsqrt.pop %v3657
    %v3660 = vmul.f32 %v3644, %v3658
    %v3661 = vmul.f32 %v3645, %v3659
    %v3663 = vlaneseq
    %v3664 = vshrl.u32 %v3663, 7
    %v3665 = vsub.s32 0, %v3664
    %v3666 = vrot.slane %v3634, %v3665
    %v3668 = vmul.f32 %v3660, %v3666
    %v3669 = vmul.f32 %v3661, %v3666
    %v3671 = vlaneseq
    %v3672 = vshrl.u32 %v3671, 7
    %v3673 = vsub.s32 0, %v3672
    %v3674 = vrot.slane %v3635, %v3673
    %v3676 = vadd.f32 %v3668, %v3674
    %v3677 = vadd.f32 %v3669, %v3674
    %v3678 = vadd.f32 %v2709, %v3474
    %v3679 = vadd.f32 %v2710, %v3479
    %v3680 = vadd.f32 %v2711, %v3484
    %v3681 = vadd.f32 %v2712, %v3489
    %v3682 = vadd.f32 %v2713, %v3494
    %v3683 = vadd.f32 %v2714, %v3499
    %v3684 = vadd.f32 %v2715, %v3504
    %v3685 = vadd.f32 %v2716, %v3509
    %v3686 = vadd.f32 %v2717, %v3514
    %v3687 = vadd.f32 %v2718, %v3519
    %v3688 = vadd.f32 %v2719, %v3524
    %v3689 = vadd.f32 %v2720, %v3529
    %v3690 = vadd.f32 %v2721, %v3534
    %v3691 = vadd.f32 %v2722, %v3539
    %v3692 = vadd.f32 %v2723, %v3544
    %v3693 = vadd.f32 %v2724, %v3549
    %v3694 = vadd.f32 %v2725, %v3554
    %v3695 = vadd.f32 %v2726, %v3559
    %v3696 = vadd.f32 %v2727, %v3564
    %v3697 = vadd.f32 %v2728, %v3569
    %v3698 = vadd.f32 %v2729, %v3574
    %v3699 = vadd.f32 %v2730, %v3579
    %v3700 = vadd.f32 %v2731, %v3584
    %v3701 = vadd.f32 %v2732, %v3589
    %v3702 = vadd.f32 %v2733, %v3594
    %v3703 = vadd.f32 %v2734, %v3599
    %v3704 = vadd.f32 %v2735, %v3604
    %v3705 = vadd.f32 %v2736, %v3609
    %v3706 = vadd.f32 %v2737, %v3614
    %v3707 = vadd.f32 %v2738, %v3619
    %v3708 = vadd.f32 %v2739, %v3624
    %v3709 = vadd.f32 %v2740, %v3629
    %v3710 = vld [vmem:[%s61] sm:$0x1]
    %v3711 = vld [vmem:[%s63] sm:$0x1]
    %v3712 = vsel %vm343, %v3678, 0.0
    %3713 = vadd.xlane.f32.xlu0 %v3712
    %v3714 = vpop.xlane.xlu0 %3713
    %v3715 = vsel %vm343, %v3679, 0.0
    %3716 = vadd.xlane.f32.xlu0 %v3715
    %v3717 = vpop.xlane.xlu0 %3716
    %v3718 = vsel %vm343, %v3680, 0.0
    %3719 = vadd.xlane.f32.xlu0 %v3718
    %v3720 = vpop.xlane.xlu0 %3719
    %v3721 = vsel %vm343, %v3681, 0.0
    %3722 = vadd.xlane.f32.xlu0 %v3721
    %v3723 = vpop.xlane.xlu0 %3722
    %v3724 = vsel %vm343, %v3682, 0.0
    %3725 = vadd.xlane.f32.xlu0 %v3724
    %v3726 = vpop.xlane.xlu0 %3725
    %v3727 = vsel %vm343, %v3683, 0.0
    %3728 = vadd.xlane.f32.xlu0 %v3727
    %v3729 = vpop.xlane.xlu0 %3728
    %v3730 = vsel %vm343, %v3684, 0.0
    %3731 = vadd.xlane.f32.xlu0 %v3730
    %v3732 = vpop.xlane.xlu0 %3731
    %v3733 = vsel %vm343, %v3685, 0.0
    %3734 = vadd.xlane.f32.xlu0 %v3733
    %v3735 = vpop.xlane.xlu0 %3734
    %v3736 = vsel %vm343, %v3686, 0.0
    %3737 = vadd.xlane.f32.xlu0 %v3736
    %v3738 = vpop.xlane.xlu0 %3737
    %v3739 = vsel %vm343, %v3687, 0.0
    %3740 = vadd.xlane.f32.xlu0 %v3739
    %v3741 = vpop.xlane.xlu0 %3740
    %v3742 = vsel %vm343, %v3688, 0.0
    %3743 = vadd.xlane.f32.xlu0 %v3742
    %v3744 = vpop.xlane.xlu0 %3743
    %v3745 = vsel %vm343, %v3689, 0.0
    %3746 = vadd.xlane.f32.xlu0 %v3745
    %v3747 = vpop.xlane.xlu0 %3746
    %v3748 = vsel %vm343, %v3690, 0.0
    %3749 = vadd.xlane.f32.xlu0 %v3748
    %v3750 = vpop.xlane.xlu0 %3749
    %v3751 = vsel %vm343, %v3691, 0.0
    %3752 = vadd.xlane.f32.xlu0 %v3751
    %v3753 = vpop.xlane.xlu0 %3752
    %v3754 = vsel %vm343, %v3692, 0.0
    %3755 = vadd.xlane.f32.xlu0 %v3754
    %v3756 = vpop.xlane.xlu0 %3755
    %v3757 = vsel %vm343, %v3693, 0.0
    %3758 = vadd.xlane.f32.xlu0 %v3757
    %v3759 = vpop.xlane.xlu0 %3758
    %v3760 = vsel %vm343, %v3694, 0.0
    %3761 = vadd.xlane.f32.xlu0 %v3760
    %v3762 = vpop.xlane.xlu0 %3761
    %v3763 = vsel %vm343, %v3695, 0.0
    %3764 = vadd.xlane.f32.xlu0 %v3763
    %v3765 = vpop.xlane.xlu0 %3764
    %v3766 = vsel %vm343, %v3696, 0.0
    %3767 = vadd.xlane.f32.xlu0 %v3766
    %v3768 = vpop.xlane.xlu0 %3767
    %v3769 = vsel %vm343, %v3697, 0.0
    %3770 = vadd.xlane.f32.xlu0 %v3769
    %v3771 = vpop.xlane.xlu0 %3770
    %v3772 = vsel %vm343, %v3698, 0.0
    %3773 = vadd.xlane.f32.xlu0 %v3772
    %v3774 = vpop.xlane.xlu0 %3773
    %v3775 = vsel %vm343, %v3699, 0.0
    %3776 = vadd.xlane.f32.xlu0 %v3775
    %v3777 = vpop.xlane.xlu0 %3776
    %v3778 = vsel %vm343, %v3700, 0.0
    %3779 = vadd.xlane.f32.xlu0 %v3778
    %v3780 = vpop.xlane.xlu0 %3779
    %v3781 = vsel %vm343, %v3701, 0.0
    %3782 = vadd.xlane.f32.xlu0 %v3781
    %v3783 = vpop.xlane.xlu0 %3782
    %v3784 = vsel %vm343, %v3702, 0.0
    %3785 = vadd.xlane.f32.xlu0 %v3784
    %v3786 = vpop.xlane.xlu0 %3785
    %v3787 = vsel %vm343, %v3703, 0.0
    %3788 = vadd.xlane.f32.xlu0 %v3787
    %v3789 = vpop.xlane.xlu0 %3788
    %v3790 = vsel %vm343, %v3704, 0.0
    %3791 = vadd.xlane.f32.xlu0 %v3790
    %v3792 = vpop.xlane.xlu0 %3791
    %v3793 = vsel %vm343, %v3705, 0.0
    %3794 = vadd.xlane.f32.xlu0 %v3793
    %v3795 = vpop.xlane.xlu0 %3794
    %v3796 = vsel %vm343, %v3706, 0.0
    %3797 = vadd.xlane.f32.xlu0 %v3796
    %v3798 = vpop.xlane.xlu0 %3797
    %v3799 = vsel %vm343, %v3707, 0.0
    %3800 = vadd.xlane.f32.xlu0 %v3799
    %v3801 = vpop.xlane.xlu0 %3800
    %v3802 = vsel %vm343, %v3708, 0.0
    %3803 = vadd.xlane.f32.xlu0 %v3802
    %v3804 = vpop.xlane.xlu0 %3803
    %v3805 = vsel %vm343, %v3709, 0.0
    %3806 = vadd.xlane.f32.xlu0 %v3805
    %v3807 = vpop.xlane.xlu0 %3806
    %v3808 = vmul.f32 %v3714, %v2178
    %v3809 = vmul.f32 %v3717, %v2178
    %v3810 = vmul.f32 %v3720, %v2178
    %v3811 = vmul.f32 %v3723, %v2178
    %v3812 = vmul.f32 %v3726, %v2178
    %v3813 = vmul.f32 %v3729, %v2178
    %v3814 = vmul.f32 %v3732, %v2178
    %v3815 = vmul.f32 %v3735, %v2178
    %v3816 = vmul.f32 %v3738, %v2178
    %v3817 = vmul.f32 %v3741, %v2178
    %v3818 = vmul.f32 %v3744, %v2178
    %v3819 = vmul.f32 %v3747, %v2178
    %v3820 = vmul.f32 %v3750, %v2178
    %v3821 = vmul.f32 %v3753, %v2178
    %v3822 = vmul.f32 %v3756, %v2178
    %v3823 = vmul.f32 %v3759, %v2178
    %v3824 = vmul.f32 %v3762, %v2178
    %v3825 = vmul.f32 %v3765, %v2178
    %v3826 = vmul.f32 %v3768, %v2178
    %v3827 = vmul.f32 %v3771, %v2178
    %v3828 = vmul.f32 %v3774, %v2178
    %v3829 = vmul.f32 %v3777, %v2178
    %v3830 = vmul.f32 %v3780, %v2178
    %v3831 = vmul.f32 %v3783, %v2178
    %v3832 = vmul.f32 %v3786, %v2178
    %v3833 = vmul.f32 %v3789, %v2178
    %v3834 = vmul.f32 %v3792, %v2178
    %v3835 = vmul.f32 %v3795, %v2178
    %v3836 = vmul.f32 %v3798, %v2178
    %v3837 = vmul.f32 %v3801, %v2178
    %v3838 = vmul.f32 %v3804, %v2178
    %v3839 = vmul.f32 %v3807, %v2178
    %v3840 = vsub.f32 %v3678, %v3808
    %v3841 = vsub.f32 %v3679, %v3809
    %v3842 = vsub.f32 %v3680, %v3810
    %v3843 = vsub.f32 %v3681, %v3811
    %v3844 = vsub.f32 %v3682, %v3812
    %v3845 = vsub.f32 %v3683, %v3813
    %v3846 = vsub.f32 %v3684, %v3814
    %v3847 = vsub.f32 %v3685, %v3815
    %v3848 = vsub.f32 %v3686, %v3816
    %v3849 = vsub.f32 %v3687, %v3817
    %v3850 = vsub.f32 %v3688, %v3818
    %v3851 = vsub.f32 %v3689, %v3819
    %v3852 = vsub.f32 %v3690, %v3820
    %v3853 = vsub.f32 %v3691, %v3821
    %v3854 = vsub.f32 %v3692, %v3822
    %v3855 = vsub.f32 %v3693, %v3823
    %v3856 = vsub.f32 %v3694, %v3824
    %v3857 = vsub.f32 %v3695, %v3825
    %v3858 = vsub.f32 %v3696, %v3826
    %v3859 = vsub.f32 %v3697, %v3827
    %v3860 = vsub.f32 %v3698, %v3828
    %v3861 = vsub.f32 %v3699, %v3829
    %v3862 = vsub.f32 %v3700, %v3830
    %v3863 = vsub.f32 %v3701, %v3831
    %v3864 = vsub.f32 %v3702, %v3832
    %v3865 = vsub.f32 %v3703, %v3833
    %v3866 = vsub.f32 %v3704, %v3834
    %v3867 = vsub.f32 %v3705, %v3835
    %v3868 = vsub.f32 %v3706, %v3836
    %v3869 = vsub.f32 %v3707, %v3837
    %v3870 = vsub.f32 %v3708, %v3838
    %v3871 = vsub.f32 %v3709, %v3839
    %v3872 = vmul.f32 %v3840, %v3840
    %v3873 = vmul.f32 %v3841, %v3841
    %v3874 = vmul.f32 %v3842, %v3842
    %v3875 = vmul.f32 %v3843, %v3843
    %v3876 = vmul.f32 %v3844, %v3844
    %v3877 = vmul.f32 %v3845, %v3845
    %v3878 = vmul.f32 %v3846, %v3846
    %v3879 = vmul.f32 %v3847, %v3847
    %v3880 = vmul.f32 %v3848, %v3848
    %v3881 = vmul.f32 %v3849, %v3849
    %v3882 = vmul.f32 %v3850, %v3850
    %v3883 = vmul.f32 %v3851, %v3851
    %v3884 = vmul.f32 %v3852, %v3852
    %v3885 = vmul.f32 %v3853, %v3853
    %v3886 = vmul.f32 %v3854, %v3854
    %v3887 = vmul.f32 %v3855, %v3855
    %v3888 = vmul.f32 %v3856, %v3856
    %v3889 = vmul.f32 %v3857, %v3857
    %v3890 = vmul.f32 %v3858, %v3858
    %v3891 = vmul.f32 %v3859, %v3859
    %v3892 = vmul.f32 %v3860, %v3860
    %v3893 = vmul.f32 %v3861, %v3861
    %v3894 = vmul.f32 %v3862, %v3862
    %v3895 = vmul.f32 %v3863, %v3863
    %v3896 = vmul.f32 %v3864, %v3864
    %v3897 = vmul.f32 %v3865, %v3865
    %v3898 = vmul.f32 %v3866, %v3866
    %v3899 = vmul.f32 %v3867, %v3867
    %v3900 = vmul.f32 %v3868, %v3868
    %v3901 = vmul.f32 %v3869, %v3869
    %v3902 = vmul.f32 %v3870, %v3870
    %v3903 = vmul.f32 %v3871, %v3871
    %v3904 = vsel %vm343, %v3872, 0.0
    %3905 = vadd.xlane.f32.xlu0 %v3904
    %v3906 = vpop.xlane.xlu0 %3905
    %v3907 = vsel %vm343, %v3873, 0.0
    %3908 = vadd.xlane.f32.xlu0 %v3907
    %v3909 = vpop.xlane.xlu0 %3908
    %v3910 = vsel %vm343, %v3874, 0.0
    %3911 = vadd.xlane.f32.xlu0 %v3910
    %v3912 = vpop.xlane.xlu0 %3911
    %v3913 = vsel %vm343, %v3875, 0.0
    %3914 = vadd.xlane.f32.xlu0 %v3913
    %v3915 = vpop.xlane.xlu0 %3914
    %v3916 = vsel %vm343, %v3876, 0.0
    %3917 = vadd.xlane.f32.xlu0 %v3916
    %v3918 = vpop.xlane.xlu0 %3917
    %v3919 = vsel %vm343, %v3877, 0.0
    %3920 = vadd.xlane.f32.xlu0 %v3919
    %v3921 = vpop.xlane.xlu0 %3920
    %v3922 = vsel %vm343, %v3878, 0.0
    %3923 = vadd.xlane.f32.xlu0 %v3922
    %v3924 = vpop.xlane.xlu0 %3923
    %v3925 = vsel %vm343, %v3879, 0.0
    %3926 = vadd.xlane.f32.xlu0 %v3925
    %v3927 = vpop.xlane.xlu0 %3926
    %v3928 = vsel %vm343, %v3880, 0.0
    %3929 = vadd.xlane.f32.xlu0 %v3928
    %v3930 = vpop.xlane.xlu0 %3929
    %v3931 = vsel %vm343, %v3881, 0.0
    %3932 = vadd.xlane.f32.xlu0 %v3931
    %v3933 = vpop.xlane.xlu0 %3932
    %v3934 = vsel %vm343, %v3882, 0.0
    %3935 = vadd.xlane.f32.xlu0 %v3934
    %v3936 = vpop.xlane.xlu0 %3935
    %v3937 = vsel %vm343, %v3883, 0.0
    %3938 = vadd.xlane.f32.xlu0 %v3937
    %v3939 = vpop.xlane.xlu0 %3938
    %v3940 = vsel %vm343, %v3884, 0.0
    %3941 = vadd.xlane.f32.xlu0 %v3940
    %v3942 = vpop.xlane.xlu0 %3941
    %v3943 = vsel %vm343, %v3885, 0.0
    %3944 = vadd.xlane.f32.xlu0 %v3943
    %v3945 = vpop.xlane.xlu0 %3944
    %v3946 = vsel %vm343, %v3886, 0.0
    %3947 = vadd.xlane.f32.xlu0 %v3946
    %v3948 = vpop.xlane.xlu0 %3947
    %v3949 = vsel %vm343, %v3887, 0.0
    %3950 = vadd.xlane.f32.xlu0 %v3949
    %v3951 = vpop.xlane.xlu0 %3950
    %v3952 = vsel %vm343, %v3888, 0.0
    %3953 = vadd.xlane.f32.xlu0 %v3952
    %v3954 = vpop.xlane.xlu0 %3953
    %v3955 = vsel %vm343, %v3889, 0.0
    %3956 = vadd.xlane.f32.xlu0 %v3955
    %v3957 = vpop.xlane.xlu0 %3956
    %v3958 = vsel %vm343, %v3890, 0.0
    %3959 = vadd.xlane.f32.xlu0 %v3958
    %v3960 = vpop.xlane.xlu0 %3959
    %v3961 = vsel %vm343, %v3891, 0.0
    %3962 = vadd.xlane.f32.xlu0 %v3961
    %v3963 = vpop.xlane.xlu0 %3962
    %v3964 = vsel %vm343, %v3892, 0.0
    %3965 = vadd.xlane.f32.xlu0 %v3964
    %v3966 = vpop.xlane.xlu0 %3965
    %v3967 = vsel %vm343, %v3893, 0.0
    %3968 = vadd.xlane.f32.xlu0 %v3967
    %v3969 = vpop.xlane.xlu0 %3968
    %v3970 = vsel %vm343, %v3894, 0.0
    %3971 = vadd.xlane.f32.xlu0 %v3970
    %v3972 = vpop.xlane.xlu0 %3971
    %v3973 = vsel %vm343, %v3895, 0.0
    %3974 = vadd.xlane.f32.xlu0 %v3973
    %v3975 = vpop.xlane.xlu0 %3974
    %v3976 = vsel %vm343, %v3896, 0.0
    %3977 = vadd.xlane.f32.xlu0 %v3976
    %v3978 = vpop.xlane.xlu0 %3977
    %v3979 = vsel %vm343, %v3897, 0.0
    %3980 = vadd.xlane.f32.xlu0 %v3979
    %v3981 = vpop.xlane.xlu0 %3980
    %v3982 = vsel %vm343, %v3898, 0.0
    %3983 = vadd.xlane.f32.xlu0 %v3982
    %v3984 = vpop.xlane.xlu0 %3983
    %v3985 = vsel %vm343, %v3899, 0.0
    %3986 = vadd.xlane.f32.xlu0 %v3985
    %v3987 = vpop.xlane.xlu0 %3986
    %v3988 = vsel %vm343, %v3900, 0.0
    %3989 = vadd.xlane.f32.xlu0 %v3988
    %v3990 = vpop.xlane.xlu0 %3989
    %v3991 = vsel %vm343, %v3901, 0.0
    %3992 = vadd.xlane.f32.xlu0 %v3991
    %v3993 = vpop.xlane.xlu0 %3992
    %v3994 = vsel %vm343, %v3902, 0.0
    %3995 = vadd.xlane.f32.xlu0 %v3994
    %v3996 = vpop.xlane.xlu0 %3995
    %v3997 = vsel %vm343, %v3903, 0.0
    %3998 = vadd.xlane.f32.xlu0 %v3997
    %v3999 = vpop.xlane.xlu0 %3998
    %v4000 = vmul.f32 %v3906, %v2178
    %v4001 = vmul.f32 %v3909, %v2178
    %v4002 = vmul.f32 %v3912, %v2178
    %v4003 = vmul.f32 %v3915, %v2178
    %v4004 = vmul.f32 %v3918, %v2178
    %v4005 = vmul.f32 %v3921, %v2178
    %v4006 = vmul.f32 %v3924, %v2178
    %v4007 = vmul.f32 %v3927, %v2178
    %v4008 = vmul.f32 %v3930, %v2178
    %v4009 = vmul.f32 %v3933, %v2178
    %v4010 = vmul.f32 %v3936, %v2178
    %v4011 = vmul.f32 %v3939, %v2178
    %v4012 = vmul.f32 %v3942, %v2178
    %v4013 = vmul.f32 %v3945, %v2178
    %v4014 = vmul.f32 %v3948, %v2178
    %v4015 = vmul.f32 %v3951, %v2178
    %v4016 = vmul.f32 %v3954, %v2178
    %v4017 = vmul.f32 %v3957, %v2178
    %v4018 = vmul.f32 %v3960, %v2178
    %v4019 = vmul.f32 %v3963, %v2178
    %v4020 = vmul.f32 %v3966, %v2178
    %v4021 = vmul.f32 %v3969, %v2178
    %v4022 = vmul.f32 %v3972, %v2178
    %v4023 = vmul.f32 %v3975, %v2178
    %v4024 = vmul.f32 %v3978, %v2178
    %v4025 = vmul.f32 %v3981, %v2178
    %v4026 = vmul.f32 %v3984, %v2178
    %v4027 = vmul.f32 %v3987, %v2178
    %v4028 = vmul.f32 %v3990, %v2178
    %v4029 = vmul.f32 %v3993, %v2178
    %v4030 = vmul.f32 %v3996, %v2178
    %v4031 = vmul.f32 %v3999, %v2178
    %v4032 = vadd.f32 %v4000, 1e-05
    %v4033 = vadd.f32 %v4001, 1e-05
    %v4034 = vadd.f32 %v4002, 1e-05
    %v4035 = vadd.f32 %v4003, 1e-05
    %v4036 = vadd.f32 %v4004, 1e-05
    %v4037 = vadd.f32 %v4005, 1e-05
    %v4038 = vadd.f32 %v4006, 1e-05
    %v4039 = vadd.f32 %v4007, 1e-05
    %v4040 = vadd.f32 %v4008, 1e-05
    %v4041 = vadd.f32 %v4009, 1e-05
    %v4042 = vadd.f32 %v4010, 1e-05
    %v4043 = vadd.f32 %v4011, 1e-05
    %v4044 = vadd.f32 %v4012, 1e-05
    %v4045 = vadd.f32 %v4013, 1e-05
    %v4046 = vadd.f32 %v4014, 1e-05
    %v4047 = vadd.f32 %v4015, 1e-05
    %v4048 = vadd.f32 %v4016, 1e-05
    %v4049 = vadd.f32 %v4017, 1e-05
    %v4050 = vadd.f32 %v4018, 1e-05
    %v4051 = vadd.f32 %v4019, 1e-05
    %v4052 = vadd.f32 %v4020, 1e-05
    %v4053 = vadd.f32 %v4021, 1e-05
    %v4054 = vadd.f32 %v4022, 1e-05
    %v4055 = vadd.f32 %v4023, 1e-05
    %v4056 = vadd.f32 %v4024, 1e-05
    %v4057 = vadd.f32 %v4025, 1e-05
    %v4058 = vadd.f32 %v4026, 1e-05
    %v4059 = vadd.f32 %v4027, 1e-05
    %v4060 = vadd.f32 %v4028, 1e-05
    %v4061 = vadd.f32 %v4029, 1e-05
    %v4062 = vadd.f32 %v4030, 1e-05
    %v4063 = vadd.f32 %v4031, 1e-05
    %v4064 = vrsqrt.pop %v4032
    %v4065 = vrsqrt.pop %v4033
    %v4066 = vrsqrt.pop %v4034
    %v4067 = vrsqrt.pop %v4035
    %v4068 = vrsqrt.pop %v4036
    %v4069 = vrsqrt.pop %v4037
    %v4070 = vrsqrt.pop %v4038
    %v4071 = vrsqrt.pop %v4039
    %v4072 = vrsqrt.pop %v4040
    %v4073 = vrsqrt.pop %v4041
    %v4074 = vrsqrt.pop %v4042
    %v4075 = vrsqrt.pop %v4043
    %v4076 = vrsqrt.pop %v4044
    %v4077 = vrsqrt.pop %v4045
    %v4078 = vrsqrt.pop %v4046
    %v4079 = vrsqrt.pop %v4047
    %v4080 = vrsqrt.pop %v4048
    %v4081 = vrsqrt.pop %v4049
    %v4082 = vrsqrt.pop %v4050
    %v4083 = vrsqrt.pop %v4051
    %v4084 = vrsqrt.pop %v4052
    %v4085 = vrsqrt.pop %v4053
    %v4086 = vrsqrt.pop %v4054
    %v4087 = vrsqrt.pop %v4055
    %v4088 = vrsqrt.pop %v4056
    %v4089 = vrsqrt.pop %v4057
    %v4090 = vrsqrt.pop %v4058
    %v4091 = vrsqrt.pop %v4059
    %v4092 = vrsqrt.pop %v4060
    %v4093 = vrsqrt.pop %v4061
    %v4094 = vrsqrt.pop %v4062
    %v4095 = vrsqrt.pop %v4063
    %v4096 = vmul.f32 %v3840, %v4064
    %v4097 = vmul.f32 %v3841, %v4065
    %v4098 = vmul.f32 %v3842, %v4066
    %v4099 = vmul.f32 %v3843, %v4067
    %v4100 = vmul.f32 %v3844, %v4068
    %v4101 = vmul.f32 %v3845, %v4069
    %v4102 = vmul.f32 %v3846, %v4070
    %v4103 = vmul.f32 %v3847, %v4071
    %v4104 = vmul.f32 %v3848, %v4072
    %v4105 = vmul.f32 %v3849, %v4073
    %v4106 = vmul.f32 %v3850, %v4074
    %v4107 = vmul.f32 %v3851, %v4075
    %v4108 = vmul.f32 %v3852, %v4076
    %v4109 = vmul.f32 %v3853, %v4077
    %v4110 = vmul.f32 %v3854, %v4078
    %v4111 = vmul.f32 %v3855, %v4079
    %v4112 = vmul.f32 %v3856, %v4080
    %v4113 = vmul.f32 %v3857, %v4081
    %v4114 = vmul.f32 %v3858, %v4082
    %v4115 = vmul.f32 %v3859, %v4083
    %v4116 = vmul.f32 %v3860, %v4084
    %v4117 = vmul.f32 %v3861, %v4085
    %v4118 = vmul.f32 %v3862, %v4086
    %v4119 = vmul.f32 %v3863, %v4087
    %v4120 = vmul.f32 %v3864, %v4088
    %v4121 = vmul.f32 %v3865, %v4089
    %v4122 = vmul.f32 %v3866, %v4090
    %v4123 = vmul.f32 %v3867, %v4091
    %v4124 = vmul.f32 %v3868, %v4092
    %v4125 = vmul.f32 %v3869, %v4093
    %v4126 = vmul.f32 %v3870, %v4094
    %v4127 = vmul.f32 %v3871, %v4095
    %v4129 = vlaneseq
    %v4130 = vshrl.u32 %v4129, 7
    %v4131 = vsub.s32 0, %v4130
    %v4132 = vrot.slane %v3710, %v4131
    %v4134 = vmul.f32 %v4096, %v4132
    %v4135 = vmul.f32 %v4097, %v4132
    %v4136 = vmul.f32 %v4098, %v4132
    %v4137 = vmul.f32 %v4099, %v4132
    %v4138 = vmul.f32 %v4100, %v4132
    %v4139 = vmul.f32 %v4101, %v4132
    %v4140 = vmul.f32 %v4102, %v4132
    %v4141 = vmul.f32 %v4103, %v4132
    %v4142 = vmul.f32 %v4104, %v4132
    %v4143 = vmul.f32 %v4105, %v4132
    %v4144 = vmul.f32 %v4106, %v4132
    %v4145 = vmul.f32 %v4107, %v4132
    %v4146 = vmul.f32 %v4108, %v4132
    %v4147 = vmul.f32 %v4109, %v4132
    %v4148 = vmul.f32 %v4110, %v4132
    %v4149 = vmul.f32 %v4111, %v4132
    %v4150 = vmul.f32 %v4112, %v4132
    %v4151 = vmul.f32 %v4113, %v4132
    %v4152 = vmul.f32 %v4114, %v4132
    %v4153 = vmul.f32 %v4115, %v4132
    %v4154 = vmul.f32 %v4116, %v4132
    %v4155 = vmul.f32 %v4117, %v4132
    %v4156 = vmul.f32 %v4118, %v4132
    %v4157 = vmul.f32 %v4119, %v4132
    %v4158 = vmul.f32 %v4120, %v4132
    %v4159 = vmul.f32 %v4121, %v4132
    %v4160 = vmul.f32 %v4122, %v4132
    %v4161 = vmul.f32 %v4123, %v4132
    %v4162 = vmul.f32 %v4124, %v4132
    %v4163 = vmul.f32 %v4125, %v4132
    %v4164 = vmul.f32 %v4126, %v4132
    %v4165 = vmul.f32 %v4127, %v4132
    %v4167 = vlaneseq
    %v4168 = vshrl.u32 %v4167, 7
    %v4169 = vsub.s32 0, %v4168
    %v4170 = vrot.slane %v3711, %v4169
    %v4172 = vadd.f32 %v4134, %v4170
    %v4173 = vadd.f32 %v4135, %v4170
    %v4174 = vadd.f32 %v4136, %v4170
    %v4175 = vadd.f32 %v4137, %v4170
    %v4176 = vadd.f32 %v4138, %v4170
    %v4177 = vadd.f32 %v4139, %v4170
    %v4178 = vadd.f32 %v4140, %v4170
    %v4179 = vadd.f32 %v4141, %v4170
    %v4180 = vadd.f32 %v4142, %v4170
    %v4181 = vadd.f32 %v4143, %v4170
    %v4182 = vadd.f32 %v4144, %v4170
    %v4183 = vadd.f32 %v4145, %v4170
    %v4184 = vadd.f32 %v4146, %v4170
    %v4185 = vadd.f32 %v4147, %v4170
    %v4186 = vadd.f32 %v4148, %v4170
    %v4187 = vadd.f32 %v4149, %v4170
    %v4188 = vadd.f32 %v4150, %v4170
    %v4189 = vadd.f32 %v4151, %v4170
    %v4190 = vadd.f32 %v4152, %v4170
    %v4191 = vadd.f32 %v4153, %v4170
    %v4192 = vadd.f32 %v4154, %v4170
    %v4193 = vadd.f32 %v4155, %v4170
    %v4194 = vadd.f32 %v4156, %v4170
    %v4195 = vadd.f32 %v4157, %v4170
    %v4196 = vadd.f32 %v4158, %v4170
    %v4197 = vadd.f32 %v4159, %v4170
    %v4198 = vadd.f32 %v4160, %v4170
    %v4199 = vadd.f32 %v4161, %v4170
    %v4200 = vadd.f32 %v4162, %v4170
    %v4201 = vadd.f32 %v4163, %v4170
    %v4202 = vadd.f32 %v4164, %v4170
    %v4203 = vadd.f32 %v4165, %v4170
    %s4204 = scalar_lea.vmem %s17, 32
    %v4205 = vld [vmem:[%s4204] sm:$0xff]
    %v4206 = vld [vmem:[%s4204 + $0x8] sm:$0xff]
    %v4207 = vld [vmem:[%s4204 + $0x10] sm:$0xff]
    %v4208 = vld [vmem:[%s4204 + $0x18] sm:$0xff]
    %s4209 = scalar_lea.vmem %s19, 1
    %v4210 = vld [vmem:[%s4209] sm:$0x1]
    %v4212 = vlaneseq
    %v4213 = vshrl.u32 %v4212, 7
    %v4214 = vsub.s32 0, %v4213
    %v4215 = vrot.slane %v4210, %v4214
    %v4218 = vsel %vm343, %v3676, 0
    %v4221 = vsel %vm343, %v3677, 0
    %4223 = vmatprep.subr.mxu0 0.0
    %4224 = vmatpush1.msra.mxu0 %v4205
    %4225 = vmatprep.subr.mxu0 0.0
    %4226 = vmatpush1.msra.mxu0 %v4206
    %4227 = vmatprep.subr.mxu0 0.0
    %4228 = vmatpush1.msra.mxu0 %v4207
    %4229 = vmatprep.subr.mxu0 0.0
    %4230 = vmatpush1.msra.mxu0 %v4208
    %4231 = vmatprep.subr.mxu0 0.0
    %4232 = vmatpush1.msra.mxu0 0.0
    %4233 = vmatprep.subr.mxu0 0.0
    %4234 = vmatpush1.msra.mxu0 0.0
    %4235 = vmatprep.subr.mxu0 0.0
    %4236 = vmatpush1.msra.mxu0 0.0
    %4237 = vmatprep.subr.mxu0 0.0
    %4238 = vmatpush1.msra.mxu0 0.0
    %4239 = vmatprep.subr.mxu0 0.0
    %4240 = vmatpush1.msra.mxu0 0.0
    %4241 = vmatprep.subr.mxu0 0.0
    %4242 = vmatpush1.msra.mxu0 0.0
    %4243 = vmatprep.subr.mxu0 0.0
    %4244 = vmatpush1.msra.mxu0 0.0
    %4245 = vmatprep.subr.mxu0 0.0
    %4246 = vmatpush1.msra.mxu0 0.0
    %4247 = vmatprep.subr.mxu0 0.0
    %4248 = vmatpush1.msra.mxu0 0.0
    %4249 = vmatprep.subr.mxu0 0.0
    %4250 = vmatpush1.msra.mxu0 0.0
    %4251 = vmatprep.subr.mxu0 0.0
    %4252 = vmatpush1.msra.mxu0 0.0
    %4253 = vmatprep.subr.mxu0 0.0
    %4254 = vmatpush1.msra.mxu0 0.0
    %4255 = vmatprep.subr.mxu0 0.0
    %4256 = vmatpush1.msra.mxu0 0.0
    %4257 = vmatprep.subr.mxu0 0.0
    %4258 = vmatpush1.msra.mxu0 0.0
    %4259 = vmatprep.subr.mxu0 0.0
    %4260 = vmatpush1.msra.mxu0 0.0
    %4261 = vmatprep.subr.mxu0 0.0
    %4262 = vmatpush1.msra.mxu0 0.0
    %4263 = vmatprep.subr.mxu0 0.0
    %4264 = vmatpush1.msra.mxu0 0.0
    %4265 = vmatprep.subr.mxu0 0.0
    %4266 = vmatpush1.msra.mxu0 0.0
    %4267 = vmatprep.subr.mxu0 0.0
    %4268 = vmatpush1.msra.mxu0 0.0
    %4269 = vmatprep.subr.mxu0 0.0
    %4270 = vmatpush1.msra.mxu0 0.0
    %4271 = vmatprep.subr.mxu0 0.0
    %4272 = vmatpush1.msra.mxu0 0.0
    %4273 = vmatprep.subr.mxu0 0.0
    %4274 = vmatpush1.msra.mxu0 0.0
    %4275 = vmatprep.subr.mxu0 0.0
    %4276 = vmatpush1.msra.mxu0 0.0
    %4277 = vmatprep.subr.mxu0 0.0
    %4278 = vmatpush1.msra.mxu0 0.0
    %4279 = vmatprep.subr.mxu0 0.0
    %4280 = vmatpush1.msra.mxu0 0.0
    %4281 = vmatprep.subr.mxu0 0.0
    %4282 = vmatpush1.msra.mxu0 0.0
    %4283 = vmatprep.subr.mxu0 0.0
    %4284 = vmatpush1.msra.mxu0 0.0
    %4285 = vmatprep.subr.mxu0 0.0
    %4286 = vmatpush1.msra.mxu0 0.0
    %4287 = vmatprep.mubr.f32.mxu0 0.0
    %4288 = vmatmul.mubr.f32.gmra.mrb[0].mxu0 %v4218
    %v4289 = vpop.f32.mrb[0].mxu0
    %v4290 = vadd.f32 %v4215, %v4289
    %v4291 = vpop.f32.mrb[0].mxu0
    %4292 = vmatprep.mubr.f32.mxu0 0.0
    %4293 = vmatmul.mubr.f32.gmra.mrb[0].mxu0 %v4221
    %v4294 = vpop.f32.mrb[0].mxu0
    %v4295 = vadd.f32 %v4215, %v4294
    %v4296 = vpop.f32.mrb[0].mxu0
    %4297 = vdwg.mxu0
    %s4298 = scalar_lea.vmem %s21, 32
    %v4299 = vld [vmem:[%s4298] sm:$0xff]
    %v4300 = vld [vmem:[%s4298 + $0x8] sm:$0xff]
    %v4301 = vld [vmem:[%s4298 + $0x10] sm:$0xff]
    %v4302 = vld [vmem:[%s4298 + $0x18] sm:$0xff]
    %s4303 = scalar_lea.vmem %s23, 1
    %v4304 = vld [vmem:[%s4303] sm:$0x1]
    %v4306 = vlaneseq
    %v4307 = vshrl.u32 %v4306, 7
    %v4308 = vsub.s32 0, %v4307
    %v4309 = vrot.slane %v4304, %v4308
    %v4312 = vsel %vm343, %v4172, 0
    %v4315 = vsel %vm343, %v4173, 0
    %v4318 = vsel %vm343, %v4174, 0
    %v4321 = vsel %vm343, %v4175, 0
    %v4324 = vsel %vm343, %v4176, 0
    %v4327 = vsel %vm343, %v4177, 0
    %v4330 = vsel %vm343, %v4178, 0
    %v4333 = vsel %vm343, %v4179, 0
    %v4336 = vsel %vm343, %v4180, 0
    %v4339 = vsel %vm343, %v4181, 0
    %v4342 = vsel %vm343, %v4182, 0
    %v4345 = vsel %vm343, %v4183, 0
    %v4348 = vsel %vm343, %v4184, 0
    %v4351 = vsel %vm343, %v4185, 0
    %v4354 = vsel %vm343, %v4186, 0
    %v4357 = vsel %vm343, %v4187, 0
    %v4360 = vsel %vm343, %v4188, 0
    %v4363 = vsel %vm343, %v4189, 0
    %v4366 = vsel %vm343, %v4190, 0
    %v4369 = vsel %vm343, %v4191, 0
    %v4372 = vsel %vm343, %v4192, 0
    %v4375 = vsel %vm343, %v4193, 0
    %v4378 = vsel %vm343, %v4194, 0
    %v4381 = vsel %vm343, %v4195, 0
    %v4384 = vsel %vm343, %v4196, 0
    %v4387 = vsel %vm343, %v4197, 0
    %v4390 = vsel %vm343, %v4198, 0
    %v4393 = vsel %vm343, %v4199, 0
    %v4396 = vsel %vm343, %v4200, 0
    %v4399 = vsel %vm343, %v4201, 0
    %v4402 = vsel %vm343, %v4202, 0
    %v4405 = vsel %vm343, %v4203, 0
    %4407 = vmatprep.subr.mxu0 0.0
    %4408 = vmatpush1.msra.mxu0 %v4299
    %4409 = vmatprep.subr.mxu0 0.0
    %4410 = vmatpush1.msra.mxu0 %v4300
    %4411 = vmatprep.subr.mxu0 0.0
    %4412 = vmatpush1.msra.mxu0 %v4301
    %4413 = vmatprep.subr.mxu0 0.0
    %4414 = vmatpush1.msra.mxu0 %v4302
    %4415 = vmatprep.subr.mxu0 0.0
    %4416 = vmatpush1.msra.mxu0 0.0
    %4417 = vmatprep.subr.mxu0 0.0
    %4418 = vmatpush1.msra.mxu0 0.0
    %4419 = vmatprep.subr.mxu0 0.0
    %4420 = vmatpush1.msra.mxu0 0.0
    %4421 = vmatprep.subr.mxu0 0.0
    %4422 = vmatpush1.msra.mxu0 0.0
    %4423 = vmatprep.subr.mxu0 0.0
    %4424 = vmatpush1.msra.mxu0 0.0
    %4425 = vmatprep.subr.mxu0 0.0
    %4426 = vmatpush1.msra.mxu0 0.0
    %4427 = vmatprep.subr.mxu0 0.0
    %4428 = vmatpush1.msra.mxu0 0.0
    %4429 = vmatprep.subr.mxu0 0.0
    %4430 = vmatpush1.msra.mxu0 0.0
    %4431 = vmatprep.subr.mxu0 0.0
    %4432 = vmatpush1.msra.mxu0 0.0
    %4433 = vmatprep.subr.mxu0 0.0
    %4434 = vmatpush1.msra.mxu0 0.0
    %4435 = vmatprep.subr.mxu0 0.0
    %4436 = vmatpush1.msra.mxu0 0.0
    %4437 = vmatprep.subr.mxu0 0.0
    %4438 = vmatpush1.msra.mxu0 0.0
    %4439 = vmatprep.subr.mxu0 0.0
    %4440 = vmatpush1.msra.mxu0 0.0
    %4441 = vmatprep.subr.mxu0 0.0
    %4442 = vmatpush1.msra.mxu0 0.0
    %4443 = vmatprep.subr.mxu0 0.0
    %4444 = vmatpush1.msra.mxu0 0.0
    %4445 = vmatprep.subr.mxu0 0.0
    %4446 = vmatpush1.msra.mxu0 0.0
    %4447 = vmatprep.subr.mxu0 0.0
    %4448 = vmatpush1.msra.mxu0 0.0
    %4449 = vmatprep.subr.mxu0 0.0
    %4450 = vmatpush1.msra.mxu0 0.0
    %4451 = vmatprep.subr.mxu0 0.0
    %4452 = vmatpush1.msra.mxu0 0.0
    %4453 = vmatprep.subr.mxu0 0.0
    %4454 = vmatpush1.msra.mxu0 0.0
    %4455 = vmatprep.subr.mxu0 0.0
    %4456 = vmatpush1.msra.mxu0 0.0
    %4457 = vmatprep.subr.mxu0 0.0
    %4458 = vmatpush1.msra.mxu0 0.0
    %4459 = vmatprep.subr.mxu0 0.0
    %4460 = vmatpush1.msra.mxu0 0.0
    %4461 = vmatprep.subr.mxu0 0.0
    %4462 = vmatpush1.msra.mxu0 0.0
    %4463 = vmatprep.subr.mxu0 0.0
    %4464 = vmatpush1.msra.mxu0 0.0
    %4465 = vmatprep.subr.mxu0 0.0
    %4466 = vmatpush1.msra.mxu0 0.0
    %4467 = vmatprep.subr.mxu0 0.0
    %4468 = vmatpush1.msra.mxu0 0.0
    %4469 = vmatprep.subr.mxu0 0.0
    %4470 = vmatpush1.msra.mxu0 0.0
    %4471 = vmatprep.mubr.f32.mxu0 0.0
    %4472 = vmatmul.mubr.f32.gmra.mrb[0].mxu0 %v4312
    %v4473 = vpop.f32.mrb[0].mxu0
    %v4474 = vadd.f32 %v4309, %v4473
    %v4475 = vpop.f32.mrb[0].mxu0
    %4476 = vmatprep.mubr.f32.mxu0 0.0
    %4477 = vmatmul.mubr.f32.gmra.mrb[0].mxu0 %v4315
    %v4478 = vpop.f32.mrb[0].mxu0
    %v4479 = vadd.f32 %v4309, %v4478
    %v4480 = vpop.f32.mrb[0].mxu0
    %4481 = vmatprep.mubr.f32.mxu0 0.0
    %4482 = vmatmul.mubr.f32.gmra.mrb[0].mxu0 %v4318
    %v4483 = vpop.f32.mrb[0].mxu0
    %v4484 = vadd.f32 %v4309, %v4483
    %v4485 = vpop.f32.mrb[0].mxu0
    %4486 = vmatprep.mubr.f32.mxu0 0.0
    %4487 = vmatmul.mubr.f32.gmra.mrb[0].mxu0 %v4321
    %v4488 = vpop.f32.mrb[0].mxu0
    %v4489 = vadd.f32 %v4309, %v4488
    %v4490 = vpop.f32.mrb[0].mxu0
    %4491 = vmatprep.mubr.f32.mxu0 0.0
    %4492 = vmatmul.mubr.f32.gmra.mrb[0].mxu0 %v4324
    %v4493 = vpop.f32.mrb[0].mxu0
    %v4494 = vadd.f32 %v4309, %v4493
    %v4495 = vpop.f32.mrb[0].mxu0
    %4496 = vmatprep.mubr.f32.mxu0 0.0
    %4497 = vmatmul.mubr.f32.gmra.mrb[0].mxu0 %v4327
    %v4498 = vpop.f32.mrb[0].mxu0
    %v4499 = vadd.f32 %v4309, %v4498
    %v4500 = vpop.f32.mrb[0].mxu0
    %4501 = vmatprep.mubr.f32.mxu0 0.0
    %4502 = vmatmul.mubr.f32.gmra.mrb[0].mxu0 %v4330
    %v4503 = vpop.f32.mrb[0].mxu0
    %v4504 = vadd.f32 %v4309, %v4503
    %v4505 = vpop.f32.mrb[0].mxu0
    %4506 = vmatprep.mubr.f32.mxu0 0.0
    %4507 = vmatmul.mubr.f32.gmra.mrb[0].mxu0 %v4333
    %v4508 = vpop.f32.mrb[0].mxu0
    %v4509 = vadd.f32 %v4309, %v4508
    %v4510 = vpop.f32.mrb[0].mxu0
    %4511 = vmatprep.mubr.f32.mxu0 0.0
    %4512 = vmatmul.mubr.f32.gmra.mrb[0].mxu0 %v4336
    %v4513 = vpop.f32.mrb[0].mxu0
    %v4514 = vadd.f32 %v4309, %v4513
    %v4515 = vpop.f32.mrb[0].mxu0
    %4516 = vmatprep.mubr.f32.mxu0 0.0
    %4517 = vmatmul.mubr.f32.gmra.mrb[0].mxu0 %v4339
    %v4518 = vpop.f32.mrb[0].mxu0
    %v4519 = vadd.f32 %v4309, %v4518
    %v4520 = vpop.f32.mrb[0].mxu0
    %4521 = vmatprep.mubr.f32.mxu0 0.0
    %4522 = vmatmul.mubr.f32.gmra.mrb[0].mxu0 %v4342
    %v4523 = vpop.f32.mrb[0].mxu0
    %v4524 = vadd.f32 %v4309, %v4523
    %v4525 = vpop.f32.mrb[0].mxu0
    %4526 = vmatprep.mubr.f32.mxu0 0.0
    %4527 = vmatmul.mubr.f32.gmra.mrb[0].mxu0 %v4345
    %v4528 = vpop.f32.mrb[0].mxu0
    %v4529 = vadd.f32 %v4309, %v4528
    %v4530 = vpop.f32.mrb[0].mxu0
    %4531 = vmatprep.mubr.f32.mxu0 0.0
    %4532 = vmatmul.mubr.f32.gmra.mrb[0].mxu0 %v4348
    %v4533 = vpop.f32.mrb[0].mxu0
    %v4534 = vadd.f32 %v4309, %v4533
    %v4535 = vpop.f32.mrb[0].mxu0
    %4536 = vmatprep.mubr.f32.mxu0 0.0
    %4537 = vmatmul.mubr.f32.gmra.mrb[0].mxu0 %v4351
    %v4538 = vpop.f32.mrb[0].mxu0
    %v4539 = vadd.f32 %v4309, %v4538
    %v4540 = vpop.f32.mrb[0].mxu0
    %4541 = vmatprep.mubr.f32.mxu0 0.0
    %4542 = vmatmul.mubr.f32.gmra.mrb[0].mxu0 %v4354
    %v4543 = vpop.f32.mrb[0].mxu0
    %v4544 = vadd.f32 %v4309, %v4543
    %v4545 = vpop.f32.mrb[0].mxu0
    %4546 = vmatprep.mubr.f32.mxu0 0.0
    %4547 = vmatmul.mubr.f32.gmra.mrb[0].mxu0 %v4357
    %v4548 = vpop.f32.mrb[0].mxu0
    %v4549 = vadd.f32 %v4309, %v4548
    %v4550 = vpop.f32.mrb[0].mxu0
    %4551 = vmatprep.mubr.f32.mxu0 0.0
    %4552 = vmatmul.mubr.f32.gmra.mrb[0].mxu0 %v4360
    %v4553 = vpop.f32.mrb[0].mxu0
    %v4554 = vadd.f32 %v4309, %v4553
    %v4555 = vpop.f32.mrb[0].mxu0
    %4556 = vmatprep.mubr.f32.mxu0 0.0
    %4557 = vmatmul.mubr.f32.gmra.mrb[0].mxu0 %v4363
    %v4558 = vpop.f32.mrb[0].mxu0
    %v4559 = vadd.f32 %v4309, %v4558
    %v4560 = vpop.f32.mrb[0].mxu0
    %4561 = vmatprep.mubr.f32.mxu0 0.0
    %4562 = vmatmul.mubr.f32.gmra.mrb[0].mxu0 %v4366
    %v4563 = vpop.f32.mrb[0].mxu0
    %v4564 = vadd.f32 %v4309, %v4563
    %v4565 = vpop.f32.mrb[0].mxu0
    %4566 = vmatprep.mubr.f32.mxu0 0.0
    %4567 = vmatmul.mubr.f32.gmra.mrb[0].mxu0 %v4369
    %v4568 = vpop.f32.mrb[0].mxu0
    %v4569 = vadd.f32 %v4309, %v4568
    %v4570 = vpop.f32.mrb[0].mxu0
    %4571 = vmatprep.mubr.f32.mxu0 0.0
    %4572 = vmatmul.mubr.f32.gmra.mrb[0].mxu0 %v4372
    %v4573 = vpop.f32.mrb[0].mxu0
    %v4574 = vadd.f32 %v4309, %v4573
    %v4575 = vpop.f32.mrb[0].mxu0
    %4576 = vmatprep.mubr.f32.mxu0 0.0
    %4577 = vmatmul.mubr.f32.gmra.mrb[0].mxu0 %v4375
    %v4578 = vpop.f32.mrb[0].mxu0
    %v4579 = vadd.f32 %v4309, %v4578
    %v4580 = vpop.f32.mrb[0].mxu0
    %4581 = vmatprep.mubr.f32.mxu0 0.0
    %4582 = vmatmul.mubr.f32.gmra.mrb[0].mxu0 %v4378
    %v4583 = vpop.f32.mrb[0].mxu0
    %v4584 = vadd.f32 %v4309, %v4583
    %v4585 = vpop.f32.mrb[0].mxu0
    %4586 = vmatprep.mubr.f32.mxu0 0.0
    %4587 = vmatmul.mubr.f32.gmra.mrb[0].mxu0 %v4381
    %v4588 = vpop.f32.mrb[0].mxu0
    %v4589 = vadd.f32 %v4309, %v4588
    %v4590 = vpop.f32.mrb[0].mxu0
    %4591 = vmatprep.mubr.f32.mxu0 0.0
    %4592 = vmatmul.mubr.f32.gmra.mrb[0].mxu0 %v4384
    %v4593 = vpop.f32.mrb[0].mxu0
    %v4594 = vadd.f32 %v4309, %v4593
    %v4595 = vpop.f32.mrb[0].mxu0
    %4596 = vmatprep.mubr.f32.mxu0 0.0
    %4597 = vmatmul.mubr.f32.gmra.mrb[0].mxu0 %v4387
    %v4598 = vpop.f32.mrb[0].mxu0
    %v4599 = vadd.f32 %v4309, %v4598
    %v4600 = vpop.f32.mrb[0].mxu0
    %4601 = vmatprep.mubr.f32.mxu0 0.0
    %4602 = vmatmul.mubr.f32.gmra.mrb[0].mxu0 %v4390
    %v4603 = vpop.f32.mrb[0].mxu0
    %v4604 = vadd.f32 %v4309, %v4603
    %v4605 = vpop.f32.mrb[0].mxu0
    %4606 = vmatprep.mubr.f32.mxu0 0.0
    %4607 = vmatmul.mubr.f32.gmra.mrb[0].mxu0 %v4393
    %v4608 = vpop.f32.mrb[0].mxu0
    %v4609 = vadd.f32 %v4309, %v4608
    %v4610 = vpop.f32.mrb[0].mxu0
    %4611 = vmatprep.mubr.f32.mxu0 0.0
    %4612 = vmatmul.mubr.f32.gmra.mrb[0].mxu0 %v4396
    %v4613 = vpop.f32.mrb[0].mxu0
    %v4614 = vadd.f32 %v4309, %v4613
    %v4615 = vpop.f32.mrb[0].mxu0
    %4616 = vmatprep.mubr.f32.mxu0 0.0
    %4617 = vmatmul.mubr.f32.gmra.mrb[0].mxu0 %v4399
    %v4618 = vpop.f32.mrb[0].mxu0
    %v4619 = vadd.f32 %v4309, %v4618
    %v4620 = vpop.f32.mrb[0].mxu0
    %4621 = vmatprep.mubr.f32.mxu0 0.0
    %4622 = vmatmul.mubr.f32.gmra.mrb[0].mxu0 %v4402
    %v4623 = vpop.f32.mrb[0].mxu0
    %v4624 = vadd.f32 %v4309, %v4623
    %v4625 = vpop.f32.mrb[0].mxu0
    %4626 = vmatprep.mubr.f32.mxu0 0.0
    %4627 = vmatmul.mubr.f32.gmra.mrb[0].mxu0 %v4405
    %v4628 = vpop.f32.mrb[0].mxu0
    %v4629 = vadd.f32 %v4309, %v4628
    %v4630 = vpop.f32.mrb[0].mxu0
    %4631 = vdwg.mxu0
    %v4634 = vcombine.high %v4290, %v4290
    %v4636 = vunpack.c.l.s4 1966171168
    %v4637 = vunpack.c.0.s8 %v4636
    %v4638 = vlaneseq
    %v4639 = vshrl.u32 %v4638, 7
    %v4640 = vsub.s32 %v4637, %v4639
    %v4641 = vrot.slane %v4290, %v4640
    %v4643 = vunpack.c.l.s4 1966171168
    %v4644 = vunpack.c.0.s8 %v4643
    %v4645 = vlaneseq
    %v4646 = vshrl.u32 %v4645, 7
    %v4647 = vsub.s32 %v4644, %v4646
    %v4648 = vrot.slane %v4634, %v4647
    %v4649 = vcombine.high %v4641, %v4641
    %v4650 = vcombine.high %v4648, %v4648
    %v4652 = vunpack.c.l.s4 1966171168
    %v4653 = vunpack.c.0.s8 %v4652
    %v4654 = vlaneseq
    %v4655 = vshrl.u32 %v4654, 7
    %v4656 = vsub.s32 %v4653, %v4655
    %v4657 = vrot.slane %v4641, %v4656
    %v4659 = vunpack.c.l.s4 1966171168
    %v4660 = vunpack.c.0.s8 %v4659
    %v4661 = vlaneseq
    %v4662 = vshrl.u32 %v4661, 7
    %v4663 = vsub.s32 %v4660, %v4662
    %v4664 = vrot.slane %v4648, %v4663
    %v4666 = vunpack.c.l.s4 1966171168
    %v4667 = vunpack.c.0.s8 %v4666
    %v4668 = vlaneseq
    %v4669 = vshrl.u32 %v4668, 7
    %v4670 = vsub.s32 %v4667, %v4669
    %v4671 = vrot.slane %v4649, %v4670
    %v4673 = vunpack.c.l.s4 1966171168
    %v4674 = vunpack.c.0.s8 %v4673
    %v4675 = vlaneseq
    %v4676 = vshrl.u32 %v4675, 7
    %v4677 = vsub.s32 %v4674, %v4676
    %v4678 = vrot.slane %v4650, %v4677
    %v4679 = vcombine.high %v4657, %v4657
    %v4680 = vcombine.high %v4664, %v4664
    %v4681 = vcombine.high %v4671, %v4671
    %v4682 = vcombine.high %v4678, %v4678
    %v4683 = vcombine.high %v4295, %v4295
    %v4685 = vunpack.c.l.s4 1966171168
    %v4686 = vunpack.c.0.s8 %v4685
    %v4687 = vlaneseq
    %v4688 = vshrl.u32 %v4687, 7
    %v4689 = vsub.s32 %v4686, %v4688
    %v4690 = vrot.slane %v4295, %v4689
    %v4692 = vunpack.c.l.s4 1966171168
    %v4693 = vunpack.c.0.s8 %v4692
    %v4694 = vlaneseq
    %v4695 = vshrl.u32 %v4694, 7
    %v4696 = vsub.s32 %v4693, %v4695
    %v4697 = vrot.slane %v4683, %v4696
    %v4698 = vcombine.high %v4690, %v4690
    %v4699 = vcombine.high %v4697, %v4697
    %v4701 = vunpack.c.l.s4 1966171168
    %v4702 = vunpack.c.0.s8 %v4701
    %v4703 = vlaneseq
    %v4704 = vshrl.u32 %v4703, 7
    %v4705 = vsub.s32 %v4702, %v4704
    %v4706 = vrot.slane %v4690, %v4705
    %v4708 = vunpack.c.l.s4 1966171168
    %v4709 = vunpack.c.0.s8 %v4708
    %v4710 = vlaneseq
    %v4711 = vshrl.u32 %v4710, 7
    %v4712 = vsub.s32 %v4709, %v4711
    %v4713 = vrot.slane %v4697, %v4712
    %v4715 = vunpack.c.l.s4 1966171168
    %v4716 = vunpack.c.0.s8 %v4715
    %v4717 = vlaneseq
    %v4718 = vshrl.u32 %v4717, 7
    %v4719 = vsub.s32 %v4716, %v4718
    %v4720 = vrot.slane %v4698, %v4719
    %v4722 = vunpack.c.l.s4 1966171168
    %v4723 = vunpack.c.0.s8 %v4722
    %v4724 = vlaneseq
    %v4725 = vshrl.u32 %v4724, 7
    %v4726 = vsub.s32 %v4723, %v4725
    %v4727 = vrot.slane %v4699, %v4726
    %v4728 = vcombine.high %v4706, %v4706
    %v4729 = vcombine.high %v4713, %v4713
    %v4730 = vcombine.high %v4720, %v4720
    %v4731 = vcombine.high %v4727, %v4727
    %v4732 = vlaneseq
    %v4733 = vshrl.u32 %v4732, 7
    %v4734 = vsub.s32 0, %v4733
    %v4735 = vrot.slane %v4657, %v4734
    %v4736 = vlaneseq
    %v4737 = vshrl.u32 %v4736, 7
    %v4738 = vsub.s32 0, %v4737
    %v4739 = vrot.slane %v4671, %v4738
    %v4740 = vlaneseq
    %v4741 = vshrl.u32 %v4740, 7
    %v4742 = vsub.s32 0, %v4741
    %v4743 = vrot.slane %v4679, %v4742
    %v4744 = vlaneseq
    %v4745 = vshrl.u32 %v4744, 7
    %v4746 = vsub.s32 0, %v4745
    %v4747 = vrot.slane %v4681, %v4746
    %v4748 = vlaneseq
    %v4749 = vshrl.u32 %v4748, 7
    %v4750 = vsub.s32 0, %v4749
    %v4751 = vrot.slane %v4664, %v4750
    %v4752 = vlaneseq
    %v4753 = vshrl.u32 %v4752, 7
    %v4754 = vsub.s32 0, %v4753
    %v4755 = vrot.slane %v4678, %v4754
    %v4756 = vlaneseq
    %v4757 = vshrl.u32 %v4756, 7
    %v4758 = vsub.s32 0, %v4757
    %v4759 = vrot.slane %v4680, %v4758
    %v4760 = vlaneseq
    %v4761 = vshrl.u32 %v4760, 7
    %v4762 = vsub.s32 0, %v4761
    %v4763 = vrot.slane %v4682, %v4762
    %v4764 = vlaneseq
    %v4765 = vshrl.u32 %v4764, 7
    %v4766 = vsub.s32 0, %v4765
    %v4767 = vrot.slane %v4706, %v4766
    %v4768 = vlaneseq
    %v4769 = vshrl.u32 %v4768, 7
    %v4770 = vsub.s32 0, %v4769
    %v4771 = vrot.slane %v4720, %v4770
    %v4772 = vlaneseq
    %v4773 = vshrl.u32 %v4772, 7
    %v4774 = vsub.s32 0, %v4773
    %v4775 = vrot.slane %v4728, %v4774
    %v4776 = vlaneseq
    %v4777 = vshrl.u32 %v4776, 7
    %v4778 = vsub.s32 0, %v4777
    %v4779 = vrot.slane %v4730, %v4778
    %v4780 = vlaneseq
    %v4781 = vshrl.u32 %v4780, 7
    %v4782 = vsub.s32 0, %v4781
    %v4783 = vrot.slane %v4713, %v4782
    %v4784 = vlaneseq
    %v4785 = vshrl.u32 %v4784, 7
    %v4786 = vsub.s32 0, %v4785
    %v4787 = vrot.slane %v4727, %v4786
    %v4788 = vlaneseq
    %v4789 = vshrl.u32 %v4788, 7
    %v4790 = vsub.s32 0, %v4789
    %v4791 = vrot.slane %v4729, %v4790
    %v4792 = vlaneseq
    %v4793 = vshrl.u32 %v4792, 7
    %v4794 = vsub.s32 0, %v4793
    %v4795 = vrot.slane %v4731, %v4794
    %4812 = vrot.lane.b32.xlu0 %v4290, 96
    %v4813 = vpop.permute.xlu0 %4812
    %4814 = vrot.lane.b32.xlu0 %v4295, 96
    %v4815 = vpop.permute.xlu0 %4814
    %v4818 = vmul.f32 %v4735, %v4813
    %v4819 = vmul.f32 %v4735, %v4815
    %v4820 = vmul.f32 %v4739, %v4813
    %v4821 = vmul.f32 %v4739, %v4815
    %v4822 = vmul.f32 %v4743, %v4813
    %v4823 = vmul.f32 %v4743, %v4815
    %v4824 = vmul.f32 %v4747, %v4813
    %v4825 = vmul.f32 %v4747, %v4815
    %v4826 = vmul.f32 %v4751, %v4813
    %v4827 = vmul.f32 %v4751, %v4815
    %v4828 = vmul.f32 %v4755, %v4813
    %v4829 = vmul.f32 %v4755, %v4815
    %v4830 = vmul.f32 %v4759, %v4813
    %v4831 = vmul.f32 %v4759, %v4815
    %v4832 = vmul.f32 %v4763, %v4813
    %v4833 = vmul.f32 %v4763, %v4815
    %v4834 = vmul.f32 %v4767, %v4813
    %v4835 = vmul.f32 %v4767, %v4815
    %v4836 = vmul.f32 %v4771, %v4813
    %v4837 = vmul.f32 %v4771, %v4815
    %v4838 = vmul.f32 %v4775, %v4813
    %v4839 = vmul.f32 %v4775, %v4815
    %v4840 = vmul.f32 %v4779, %v4813
    %v4841 = vmul.f32 %v4779, %v4815
    %v4842 = vmul.f32 %v4783, %v4813
    %v4843 = vmul.f32 %v4783, %v4815
    %v4844 = vmul.f32 %v4787, %v4813
    %v4845 = vmul.f32 %v4787, %v4815
    %v4846 = vmul.f32 %v4791, %v4813
    %v4847 = vmul.f32 %v4791, %v4815
    %v4848 = vmul.f32 %v4795, %v4813
    %v4849 = vmul.f32 %v4795, %v4815
    %v4850 = vmul.f32 %v4818, %v4474
    %v4851 = vmul.f32 %v4819, %v4479
    %v4852 = vmul.f32 %v4820, %v4484
    %v4853 = vmul.f32 %v4821, %v4489
    %v4854 = vmul.f32 %v4822, %v4494
    %v4855 = vmul.f32 %v4823, %v4499
    %v4856 = vmul.f32 %v4824, %v4504
    %v4857 = vmul.f32 %v4825, %v4509
    %v4858 = vmul.f32 %v4826, %v4514
    %v4859 = vmul.f32 %v4827, %v4519
    %v4860 = vmul.f32 %v4828, %v4524
    %v4861 = vmul.f32 %v4829, %v4529
    %v4862 = vmul.f32 %v4830, %v4534
    %v4863 = vmul.f32 %v4831, %v4539
    %v4864 = vmul.f32 %v4832, %v4544
    %v4865 = vmul.f32 %v4833, %v4549
    %v4866 = vmul.f32 %v4834, %v4554
    %v4867 = vmul.f32 %v4835, %v4559
    %v4868 = vmul.f32 %v4836, %v4564
    %v4869 = vmul.f32 %v4837, %v4569
    %v4870 = vmul.f32 %v4838, %v4574
    %v4871 = vmul.f32 %v4839, %v4579
    %v4872 = vmul.f32 %v4840, %v4584
    %v4873 = vmul.f32 %v4841, %v4589
    %v4874 = vmul.f32 %v4842, %v4594
    %v4875 = vmul.f32 %v4843, %v4599
    %v4876 = vmul.f32 %v4844, %v4604
    %v4877 = vmul.f32 %v4845, %v4609
    %v4878 = vmul.f32 %v4846, %v4614
    %v4879 = vmul.f32 %v4847, %v4619
    %v4880 = vmul.f32 %v4848, %v4624
    %v4881 = vmul.f32 %v4849, %v4629
    %v4883 = vsel %vm343, %v4850, 0
    %v4886 = vsel %vm343, %v4851, 0
    %v4889 = vsel %vm343, %v4852, 0
    %v4892 = vsel %vm343, %v4853, 0
    %v4895 = vsel %vm343, %v4854, 0
    %v4898 = vsel %vm343, %v4855, 0
    %v4901 = vsel %vm343, %v4856, 0
    %v4904 = vsel %vm343, %v4857, 0
    %v4907 = vsel %vm343, %v4858, 0
    %v4910 = vsel %vm343, %v4859, 0
    %v4913 = vsel %vm343, %v4860, 0
    %v4916 = vsel %vm343, %v4861, 0
    %v4919 = vsel %vm343, %v4862, 0
    %v4922 = vsel %vm343, %v4863, 0
    %v4925 = vsel %vm343, %v4864, 0
    %v4928 = vsel %vm343, %v4865, 0
    %v4931 = vsel %vm343, %v4866, 0
    %v4934 = vsel %vm343, %v4867, 0
    %v4937 = vsel %vm343, %v4868, 0
    %v4940 = vsel %vm343, %v4869, 0
    %v4943 = vsel %vm343, %v4870, 0
    %v4946 = vsel %vm343, %v4871, 0
    %v4949 = vsel %vm343, %v4872, 0
    %v4952 = vsel %vm343, %v4873, 0
    %v4955 = vsel %vm343, %v4874, 0
    %v4958 = vsel %vm343, %v4875, 0
    %v4961 = vsel %vm343, %v4876, 0
    %v4964 = vsel %vm343, %v4877, 0
    %v4967 = vsel %vm343, %v4878, 0
    %v4970 = vsel %vm343, %v4879, 0
    %v4973 = vsel %vm343, %v4880, 0
    %v4976 = vsel %vm343, %v4881, 0
    %4978 = vmatprep.subr.mxu0 0.0
    %4979 = vmatpush1.msra.mxu0 %v328
    %4980 = vmatprep.subr.mxu0 0.0
    %4981 = vmatpush1.msra.mxu0 %v329
    %4982 = vmatprep.subr.mxu0 0.0
    %4983 = vmatpush1.msra.mxu0 %v330
    %4984 = vmatprep.subr.mxu0 0.0
    %4985 = vmatpush1.msra.mxu0 %v331
    %4986 = vmatprep.subr.mxu0 0.0
    %4987 = vmatpush1.msra.mxu0 0.0
    %4988 = vmatprep.subr.mxu0 0.0
    %4989 = vmatpush1.msra.mxu0 0.0
    %4990 = vmatprep.subr.mxu0 0.0
    %4991 = vmatpush1.msra.mxu0 0.0
    %4992 = vmatprep.subr.mxu0 0.0
    %4993 = vmatpush1.msra.mxu0 0.0
    %4994 = vmatprep.subr.mxu0 0.0
    %4995 = vmatpush1.msra.mxu0 0.0
    %4996 = vmatprep.subr.mxu0 0.0
    %4997 = vmatpush1.msra.mxu0 0.0
    %4998 = vmatprep.subr.mxu0 0.0
    %4999 = vmatpush1.msra.mxu0 0.0
    %5000 = vmatprep.subr.mxu0 0.0
    %5001 = vmatpush1.msra.mxu0 0.0
    %5002 = vmatprep.subr.mxu0 0.0
    %5003 = vmatpush1.msra.mxu0 0.0
    %5004 = vmatprep.subr.mxu0 0.0
    %5005 = vmatpush1.msra.mxu0 0.0
    %5006 = vmatprep.subr.mxu0 0.0
    %5007 = vmatpush1.msra.mxu0 0.0
    %5008 = vmatprep.subr.mxu0 0.0
    %5009 = vmatpush1.msra.mxu0 0.0
    %5010 = vmatprep.subr.mxu0 0.0
    %5011 = vmatpush1.msra.mxu0 0.0
    %5012 = vmatprep.subr.mxu0 0.0
    %5013 = vmatpush1.msra.mxu0 0.0
    %5014 = vmatprep.subr.mxu0 0.0
    %5015 = vmatpush1.msra.mxu0 0.0
    %5016 = vmatprep.subr.mxu0 0.0
    %5017 = vmatpush1.msra.mxu0 0.0
    %5018 = vmatprep.subr.mxu0 0.0
    %5019 = vmatpush1.msra.mxu0 0.0
    %5020 = vmatprep.subr.mxu0 0.0
    %5021 = vmatpush1.msra.mxu0 0.0
    %5022 = vmatprep.subr.mxu0 0.0
    %5023 = vmatpush1.msra.mxu0 0.0
    %5024 = vmatprep.subr.mxu0 0.0
    %5025 = vmatpush1.msra.mxu0 0.0
    %5026 = vmatprep.subr.mxu0 0.0
    %5027 = vmatpush1.msra.mxu0 0.0
    %5028 = vmatprep.subr.mxu0 0.0
    %5029 = vmatpush1.msra.mxu0 0.0
    %5030 = vmatprep.subr.mxu0 0.0
    %5031 = vmatpush1.msra.mxu0 0.0
    %5032 = vmatprep.subr.mxu0 0.0
    %5033 = vmatpush1.msra.mxu0 0.0
    %5034 = vmatprep.subr.mxu0 0.0
    %5035 = vmatpush1.msra.mxu0 0.0
    %5036 = vmatprep.subr.mxu0 0.0
    %5037 = vmatpush1.msra.mxu0 0.0
    %5038 = vmatprep.subr.mxu0 0.0
    %5039 = vmatpush1.msra.mxu0 0.0
    %5040 = vmatprep.subr.mxu0 0.0
    %5041 = vmatpush1.msra.mxu0 0.0
    %5042 = vmatprep.mubr.f32.mxu0 0.0
    %5043 = vmatmul.mubr.f32.gmra.mrb[0].mxu0 %v4883
    %v5044 = vpop.f32.mrb[0].mxu0
    %v5045 = vadd.f32 0.0, %v5044
    %v5046 = vpop.f32.mrb[0].mxu0
    %5047 = vmatprep.mubr.f32.mxu0 0.0
    %5048 = vmatmul.mubr.f32.gmra.mrb[0].mxu0 %v4886
    %v5049 = vpop.f32.mrb[0].mxu0
    %v5050 = vadd.f32 0.0, %v5049
    %v5051 = vpop.f32.mrb[0].mxu0
    %5052 = vmatprep.mubr.f32.mxu0 0.0
    %5053 = vmatmul.mubr.f32.gmra.mrb[0].mxu0 %v4889
    %v5054 = vpop.f32.mrb[0].mxu0
    %v5055 = vadd.f32 0.0, %v5054
    %v5056 = vpop.f32.mrb[0].mxu0
    %5057 = vmatprep.mubr.f32.mxu0 0.0
    %5058 = vmatmul.mubr.f32.gmra.mrb[0].mxu0 %v4892
    %v5059 = vpop.f32.mrb[0].mxu0
    %v5060 = vadd.f32 0.0, %v5059
    %v5061 = vpop.f32.mrb[0].mxu0
    %5062 = vmatprep.mubr.f32.mxu0 0.0
    %5063 = vmatmul.mubr.f32.gmra.mrb[0].mxu0 %v4895
    %v5064 = vpop.f32.mrb[0].mxu0
    %v5065 = vadd.f32 0.0, %v5064
    %v5066 = vpop.f32.mrb[0].mxu0
    %5067 = vmatprep.mubr.f32.mxu0 0.0
    %5068 = vmatmul.mubr.f32.gmra.mrb[0].mxu0 %v4898
    %v5069 = vpop.f32.mrb[0].mxu0
    %v5070 = vadd.f32 0.0, %v5069
    %v5071 = vpop.f32.mrb[0].mxu0
    %5072 = vmatprep.mubr.f32.mxu0 0.0
    %5073 = vmatmul.mubr.f32.gmra.mrb[0].mxu0 %v4901
    %v5074 = vpop.f32.mrb[0].mxu0
    %v5075 = vadd.f32 0.0, %v5074
    %v5076 = vpop.f32.mrb[0].mxu0
    %5077 = vmatprep.mubr.f32.mxu0 0.0
    %5078 = vmatmul.mubr.f32.gmra.mrb[0].mxu0 %v4904
    %v5079 = vpop.f32.mrb[0].mxu0
    %v5080 = vadd.f32 0.0, %v5079
    %v5081 = vpop.f32.mrb[0].mxu0
    %5082 = vmatprep.mubr.f32.mxu0 0.0
    %5083 = vmatmul.mubr.f32.gmra.mrb[0].mxu0 %v4907
    %v5084 = vpop.f32.mrb[0].mxu0
    %v5085 = vadd.f32 0.0, %v5084
    %v5086 = vpop.f32.mrb[0].mxu0
    %5087 = vmatprep.mubr.f32.mxu0 0.0
    %5088 = vmatmul.mubr.f32.gmra.mrb[0].mxu0 %v4910
    %v5089 = vpop.f32.mrb[0].mxu0
    %v5090 = vadd.f32 0.0, %v5089
    %v5091 = vpop.f32.mrb[0].mxu0
    %5092 = vmatprep.mubr.f32.mxu0 0.0
    %5093 = vmatmul.mubr.f32.gmra.mrb[0].mxu0 %v4913
    %v5094 = vpop.f32.mrb[0].mxu0
    %v5095 = vadd.f32 0.0, %v5094
    %v5096 = vpop.f32.mrb[0].mxu0
    %5097 = vmatprep.mubr.f32.mxu0 0.0
    %5098 = vmatmul.mubr.f32.gmra.mrb[0].mxu0 %v4916
    %v5099 = vpop.f32.mrb[0].mxu0
    %v5100 = vadd.f32 0.0, %v5099
    %v5101 = vpop.f32.mrb[0].mxu0
    %5102 = vmatprep.mubr.f32.mxu0 0.0
    %5103 = vmatmul.mubr.f32.gmra.mrb[0].mxu0 %v4919
    %v5104 = vpop.f32.mrb[0].mxu0
    %v5105 = vadd.f32 0.0, %v5104
    %v5106 = vpop.f32.mrb[0].mxu0
    %5107 = vmatprep.mubr.f32.mxu0 0.0
    %5108 = vmatmul.mubr.f32.gmra.mrb[0].mxu0 %v4922
    %v5109 = vpop.f32.mrb[0].mxu0
    %v5110 = vadd.f32 0.0, %v5109
    %v5111 = vpop.f32.mrb[0].mxu0
    %5112 = vmatprep.mubr.f32.mxu0 0.0
    %5113 = vmatmul.mubr.f32.gmra.mrb[0].mxu0 %v4925
    %v5114 = vpop.f32.mrb[0].mxu0
    %v5115 = vadd.f32 0.0, %v5114
    %v5116 = vpop.f32.mrb[0].mxu0
    %5117 = vmatprep.mubr.f32.mxu0 0.0
    %5118 = vmatmul.mubr.f32.gmra.mrb[0].mxu0 %v4928
    %v5119 = vpop.f32.mrb[0].mxu0
    %v5120 = vadd.f32 0.0, %v5119
    %v5121 = vpop.f32.mrb[0].mxu0
    %5122 = vmatprep.mubr.f32.mxu0 0.0
    %5123 = vmatmul.mubr.f32.gmra.mrb[0].mxu0 %v4931
    %v5124 = vpop.f32.mrb[0].mxu0
    %v5125 = vadd.f32 0.0, %v5124
    %v5126 = vpop.f32.mrb[0].mxu0
    %5127 = vmatprep.mubr.f32.mxu0 0.0
    %5128 = vmatmul.mubr.f32.gmra.mrb[0].mxu0 %v4934
    %v5129 = vpop.f32.mrb[0].mxu0
    %v5130 = vadd.f32 0.0, %v5129
    %v5131 = vpop.f32.mrb[0].mxu0
    %5132 = vmatprep.mubr.f32.mxu0 0.0
    %5133 = vmatmul.mubr.f32.gmra.mrb[0].mxu0 %v4937
    %v5134 = vpop.f32.mrb[0].mxu0
    %v5135 = vadd.f32 0.0, %v5134
    %v5136 = vpop.f32.mrb[0].mxu0
    %5137 = vmatprep.mubr.f32.mxu0 0.0
    %5138 = vmatmul.mubr.f32.gmra.mrb[0].mxu0 %v4940
    %v5139 = vpop.f32.mrb[0].mxu0
    %v5140 = vadd.f32 0.0, %v5139
    %v5141 = vpop.f32.mrb[0].mxu0
    %5142 = vmatprep.mubr.f32.mxu0 0.0
    %5143 = vmatmul.mubr.f32.gmra.mrb[0].mxu0 %v4943
    %v5144 = vpop.f32.mrb[0].mxu0
    %v5145 = vadd.f32 0.0, %v5144
    %v5146 = vpop.f32.mrb[0].mxu0
    %5147 = vmatprep.mubr.f32.mxu0 0.0
    %5148 = vmatmul.mubr.f32.gmra.mrb[0].mxu0 %v4946
    %v5149 = vpop.f32.mrb[0].mxu0
    %v5150 = vadd.f32 0.0, %v5149
    %v5151 = vpop.f32.mrb[0].mxu0
    %5152 = vmatprep.mubr.f32.mxu0 0.0
    %5153 = vmatmul.mubr.f32.gmra.mrb[0].mxu0 %v4949
    %v5154 = vpop.f32.mrb[0].mxu0
    %v5155 = vadd.f32 0.0, %v5154
    %v5156 = vpop.f32.mrb[0].mxu0
    %5157 = vmatprep.mubr.f32.mxu0 0.0
    %5158 = vmatmul.mubr.f32.gmra.mrb[0].mxu0 %v4952
    %v5159 = vpop.f32.mrb[0].mxu0
    %v5160 = vadd.f32 0.0, %v5159
    %v5161 = vpop.f32.mrb[0].mxu0
    %5162 = vmatprep.mubr.f32.mxu0 0.0
    %5163 = vmatmul.mubr.f32.gmra.mrb[0].mxu0 %v4955
    %v5164 = vpop.f32.mrb[0].mxu0
    %v5165 = vadd.f32 0.0, %v5164
    %v5166 = vpop.f32.mrb[0].mxu0
    %5167 = vmatprep.mubr.f32.mxu0 0.0
    %5168 = vmatmul.mubr.f32.gmra.mrb[0].mxu0 %v4958
    %v5169 = vpop.f32.mrb[0].mxu0
    %v5170 = vadd.f32 0.0, %v5169
    %v5171 = vpop.f32.mrb[0].mxu0
    %5172 = vmatprep.mubr.f32.mxu0 0.0
    %5173 = vmatmul.mubr.f32.gmra.mrb[0].mxu0 %v4961
    %v5174 = vpop.f32.mrb[0].mxu0
    %v5175 = vadd.f32 0.0, %v5174
    %v5176 = vpop.f32.mrb[0].mxu0
    %5177 = vmatprep.mubr.f32.mxu0 0.0
    %5178 = vmatmul.mubr.f32.gmra.mrb[0].mxu0 %v4964
    %v5179 = vpop.f32.mrb[0].mxu0
    %v5180 = vadd.f32 0.0, %v5179
    %v5181 = vpop.f32.mrb[0].mxu0
    %5182 = vmatprep.mubr.f32.mxu0 0.0
    %5183 = vmatmul.mubr.f32.gmra.mrb[0].mxu0 %v4967
    %v5184 = vpop.f32.mrb[0].mxu0
    %v5185 = vadd.f32 0.0, %v5184
    %v5186 = vpop.f32.mrb[0].mxu0
    %5187 = vmatprep.mubr.f32.mxu0 0.0
    %5188 = vmatmul.mubr.f32.gmra.mrb[0].mxu0 %v4970
    %v5189 = vpop.f32.mrb[0].mxu0
    %v5190 = vadd.f32 0.0, %v5189
    %v5191 = vpop.f32.mrb[0].mxu0
    %5192 = vmatprep.mubr.f32.mxu0 0.0
    %5193 = vmatmul.mubr.f32.gmra.mrb[0].mxu0 %v4973
    %v5194 = vpop.f32.mrb[0].mxu0
    %v5195 = vadd.f32 0.0, %v5194
    %v5196 = vpop.f32.mrb[0].mxu0
    %5197 = vmatprep.mubr.f32.mxu0 0.0
    %5198 = vmatmul.mubr.f32.gmra.mrb[0].mxu0 %v4976
    %v5199 = vpop.f32.mrb[0].mxu0
    %v5200 = vadd.f32 0.0, %v5199
    %v5201 = vpop.f32.mrb[0].mxu0
    %5202 = vdwg.mxu0
    %v5203 = vmax.f32 %v5045, -5.0
    %v5204 = vmax.f32 %v5050, -5.0
    %v5205 = vmax.f32 %v5055, -5.0
    %v5206 = vmax.f32 %v5060, -5.0
    %v5207 = vmax.f32 %v5065, -5.0
    %v5208 = vmax.f32 %v5070, -5.0
    %v5209 = vmax.f32 %v5075, -5.0
    %v5210 = vmax.f32 %v5080, -5.0
    %v5211 = vmax.f32 %v5085, -5.0
    %v5212 = vmax.f32 %v5090, -5.0
    %v5213 = vmax.f32 %v5095, -5.0
    %v5214 = vmax.f32 %v5100, -5.0
    %v5215 = vmax.f32 %v5105, -5.0
    %v5216 = vmax.f32 %v5110, -5.0
    %v5217 = vmax.f32 %v5115, -5.0
    %v5218 = vmax.f32 %v5120, -5.0
    %v5219 = vmax.f32 %v5125, -5.0
    %v5220 = vmax.f32 %v5130, -5.0
    %v5221 = vmax.f32 %v5135, -5.0
    %v5222 = vmax.f32 %v5140, -5.0
    %v5223 = vmax.f32 %v5145, -5.0
    %v5224 = vmax.f32 %v5150, -5.0
    %v5225 = vmax.f32 %v5155, -5.0
    %v5226 = vmax.f32 %v5160, -5.0
    %v5227 = vmax.f32 %v5165, -5.0
    %v5228 = vmax.f32 %v5170, -5.0
    %v5229 = vmax.f32 %v5175, -5.0
    %v5230 = vmax.f32 %v5180, -5.0
    %v5231 = vmax.f32 %v5185, -5.0
    %v5232 = vmax.f32 %v5190, -5.0
    %v5233 = vmax.f32 %v5195, -5.0
    %v5234 = vmax.f32 %v5200, -5.0
    %v5235 = vmin.f32 %v5203, 5.0
    %v5236 = vmin.f32 %v5204, 5.0
    %v5237 = vmin.f32 %v5205, 5.0
    %v5238 = vmin.f32 %v5206, 5.0
    %v5239 = vmin.f32 %v5207, 5.0
    %v5240 = vmin.f32 %v5208, 5.0
    %v5241 = vmin.f32 %v5209, 5.0
    %v5242 = vmin.f32 %v5210, 5.0
    %v5243 = vmin.f32 %v5211, 5.0
    %v5244 = vmin.f32 %v5212, 5.0
    %v5245 = vmin.f32 %v5213, 5.0
    %v5246 = vmin.f32 %v5214, 5.0
    %v5247 = vmin.f32 %v5215, 5.0
    %v5248 = vmin.f32 %v5216, 5.0
    %v5249 = vmin.f32 %v5217, 5.0
    %v5250 = vmin.f32 %v5218, 5.0
    %v5251 = vmin.f32 %v5219, 5.0
    %v5252 = vmin.f32 %v5220, 5.0
    %v5253 = vmin.f32 %v5221, 5.0
    %v5254 = vmin.f32 %v5222, 5.0
    %v5255 = vmin.f32 %v5223, 5.0
    %v5256 = vmin.f32 %v5224, 5.0
    %v5257 = vmin.f32 %v5225, 5.0
    %v5258 = vmin.f32 %v5226, 5.0
    %v5259 = vmin.f32 %v5227, 5.0
    %v5260 = vmin.f32 %v5228, 5.0
    %v5261 = vmin.f32 %v5229, 5.0
    %v5262 = vmin.f32 %v5230, 5.0
    %v5263 = vmin.f32 %v5231, 5.0
    %v5264 = vmin.f32 %v5232, 5.0
    %v5265 = vmin.f32 %v5233, 5.0
    %v5266 = vmin.f32 %v5234, 5.0
    %v5267 = vmul.f32 %v5235, 1.442695
    %v5268 = vpow.pop %v5267
    %v5269 = vmul.f32 %v5236, 1.442695
    %v5270 = vpow.pop %v5269
    %v5271 = vmul.f32 %v5237, 1.442695
    %v5272 = vpow.pop %v5271
    %v5273 = vmul.f32 %v5238, 1.442695
    %v5274 = vpow.pop %v5273
    %v5275 = vmul.f32 %v5239, 1.442695
    %v5276 = vpow.pop %v5275
    %v5277 = vmul.f32 %v5240, 1.442695
    %v5278 = vpow.pop %v5277
    %v5279 = vmul.f32 %v5241, 1.442695
    %v5280 = vpow.pop %v5279
    %v5281 = vmul.f32 %v5242, 1.442695
    %v5282 = vpow.pop %v5281
    %v5283 = vmul.f32 %v5243, 1.442695
    %v5284 = vpow.pop %v5283
    %v5285 = vmul.f32 %v5244, 1.442695
    %v5286 = vpow.pop %v5285
    %v5287 = vmul.f32 %v5245, 1.442695
    %v5288 = vpow.pop %v5287
    %v5289 = vmul.f32 %v5246, 1.442695
    %v5290 = vpow.pop %v5289
    %v5291 = vmul.f32 %v5247, 1.442695
    %v5292 = vpow.pop %v5291
    %v5293 = vmul.f32 %v5248, 1.442695
    %v5294 = vpow.pop %v5293
    %v5295 = vmul.f32 %v5249, 1.442695
    %v5296 = vpow.pop %v5295
    %v5297 = vmul.f32 %v5250, 1.442695
    %v5298 = vpow.pop %v5297
    %v5299 = vmul.f32 %v5251, 1.442695
    %v5300 = vpow.pop %v5299
    %v5301 = vmul.f32 %v5252, 1.442695
    %v5302 = vpow.pop %v5301
    %v5303 = vmul.f32 %v5253, 1.442695
    %v5304 = vpow.pop %v5303
    %v5305 = vmul.f32 %v5254, 1.442695
    %v5306 = vpow.pop %v5305
    %v5307 = vmul.f32 %v5255, 1.442695
    %v5308 = vpow.pop %v5307
    %v5309 = vmul.f32 %v5256, 1.442695
    %v5310 = vpow.pop %v5309
    %v5311 = vmul.f32 %v5257, 1.442695
    %v5312 = vpow.pop %v5311
    %v5313 = vmul.f32 %v5258, 1.442695
    %v5314 = vpow.pop %v5313
    %v5315 = vmul.f32 %v5259, 1.442695
    %v5316 = vpow.pop %v5315
    %v5317 = vmul.f32 %v5260, 1.442695
    %v5318 = vpow.pop %v5317
    %v5319 = vmul.f32 %v5261, 1.442695
    %v5320 = vpow.pop %v5319
    %v5321 = vmul.f32 %v5262, 1.442695
    %v5322 = vpow.pop %v5321
    %v5323 = vmul.f32 %v5263, 1.442695
    %v5324 = vpow.pop %v5323
    %v5325 = vmul.f32 %v5264, 1.442695
    %v5326 = vpow.pop %v5325
    %v5327 = vmul.f32 %v5265, 1.442695
    %v5328 = vpow.pop %v5327
    %v5329 = vmul.f32 %v5266, 1.442695
    %v5330 = vpow.pop %v5329
    %v5331 = vmul.f32 %v5268, %v1459
    %v5332 = vmul.f32 %v5270, %v1464
    %v5333 = vmul.f32 %v5272, %v1469
    %v5334 = vmul.f32 %v5274, %v1474
    %v5335 = vmul.f32 %v5276, %v1479
    %v5336 = vmul.f32 %v5278, %v1484
    %v5337 = vmul.f32 %v5280, %v1489
    %v5338 = vmul.f32 %v5282, %v1494
    %v5339 = vmul.f32 %v5284, %v1499
    %v5340 = vmul.f32 %v5286, %v1504
    %v5341 = vmul.f32 %v5288, %v1509
    %v5342 = vmul.f32 %v5290, %v1514
    %v5343 = vmul.f32 %v5292, %v1519
    %v5344 = vmul.f32 %v5294, %v1524
    %v5345 = vmul.f32 %v5296, %v1529
    %v5346 = vmul.f32 %v5298, %v1534
    %v5347 = vmul.f32 %v5300, %v1539
    %v5348 = vmul.f32 %v5302, %v1544
    %v5349 = vmul.f32 %v5304, %v1549
    %v5350 = vmul.f32 %v5306, %v1554
    %v5351 = vmul.f32 %v5308, %v1559
    %v5352 = vmul.f32 %v5310, %v1564
    %v5353 = vmul.f32 %v5312, %v1569
    %v5354 = vmul.f32 %v5314, %v1574
    %v5355 = vmul.f32 %v5316, %v1579
    %v5356 = vmul.f32 %v5318, %v1584
    %v5357 = vmul.f32 %v5320, %v1589
    %v5358 = vmul.f32 %v5322, %v1594
    %v5359 = vmul.f32 %v5324, %v1599
    %v5360 = vmul.f32 %v5326, %v1604
    %v5361 = vmul.f32 %v5328, %v1609
    %v5362 = vmul.f32 %v5330, %v1614
    %5363 = vrot.lane.b32.xlu0 %v4290, 64
    %v5364 = vpop.permute.xlu0 %5363
    %5365 = vrot.lane.b32.xlu0 %v4295, 64
    %v5366 = vpop.permute.xlu0 %5365
    %v5369 = vmul.f32 %v5331, %v5364
    %v5370 = vmul.f32 %v5332, %v5366
    %v5371 = vmul.f32 %v5333, %v5364
    %v5372 = vmul.f32 %v5334, %v5366
    %v5373 = vmul.f32 %v5335, %v5364
    %v5374 = vmul.f32 %v5336, %v5366
    %v5375 = vmul.f32 %v5337, %v5364
    %v5376 = vmul.f32 %v5338, %v5366
    %v5377 = vmul.f32 %v5339, %v5364
    %v5378 = vmul.f32 %v5340, %v5366
    %v5379 = vmul.f32 %v5341, %v5364
    %v5380 = vmul.f32 %v5342, %v5366
    %v5381 = vmul.f32 %v5343, %v5364
    %v5382 = vmul.f32 %v5344, %v5366
    %v5383 = vmul.f32 %v5345, %v5364
    %v5384 = vmul.f32 %v5346, %v5366
    %v5385 = vmul.f32 %v5347, %v5364
    %v5386 = vmul.f32 %v5348, %v5366
    %v5387 = vmul.f32 %v5349, %v5364
    %v5388 = vmul.f32 %v5350, %v5366
    %v5389 = vmul.f32 %v5351, %v5364
    %v5390 = vmul.f32 %v5352, %v5366
    %v5391 = vmul.f32 %v5353, %v5364
    %v5392 = vmul.f32 %v5354, %v5366
    %v5393 = vmul.f32 %v5355, %v5364
    %v5394 = vmul.f32 %v5356, %v5366
    %v5395 = vmul.f32 %v5357, %v5364
    %v5396 = vmul.f32 %v5358, %v5366
    %v5397 = vmul.f32 %v5359, %v5364
    %v5398 = vmul.f32 %v5360, %v5366
    %v5399 = vmul.f32 %v5361, %v5364
    %v5400 = vmul.f32 %v5362, %v5366
    %5401 = vmatprep.subr.mxu0 0.0
    %5402 = vmatpush1.msra.mxu0 %v5369
    %5403 = vmatprep.subr.mxu0 0.0
    %5404 = vmatpush1.msra.mxu0 %v5370
    %5405 = vmatprep.subr.mxu0 0.0
    %5406 = vmatpush1.msra.mxu0 %v5371
    %5407 = vmatprep.subr.mxu0 0.0
    %5408 = vmatpush1.msra.mxu0 %v5372
    %5409 = vmatprep.subr.mxu0 0.0
    %5410 = vmatpush1.msra.mxu0 %v5373
    %5411 = vmatprep.subr.mxu0 0.0
    %5412 = vmatpush1.msra.mxu0 %v5374
    %5413 = vmatprep.subr.mxu0 0.0
    %5414 = vmatpush1.msra.mxu0 %v5375
    %5415 = vmatprep.subr.mxu0 0.0
    %5416 = vmatpush1.msra.mxu0 %v5376
    %5417 = vmatprep.subr.mxu0 0.0
    %5418 = vmatpush1.msra.mxu0 %v5377
    %5419 = vmatprep.subr.mxu0 0.0
    %5420 = vmatpush1.msra.mxu0 %v5378
    %5421 = vmatprep.subr.mxu0 0.0
    %5422 = vmatpush1.msra.mxu0 %v5379
    %5423 = vmatprep.subr.mxu0 0.0
    %5424 = vmatpush1.msra.mxu0 %v5380
    %5425 = vmatprep.subr.mxu0 0.0
    %5426 = vmatpush1.msra.mxu0 %v5381
    %5427 = vmatprep.subr.mxu0 0.0
    %5428 = vmatpush1.msra.mxu0 %v5382
    %5429 = vmatprep.subr.mxu0 0.0
    %5430 = vmatpush1.msra.mxu0 %v5383
    %5431 = vmatprep.subr.mxu0 0.0
    %5432 = vmatpush1.msra.mxu0 %v5384
    %5433 = vmatprep.subr.mxu0 0.0
    %5434 = vmatpush1.msra.mxu0 %v5385
    %5435 = vmatprep.subr.mxu0 0.0
    %5436 = vmatpush1.msra.mxu0 %v5386
    %5437 = vmatprep.subr.mxu0 0.0
    %5438 = vmatpush1.msra.mxu0 %v5387
    %5439 = vmatprep.subr.mxu0 0.0
    %5440 = vmatpush1.msra.mxu0 %v5388
    %5441 = vmatprep.subr.mxu0 0.0
    %5442 = vmatpush1.msra.mxu0 %v5389
    %5443 = vmatprep.subr.mxu0 0.0
    %5444 = vmatpush1.msra.mxu0 %v5390
    %5445 = vmatprep.subr.mxu0 0.0
    %5446 = vmatpush1.msra.mxu0 %v5391
    %5447 = vmatprep.subr.mxu0 0.0
    %5448 = vmatpush1.msra.mxu0 %v5392
    %5449 = vmatprep.subr.mxu0 0.0
    %5450 = vmatpush1.msra.mxu0 %v5393
    %5451 = vmatprep.subr.mxu0 0.0
    %5452 = vmatpush1.msra.mxu0 %v5394
    %5453 = vmatprep.subr.mxu0 0.0
    %5454 = vmatpush1.msra.mxu0 %v5395
    %5455 = vmatprep.subr.mxu0 0.0
    %5456 = vmatpush1.msra.mxu0 %v5396
    %5457 = vmatprep.subr.mxu0 0.0
    %5458 = vmatpush1.msra.mxu0 %v5397
    %5459 = vmatprep.subr.mxu0 0.0
    %5460 = vmatpush1.msra.mxu0 %v5398
    %5461 = vmatprep.subr.mxu0 0.0
    %5462 = vmatpush1.msra.mxu0 %v5399
    %5463 = vmatprep.subr.mxu0 0.0
    %5464 = vmatpush1.msra.mxu0 %v5400
    %5465 = vmatprep.mubr.f32.mxu0 %v325
    %5466 = vmatmul.mubr.f32.gmra.mrb[0].mxu0 %v324
    %v5467 = vpop.f32.mrb[0].mxu0
    %v5468 = vadd.f32 0.0, %v5467
    %v5469 = vpop.f32.mrb[0].mxu0
    %5470 = vmatprep.mubr.f32.mxu0 %v327
    %5471 = vmatmul.mubr.f32.gmra.mrb[0].mxu0 %v326
    %v5472 = vpop.f32.mrb[0].mxu0
    %v5473 = vadd.f32 0.0, %v5472
    %v5474 = vpop.f32.mrb[0].mxu0
    %5475 = vdwg.mxu0
    %5476 = vmatprep.subr.mxu0 0.0
    %5477 = vmatpush1.msra.mxu0 %v5331
    %5478 = vmatprep.subr.mxu0 0.0
    %5479 = vmatpush1.msra.mxu0 %v5332
    %5480 = vmatprep.subr.mxu0 0.0
    %5481 = vmatpush1.msra.mxu0 %v5333
    %5482 = vmatprep.subr.mxu0 0.0
    %5483 = vmatpush1.msra.mxu0 %v5334
    %5484 = vmatprep.subr.mxu0 0.0
    %5485 = vmatpush1.msra.mxu0 %v5335
    %5486 = vmatprep.subr.mxu0 0.0
    %5487 = vmatpush1.msra.mxu0 %v5336
    %5488 = vmatprep.subr.mxu0 0.0
    %5489 = vmatpush1.msra.mxu0 %v5337
    %5490 = vmatprep.subr.mxu0 0.0
    %5491 = vmatpush1.msra.mxu0 %v5338
    %5492 = vmatprep.subr.mxu0 0.0
    %5493 = vmatpush1.msra.mxu0 %v5339
    %5494 = vmatprep.subr.mxu0 0.0
    %5495 = vmatpush1.msra.mxu0 %v5340
    %5496 = vmatprep.subr.mxu0 0.0
    %5497 = vmatpush1.msra.mxu0 %v5341
    %5498 = vmatprep.subr.mxu0 0.0
    %5499 = vmatpush1.msra.mxu0 %v5342
    %5500 = vmatprep.subr.mxu0 0.0
    %5501 = vmatpush1.msra.mxu0 %v5343
    %5502 = vmatprep.subr.mxu0 0.0
    %5503 = vmatpush1.msra.mxu0 %v5344
    %5504 = vmatprep.subr.mxu0 0.0
    %5505 = vmatpush1.msra.mxu0 %v5345
    %5506 = vmatprep.subr.mxu0 0.0
    %5507 = vmatpush1.msra.mxu0 %v5346
    %5508 = vmatprep.subr.mxu0 0.0
    %5509 = vmatpush1.msra.mxu0 %v5347
    %5510 = vmatprep.subr.mxu0 0.0
    %5511 = vmatpush1.msra.mxu0 %v5348
    %5512 = vmatprep.subr.mxu0 0.0
    %5513 = vmatpush1.msra.mxu0 %v5349
    %5514 = vmatprep.subr.mxu0 0.0
    %5515 = vmatpush1.msra.mxu0 %v5350
    %5516 = vmatprep.subr.mxu0 0.0
    %5517 = vmatpush1.msra.mxu0 %v5351
    %5518 = vmatprep.subr.mxu0 0.0
    %5519 = vmatpush1.msra.mxu0 %v5352
    %5520 = vmatprep.subr.mxu0 0.0
    %5521 = vmatpush1.msra.mxu0 %v5353
    %5522 = vmatprep.subr.mxu0 0.0
    %5523 = vmatpush1.msra.mxu0 %v5354
    %5524 = vmatprep.subr.mxu0 0.0
    %5525 = vmatpush1.msra.mxu0 %v5355
    %5526 = vmatprep.subr.mxu0 0.0
    %5527 = vmatpush1.msra.mxu0 %v5356
    %5528 = vmatprep.subr.mxu0 0.0
    %5529 = vmatpush1.msra.mxu0 %v5357
    %5530 = vmatprep.subr.mxu0 0.0
    %5531 = vmatpush1.msra.mxu0 %v5358
    %5532 = vmatprep.subr.mxu0 0.0
    %5533 = vmatpush1.msra.mxu0 %v5359
    %5534 = vmatprep.subr.mxu0 0.0
    %5535 = vmatpush1.msra.mxu0 %v5360
    %5536 = vmatprep.subr.mxu0 0.0
    %5537 = vmatpush1.msra.mxu0 %v5361
    %5538 = vmatprep.subr.mxu0 0.0
    %5539 = vmatpush1.msra.mxu0 %v5362
    %5540 = vmatprep.mubr.f32.mxu0 %v325
    %5541 = vmatmul.mubr.f32.gmra.mrb[0].mxu0 %v324
    %v5542 = vpop.f32.mrb[0].mxu0
    %v5543 = vadd.f32 1e-06, %v5542
    %v5544 = vpop.f32.mrb[0].mxu0
    %5545 = vmatprep.mubr.f32.mxu0 %v327
    %5546 = vmatmul.mubr.f32.gmra.mrb[0].mxu0 %v326
    %v5547 = vpop.f32.mrb[0].mxu0
    %v5548 = vadd.f32 1e-06, %v5547
    %v5549 = vpop.f32.mrb[0].mxu0
    %5550 = vdwg.mxu0
    %v5551 = vrcp.pop %v5543
    %v5552 = vrcp.pop %v5548
    %v5553 = vmul.f32 %v5468, %v5551
    %v5554 = vmul.f32 %v5473, %v5552
    %s5555 = scalar_lea.vmem %s25, 32
    %v5556 = vld [vmem:[%s5555] sm:$0xff]
    %v5557 = vld [vmem:[%s5555 + $0x8] sm:$0xff]
    %v5558 = vld [vmem:[%s5555 + $0x10] sm:$0xff]
    %v5559 = vld [vmem:[%s5555 + $0x18] sm:$0xff]
    %s5560 = scalar_lea.vmem %s27, 1
    %v5561 = vld [vmem:[%s5560] sm:$0x1]
    %v5563 = vlaneseq
    %v5564 = vshrl.u32 %v5563, 7
    %v5565 = vsub.s32 0, %v5564
    %v5566 = vrot.slane %v5561, %v5565
    %v5569 = vsel %vm343, %v5553, 0
    %v5572 = vsel %vm343, %v5554, 0
    %5574 = vmatprep.subr.mxu0 0.0
    %5575 = vmatpush1.msra.mxu0 %v5556
    %5576 = vmatprep.subr.mxu0 0.0
    %5577 = vmatpush1.msra.mxu0 %v5557
    %5578 = vmatprep.subr.mxu0 0.0
    %5579 = vmatpush1.msra.mxu0 %v5558
    %5580 = vmatprep.subr.mxu0 0.0
    %5581 = vmatpush1.msra.mxu0 %v5559
    %5582 = vmatprep.subr.mxu0 0.0
    %5583 = vmatpush1.msra.mxu0 0.0
    %5584 = vmatprep.subr.mxu0 0.0
    %5585 = vmatpush1.msra.mxu0 0.0
    %5586 = vmatprep.subr.mxu0 0.0
    %5587 = vmatpush1.msra.mxu0 0.0
    %5588 = vmatprep.subr.mxu0 0.0
    %5589 = vmatpush1.msra.mxu0 0.0
    %5590 = vmatprep.subr.mxu0 0.0
    %5591 = vmatpush1.msra.mxu0 0.0
    %5592 = vmatprep.subr.mxu0 0.0
    %5593 = vmatpush1.msra.mxu0 0.0
    %5594 = vmatprep.subr.mxu0 0.0
    %5595 = vmatpush1.msra.mxu0 0.0
    %5596 = vmatprep.subr.mxu0 0.0
    %5597 = vmatpush1.msra.mxu0 0.0
    %5598 = vmatprep.subr.mxu0 0.0
    %5599 = vmatpush1.msra.mxu0 0.0
    %5600 = vmatprep.subr.mxu0 0.0
    %5601 = vmatpush1.msra.mxu0 0.0
    %5602 = vmatprep.subr.mxu0 0.0
    %5603 = vmatpush1.msra.mxu0 0.0
    %5604 = vmatprep.subr.mxu0 0.0
    %5605 = vmatpush1.msra.mxu0 0.0
    %5606 = vmatprep.subr.mxu0 0.0
    %5607 = vmatpush1.msra.mxu0 0.0
    %5608 = vmatprep.subr.mxu0 0.0
    %5609 = vmatpush1.msra.mxu0 0.0
    %5610 = vmatprep.subr.mxu0 0.0
    %5611 = vmatpush1.msra.mxu0 0.0
    %5612 = vmatprep.subr.mxu0 0.0
    %5613 = vmatpush1.msra.mxu0 0.0
    %5614 = vmatprep.subr.mxu0 0.0
    %5615 = vmatpush1.msra.mxu0 0.0
    %5616 = vmatprep.subr.mxu0 0.0
    %5617 = vmatpush1.msra.mxu0 0.0
    %5618 = vmatprep.subr.mxu0 0.0
    %5619 = vmatpush1.msra.mxu0 0.0
    %5620 = vmatprep.subr.mxu0 0.0
    %5621 = vmatpush1.msra.mxu0 0.0
    %5622 = vmatprep.subr.mxu0 0.0
    %5623 = vmatpush1.msra.mxu0 0.0
    %5624 = vmatprep.subr.mxu0 0.0
    %5625 = vmatpush1.msra.mxu0 0.0
    %5626 = vmatprep.subr.mxu0 0.0
    %5627 = vmatpush1.msra.mxu0 0.0
    %5628 = vmatprep.subr.mxu0 0.0
    %5629 = vmatpush1.msra.mxu0 0.0
    %5630 = vmatprep.subr.mxu0 0.0
    %5631 = vmatpush1.msra.mxu0 0.0
    %5632 = vmatprep.subr.mxu0 0.0
    %5633 = vmatpush1.msra.mxu0 0.0
    %5634 = vmatprep.subr.mxu0 0.0
    %5635 = vmatpush1.msra.mxu0 0.0
    %5636 = vmatprep.subr.mxu0 0.0
    %5637 = vmatpush1.msra.mxu0 0.0
    %5638 = vmatprep.mubr.f32.mxu0 0.0
    %5639 = vmatmul.mubr.f32.gmra.mrb[0].mxu0 %v5569
    %v5640 = vpop.f32.mrb[0].mxu0
    %v5641 = vadd.f32 %v5566, %v5640
    %v5642 = vpop.f32.mrb[0].mxu0
    %5643 = vmatprep.mubr.f32.mxu0 0.0
    %5644 = vmatmul.mubr.f32.gmra.mrb[0].mxu0 %v5572
    %v5645 = vpop.f32.mrb[0].mxu0
    %v5646 = vadd.f32 %v5566, %v5645
    %v5647 = vpop.f32.mrb[0].mxu0
    %5648 = vdwg.mxu0
    %v5649 = vadd.f32 %v3676, %v5641
    %v5650 = vadd.f32 %v3677, %v5646
    %s5651 = scalar_lea.vmem %s49, 1
    %v5652 = vld [vmem:[%s5651] sm:$0x1]
    %s5653 = scalar_lea.vmem %s51, 1
    %v5654 = vld [vmem:[%s5653] sm:$0x1]
    %v5655 = vsel %vm343, %v5649, 0.0
    %5656 = vadd.xlane.f32.xlu0 %v5655
    %v5657 = vpop.xlane.xlu0 %5656
    %v5658 = vsel %vm343, %v5650, 0.0
    %5659 = vadd.xlane.f32.xlu0 %v5658
    %v5660 = vpop.xlane.xlu0 %5659
    %v5661 = vmul.f32 %v5657, %v2178
    %v5662 = vmul.f32 %v5660, %v2178
    %v5663 = vsub.f32 %v5649, %v5661
    %v5664 = vsub.f32 %v5650, %v5662
    %v5665 = vmul.f32 %v5663, %v5663
    %v5666 = vmul.f32 %v5664, %v5664
    %v5667 = vsel %vm343, %v5665, 0.0
    %5668 = vadd.xlane.f32.xlu0 %v5667
    %v5669 = vpop.xlane.xlu0 %5668
    %v5670 = vsel %vm343, %v5666, 0.0
    %5671 = vadd.xlane.f32.xlu0 %v5670
    %v5672 = vpop.xlane.xlu0 %5671
    %v5673 = vmul.f32 %v5669, %v2178
    %v5674 = vmul.f32 %v5672, %v2178
    %v5675 = vadd.f32 %v5673, 1e-05
    %v5676 = vadd.f32 %v5674, 1e-05
    %v5677 = vrsqrt.pop %v5675
    %v5678 = vrsqrt.pop %v5676
    %v5679 = vmul.f32 %v5663, %v5677
    %v5680 = vmul.f32 %v5664, %v5678
    %v5682 = vlaneseq
    %v5683 = vshrl.u32 %v5682, 7
    %v5684 = vsub.s32 0, %v5683
    %v5685 = vrot.slane %v5652, %v5684
    %v5687 = vmul.f32 %v5679, %v5685
    %v5688 = vmul.f32 %v5680, %v5685
    %v5690 = vlaneseq
    %v5691 = vshrl.u32 %v5690, 7
    %v5692 = vsub.s32 0, %v5691
    %v5693 = vrot.slane %v5654, %v5692
    %v5695 = vadd.f32 %v5687, %v5693
    %v5696 = vadd.f32 %v5688, %v5693
    %s5697 = scalar_lea.vmem %s33, 32
    %v5698 = vld [vmem:[%s5697] sm:$0xff]
    %v5699 = vld [vmem:[%s5697 + $0x8] sm:$0xff]
    %v5700 = vld [vmem:[%s5697 + $0x10] sm:$0xff]
    %v5701 = vld [vmem:[%s5697 + $0x18] sm:$0xff]
    %s5702 = scalar_lea.vmem %s35, 1
    %v5703 = vld [vmem:[%s5702] sm:$0x1]
    %v5705 = vlaneseq
    %v5706 = vshrl.u32 %v5705, 7
    %v5707 = vsub.s32 0, %v5706
    %v5708 = vrot.slane %v5703, %v5707
    %v5711 = vsel %vm343, %v5695, 0
    %v5714 = vsel %vm343, %v5696, 0
    %5716 = vmatprep.subr.mxu0 0.0
    %5717 = vmatpush1.msra.mxu0 %v5698
    %5718 = vmatprep.subr.mxu0 0.0
    %5719 = vmatpush1.msra.mxu0 %v5699
    %5720 = vmatprep.subr.mxu0 0.0
    %5721 = vmatpush1.msra.mxu0 %v5700
    %5722 = vmatprep.subr.mxu0 0.0
    %5723 = vmatpush1.msra.mxu0 %v5701
    %5724 = vmatprep.subr.mxu0 0.0
    %5725 = vmatpush1.msra.mxu0 0.0
    %5726 = vmatprep.subr.mxu0 0.0
    %5727 = vmatpush1.msra.mxu0 0.0
    %5728 = vmatprep.subr.mxu0 0.0
    %5729 = vmatpush1.msra.mxu0 0.0
    %5730 = vmatprep.subr.mxu0 0.0
    %5731 = vmatpush1.msra.mxu0 0.0
    %5732 = vmatprep.subr.mxu0 0.0
    %5733 = vmatpush1.msra.mxu0 0.0
    %5734 = vmatprep.subr.mxu0 0.0
    %5735 = vmatpush1.msra.mxu0 0.0
    %5736 = vmatprep.subr.mxu0 0.0
    %5737 = vmatpush1.msra.mxu0 0.0
    %5738 = vmatprep.subr.mxu0 0.0
    %5739 = vmatpush1.msra.mxu0 0.0
    %5740 = vmatprep.subr.mxu0 0.0
    %5741 = vmatpush1.msra.mxu0 0.0
    %5742 = vmatprep.subr.mxu0 0.0
    %5743 = vmatpush1.msra.mxu0 0.0
    %5744 = vmatprep.subr.mxu0 0.0
    %5745 = vmatpush1.msra.mxu0 0.0
    %5746 = vmatprep.subr.mxu0 0.0
    %5747 = vmatpush1.msra.mxu0 0.0
    %5748 = vmatprep.subr.mxu0 0.0
    %5749 = vmatpush1.msra.mxu0 0.0
    %5750 = vmatprep.subr.mxu0 0.0
    %5751 = vmatpush1.msra.mxu0 0.0
    %5752 = vmatprep.subr.mxu0 0.0
    %5753 = vmatpush1.msra.mxu0 0.0
    %5754 = vmatprep.subr.mxu0 0.0
    %5755 = vmatpush1.msra.mxu0 0.0
    %5756 = vmatprep.subr.mxu0 0.0
    %5757 = vmatpush1.msra.mxu0 0.0
    %5758 = vmatprep.subr.mxu0 0.0
    %5759 = vmatpush1.msra.mxu0 0.0
    %5760 = vmatprep.subr.mxu0 0.0
    %5761 = vmatpush1.msra.mxu0 0.0
    %5762 = vmatprep.subr.mxu0 0.0
    %5763 = vmatpush1.msra.mxu0 0.0
    %5764 = vmatprep.subr.mxu0 0.0
    %5765 = vmatpush1.msra.mxu0 0.0
    %5766 = vmatprep.subr.mxu0 0.0
    %5767 = vmatpush1.msra.mxu0 0.0
    %5768 = vmatprep.subr.mxu0 0.0
    %5769 = vmatpush1.msra.mxu0 0.0
    %5770 = vmatprep.subr.mxu0 0.0
    %5771 = vmatpush1.msra.mxu0 0.0
    %5772 = vmatprep.subr.mxu0 0.0
    %5773 = vmatpush1.msra.mxu0 0.0
    %5774 = vmatprep.subr.mxu0 0.0
    %5775 = vmatpush1.msra.mxu0 0.0
    %5776 = vmatprep.subr.mxu0 0.0
    %5777 = vmatpush1.msra.mxu0 0.0
    %5778 = vmatprep.subr.mxu0 0.0
    %5779 = vmatpush1.msra.mxu0 0.0
    %5780 = vmatprep.mubr.f32.mxu0 0.0
    %5781 = vmatmul.mubr.f32.gmra.mrb[0].mxu0 %v5711
    %v5782 = vpop.f32.mrb[0].mxu0
    %v5783 = vadd.f32 %v5708, %v5782
    %v5784 = vpop.f32.mrb[0].mxu0
    %5785 = vmatprep.mubr.f32.mxu0 0.0
    %5786 = vmatmul.mubr.f32.gmra.mrb[0].mxu0 %v5714
    %v5787 = vpop.f32.mrb[0].mxu0
    %v5788 = vadd.f32 %v5708, %v5787
    %v5789 = vpop.f32.mrb[0].mxu0
    %5790 = vdwg.mxu0
    %v5791 = vmax.f32 %v5783, 0.0
    %v5792 = vmax.f32 %v5788, 0.0
    %s5793 = scalar_lea.vmem %s37, 64
    %v5794 = vld [vmem:[%s5793] sm:$0xff]
    %v5795 = vld [vmem:[%s5793 + $0x8] sm:$0xff]
    %v5796 = vld [vmem:[%s5793 + $0x10] sm:$0xff]
    %v5797 = vld [vmem:[%s5793 + $0x18] sm:$0xff]
    %v5798 = vld [vmem:[%s5793 + $0x20] sm:$0xff]
    %v5799 = vld [vmem:[%s5793 + $0x28] sm:$0xff]
    %v5800 = vld [vmem:[%s5793 + $0x30] sm:$0xff]
    %v5801 = vld [vmem:[%s5793 + $0x38] sm:$0xff]
    %s5802 = scalar_lea.vmem %s39, 1
    %v5803 = vld [vmem:[%s5802] sm:$0x1]
    %v5805 = vlaneseq
    %v5806 = vshrl.u32 %v5805, 7
    %v5807 = vsub.s32 0, %v5806
    %v5808 = vrot.slane %v5803, %v5807
    %v5811 = vsel %vm2850, %v5791, 0
    %v5814 = vsel %vm2850, %v5792, 0
    %5816 = vmatprep.subr.mxu0 0.0
    %5817 = vmatpush1.msra.mxu0 %v5794
    %5818 = vmatprep.subr.mxu0 0.0
    %5819 = vmatpush1.msra.mxu0 %v5795
    %5820 = vmatprep.subr.mxu0 0.0
    %5821 = vmatpush1.msra.mxu0 %v5796
    %5822 = vmatprep.subr.mxu0 0.0
    %5823 = vmatpush1.msra.mxu0 %v5797
    %5824 = vmatprep.subr.mxu0 0.0
    %5825 = vmatpush1.msra.mxu0 %v5798
    %5826 = vmatprep.subr.mxu0 0.0
    %5827 = vmatpush1.msra.mxu0 %v5799
    %5828 = vmatprep.subr.mxu0 0.0
    %5829 = vmatpush1.msra.mxu0 %v5800
    %5830 = vmatprep.subr.mxu0 0.0
    %5831 = vmatpush1.msra.mxu0 %v5801
    %5832 = vmatprep.subr.mxu0 0.0
    %5833 = vmatpush1.msra.mxu0 0.0
    %5834 = vmatprep.subr.mxu0 0.0
    %5835 = vmatpush1.msra.mxu0 0.0
    %5836 = vmatprep.subr.mxu0 0.0
    %5837 = vmatpush1.msra.mxu0 0.0
    %5838 = vmatprep.subr.mxu0 0.0
    %5839 = vmatpush1.msra.mxu0 0.0
    %5840 = vmatprep.subr.mxu0 0.0
    %5841 = vmatpush1.msra.mxu0 0.0
    %5842 = vmatprep.subr.mxu0 0.0
    %5843 = vmatpush1.msra.mxu0 0.0
    %5844 = vmatprep.subr.mxu0 0.0
    %5845 = vmatpush1.msra.mxu0 0.0
    %5846 = vmatprep.subr.mxu0 0.0
    %5847 = vmatpush1.msra.mxu0 0.0
    %5848 = vmatprep.subr.mxu0 0.0
    %5849 = vmatpush1.msra.mxu0 0.0
    %5850 = vmatprep.subr.mxu0 0.0
    %5851 = vmatpush1.msra.mxu0 0.0
    %5852 = vmatprep.subr.mxu0 0.0
    %5853 = vmatpush1.msra.mxu0 0.0
    %5854 = vmatprep.subr.mxu0 0.0
    %5855 = vmatpush1.msra.mxu0 0.0
    %5856 = vmatprep.subr.mxu0 0.0
    %5857 = vmatpush1.msra.mxu0 0.0
    %5858 = vmatprep.subr.mxu0 0.0
    %5859 = vmatpush1.msra.mxu0 0.0
    %5860 = vmatprep.subr.mxu0 0.0
    %5861 = vmatpush1.msra.mxu0 0.0
    %5862 = vmatprep.subr.mxu0 0.0
    %5863 = vmatpush1.msra.mxu0 0.0
    %5864 = vmatprep.subr.mxu0 0.0
    %5865 = vmatpush1.msra.mxu0 0.0
    %5866 = vmatprep.subr.mxu0 0.0
    %5867 = vmatpush1.msra.mxu0 0.0
    %5868 = vmatprep.subr.mxu0 0.0
    %5869 = vmatpush1.msra.mxu0 0.0
    %5870 = vmatprep.subr.mxu0 0.0
    %5871 = vmatpush1.msra.mxu0 0.0
    %5872 = vmatprep.subr.mxu0 0.0
    %5873 = vmatpush1.msra.mxu0 0.0
    %5874 = vmatprep.subr.mxu0 0.0
    %5875 = vmatpush1.msra.mxu0 0.0
    %5876 = vmatprep.subr.mxu0 0.0
    %5877 = vmatpush1.msra.mxu0 0.0
    %5878 = vmatprep.subr.mxu0 0.0
    %5879 = vmatpush1.msra.mxu0 0.0
    %5880 = vmatprep.mubr.f32.mxu0 0.0
    %5881 = vmatmul.mubr.f32.gmra.mrb[0].mxu0 %v5811
    %v5882 = vpop.f32.mrb[0].mxu0
    %v5883 = vadd.f32 %v5808, %v5882
    %v5884 = vpop.f32.mrb[0].mxu0
    %5885 = vmatprep.mubr.f32.mxu0 0.0
    %5886 = vmatmul.mubr.f32.gmra.mrb[0].mxu0 %v5814
    %v5887 = vpop.f32.mrb[0].mxu0
    %v5888 = vadd.f32 %v5808, %v5887
    %v5889 = vpop.f32.mrb[0].mxu0
    %5890 = vdwg.mxu0
    %v5891 = vadd.f32 %v5695, %v5883
    %v5892 = vadd.f32 %v5696, %v5888
    %s5893 = scalar_lea.vmem %s57, 1
    %v5894 = vld [vmem:[%s5893] sm:$0x1]
    %s5895 = scalar_lea.vmem %s59, 1
    %v5896 = vld [vmem:[%s5895] sm:$0x1]
    %v5897 = vsel %vm343, %v5891, 0.0
    %5898 = vadd.xlane.f32.xlu0 %v5897
    %v5899 = vpop.xlane.xlu0 %5898
    %v5900 = vsel %vm343, %v5892, 0.0
    %5901 = vadd.xlane.f32.xlu0 %v5900
    %v5902 = vpop.xlane.xlu0 %5901
    %v5903 = vmul.f32 %v5899, %v2178
    %v5904 = vmul.f32 %v5902, %v2178
    %v5905 = vsub.f32 %v5891, %v5903
    %v5906 = vsub.f32 %v5892, %v5904
    %v5907 = vmul.f32 %v5905, %v5905
    %v5908 = vmul.f32 %v5906, %v5906
    %v5909 = vsel %vm343, %v5907, 0.0
    %5910 = vadd.xlane.f32.xlu0 %v5909
    %v5911 = vpop.xlane.xlu0 %5910
    %v5912 = vsel %vm343, %v5908, 0.0
    %5913 = vadd.xlane.f32.xlu0 %v5912
    %v5914 = vpop.xlane.xlu0 %5913
    %v5915 = vmul.f32 %v5911, %v2178
    %v5916 = vmul.f32 %v5914, %v2178
    %v5917 = vadd.f32 %v5915, 1e-05
    %v5918 = vadd.f32 %v5916, 1e-05
    %v5919 = vrsqrt.pop %v5917
    %v5920 = vrsqrt.pop %v5918
    %v5921 = vmul.f32 %v5905, %v5919
    %v5922 = vmul.f32 %v5906, %v5920
    %v5924 = vlaneseq
    %v5925 = vshrl.u32 %v5924, 7
    %v5926 = vsub.s32 0, %v5925
    %v5927 = vrot.slane %v5894, %v5926
    %v5929 = vmul.f32 %v5921, %v5927
    %v5930 = vmul.f32 %v5922, %v5927
    %v5932 = vlaneseq
    %v5933 = vshrl.u32 %v5932, 7
    %v5934 = vsub.s32 0, %v5933
    %v5935 = vrot.slane %v5896, %v5934
    %v5937 = vadd.f32 %v5929, %v5935
    %v5938 = vadd.f32 %v5930, %v5935
    %v5939 = vld [vmem:[%s65] sm:$0xff]
    %v5940 = vld [vmem:[%s65 + $0x8] sm:$0xff]
    %v5941 = vld [vmem:[%s65 + $0x10] sm:$0xff]
    %v5942 = vld [vmem:[%s65 + $0x18] sm:$0xff]
    %v5943 = vld [vmem:[%s67] sm:$0x1]
    %v5945 = vlaneseq
    %v5946 = vshrl.u32 %v5945, 7
    %v5947 = vsub.s32 0, %v5946
    %v5948 = vrot.slane %v5943, %v5947
    %v5951 = vsel %vm343, %v5937, 0
    %v5954 = vsel %vm343, %v5938, 0
    %5956 = vmatprep.subr.mxu0 0.0
    %5957 = vmatpush1.msra.mxu0 %v5939
    %5958 = vmatprep.subr.mxu0 0.0
    %5959 = vmatpush1.msra.mxu0 %v5940
    %5960 = vmatprep.subr.mxu0 0.0
    %5961 = vmatpush1.msra.mxu0 %v5941
    %5962 = vmatprep.subr.mxu0 0.0
    %5963 = vmatpush1.msra.mxu0 %v5942
    %5964 = vmatprep.subr.mxu0 0.0
    %5965 = vmatpush1.msra.mxu0 0.0
    %5966 = vmatprep.subr.mxu0 0.0
    %5967 = vmatpush1.msra.mxu0 0.0
    %5968 = vmatprep.subr.mxu0 0.0
    %5969 = vmatpush1.msra.mxu0 0.0
    %5970 = vmatprep.subr.mxu0 0.0
    %5971 = vmatpush1.msra.mxu0 0.0
    %5972 = vmatprep.subr.mxu0 0.0
    %5973 = vmatpush1.msra.mxu0 0.0
    %5974 = vmatprep.subr.mxu0 0.0
    %5975 = vmatpush1.msra.mxu0 0.0
    %5976 = vmatprep.subr.mxu0 0.0
    %5977 = vmatpush1.msra.mxu0 0.0
    %5978 = vmatprep.subr.mxu0 0.0
    %5979 = vmatpush1.msra.mxu0 0.0
    %5980 = vmatprep.subr.mxu0 0.0
    %5981 = vmatpush1.msra.mxu0 0.0
    %5982 = vmatprep.subr.mxu0 0.0
    %5983 = vmatpush1.msra.mxu0 0.0
    %5984 = vmatprep.subr.mxu0 0.0
    %5985 = vmatpush1.msra.mxu0 0.0
    %5986 = vmatprep.subr.mxu0 0.0
    %5987 = vmatpush1.msra.mxu0 0.0
    %5988 = vmatprep.subr.mxu0 0.0
    %5989 = vmatpush1.msra.mxu0 0.0
    %5990 = vmatprep.subr.mxu0 0.0
    %5991 = vmatpush1.msra.mxu0 0.0
    %5992 = vmatprep.subr.mxu0 0.0
    %5993 = vmatpush1.msra.mxu0 0.0
    %5994 = vmatprep.subr.mxu0 0.0
    %5995 = vmatpush1.msra.mxu0 0.0
    %5996 = vmatprep.subr.mxu0 0.0
    %5997 = vmatpush1.msra.mxu0 0.0
    %5998 = vmatprep.subr.mxu0 0.0
    %5999 = vmatpush1.msra.mxu0 0.0
    %6000 = vmatprep.subr.mxu0 0.0
    %6001 = vmatpush1.msra.mxu0 0.0
    %6002 = vmatprep.subr.mxu0 0.0
    %6003 = vmatpush1.msra.mxu0 0.0
    %6004 = vmatprep.subr.mxu0 0.0
    %6005 = vmatpush1.msra.mxu0 0.0
    %6006 = vmatprep.subr.mxu0 0.0
    %6007 = vmatpush1.msra.mxu0 0.0
    %6008 = vmatprep.subr.mxu0 0.0
    %6009 = vmatpush1.msra.mxu0 0.0
    %6010 = vmatprep.subr.mxu0 0.0
    %6011 = vmatpush1.msra.mxu0 0.0
    %6012 = vmatprep.subr.mxu0 0.0
    %6013 = vmatpush1.msra.mxu0 0.0
    %6014 = vmatprep.subr.mxu0 0.0
    %6015 = vmatpush1.msra.mxu0 0.0
    %6016 = vmatprep.subr.mxu0 0.0
    %6017 = vmatpush1.msra.mxu0 0.0
    %6018 = vmatprep.subr.mxu0 0.0
    %6019 = vmatpush1.msra.mxu0 0.0
    %6020 = vmatprep.mubr.f32.mxu0 0.0
    %6021 = vmatmul.mubr.f32.gmra.mrb[0].mxu0 %v5951
    %v6022 = vpop.f32.mrb[0].mxu0
    %v6023 = vadd.f32 %v5948, %v6022
    %v6024 = vpop.f32.mrb[0].mxu0
    %6025 = vmatprep.mubr.f32.mxu0 0.0
    %6026 = vmatmul.mubr.f32.gmra.mrb[0].mxu0 %v5954
    %v6027 = vpop.f32.mrb[0].mxu0
    %v6028 = vadd.f32 %v5948, %v6027
    %v6029 = vpop.f32.mrb[0].mxu0
    %6030 = vdwg.mxu0
    %v6031 = vmax.f32 %v6023, 0.0
    %v6032 = vmax.f32 %v6028, 0.0
    %v6033 = vld [vmem:[%s69] sm:$0xff]
    %v6034 = vld [vmem:[%s69 + $0x8] sm:$0xff]
    %v6035 = vld [vmem:[%s71] sm:$0x1]
    %v6037 = vlaneseq
    %v6038 = vshrl.u32 %v6037, 7
    %v6039 = vsub.s32 0, %v6038
    %v6040 = vrot.slane %v6035, %v6039
    %vm6042 = vcmask 130048
    %v6044 = vsel %vm6042, %v6031, 0
    %v6047 = vsel %vm6042, %v6032, 0
    %6049 = vmatprep.subr.mxu0 0.0
    %6050 = vmatpush1.msra.mxu0 %v6033
    %6051 = vmatprep.subr.mxu0 0.0
    %6052 = vmatpush1.msra.mxu0 %v6034
    %6053 = vmatprep.subr.mxu0 0.0
    %6054 = vmatpush1.msra.mxu0 0.0
    %6055 = vmatprep.subr.mxu0 0.0
    %6056 = vmatpush1.msra.mxu0 0.0
    %6057 = vmatprep.subr.mxu0 0.0
    %6058 = vmatpush1.msra.mxu0 0.0
    %6059 = vmatprep.subr.mxu0 0.0
    %6060 = vmatpush1.msra.mxu0 0.0
    %6061 = vmatprep.subr.mxu0 0.0
    %6062 = vmatpush1.msra.mxu0 0.0
    %6063 = vmatprep.subr.mxu0 0.0
    %6064 = vmatpush1.msra.mxu0 0.0
    %6065 = vmatprep.subr.mxu0 0.0
    %6066 = vmatpush1.msra.mxu0 0.0
    %6067 = vmatprep.subr.mxu0 0.0
    %6068 = vmatpush1.msra.mxu0 0.0
    %6069 = vmatprep.subr.mxu0 0.0
    %6070 = vmatpush1.msra.mxu0 0.0
    %6071 = vmatprep.subr.mxu0 0.0
    %6072 = vmatpush1.msra.mxu0 0.0
    %6073 = vmatprep.subr.mxu0 0.0
    %6074 = vmatpush1.msra.mxu0 0.0
    %6075 = vmatprep.subr.mxu0 0.0
    %6076 = vmatpush1.msra.mxu0 0.0
    %6077 = vmatprep.subr.mxu0 0.0
    %6078 = vmatpush1.msra.mxu0 0.0
    %6079 = vmatprep.subr.mxu0 0.0
    %6080 = vmatpush1.msra.mxu0 0.0
    %6081 = vmatprep.subr.mxu0 0.0
    %6082 = vmatpush1.msra.mxu0 0.0
    %6083 = vmatprep.subr.mxu0 0.0
    %6084 = vmatpush1.msra.mxu0 0.0
    %6085 = vmatprep.subr.mxu0 0.0
    %6086 = vmatpush1.msra.mxu0 0.0
    %6087 = vmatprep.subr.mxu0 0.0
    %6088 = vmatpush1.msra.mxu0 0.0
    %6089 = vmatprep.subr.mxu0 0.0
    %6090 = vmatpush1.msra.mxu0 0.0
    %6091 = vmatprep.subr.mxu0 0.0
    %6092 = vmatpush1.msra.mxu0 0.0
    %6093 = vmatprep.subr.mxu0 0.0
    %6094 = vmatpush1.msra.mxu0 0.0
    %6095 = vmatprep.subr.mxu0 0.0
    %6096 = vmatpush1.msra.mxu0 0.0
    %6097 = vmatprep.subr.mxu0 0.0
    %6098 = vmatpush1.msra.mxu0 0.0
    %6099 = vmatprep.subr.mxu0 0.0
    %6100 = vmatpush1.msra.mxu0 0.0
    %6101 = vmatprep.subr.mxu0 0.0
    %6102 = vmatpush1.msra.mxu0 0.0
    %6103 = vmatprep.subr.mxu0 0.0
    %6104 = vmatpush1.msra.mxu0 0.0
    %6105 = vmatprep.subr.mxu0 0.0
    %6106 = vmatpush1.msra.mxu0 0.0
    %6107 = vmatprep.subr.mxu0 0.0
    %6108 = vmatpush1.msra.mxu0 0.0
    %6109 = vmatprep.subr.mxu0 0.0
    %6110 = vmatpush1.msra.mxu0 0.0
    %6111 = vmatprep.subr.mxu0 0.0
    %6112 = vmatpush1.msra.mxu0 0.0
    %6113 = vmatprep.mubr.f32.mxu0 0.0
    %6114 = vmatmul.mubr.f32.gmra.mrb[0].mxu0 %v6044
    %v6115 = vpop.f32.mrb[0].mxu0
    %v6116 = vadd.f32 %v6040, %v6115
    %v6117 = vpop.f32.mrb[0].mxu0
    %6118 = vmatprep.mubr.f32.mxu0 0.0
    %6119 = vmatmul.mubr.f32.gmra.mrb[0].mxu0 %v6047
    %v6120 = vpop.f32.mrb[0].mxu0
    %v6121 = vadd.f32 %v6040, %v6120
    %v6122 = vpop.f32.mrb[0].mxu0
    %6123 = vdwg.mxu0
    %v6124 = vmax.f32 %v6116, 0.0
    %v6125 = vmax.f32 %v6121, 0.0
    %v6126 = vld [vmem:[%s73] sm:$0xff]
    %v6127 = vld [vmem:[%s75] sm:$0x1]
    %v6129 = vlaneseq
    %v6130 = vshrl.u32 %v6129, 7
    %v6131 = vsub.s32 0, %v6130
    %v6132 = vrot.slane %v6127, %v6131
    %v6135 = vsel %vm167, %v6124, 0
    %v6138 = vsel %vm167, %v6125, 0
    %6140 = vmatprep.subr.mxu0 0.0
    %6141 = vmatpush1.msra.mxu0 %v6126
    %6142 = vmatprep.subr.mxu0 0.0
    %6143 = vmatpush1.msra.mxu0 0.0
    %6144 = vmatprep.subr.mxu0 0.0
    %6145 = vmatpush1.msra.mxu0 0.0
    %6146 = vmatprep.subr.mxu0 0.0
    %6147 = vmatpush1.msra.mxu0 0.0
    %6148 = vmatprep.subr.mxu0 0.0
    %6149 = vmatpush1.msra.mxu0 0.0
    %6150 = vmatprep.subr.mxu0 0.0
    %6151 = vmatpush1.msra.mxu0 0.0
    %6152 = vmatprep.subr.mxu0 0.0
    %6153 = vmatpush1.msra.mxu0 0.0
    %6154 = vmatprep.subr.mxu0 0.0
    %6155 = vmatpush1.msra.mxu0 0.0
    %6156 = vmatprep.subr.mxu0 0.0
    %6157 = vmatpush1.msra.mxu0 0.0
    %6158 = vmatprep.subr.mxu0 0.0
    %6159 = vmatpush1.msra.mxu0 0.0
    %6160 = vmatprep.subr.mxu0 0.0
    %6161 = vmatpush1.msra.mxu0 0.0
    %6162 = vmatprep.subr.mxu0 0.0
    %6163 = vmatpush1.msra.mxu0 0.0
    %6164 = vmatprep.subr.mxu0 0.0
    %6165 = vmatpush1.msra.mxu0 0.0
    %6166 = vmatprep.subr.mxu0 0.0
    %6167 = vmatpush1.msra.mxu0 0.0
    %6168 = vmatprep.subr.mxu0 0.0
    %6169 = vmatpush1.msra.mxu0 0.0
    %6170 = vmatprep.subr.mxu0 0.0
    %6171 = vmatpush1.msra.mxu0 0.0
    %6172 = vmatprep.subr.mxu0 0.0
    %6173 = vmatpush1.msra.mxu0 0.0
    %6174 = vmatprep.subr.mxu0 0.0
    %6175 = vmatpush1.msra.mxu0 0.0
    %6176 = vmatprep.subr.mxu0 0.0
    %6177 = vmatpush1.msra.mxu0 0.0
    %6178 = vmatprep.subr.mxu0 0.0
    %6179 = vmatpush1.msra.mxu0 0.0
    %6180 = vmatprep.subr.mxu0 0.0
    %6181 = vmatpush1.msra.mxu0 0.0
    %6182 = vmatprep.subr.mxu0 0.0
    %6183 = vmatpush1.msra.mxu0 0.0
    %6184 = vmatprep.subr.mxu0 0.0
    %6185 = vmatpush1.msra.mxu0 0.0
    %6186 = vmatprep.subr.mxu0 0.0
    %6187 = vmatpush1.msra.mxu0 0.0
    %6188 = vmatprep.subr.mxu0 0.0
    %6189 = vmatpush1.msra.mxu0 0.0
    %6190 = vmatprep.subr.mxu0 0.0
    %6191 = vmatpush1.msra.mxu0 0.0
    %6192 = vmatprep.subr.mxu0 0.0
    %6193 = vmatpush1.msra.mxu0 0.0
    %6194 = vmatprep.subr.mxu0 0.0
    %6195 = vmatpush1.msra.mxu0 0.0
    %6196 = vmatprep.subr.mxu0 0.0
    %6197 = vmatpush1.msra.mxu0 0.0
    %6198 = vmatprep.subr.mxu0 0.0
    %6199 = vmatpush1.msra.mxu0 0.0
    %6200 = vmatprep.subr.mxu0 0.0
    %6201 = vmatpush1.msra.mxu0 0.0
    %6202 = vmatprep.subr.mxu0 0.0
    %6203 = vmatpush1.msra.mxu0 0.0
    %6204 = vmatprep.mubr.f32.mxu0 0.0
    %6205 = vmatmul.mubr.f32.gmra.mrb[0].mxu0 %v6135
    %v6206 = vpop.f32.mrb[0].mxu0
    %v6207 = vadd.f32 %v6132, %v6206
    %v6208 = vpop.f32.mrb[0].mxu0
    %6209 = vmatprep.mubr.f32.mxu0 0.0
    %6210 = vmatmul.mubr.f32.gmra.mrb[0].mxu0 %v6138
    %v6211 = vpop.f32.mrb[0].mxu0
    %v6212 = vadd.f32 %v6132, %v6211
    %v6213 = vpop.f32.mrb[0].mxu0
    %6214 = vdwg.mxu0
    %vm6215 = vcmask 23552
    %6216 = vst.msk [vmem:[%s77] sm:$0xff] %vm6215, %v6207
    %6217 = vst.msk [vmem:[%s77 + $0x8] sm:$0xff] %vm6215, %v6212
    %v6218 = vmul.f32 %v6207, %v6207
    %v6219 = vmul.f32 %v6212, %v6212
    %v6221 = vsel %vm6215, %v6207, 0
    %v6224 = vsel %vm6215, %v6212, 0
    %6226 = vmatprep.subr.mxu0 0.0
    %6227 = vmatpush1.xpose.msra.mxu0 %v6221
    %6228 = vmatprep.subr.mxu0 0.0
    %6229 = vmatpush1.xpose.msra.mxu0 %v6224
    %6230 = vmatprep.subr.mxu0 0.0
    %6231 = vmatpush1.xpose.msra.mxu0 0.0
    %6232 = vmatprep.subr.mxu0 0.0
    %6233 = vmatpush1.xpose.msra.mxu0 0.0
    %6234 = vmatprep.subr.mxu0 0.0
    %6235 = vmatpush1.xpose.msra.mxu0 0.0
    %6236 = vmatprep.subr.mxu0 0.0
    %6237 = vmatpush1.xpose.msra.mxu0 0.0
    %6238 = vmatprep.subr.mxu0 0.0
    %6239 = vmatpush1.xpose.msra.mxu0 0.0
    %6240 = vmatprep.subr.mxu0 0.0
    %6241 = vmatpush1.xpose.msra.mxu0 0.0
    %6242 = vmatprep.subr.mxu0 0.0
    %6243 = vmatpush1.xpose.msra.mxu0 0.0
    %6244 = vmatprep.subr.mxu0 0.0
    %6245 = vmatpush1.xpose.msra.mxu0 0.0
    %6246 = vmatprep.subr.mxu0 0.0
    %6247 = vmatpush1.xpose.msra.mxu0 0.0
    %6248 = vmatprep.subr.mxu0 0.0
    %6249 = vmatpush1.xpose.msra.mxu0 0.0
    %6250 = vmatprep.subr.mxu0 0.0
    %6251 = vmatpush1.xpose.msra.mxu0 0.0
    %6252 = vmatprep.subr.mxu0 0.0
    %6253 = vmatpush1.xpose.msra.mxu0 0.0
    %6254 = vmatprep.subr.mxu0 0.0
    %6255 = vmatpush1.xpose.msra.mxu0 0.0
    %6256 = vmatprep.subr.mxu0 0.0
    %6257 = vmatpush1.xpose.msra.mxu0 0.0
    %6258 = vmatprep.subr.mxu0 0.0
    %6259 = vmatpush1.xpose.msra.mxu0 0.0
    %6260 = vmatprep.subr.mxu0 0.0
    %6261 = vmatpush1.xpose.msra.mxu0 0.0
    %6262 = vmatprep.subr.mxu0 0.0
    %6263 = vmatpush1.xpose.msra.mxu0 0.0
    %6264 = vmatprep.subr.mxu0 0.0
    %6265 = vmatpush1.xpose.msra.mxu0 0.0
    %6266 = vmatprep.subr.mxu0 0.0
    %6267 = vmatpush1.xpose.msra.mxu0 0.0
    %6268 = vmatprep.subr.mxu0 0.0
    %6269 = vmatpush1.xpose.msra.mxu0 0.0
    %6270 = vmatprep.subr.mxu0 0.0
    %6271 = vmatpush1.xpose.msra.mxu0 0.0
    %6272 = vmatprep.subr.mxu0 0.0
    %6273 = vmatpush1.xpose.msra.mxu0 0.0
    %6274 = vmatprep.subr.mxu0 0.0
    %6275 = vmatpush1.xpose.msra.mxu0 0.0
    %6276 = vmatprep.subr.mxu0 0.0
    %6277 = vmatpush1.xpose.msra.mxu0 0.0
    %6278 = vmatprep.subr.mxu0 0.0
    %6279 = vmatpush1.xpose.msra.mxu0 0.0
    %6280 = vmatprep.subr.mxu0 0.0
    %6281 = vmatpush1.xpose.msra.mxu0 0.0
    %6282 = vmatprep.subr.mxu0 0.0
    %6283 = vmatpush1.xpose.msra.mxu0 0.0
    %6284 = vmatprep.subr.mxu0 0.0
    %6285 = vmatpush1.xpose.msra.mxu0 0.0
    %6286 = vmatprep.subr.mxu0 0.0
    %6287 = vmatpush1.xpose.msra.mxu0 0.0
    %6288 = vmatprep.subr.mxu0 0.0
    %6289 = vmatpush1.xpose.msra.mxu0 0.0
    %6290 = vmatprep.mubr.f32.mxu0 0.0
    %6291 = vmatmul.mubr.f32.gmra.mrb[0].mxu0 %v6221
    %v6292 = vpop.f32.mrb[0].mxu0
    %v6293 = vadd.f32 0.0, %v6292
    %v6294 = vpop.f32.mrb[0].mxu0
    %6295 = vmatprep.mubr.f32.mxu0 0.0
    %6296 = vmatmul.mubr.f32.gmra.mrb[0].mxu0 %v6224
    %v6297 = vpop.f32.mrb[0].mxu0
    %v6298 = vadd.f32 0.0, %v6297
    %v6299 = vpop.f32.mrb[0].mxu0
    %6300 = vdwg.mxu0
    %v6302 = vsel %vm6215, 1.0, 0
    %v6305 = vsel %vm6215, %v6218, 0
    %v6308 = vsel %vm6215, %v6219, 0
    %6310 = vmatprep.subr.mxu0 0.0
    %6311 = vmatpush1.xpose.msra.mxu0 %v6305
    %6312 = vmatprep.subr.mxu0 0.0
    %6313 = vmatpush1.xpose.msra.mxu0 %v6308
    %6314 = vmatprep.subr.mxu0 0.0
    %6315 = vmatpush1.xpose.msra.mxu0 0.0
    %6316 = vmatprep.subr.mxu0 0.0
    %6317 = vmatpush1.xpose.msra.mxu0 0.0
    %6318 = vmatprep.subr.mxu0 0.0
    %6319 = vmatpush1.xpose.msra.mxu0 0.0
    %6320 = vmatprep.subr.mxu0 0.0
    %6321 = vmatpush1.xpose.msra.mxu0 0.0
    %6322 = vmatprep.subr.mxu0 0.0
    %6323 = vmatpush1.xpose.msra.mxu0 0.0
    %6324 = vmatprep.subr.mxu0 0.0
    %6325 = vmatpush1.xpose.msra.mxu0 0.0
    %6326 = vmatprep.subr.mxu0 0.0
    %6327 = vmatpush1.xpose.msra.mxu0 0.0
    %6328 = vmatprep.subr.mxu0 0.0
    %6329 = vmatpush1.xpose.msra.mxu0 0.0
    %6330 = vmatprep.subr.mxu0 0.0
    %6331 = vmatpush1.xpose.msra.mxu0 0.0
    %6332 = vmatprep.subr.mxu0 0.0
    %6333 = vmatpush1.xpose.msra.mxu0 0.0
    %6334 = vmatprep.subr.mxu0 0.0
    %6335 = vmatpush1.xpose.msra.mxu0 0.0
    %6336 = vmatprep.subr.mxu0 0.0
    %6337 = vmatpush1.xpose.msra.mxu0 0.0
    %6338 = vmatprep.subr.mxu0 0.0
    %6339 = vmatpush1.xpose.msra.mxu0 0.0
    %6340 = vmatprep.subr.mxu0 0.0
    %6341 = vmatpush1.xpose.msra.mxu0 0.0
    %6342 = vmatprep.subr.mxu0 0.0
    %6343 = vmatpush1.xpose.msra.mxu0 0.0
    %6344 = vmatprep.subr.mxu0 0.0
    %6345 = vmatpush1.xpose.msra.mxu0 0.0
    %6346 = vmatprep.subr.mxu0 0.0
    %6347 = vmatpush1.xpose.msra.mxu0 0.0
    %6348 = vmatprep.subr.mxu0 0.0
    %6349 = vmatpush1.xpose.msra.mxu0 0.0
    %6350 = vmatprep.subr.mxu0 0.0
    %6351 = vmatpush1.xpose.msra.mxu0 0.0
    %6352 = vmatprep.subr.mxu0 0.0
    %6353 = vmatpush1.xpose.msra.mxu0 0.0
    %6354 = vmatprep.subr.mxu0 0.0
    %6355 = vmatpush1.xpose.msra.mxu0 0.0
    %6356 = vmatprep.subr.mxu0 0.0
    %6357 = vmatpush1.xpose.msra.mxu0 0.0
    %6358 = vmatprep.subr.mxu0 0.0
    %6359 = vmatpush1.xpose.msra.mxu0 0.0
    %6360 = vmatprep.subr.mxu0 0.0
    %6361 = vmatpush1.xpose.msra.mxu0 0.0
    %6362 = vmatprep.subr.mxu0 0.0
    %6363 = vmatpush1.xpose.msra.mxu0 0.0
    %6364 = vmatprep.subr.mxu0 0.0
    %6365 = vmatpush1.xpose.msra.mxu0 0.0
    %6366 = vmatprep.subr.mxu0 0.0
    %6367 = vmatpush1.xpose.msra.mxu0 0.0
    %6368 = vmatprep.subr.mxu0 0.0
    %6369 = vmatpush1.xpose.msra.mxu0 0.0
    %6370 = vmatprep.subr.mxu0 0.0
    %6371 = vmatpush1.xpose.msra.mxu0 0.0
    %6372 = vmatprep.subr.mxu0 0.0
    %6373 = vmatpush1.xpose.msra.mxu0 0.0
    %6374 = vmatprep.mubr.f32.mxu0 0.0
    %6375 = vmatmul.mubr.f32.gmra.mrb[0].mxu0 %v6302
    %v6376 = vpop.f32.mrb[0].mxu0
    %v6377 = vadd.f32 0.0, %v6376
    %v6378 = vpop.f32.mrb[0].mxu0
    %6379 = vmatprep.mubr.f32.mxu0 0.0
    %6380 = vmatmul.mubr.f32.gmra.mrb[0].mxu0 %v6302
    %v6381 = vpop.f32.mrb[0].mxu0
    %v6382 = vadd.f32 0.0, %v6381
    %v6383 = vpop.f32.mrb[0].mxu0
    %6384 = vdwg.mxu0
    %vm6385 = vcmask 1042432
    %v6386 = vsel %vm6385, 1.0, 0
    %6388 = vmatprep.subr.mxu0 0.0
    %6389 = vmatpush1.msra.mxu0 %v6386
    %6390 = vmatprep.subr.mxu0 0.0
    %6391 = vmatpush1.msra.mxu0 0.0
    %6392 = vmatprep.subr.mxu0 0.0
    %6393 = vmatpush1.msra.mxu0 0.0
    %6394 = vmatprep.subr.mxu0 0.0
    %6395 = vmatpush1.msra.mxu0 0.0
    %6396 = vmatprep.subr.mxu0 0.0
    %6397 = vmatpush1.msra.mxu0 0.0
    %6398 = vmatprep.subr.mxu0 0.0
    %6399 = vmatpush1.msra.mxu0 0.0
    %6400 = vmatprep.subr.mxu0 0.0
    %6401 = vmatpush1.msra.mxu0 0.0
    %6402 = vmatprep.subr.mxu0 0.0
    %6403 = vmatpush1.msra.mxu0 0.0
    %6404 = vmatprep.subr.mxu0 0.0
    %6405 = vmatpush1.msra.mxu0 0.0
    %6406 = vmatprep.subr.mxu0 0.0
    %6407 = vmatpush1.msra.mxu0 0.0
    %6408 = vmatprep.subr.mxu0 0.0
    %6409 = vmatpush1.msra.mxu0 0.0
    %6410 = vmatprep.subr.mxu0 0.0
    %6411 = vmatpush1.msra.mxu0 0.0
    %6412 = vmatprep.subr.mxu0 0.0
    %6413 = vmatpush1.msra.mxu0 0.0
    %6414 = vmatprep.subr.mxu0 0.0
    %6415 = vmatpush1.msra.mxu0 0.0
    %6416 = vmatprep.subr.mxu0 0.0
    %6417 = vmatpush1.msra.mxu0 0.0
    %6418 = vmatprep.subr.mxu0 0.0
    %6419 = vmatpush1.msra.mxu0 0.0
    %6420 = vmatprep.subr.mxu0 0.0
    %6421 = vmatpush1.msra.mxu0 0.0
    %6422 = vmatprep.subr.mxu0 0.0
    %6423 = vmatpush1.msra.mxu0 0.0
    %6424 = vmatprep.subr.mxu0 0.0
    %6425 = vmatpush1.msra.mxu0 0.0
    %6426 = vmatprep.subr.mxu0 0.0
    %6427 = vmatpush1.msra.mxu0 0.0
    %6428 = vmatprep.subr.mxu0 0.0
    %6429 = vmatpush1.msra.mxu0 0.0
    %6430 = vmatprep.subr.mxu0 0.0
    %6431 = vmatpush1.msra.mxu0 0.0
    %6432 = vmatprep.subr.mxu0 0.0
    %6433 = vmatpush1.msra.mxu0 0.0
    %6434 = vmatprep.subr.mxu0 0.0
    %6435 = vmatpush1.msra.mxu0 0.0
    %6436 = vmatprep.subr.mxu0 0.0
    %6437 = vmatpush1.msra.mxu0 0.0
    %6438 = vmatprep.subr.mxu0 0.0
    %6439 = vmatpush1.msra.mxu0 0.0
    %6440 = vmatprep.subr.mxu0 0.0
    %6441 = vmatpush1.msra.mxu0 0.0
    %6442 = vmatprep.subr.mxu0 0.0
    %6443 = vmatpush1.msra.mxu0 0.0
    %6444 = vmatprep.subr.mxu0 0.0
    %6445 = vmatpush1.msra.mxu0 0.0
    %6446 = vmatprep.subr.mxu0 0.0
    %6447 = vmatpush1.msra.mxu0 0.0
    %6448 = vmatprep.subr.mxu0 0.0
    %6449 = vmatpush1.msra.mxu0 0.0
    %6450 = vmatprep.subr.mxu0 0.0
    %6451 = vmatpush1.msra.mxu0 0.0
    %6452 = vmatprep.mubr.f32.mxu0 0.0
    %6453 = vmatmul.mubr.f32.gmra.mrb[0].mxu0 %v6305
    %v6454 = vpop.f32.mrb[0].mxu0
    %v6455 = vadd.f32 %v6377, %v6454
    %v6456 = vpop.f32.mrb[0].mxu0
    %6457 = vmatprep.mubr.f32.mxu0 0.0
    %6458 = vmatmul.mubr.f32.gmra.mrb[0].mxu0 %v6308
    %v6459 = vpop.f32.mrb[0].mxu0
    %v6460 = vadd.f32 %v6382, %v6459
    %v6461 = vpop.f32.mrb[0].mxu0
    %6462 = vdwg.mxu0
    %v6463 = vmul.f32 %v6293, 2.0
    %v6464 = vmul.f32 %v6298, 2.0
    %v6465 = vsub.f32 %v6455, %v6463
    %v6466 = vsub.f32 %v6460, %v6464
    %v6467 = vmax.f32 %v6465, 0.0
    %v6468 = vmax.f32 %v6466, 0.0
    %v6469 = vrsqrt.pop %v6467
    %v6470 = vmul.f32 %v6467, %v6469
    %vm6471 = vcmp.eq.f32.partialorder %v6467, inf
    %v6472 = vsel %vm6471, %v6467, %v6470
    %vm6473 = vcmp.eq.f32.partialorder %v6467, 0.0
    %v6474 = vand.u32 %v6467, 2147483648
    %v6475 = vsel %vm6473, %v6474, %v6472
    %v6476 = vrsqrt.pop %v6468
    %v6477 = vmul.f32 %v6468, %v6476
    %vm6478 = vcmp.eq.f32.partialorder %v6468, inf
    %v6479 = vsel %vm6478, %v6468, %v6477
    %vm6480 = vcmp.eq.f32.partialorder %v6468, 0.0
    %v6481 = vand.u32 %v6468, 2147483648
    %v6482 = vsel %vm6480, %v6481, %v6479
    %6483 = vst.msk [vmem:[#allocation2] sm:$0xff] %vm6042, %v6475
    %6484 = vst.msk [vmem:[#allocation2 + $0x8] sm:$0xff] %vm6042, %v6482
    // Predicated region
    $region154: #{our_dynamics_forward.1} parent=1 // pred_check
      _
    $region155: #{our_dynamics_forward.1} parent=1 // pred_check_branch
      %6486 = sbr.rel (0) target = $region157
    $region156: #{our_dynamics_forward.1} parent=1 // pred_region
      _
    $region157: #{our_dynamics_forward.1} parent=1 // pred_fallthru
      _
    // Predicated region
    $region158: #{our_dynamics_forward.1} parent=1 // pred_check
      _
    $region159: #{our_dynamics_forward.1} parent=1 // pred_check_branch
      %6488 = sbr.rel (0) target = $region161
    $region160: #{our_dynamics_forward.1} parent=1 // pred_region
      %s6490 = ssub.s32 256, 256
      %6491 = vsyncadd [#allocation3], %s6490
      %s6492 = sshll.u32 [#allocation2], 4
      %s6493 = int_to_ptr.vmem [resolvable:$true] %s6492
      %6498 = dma.vmem_to_hbm [thread:$0]  %s6493, 256, %s79, [#allocation3], 128, 128, 8
    $region161: #{our_dynamics_forward.1} parent=1 // pred_fallthru
      _
    // Predicated region
    $region162: #{our_dynamics_forward.1} parent=1 // pred_check
      _
    $region163: #{our_dynamics_forward.1} parent=1 // pred_check_branch
      %6500 = sbr.rel (0) target = $region165
    $region164: #{our_dynamics_forward.1} parent=1 // pred_region
      _
    $region165: #{our_dynamics_forward.1} parent=1 // pred_fallthru
      _
    // Predicated region
    $region166: #{our_dynamics_forward.1} parent=1 // pred_check
      _
    $region167: #{our_dynamics_forward.1} parent=1 // pred_check_branch
      %6502 = sbr.rel (0) target = $region169
    $region168: #{our_dynamics_forward.1} parent=1 // pred_region
      %6503 = dma.done [#allocation3], 256
    $region169: #{our_dynamics_forward.1} parent=1 // pred_fallthru
      _
    %6504 = vsyncpa [#allocation3], 1

</llo_original>
